<compile_context>
chip_gen: v7x
topology: tpu7x:2x2x1
jax: 0.10.0
libtpu: 0.0.40
codegen_flags: <defaults>
</compile_context>

<pallas_src>
import jax
import jax.numpy as jnp
from jax.experimental import pallas as pl
from jax.experimental.pallas import tpu as pltpu

IN_CHANNELS = 8
HIDDEN = 64                  # subgraph_width == global_graph_width
NUM_SUBGRAPH_LAYERS = 3
LN_EPS = 1e-5
L2_EPS = 1e-12
SEG_NEG = -1e15              # finite sentinel for masked segment-max (no inf/NaN risk)
ATT_NEG = -1e9               # additive bias masking cross-sample attention entries


# ----------------------------------------------------------------------------
# Pallas kernel: one grid step == Bblk batch samples, flattened block-diagonally.
# ----------------------------------------------------------------------------
def vectornet_kernel(x_ref, ohg_ref, segid_ref, id_ref,
                     pids_ref, abias_ref,
                     w0_ref, b0_ref,
                     w12h_ref, w12g_ref, b12_ref,
                     w2_ref, b2_ref,
                     g1_ref, bt1_ref, g2_ref, bt2_ref, gsc_ref, btsc_ref,
                     linwh_ref, linwg_ref, linb_ref,
                     qkvwp_ref, qkvwi_ref, qkvb_ref,
                     out_ref):
    H = HIDDEN

    def bf16(v):
        return v.astype(jnp.bfloat16)

    def dot(a, b):
        # bf16 operands, f32 accumulation on the MXU
        return jnp.dot(a, b, preferred_element_type=jnp.float32)

    def layer_norm(v, g, b):
        m = jnp.mean(v, axis=-1, keepdims=True)
        c = v - m
        var = jnp.mean(c * c, axis=-1, keepdims=True)
        return c * jax.lax.rsqrt(var + LN_EPS) * g + b

    # membership mask derived in-kernel: member[q, n, 0] == (segid[n] == q)
    # segid: [BN, 1] int32 (step-local segment id, -1 for padded rows)
    # pids : [BP, 1, 1] int32 (= arange(BP))
    member = (segid_ref[...][None, :, :] == pids_ref[...])          # [BP, BN, 1] bool

    def seg_max(h):                                                  # h: [BN, H] f32
        masked = jnp.where(member, h[None, :, :], SEG_NEG)           # [BP, BN, H]
        return jnp.max(masked, axis=1)                               # [BP, H]

    ohg = bf16(ohg_ref[...])                                         # [BN, BP] block-diag one-hot

    def mlp_block(z, l):
        # z: [BN, 2H] = feat @ [w1 | wsc] + [b1 | bsc]  (128-wide packed output)
        out = jnp.maximum(
            layer_norm(z[:, :H], g1_ref[l:l + 1, :], bt1_ref[l:l + 1, :]), 0.0)
        out = dot(bf16(out), w2_ref[l]) + b2_ref[l:l + 1, :]
        out = layer_norm(out, g2_ref[l:l + 1, :], bt2_ref[l:l + 1, :])
        sc = layer_norm(z[:, H:], gsc_ref[l:l + 1, :], btsc_ref[l:l + 1, :])
        return jnp.maximum(out + sc, 0.0)                            # [BN, H]

    # ---- subgraph layer 0 (true 8-channel input, fused [w1|wsc] weight) ----
    z = dot(bf16(x_ref[...]), w0_ref[...]) + b0_ref[...]             # [BN, 2H]
    h = mlp_block(z, 0)
    agg = seg_max(h)                                                 # [BP, H]
    gathered = dot(ohg, bf16(agg))                                   # [BN, H]

    # ---- subgraph layers 1..2 (concat-free split contraction) ----
    for l in range(NUM_SUBGRAPH_LAYERS - 1):
        z = (dot(bf16(h), w12h_ref[l]) + dot(bf16(gathered), w12g_ref[l])
             + b12_ref[l:l + 1, :])                                  # [BN, 2H]
        h = mlp_block(z, l + 1)
        agg = seg_max(h)
        gathered = dot(ohg, bf16(agg))

    # ---- final subgraph linear + per-cluster max + L2 row normalize ----
    y = (dot(bf16(h), linwh_ref[...]) + dot(bf16(gathered), linwg_ref[...])
         + linb_ref[...])                                            # [BN, H]
    poly = seg_max(y)                                                # [BP, H]
    nrm = jnp.sqrt(jnp.sum(poly * poly, axis=-1, keepdims=True))
    poly = poly / jnp.maximum(nrm, L2_EPS)

    # ---- global graph: split QKV contraction over [poly | identifier] ----
    qkv = (dot(bf16(poly), qkvwp_ref[...]) + dot(bf16(id_ref[...]), qkvwi_ref[...])
           + qkvb_ref[...])                                          # [BP, 3H]
    q, k, v = qkv[:, :H], qkv[:, H:2 * H], qkv[:, 2 * H:]
    s = jax.lax.dot_general(bf16(q), bf16(k), (((1,), (1,)), ((), ())),
                            preferred_element_type=jnp.float32)      # [BP, BP]
    s = s + abias_ref[...]                       # block-diag bias -> per-sample softmax
    s = s - jnp.max(s, axis=-1, keepdims=True)
    e = jnp.exp(s)
    attn = e / jnp.sum(e, axis=-1, keepdims=True)
    out_ref[...] = dot(bf16(attn), bf16(v)).astype(out_ref.dtype)    # [BP, H]


def choose_blocking(B, n_pad, P):
    if B <= 1:
        return 1, 1
    # cap Bblk so (a) the [Bblk*P, Bblk*n_pad, H] f32 seg-max temp stays <= ~4 MiB and
    # (b) the folded matmul M dim stays in the few-hundred-row range (MXU occupancy,
    # bounded seg-max redundancy); keep at least 2 grid steps for v7x megacore.
    cap_vmem = max(1, int((4 * 1024 * 1024 / (P * n_pad * HIDDEN * 4)) ** 0.5))
    cap_rows = max(1, 512 // n_pad)
    bblk = max(1, min(cap_vmem, cap_rows, (B + 1) // 2))
    steps = -(-B // bblk)
    return bblk, steps


def run_kernel(x_s, ohg_s, segid_s, id_s, pids, abias, pp):
    S, BN, Cin = x_s.shape
    BP = id_s.shape[1]

    data_specs = [
        pl.BlockSpec((None, BN, Cin), lambda s: (s, 0, 0)),
        pl.BlockSpec((None, BN, BP), lambda s: (s, 0, 0)),
        pl.BlockSpec((None, BN, 1), lambda s: (s, 0, 0)),
        pl.BlockSpec((None, BP, HIDDEN), lambda s: (s, 0, 0)),
    ]

    param_names = ['w0', 'b0', 'w12h', 'w12g', 'b12', 'w2', 'b2',
                   'g1', 'bt1', 'g2', 'bt2', 'gsc', 'btsc',
                   'linwh', 'linwg', 'linb', 'qkvwp', 'qkvwi', 'qkvb']
    params = [pp[k] for k in param_names]
    consts = [pids, abias] + params

    def const_spec(a):
        nd = a.ndim
        # constant block index -> parameter block is not re-fetched across grid steps
        return pl.BlockSpec(a.shape, lambda s, _nd=nd: (0,) * _nd)

    return pl.pallas_call(
        vectornet_kernel,
        out_shape=jax.ShapeDtypeStruct((S, BP, HIDDEN), jnp.float32),
        grid=(S,),
        in_specs=data_specs + [const_spec(a) for a in consts],
        out_specs=pl.BlockSpec((None, BP, HIDDEN), lambda s: (s, 0, 0)),
        compiler_params=pltpu.CompilerParams(
            dimension_semantics=("parallel",)),      # v7x: split steps across both TCs
    )(x_s, ohg_s, segid_s, id_s, *consts)


# ----------------------------------------------------------------------------
# Module-level forward: mirrors VectorNetBackbone.forward (eval path).
# ----------------------------------------------------------------------------
def vectornet_backbone_forward(data, packed_params):
    B = len(data)
    P = data[0]['identifier'].shape[0]
    for bd in data:
        assert bd['identifier'].shape[0] == P, "all samples must share the polyline count"
    n_max = max(bd['x'].shape[0] for bd in data)
    n_pad = ((n_max + 7) // 8) * 8        # sublane-friendly; padded rows are inert

    bblk, steps = choose_blocking(B, n_pad, P)
    B_pad = bblk * steps
    BP = bblk * P

    x_rows, seg_rows, id_rows = [], [], []
    for b in range(B_pad):
        bd = data[min(b, B - 1)]          # batch padding (if any) duplicates the last sample
        j = b % bblk                      # local position inside the step block
        x = bd['x']
        n = x.shape[0]
        cl = bd['cluster'].astype(jnp.int32)
        seg = jnp.full((n_pad,), -1, jnp.int32).at[:n].set(j * P + cl)
        x_rows.append(jnp.pad(x, ((0, n_pad - n), (0, 0))))
        seg_rows.append(seg)
        ident = bd['identifier']
        id_rows.append(jnp.pad(ident, ((0, 0), (0, HIDDEN - ident.shape[1]))))  # [P, 64]

    def step_stack(rows):
        return jnp.stack([jnp.concatenate(rows[s * bblk:(s + 1) * bblk], axis=0)
                          for s in range(steps)])

    x_s = step_stack(x_rows)                                         # [S, BN, Cin]
    seg_flat = jnp.stack([jnp.concatenate(seg_rows[s * bblk:(s + 1) * bblk])
                          for s in range(steps)])                    # [S, BN]
    ohg_s = jax.nn.one_hot(seg_flat, BP, dtype=jnp.bfloat16)         # [S, BN, BP] block-diag
    segid_s = seg_flat[..., None].astype(jnp.int32)                  # [S, BN, 1]
    id_s = step_stack(id_rows)                                       # [S, BP, 64]

    pids = jnp.arange(BP, dtype=jnp.int32).reshape(BP, 1, 1)         # [BP, 1, 1]
    blk = jnp.kron(jnp.eye(bblk, dtype=jnp.float32), jnp.ones((P, P), jnp.float32))
    abias = (1.0 - blk) * ATT_NEG                                    # [BP, BP]

    out = run_kernel(x_s, ohg_s, segid_s, id_s, pids, abias, packed_params)  # [S, BP, 64]
    out = out.reshape(B_pad, P, HIDDEN)[:B]
    return [out[b:b + 1] for b in range(B)], None, None              # list of [1, P, 64]


# ----------------------------------------------------------------------------
# Parameters: raw per-module tensors (PyTorch-like shapes) + host-side packing.
# ----------------------------------------------------------------------------
def _uniform(key, shape, bound):
    return jax.random.uniform(key, shape, jnp.float32, -bound, bound)


def make_params(key):
    H = HIDDEN
    keys = iter(jax.random.split(key, 64))
    sub, in_c = [], IN_CHANNELS
    for _ in range(NUM_SUBGRAPH_LAYERS):
        b_in, b_h = 1.0 / (in_c ** 0.5), 1.0 / (H ** 0.5)
        sub.append(dict(
            w1=_uniform(next(keys), (in_c, H), b_in), b1=_uniform(next(keys), (H,), b_in),
            wsc=_uniform(next(keys), (in_c, H), b_in), bsc=_uniform(next(keys), (H,), b_in),
            w2=_uniform(next(keys), (H, H), b_h), b2=_uniform(next(keys), (H,), b_h),
            g1=jnp.ones((H,)), bt1=jnp.zeros((H,)),
            g2=jnp.ones((H,)), bt2=jnp.zeros((H,)),
            gsc=jnp.ones((H,)), btsc=jnp.zeros((H,)),
        ))
        in_c = 2 * H
    b_lin = 1.0 / ((2 * H) ** 0.5)
    linw = _uniform(next(keys), (2 * H, H), b_lin)
    linb = _uniform(next(keys), (H,), b_lin)
    gin = H + 2
    b_g = 1.0 / (gin ** 0.5)
    qkvw = [_uniform(next(keys), (gin, H), b_g) for _ in range(3)]
    qkvb = [_uniform(next(keys), (H,), b_g) for _ in range(3)]
    return dict(sub=sub, linw=linw, linb=linb, qkvw=qkvw, qkvb=qkvb)


def pack_params(raw):
    H = HIDDEN
    s0, s1, s2 = raw['sub']
    bf = lambda a: a.astype(jnp.bfloat16)

    w0 = bf(jnp.concatenate([s0['w1'], s0['wsc']], axis=1))                   # [Cin, 2H]
    b0 = jnp.concatenate([s0['b1'], s0['bsc']])[None, :]                      # [1, 2H]
    # layers 1..2: split the 2H-row fused weight into the h-part and gathered-part
    w12h = bf(jnp.stack([jnp.concatenate([s['w1'][:H], s['wsc'][:H]], axis=1)
                         for s in (s1, s2)]))                                 # [2, H, 2H]
    w12g = bf(jnp.stack([jnp.concatenate([s['w1'][H:], s['wsc'][H:]], axis=1)
                         for s in (s1, s2)]))                                 # [2, H, 2H]
    b12 = jnp.stack([jnp.concatenate([s['b1'], s['bsc']]) for s in (s1, s2)]) # [2, 2H]
    w2 = bf(jnp.stack([s['w2'] for s in raw['sub']]))                         # [3, H, H]
    b2 = jnp.stack([s['b2'] for s in raw['sub']])                             # [3, H]
    ln = {k: jnp.stack([s[k] for s in raw['sub']])
          for k in ('g1', 'bt1', 'g2', 'bt2', 'gsc', 'btsc')}
    linwh = bf(raw['linw'][:H])                                               # [H, H]
    linwg = bf(raw['linw'][H:])                                               # [H, H]
    qkvw = jnp.concatenate(raw['qkvw'], axis=1)                               # [H+2, 3H]
    qkvwp = bf(qkvw[:H])                                                      # [H, 3H]
    qkvwi = bf(jnp.pad(qkvw[H:], ((0, H - 2), (0, 0))))                       # [H, 3H]
    qkvb = jnp.concatenate(raw['qkvb'])[None, :]                              # [1, 3H]
    return dict(w0=w0, b0=b0, w12h=w12h, w12g=w12g, b12=b12, w2=w2, b2=b2,
                linwh=linwh, linwg=linwg, linb=raw['linb'][None, :],
                qkvwp=qkvwp, qkvwi=qkvwi, qkvb=qkvb, **ln)


# ----------------------------------------------------------------------------
# Pure-JAX reference (same math on the raw, unfused parameters).
# ----------------------------------------------------------------------------
def reference_forward(x, cluster, ident, raw):
    cluster = cluster.astype(jnp.int32)
    P = ident.shape[0]

    def ln(v, g, b):
        m = jnp.mean(v, axis=-1, keepdims=True)
        var = jnp.mean((v - m) ** 2, axis=-1, keepdims=True)
        return (v - m) / jnp.sqrt(var + LN_EPS) * g + b

    feat = x
    for lay in raw['sub']:
        out = jax.nn.relu(ln(feat @ lay['w1'] + lay['b1'], lay['g1'], lay['bt1']))
        out = ln(out @ lay['w2'] + lay['b2'], lay['g2'], lay['bt2'])
        sc = ln(feat @ lay['wsc'] + lay['bsc'], lay['gsc'], lay['btsc'])
        h = jax.nn.relu(out + sc)
        agg = jax.ops.segment_max(h, cluster, num_segments=P)
        feat = jnp.concatenate([h, agg[cluster]], axis=1)

    y = feat @ raw['linw'] + raw['linb']
    poly = jax.ops.segment_max(y, cluster, num_segments=P)
    poly = poly / jnp.maximum(
        jnp.sqrt(jnp.sum(poly * poly, axis=-1, keepdims=True)), L2_EPS)

    gin = jnp.concatenate([poly, ident], axis=1)
    q = gin @ raw['qkvw'][0] + raw['qkvb'][0]
    k = gin @ raw['qkvw'][1] + raw['qkvb'][1]
    v = gin @ raw['qkvw'][2] + raw['qkvb'][2]
    attn = jax.nn.softmax(q @ k.T, axis=-1)
    return (attn @ v)[None]


if __name__ == "__main__":
    key = jax.random.PRNGKey(0)
    kparam, kdata = jax.random.split(key)
    raw = make_params(kparam)
    packed = pack_params(raw)

    # deterministic batch: 4 samples, 8 polylines (3 traj + 5 lane), different N per sample
    data = []
    for vec_per_poly in (4, 5, 6, 7):
        kdata, kx, kid = jax.random.split(kdata, 3)
        traj_num, lane_num = 3, 5
        P = traj_num + lane_num
        N = P * vec_per_poly
        data.append({
            'x': jax.random.normal(kx, (N, IN_CHANNELS), jnp.float32),
            'cluster': jnp.repeat(jnp.arange(P, dtype=jnp.int32), vec_per_poly),
            'identifier': jax.random.normal(kid, (P, 2), jnp.float32),
            'traj_num': traj_num,
            'lane_num': lane_num,
        })

    outs, aux_gt, aux_out = vectornet_backbone_forward(data, packed)
    outs = [jax.block_until_ready(o) for o in outs]

    # tolerance accounts for bf16 MXU operands (reference matmuls also run bf16 on TPU)
    ok = True
    for o, bd in zip(outs, data):
        ref = reference_forward(bd['x'], bd['cluster'], bd['identifier'], raw)
        ok = ok and (o.shape == (1, bd['traj_num'] + bd['lane_num'], HIDDEN))
        ok = ok and bool(jnp.allclose(o, ref, atol=2.5e-2, rtol=2.5e-2))

    if ok:
        print("KERNEL_OK")
    else:
        raise SystemExit("kernel output mismatch vs pure-JAX reference")
</pallas_src>

<mosaic_0001>
module attributes {stable_mosaic.version = 11 : i64} {
  func.func @vectornet_kernel(%arg0: i32, %arg1: memref<1x112x8xf32, #tpu.memory_space<vmem>>, %arg2: memref<1x112x16xbf16, #tpu.memory_space<vmem>>, %arg3: memref<1x112x1xi32, #tpu.memory_space<vmem>>, %arg4: memref<1x16x64xf32, #tpu.memory_space<vmem>>, %arg5: memref<16x1x1xi32, #tpu.memory_space<vmem>>, %arg6: memref<16x16xf32, #tpu.memory_space<vmem>>, %arg7: memref<8x128xbf16, #tpu.memory_space<vmem>>, %arg8: memref<1x128xf32, #tpu.memory_space<vmem>>, %arg9: memref<2x64x128xbf16, #tpu.memory_space<vmem>>, %arg10: memref<2x64x128xbf16, #tpu.memory_space<vmem>>, %arg11: memref<2x128xf32, #tpu.memory_space<vmem>>, %arg12: memref<3x64x64xbf16, #tpu.memory_space<vmem>>, %arg13: memref<3x64xf32, #tpu.memory_space<vmem>>, %arg14: memref<3x64xf32, #tpu.memory_space<vmem>>, %arg15: memref<3x64xf32, #tpu.memory_space<vmem>>, %arg16: memref<3x64xf32, #tpu.memory_space<vmem>>, %arg17: memref<3x64xf32, #tpu.memory_space<vmem>>, %arg18: memref<3x64xf32, #tpu.memory_space<vmem>>, %arg19: memref<3x64xf32, #tpu.memory_space<vmem>>, %arg20: memref<64x64xbf16, #tpu.memory_space<vmem>>, %arg21: memref<64x64xbf16, #tpu.memory_space<vmem>>, %arg22: memref<1x64xf32, #tpu.memory_space<vmem>>, %arg23: memref<64x192xbf16, #tpu.memory_space<vmem>>, %arg24: memref<64x192xbf16, #tpu.memory_space<vmem>>, %arg25: memref<1x192xf32, #tpu.memory_space<vmem>>, %arg26: memref<1x16x64xf32, #tpu.memory_space<vmem>>) attributes {dimension_semantics = [#tpu.dimension_semantics<parallel>], iteration_bounds = array<i64: 2>, scalar_prefetch = 0 : i64, scratch_operands = 0 : i64, tpu.core_type = #tpu.core_type<tc>, window_params = [{transform_indices = @transform_0, window_bounds = array<i64: 1, 112, 8>}, {transform_indices = @transform_1, window_bounds = array<i64: 1, 112, 16>}, {transform_indices = @transform_2, window_bounds = array<i64: 1, 112, 1>}, {transform_indices = @transform_3, window_bounds = array<i64: 1, 16, 64>}, {pipeline_mode = #tpu.pipeline_mode<synchronous>, transform_indices = @transform_4, window_bounds = array<i64: 16, 1, 1>}, {pipeline_mode = #tpu.pipeline_mode<synchronous>, transform_indices = @transform_5, window_bounds = array<i64: 16, 16>}, {pipeline_mode = #tpu.pipeline_mode<synchronous>, transform_indices = @transform_6, window_bounds = array<i64: 8, 128>}, {pipeline_mode = #tpu.pipeline_mode<synchronous>, transform_indices = @transform_7, window_bounds = array<i64: 1, 128>}, {pipeline_mode = #tpu.pipeline_mode<synchronous>, transform_indices = @transform_8, window_bounds = array<i64: 2, 64, 128>}, {pipeline_mode = #tpu.pipeline_mode<synchronous>, transform_indices = @transform_9, window_bounds = array<i64: 2, 64, 128>}, {pipeline_mode = #tpu.pipeline_mode<synchronous>, transform_indices = @transform_10, window_bounds = array<i64: 2, 128>}, {pipeline_mode = #tpu.pipeline_mode<synchronous>, transform_indices = @transform_11, window_bounds = array<i64: 3, 64, 64>}, {pipeline_mode = #tpu.pipeline_mode<synchronous>, transform_indices = @transform_12, window_bounds = array<i64: 3, 64>}, {pipeline_mode = #tpu.pipeline_mode<synchronous>, transform_indices = @transform_13, window_bounds = array<i64: 3, 64>}, {pipeline_mode = #tpu.pipeline_mode<synchronous>, transform_indices = @transform_14, window_bounds = array<i64: 3, 64>}, {pipeline_mode = #tpu.pipeline_mode<synchronous>, transform_indices = @transform_15, window_bounds = array<i64: 3, 64>}, {pipeline_mode = #tpu.pipeline_mode<synchronous>, transform_indices = @transform_16, window_bounds = array<i64: 3, 64>}, {pipeline_mode = #tpu.pipeline_mode<synchronous>, transform_indices = @transform_17, window_bounds = array<i64: 3, 64>}, {pipeline_mode = #tpu.pipeline_mode<synchronous>, transform_indices = @transform_18, window_bounds = array<i64: 3, 64>}, {pipeline_mode = #tpu.pipeline_mode<synchronous>, transform_indices = @transform_19, window_bounds = array<i64: 64, 64>}, {pipeline_mode = #tpu.pipeline_mode<synchronous>, transform_indices = @transform_20, window_bounds = array<i64: 64, 64>}, {pipeline_mode = #tpu.pipeline_mode<synchronous>, transform_indices = @transform_21, window_bounds = array<i64: 1, 64>}, {pipeline_mode = #tpu.pipeline_mode<synchronous>, transform_indices = @transform_22, window_bounds = array<i64: 64, 192>}, {pipeline_mode = #tpu.pipeline_mode<synchronous>, transform_indices = @transform_23, window_bounds = array<i64: 64, 192>}, {pipeline_mode = #tpu.pipeline_mode<synchronous>, transform_indices = @transform_24, window_bounds = array<i64: 1, 192>}, {transform_indices = @transform_25, window_bounds = array<i64: 1, 16, 64>}]} {
    %c0 = arith.constant 0 : index
    %c0_0 = arith.constant 0 : index
    %c0_1 = arith.constant 0 : index
    %0 = vector.load %arg3[%c0, %c0_0, %c0_1] : memref<1x112x1xi32, #tpu.memory_space<vmem>>, vector<1x112x1xi32>
    %1 = vector.shape_cast %0 : vector<1x112x1xi32> to vector<112x1xi32>
    %2 = vector.shape_cast %1 : vector<112x1xi32> to vector<1x112x1xi32>
    %c0_2 = arith.constant 0 : index
    %c0_3 = arith.constant 0 : index
    %c0_4 = arith.constant 0 : index
    %3 = vector.load %arg5[%c0_2, %c0_3, %c0_4] : memref<16x1x1xi32, #tpu.memory_space<vmem>>, vector<16x1x1xi32>
    %4 = vector.broadcast %2 : vector<1x112x1xi32> to vector<16x112x1xi32>
    %5 = vector.broadcast %3 : vector<16x1x1xi32> to vector<16x112x1xi32>
    %6 = arith.cmpi eq, %4, %5 : vector<16x112x1xi32>
    %c0_5 = arith.constant 0 : index
    %c0_6 = arith.constant 0 : index
    %c0_7 = arith.constant 0 : index
    %7 = vector.load %arg2[%c0_5, %c0_6, %c0_7] : memref<1x112x16xbf16, #tpu.memory_space<vmem>>, vector<1x112x16xbf16>
    %8 = vector.shape_cast %7 : vector<1x112x16xbf16> to vector<112x16xbf16>
    %c0_8 = arith.constant 0 : index
    %c0_9 = arith.constant 0 : index
    %c0_10 = arith.constant 0 : index
    %9 = vector.load %arg1[%c0_8, %c0_9, %c0_10] : memref<1x112x8xf32, #tpu.memory_space<vmem>>, vector<1x112x8xf32>
    %10 = vector.shape_cast %9 : vector<1x112x8xf32> to vector<112x8xf32>
    %11 = arith.truncf %10 : vector<112x8xf32> to vector<112x8xbf16>
    %c0_11 = arith.constant 0 : index
    %c0_12 = arith.constant 0 : index
    %12 = vector.load %arg7[%c0_11, %c0_12] : memref<8x128xbf16, #tpu.memory_space<vmem>>, vector<8x128xbf16>
    %cst = arith.constant dense<0.000000e+00> : vector<112x128xf32>
    %13 = tpu.matmul %11, %12, %cst {dimension_numbers = #tpu.dot_dimension_numbers<[1], [0], [0], [1], [0, 0, 1, 1], [], []>} : vector<112x8xbf16>, vector<8x128xbf16>, vector<112x128xf32> -> vector<112x128xf32>
    %c0_13 = arith.constant 0 : index
    %c0_14 = arith.constant 0 : index
    %14 = vector.load %arg8[%c0_13, %c0_14] : memref<1x128xf32, #tpu.memory_space<vmem>>, vector<1x128xf32>
    %15 = vector.broadcast %14 : vector<1x128xf32> to vector<112x128xf32>
    %16 = arith.addf %13, %15 : vector<112x128xf32>
    %17 = vector.extract_strided_slice %16 {offsets = [0, 0], sizes = [112, 64], strides = [1, 1]} : vector<112x128xf32> to vector<112x64xf32>
    %c0_15 = arith.constant 0 : index
    %c0_16 = arith.constant 0 : index
    %18 = vector.load %arg14[%c0_15, %c0_16] : memref<3x64xf32, #tpu.memory_space<vmem>>, vector<1x64xf32>
    %c0_17 = arith.constant 0 : index
    %c0_18 = arith.constant 0 : index
    %19 = vector.load %arg15[%c0_17, %c0_18] : memref<3x64xf32, #tpu.memory_space<vmem>>, vector<1x64xf32>
    %cst_19 = arith.constant dense<0.000000e+00> : vector<112xf32>
    %20 = vector.multi_reduction <add>, %17, %cst_19 [1] : vector<112x64xf32> to vector<112xf32>
    %21 = vector.shape_cast %20 : vector<112xf32> to vector<112x1xf32>
    %cst_20 = arith.constant 6.400000e+01 : f32
    %22 = vector.broadcast %cst_20 : f32 to vector<112x1xf32>
    %23 = arith.divf %21, %22 : vector<112x1xf32>
    %24 = vector.broadcast %23 : vector<112x1xf32> to vector<112x64xf32>
    %25 = arith.subf %17, %24 : vector<112x64xf32>
    %26 = arith.mulf %25, %25 : vector<112x64xf32>
    %cst_21 = arith.constant dense<0.000000e+00> : vector<112xf32>
    %27 = vector.multi_reduction <add>, %26, %cst_21 [1] : vector<112x64xf32> to vector<112xf32>
    %28 = vector.shape_cast %27 : vector<112xf32> to vector<112x1xf32>
    %cst_22 = arith.constant 6.400000e+01 : f32
    %29 = vector.broadcast %cst_22 : f32 to vector<112x1xf32>
    %30 = arith.divf %28, %29 : vector<112x1xf32>
    %cst_23 = arith.constant 9.99999974E-6 : f32
    %31 = vector.broadcast %cst_23 : f32 to vector<112x1xf32>
    %32 = arith.addf %30, %31 : vector<112x1xf32>
    %33 = math.rsqrt %32 : vector<112x1xf32>
    %34 = vector.broadcast %33 : vector<112x1xf32> to vector<112x64xf32>
    %35 = arith.mulf %25, %34 : vector<112x64xf32>
    %36 = vector.broadcast %18 : vector<1x64xf32> to vector<112x64xf32>
    %37 = arith.mulf %35, %36 : vector<112x64xf32>
    %38 = vector.broadcast %19 : vector<1x64xf32> to vector<112x64xf32>
    %39 = arith.addf %37, %38 : vector<112x64xf32>
    %cst_24 = arith.constant 0.000000e+00 : f32
    %40 = vector.broadcast %cst_24 : f32 to vector<112x64xf32>
    %41 = arith.maximumf %39, %40 : vector<112x64xf32>
    %42 = arith.truncf %41 : vector<112x64xf32> to vector<112x64xbf16>
    %c0_25 = arith.constant 0 : index
    %c0_26 = arith.constant 0 : index
    %c0_27 = arith.constant 0 : index
    %43 = vector.load %arg12[%c0_25, %c0_26, %c0_27] : memref<3x64x64xbf16, #tpu.memory_space<vmem>>, vector<1x64x64xbf16>
    %44 = vector.shape_cast %43 : vector<1x64x64xbf16> to vector<64x64xbf16>
    %cst_28 = arith.constant dense<0.000000e+00> : vector<112x64xf32>
    %45 = tpu.matmul %42, %44, %cst_28 {dimension_numbers = #tpu.dot_dimension_numbers<[1], [0], [0], [1], [0, 0, 1, 1], [], []>} : vector<112x64xbf16>, vector<64x64xbf16>, vector<112x64xf32> -> vector<112x64xf32>
    %c0_29 = arith.constant 0 : index
    %c0_30 = arith.constant 0 : index
    %46 = vector.load %arg13[%c0_29, %c0_30] : memref<3x64xf32, #tpu.memory_space<vmem>>, vector<1x64xf32>
    %47 = vector.broadcast %46 : vector<1x64xf32> to vector<112x64xf32>
    %48 = arith.addf %45, %47 : vector<112x64xf32>
    %c0_31 = arith.constant 0 : index
    %c0_32 = arith.constant 0 : index
    %49 = vector.load %arg16[%c0_31, %c0_32] : memref<3x64xf32, #tpu.memory_space<vmem>>, vector<1x64xf32>
    %c0_33 = arith.constant 0 : index
    %c0_34 = arith.constant 0 : index
    %50 = vector.load %arg17[%c0_33, %c0_34] : memref<3x64xf32, #tpu.memory_space<vmem>>, vector<1x64xf32>
    %cst_35 = arith.constant dense<0.000000e+00> : vector<112xf32>
    %51 = vector.multi_reduction <add>, %48, %cst_35 [1] : vector<112x64xf32> to vector<112xf32>
    %52 = vector.shape_cast %51 : vector<112xf32> to vector<112x1xf32>
    %cst_36 = arith.constant 6.400000e+01 : f32
    %53 = vector.broadcast %cst_36 : f32 to vector<112x1xf32>
    %54 = arith.divf %52, %53 : vector<112x1xf32>
    %55 = vector.broadcast %54 : vector<112x1xf32> to vector<112x64xf32>
    %56 = arith.subf %48, %55 : vector<112x64xf32>
    %57 = arith.mulf %56, %56 : vector<112x64xf32>
    %cst_37 = arith.constant dense<0.000000e+00> : vector<112xf32>
    %58 = vector.multi_reduction <add>, %57, %cst_37 [1] : vector<112x64xf32> to vector<112xf32>
    %59 = vector.shape_cast %58 : vector<112xf32> to vector<112x1xf32>
    %cst_38 = arith.constant 6.400000e+01 : f32
    %60 = vector.broadcast %cst_38 : f32 to vector<112x1xf32>
    %61 = arith.divf %59, %60 : vector<112x1xf32>
    %cst_39 = arith.constant 9.99999974E-6 : f32
    %62 = vector.broadcast %cst_39 : f32 to vector<112x1xf32>
    %63 = arith.addf %61, %62 : vector<112x1xf32>
    %64 = math.rsqrt %63 : vector<112x1xf32>
    %65 = vector.broadcast %64 : vector<112x1xf32> to vector<112x64xf32>
    %66 = arith.mulf %56, %65 : vector<112x64xf32>
    %67 = vector.broadcast %49 : vector<1x64xf32> to vector<112x64xf32>
    %68 = arith.mulf %66, %67 : vector<112x64xf32>
    %69 = vector.broadcast %50 : vector<1x64xf32> to vector<112x64xf32>
    %70 = arith.addf %68, %69 : vector<112x64xf32>
    %71 = vector.extract_strided_slice %16 {offsets = [0, 64], sizes = [112, 64], strides = [1, 1]} : vector<112x128xf32> to vector<112x64xf32>
    %c0_40 = arith.constant 0 : index
    %c0_41 = arith.constant 0 : index
    %72 = vector.load %arg18[%c0_40, %c0_41] : memref<3x64xf32, #tpu.memory_space<vmem>>, vector<1x64xf32>
    %c0_42 = arith.constant 0 : index
    %c0_43 = arith.constant 0 : index
    %73 = vector.load %arg19[%c0_42, %c0_43] : memref<3x64xf32, #tpu.memory_space<vmem>>, vector<1x64xf32>
    %cst_44 = arith.constant dense<0.000000e+00> : vector<112xf32>
    %74 = vector.multi_reduction <add>, %71, %cst_44 [1] : vector<112x64xf32> to vector<112xf32>
    %75 = vector.shape_cast %74 : vector<112xf32> to vector<112x1xf32>
    %cst_45 = arith.constant 6.400000e+01 : f32
    %76 = vector.broadcast %cst_45 : f32 to vector<112x1xf32>
    %77 = arith.divf %75, %76 : vector<112x1xf32>
    %78 = vector.broadcast %77 : vector<112x1xf32> to vector<112x64xf32>
    %79 = arith.subf %71, %78 : vector<112x64xf32>
    %80 = arith.mulf %79, %79 : vector<112x64xf32>
    %cst_46 = arith.constant dense<0.000000e+00> : vector<112xf32>
    %81 = vector.multi_reduction <add>, %80, %cst_46 [1] : vector<112x64xf32> to vector<112xf32>
    %82 = vector.shape_cast %81 : vector<112xf32> to vector<112x1xf32>
    %cst_47 = arith.constant 6.400000e+01 : f32
    %83 = vector.broadcast %cst_47 : f32 to vector<112x1xf32>
    %84 = arith.divf %82, %83 : vector<112x1xf32>
    %cst_48 = arith.constant 9.99999974E-6 : f32
    %85 = vector.broadcast %cst_48 : f32 to vector<112x1xf32>
    %86 = arith.addf %84, %85 : vector<112x1xf32>
    %87 = math.rsqrt %86 : vector<112x1xf32>
    %88 = vector.broadcast %87 : vector<112x1xf32> to vector<112x64xf32>
    %89 = arith.mulf %79, %88 : vector<112x64xf32>
    %90 = vector.broadcast %72 : vector<1x64xf32> to vector<112x64xf32>
    %91 = arith.mulf %89, %90 : vector<112x64xf32>
    %92 = vector.broadcast %73 : vector<1x64xf32> to vector<112x64xf32>
    %93 = arith.addf %91, %92 : vector<112x64xf32>
    %94 = arith.addf %70, %93 : vector<112x64xf32>
    %cst_49 = arith.constant 0.000000e+00 : f32
    %95 = vector.broadcast %cst_49 : f32 to vector<112x64xf32>
    %96 = arith.maximumf %94, %95 : vector<112x64xf32>
    %97 = vector.shape_cast %96 : vector<112x64xf32> to vector<1x112x64xf32>
    %cst_50 = arith.constant -9.99999986E+14 : f32
    %98 = vector.shape_cast %6 : vector<16x112x1xi1> to vector<16x112x1xi1>
    %99 = vector.broadcast %98 : vector<16x112x1xi1> to vector<16x112x64xi1>
    %100 = vector.shape_cast %97 : vector<1x112x64xf32> to vector<1x112x64xf32>
    %101 = vector.broadcast %100 : vector<1x112x64xf32> to vector<16x112x64xf32>
    %102 = vector.broadcast %cst_50 : f32 to vector<16x112x64xf32>
    %103 = arith.select %99, %101, %102 : vector<16x112x64xi1>, vector<16x112x64xf32>
    %cst_51 = arith.constant dense<0xFF800000> : vector<16x64xf32>
    %104 = vector.multi_reduction <maximumf>, %103, %cst_51 [1] : vector<16x112x64xf32> to vector<16x64xf32>
    %105 = arith.truncf %104 : vector<16x64xf32> to vector<16x64xbf16>
    %cst_52 = arith.constant dense<0.000000e+00> : vector<112x64xf32>
    %106 = tpu.matmul %8, %105, %cst_52 {dimension_numbers = #tpu.dot_dimension_numbers<[1], [0], [0], [1], [0, 0, 1, 1], [], []>} : vector<112x16xbf16>, vector<16x64xbf16>, vector<112x64xf32> -> vector<112x64xf32>
    %107 = arith.truncf %96 : vector<112x64xf32> to vector<112x64xbf16>
    %c0_53 = arith.constant 0 : index
    %c0_54 = arith.constant 0 : index
    %c0_55 = arith.constant 0 : index
    %108 = vector.load %arg9[%c0_53, %c0_54, %c0_55] : memref<2x64x128xbf16, #tpu.memory_space<vmem>>, vector<1x64x128xbf16>
    %109 = vector.shape_cast %108 : vector<1x64x128xbf16> to vector<64x128xbf16>
    %cst_56 = arith.constant dense<0.000000e+00> : vector<112x128xf32>
    %110 = tpu.matmul %107, %109, %cst_56 {dimension_numbers = #tpu.dot_dimension_numbers<[1], [0], [0], [1], [0, 0, 1, 1], [], []>} : vector<112x64xbf16>, vector<64x128xbf16>, vector<112x128xf32> -> vector<112x128xf32>
    %111 = arith.truncf %106 : vector<112x64xf32> to vector<112x64xbf16>
    %c0_57 = arith.constant 0 : index
    %c0_58 = arith.constant 0 : index
    %c0_59 = arith.constant 0 : index
    %112 = vector.load %arg10[%c0_57, %c0_58, %c0_59] : memref<2x64x128xbf16, #tpu.memory_space<vmem>>, vector<1x64x128xbf16>
    %113 = vector.shape_cast %112 : vector<1x64x128xbf16> to vector<64x128xbf16>
    %cst_60 = arith.constant dense<0.000000e+00> : vector<112x128xf32>
    %114 = tpu.matmul %111, %113, %cst_60 {dimension_numbers = #tpu.dot_dimension_numbers<[1], [0], [0], [1], [0, 0, 1, 1], [], []>} : vector<112x64xbf16>, vector<64x128xbf16>, vector<112x128xf32> -> vector<112x128xf32>
    %115 = arith.addf %110, %114 : vector<112x128xf32>
    %c0_61 = arith.constant 0 : index
    %c0_62 = arith.constant 0 : index
    %116 = vector.load %arg11[%c0_61, %c0_62] : memref<2x128xf32, #tpu.memory_space<vmem>>, vector<1x128xf32>
    %117 = vector.broadcast %116 : vector<1x128xf32> to vector<112x128xf32>
    %118 = arith.addf %115, %117 : vector<112x128xf32>
    %119 = vector.extract_strided_slice %118 {offsets = [0, 0], sizes = [112, 64], strides = [1, 1]} : vector<112x128xf32> to vector<112x64xf32>
    %c1 = arith.constant 1 : index
    %c0_63 = arith.constant 0 : index
    %120 = vector.load %arg14[%c1, %c0_63] : memref<3x64xf32, #tpu.memory_space<vmem>>, vector<1x64xf32>
    %c1_64 = arith.constant 1 : index
    %c0_65 = arith.constant 0 : index
    %121 = vector.load %arg15[%c1_64, %c0_65] : memref<3x64xf32, #tpu.memory_space<vmem>>, vector<1x64xf32>
    %cst_66 = arith.constant dense<0.000000e+00> : vector<112xf32>
    %122 = vector.multi_reduction <add>, %119, %cst_66 [1] : vector<112x64xf32> to vector<112xf32>
    %123 = vector.shape_cast %122 : vector<112xf32> to vector<112x1xf32>
    %cst_67 = arith.constant 6.400000e+01 : f32
    %124 = vector.broadcast %cst_67 : f32 to vector<112x1xf32>
    %125 = arith.divf %123, %124 : vector<112x1xf32>
    %126 = vector.broadcast %125 : vector<112x1xf32> to vector<112x64xf32>
    %127 = arith.subf %119, %126 : vector<112x64xf32>
    %128 = arith.mulf %127, %127 : vector<112x64xf32>
    %cst_68 = arith.constant dense<0.000000e+00> : vector<112xf32>
    %129 = vector.multi_reduction <add>, %128, %cst_68 [1] : vector<112x64xf32> to vector<112xf32>
    %130 = vector.shape_cast %129 : vector<112xf32> to vector<112x1xf32>
    %cst_69 = arith.constant 6.400000e+01 : f32
    %131 = vector.broadcast %cst_69 : f32 to vector<112x1xf32>
    %132 = arith.divf %130, %131 : vector<112x1xf32>
    %cst_70 = arith.constant 9.99999974E-6 : f32
    %133 = vector.broadcast %cst_70 : f32 to vector<112x1xf32>
    %134 = arith.addf %132, %133 : vector<112x1xf32>
    %135 = math.rsqrt %134 : vector<112x1xf32>
    %136 = vector.broadcast %135 : vector<112x1xf32> to vector<112x64xf32>
    %137 = arith.mulf %127, %136 : vector<112x64xf32>
    %138 = vector.broadcast %120 : vector<1x64xf32> to vector<112x64xf32>
    %139 = arith.mulf %137, %138 : vector<112x64xf32>
    %140 = vector.broadcast %121 : vector<1x64xf32> to vector<112x64xf32>
    %141 = arith.addf %139, %140 : vector<112x64xf32>
    %cst_71 = arith.constant 0.000000e+00 : f32
    %142 = vector.broadcast %cst_71 : f32 to vector<112x64xf32>
    %143 = arith.maximumf %141, %142 : vector<112x64xf32>
    %144 = arith.truncf %143 : vector<112x64xf32> to vector<112x64xbf16>
    %c1_72 = arith.constant 1 : index
    %c0_73 = arith.constant 0 : index
    %c0_74 = arith.constant 0 : index
    %145 = vector.load %arg12[%c1_72, %c0_73, %c0_74] : memref<3x64x64xbf16, #tpu.memory_space<vmem>>, vector<1x64x64xbf16>
    %146 = vector.shape_cast %145 : vector<1x64x64xbf16> to vector<64x64xbf16>
    %cst_75 = arith.constant dense<0.000000e+00> : vector<112x64xf32>
    %147 = tpu.matmul %144, %146, %cst_75 {dimension_numbers = #tpu.dot_dimension_numbers<[1], [0], [0], [1], [0, 0, 1, 1], [], []>} : vector<112x64xbf16>, vector<64x64xbf16>, vector<112x64xf32> -> vector<112x64xf32>
    %c1_76 = arith.constant 1 : index
    %c0_77 = arith.constant 0 : index
    %148 = vector.load %arg13[%c1_76, %c0_77] : memref<3x64xf32, #tpu.memory_space<vmem>>, vector<1x64xf32>
    %149 = vector.broadcast %148 : vector<1x64xf32> to vector<112x64xf32>
    %150 = arith.addf %147, %149 : vector<112x64xf32>
    %c1_78 = arith.constant 1 : index
    %c0_79 = arith.constant 0 : index
    %151 = vector.load %arg16[%c1_78, %c0_79] : memref<3x64xf32, #tpu.memory_space<vmem>>, vector<1x64xf32>
    %c1_80 = arith.constant 1 : index
    %c0_81 = arith.constant 0 : index
    %152 = vector.load %arg17[%c1_80, %c0_81] : memref<3x64xf32, #tpu.memory_space<vmem>>, vector<1x64xf32>
    %cst_82 = arith.constant dense<0.000000e+00> : vector<112xf32>
    %153 = vector.multi_reduction <add>, %150, %cst_82 [1] : vector<112x64xf32> to vector<112xf32>
    %154 = vector.shape_cast %153 : vector<112xf32> to vector<112x1xf32>
    %cst_83 = arith.constant 6.400000e+01 : f32
    %155 = vector.broadcast %cst_83 : f32 to vector<112x1xf32>
    %156 = arith.divf %154, %155 : vector<112x1xf32>
    %157 = vector.broadcast %156 : vector<112x1xf32> to vector<112x64xf32>
    %158 = arith.subf %150, %157 : vector<112x64xf32>
    %159 = arith.mulf %158, %158 : vector<112x64xf32>
    %cst_84 = arith.constant dense<0.000000e+00> : vector<112xf32>
    %160 = vector.multi_reduction <add>, %159, %cst_84 [1] : vector<112x64xf32> to vector<112xf32>
    %161 = vector.shape_cast %160 : vector<112xf32> to vector<112x1xf32>
    %cst_85 = arith.constant 6.400000e+01 : f32
    %162 = vector.broadcast %cst_85 : f32 to vector<112x1xf32>
    %163 = arith.divf %161, %162 : vector<112x1xf32>
    %cst_86 = arith.constant 9.99999974E-6 : f32
    %164 = vector.broadcast %cst_86 : f32 to vector<112x1xf32>
    %165 = arith.addf %163, %164 : vector<112x1xf32>
    %166 = math.rsqrt %165 : vector<112x1xf32>
    %167 = vector.broadcast %166 : vector<112x1xf32> to vector<112x64xf32>
    %168 = arith.mulf %158, %167 : vector<112x64xf32>
    %169 = vector.broadcast %151 : vector<1x64xf32> to vector<112x64xf32>
    %170 = arith.mulf %168, %169 : vector<112x64xf32>
    %171 = vector.broadcast %152 : vector<1x64xf32> to vector<112x64xf32>
    %172 = arith.addf %170, %171 : vector<112x64xf32>
    %173 = vector.extract_strided_slice %118 {offsets = [0, 64], sizes = [112, 64], strides = [1, 1]} : vector<112x128xf32> to vector<112x64xf32>
    %c1_87 = arith.constant 1 : index
    %c0_88 = arith.constant 0 : index
    %174 = vector.load %arg18[%c1_87, %c0_88] : memref<3x64xf32, #tpu.memory_space<vmem>>, vector<1x64xf32>
    %c1_89 = arith.constant 1 : index
    %c0_90 = arith.constant 0 : index
    %175 = vector.load %arg19[%c1_89, %c0_90] : memref<3x64xf32, #tpu.memory_space<vmem>>, vector<1x64xf32>
    %cst_91 = arith.constant dense<0.000000e+00> : vector<112xf32>
    %176 = vector.multi_reduction <add>, %173, %cst_91 [1] : vector<112x64xf32> to vector<112xf32>
    %177 = vector.shape_cast %176 : vector<112xf32> to vector<112x1xf32>
    %cst_92 = arith.constant 6.400000e+01 : f32
    %178 = vector.broadcast %cst_92 : f32 to vector<112x1xf32>
    %179 = arith.divf %177, %178 : vector<112x1xf32>
    %180 = vector.broadcast %179 : vector<112x1xf32> to vector<112x64xf32>
    %181 = arith.subf %173, %180 : vector<112x64xf32>
    %182 = arith.mulf %181, %181 : vector<112x64xf32>
    %cst_93 = arith.constant dense<0.000000e+00> : vector<112xf32>
    %183 = vector.multi_reduction <add>, %182, %cst_93 [1] : vector<112x64xf32> to vector<112xf32>
    %184 = vector.shape_cast %183 : vector<112xf32> to vector<112x1xf32>
    %cst_94 = arith.constant 6.400000e+01 : f32
    %185 = vector.broadcast %cst_94 : f32 to vector<112x1xf32>
    %186 = arith.divf %184, %185 : vector<112x1xf32>
    %cst_95 = arith.constant 9.99999974E-6 : f32
    %187 = vector.broadcast %cst_95 : f32 to vector<112x1xf32>
    %188 = arith.addf %186, %187 : vector<112x1xf32>
    %189 = math.rsqrt %188 : vector<112x1xf32>
    %190 = vector.broadcast %189 : vector<112x1xf32> to vector<112x64xf32>
    %191 = arith.mulf %181, %190 : vector<112x64xf32>
    %192 = vector.broadcast %174 : vector<1x64xf32> to vector<112x64xf32>
    %193 = arith.mulf %191, %192 : vector<112x64xf32>
    %194 = vector.broadcast %175 : vector<1x64xf32> to vector<112x64xf32>
    %195 = arith.addf %193, %194 : vector<112x64xf32>
    %196 = arith.addf %172, %195 : vector<112x64xf32>
    %cst_96 = arith.constant 0.000000e+00 : f32
    %197 = vector.broadcast %cst_96 : f32 to vector<112x64xf32>
    %198 = arith.maximumf %196, %197 : vector<112x64xf32>
    %199 = vector.shape_cast %198 : vector<112x64xf32> to vector<1x112x64xf32>
    %cst_97 = arith.constant -9.99999986E+14 : f32
    %200 = vector.shape_cast %6 : vector<16x112x1xi1> to vector<16x112x1xi1>
    %201 = vector.broadcast %200 : vector<16x112x1xi1> to vector<16x112x64xi1>
    %202 = vector.shape_cast %199 : vector<1x112x64xf32> to vector<1x112x64xf32>
    %203 = vector.broadcast %202 : vector<1x112x64xf32> to vector<16x112x64xf32>
    %204 = vector.broadcast %cst_97 : f32 to vector<16x112x64xf32>
    %205 = arith.select %201, %203, %204 : vector<16x112x64xi1>, vector<16x112x64xf32>
    %cst_98 = arith.constant dense<0xFF800000> : vector<16x64xf32>
    %206 = vector.multi_reduction <maximumf>, %205, %cst_98 [1] : vector<16x112x64xf32> to vector<16x64xf32>
    %207 = arith.truncf %206 : vector<16x64xf32> to vector<16x64xbf16>
    %cst_99 = arith.constant dense<0.000000e+00> : vector<112x64xf32>
    %208 = tpu.matmul %8, %207, %cst_99 {dimension_numbers = #tpu.dot_dimension_numbers<[1], [0], [0], [1], [0, 0, 1, 1], [], []>} : vector<112x16xbf16>, vector<16x64xbf16>, vector<112x64xf32> -> vector<112x64xf32>
    %209 = arith.truncf %198 : vector<112x64xf32> to vector<112x64xbf16>
    %c1_100 = arith.constant 1 : index
    %c0_101 = arith.constant 0 : index
    %c0_102 = arith.constant 0 : index
    %210 = vector.load %arg9[%c1_100, %c0_101, %c0_102] : memref<2x64x128xbf16, #tpu.memory_space<vmem>>, vector<1x64x128xbf16>
    %211 = vector.shape_cast %210 : vector<1x64x128xbf16> to vector<64x128xbf16>
    %cst_103 = arith.constant dense<0.000000e+00> : vector<112x128xf32>
    %212 = tpu.matmul %209, %211, %cst_103 {dimension_numbers = #tpu.dot_dimension_numbers<[1], [0], [0], [1], [0, 0, 1, 1], [], []>} : vector<112x64xbf16>, vector<64x128xbf16>, vector<112x128xf32> -> vector<112x128xf32>
    %213 = arith.truncf %208 : vector<112x64xf32> to vector<112x64xbf16>
    %c1_104 = arith.constant 1 : index
    %c0_105 = arith.constant 0 : index
    %c0_106 = arith.constant 0 : index
    %214 = vector.load %arg10[%c1_104, %c0_105, %c0_106] : memref<2x64x128xbf16, #tpu.memory_space<vmem>>, vector<1x64x128xbf16>
    %215 = vector.shape_cast %214 : vector<1x64x128xbf16> to vector<64x128xbf16>
    %cst_107 = arith.constant dense<0.000000e+00> : vector<112x128xf32>
    %216 = tpu.matmul %213, %215, %cst_107 {dimension_numbers = #tpu.dot_dimension_numbers<[1], [0], [0], [1], [0, 0, 1, 1], [], []>} : vector<112x64xbf16>, vector<64x128xbf16>, vector<112x128xf32> -> vector<112x128xf32>
    %217 = arith.addf %212, %216 : vector<112x128xf32>
    %c1_108 = arith.constant 1 : index
    %c0_109 = arith.constant 0 : index
    %218 = vector.load %arg11[%c1_108, %c0_109] : memref<2x128xf32, #tpu.memory_space<vmem>>, vector<1x128xf32>
    %219 = vector.broadcast %218 : vector<1x128xf32> to vector<112x128xf32>
    %220 = arith.addf %217, %219 : vector<112x128xf32>
    %221 = vector.extract_strided_slice %220 {offsets = [0, 0], sizes = [112, 64], strides = [1, 1]} : vector<112x128xf32> to vector<112x64xf32>
    %c2 = arith.constant 2 : index
    %c0_110 = arith.constant 0 : index
    %222 = vector.load %arg14[%c2, %c0_110] : memref<3x64xf32, #tpu.memory_space<vmem>>, vector<1x64xf32>
    %c2_111 = arith.constant 2 : index
    %c0_112 = arith.constant 0 : index
    %223 = vector.load %arg15[%c2_111, %c0_112] : memref<3x64xf32, #tpu.memory_space<vmem>>, vector<1x64xf32>
    %cst_113 = arith.constant dense<0.000000e+00> : vector<112xf32>
    %224 = vector.multi_reduction <add>, %221, %cst_113 [1] : vector<112x64xf32> to vector<112xf32>
    %225 = vector.shape_cast %224 : vector<112xf32> to vector<112x1xf32>
    %cst_114 = arith.constant 6.400000e+01 : f32
    %226 = vector.broadcast %cst_114 : f32 to vector<112x1xf32>
    %227 = arith.divf %225, %226 : vector<112x1xf32>
    %228 = vector.broadcast %227 : vector<112x1xf32> to vector<112x64xf32>
    %229 = arith.subf %221, %228 : vector<112x64xf32>
    %230 = arith.mulf %229, %229 : vector<112x64xf32>
    %cst_115 = arith.constant dense<0.000000e+00> : vector<112xf32>
    %231 = vector.multi_reduction <add>, %230, %cst_115 [1] : vector<112x64xf32> to vector<112xf32>
    %232 = vector.shape_cast %231 : vector<112xf32> to vector<112x1xf32>
    %cst_116 = arith.constant 6.400000e+01 : f32
    %233 = vector.broadcast %cst_116 : f32 to vector<112x1xf32>
    %234 = arith.divf %232, %233 : vector<112x1xf32>
    %cst_117 = arith.constant 9.99999974E-6 : f32
    %235 = vector.broadcast %cst_117 : f32 to vector<112x1xf32>
    %236 = arith.addf %234, %235 : vector<112x1xf32>
    %237 = math.rsqrt %236 : vector<112x1xf32>
    %238 = vector.broadcast %237 : vector<112x1xf32> to vector<112x64xf32>
    %239 = arith.mulf %229, %238 : vector<112x64xf32>
    %240 = vector.broadcast %222 : vector<1x64xf32> to vector<112x64xf32>
    %241 = arith.mulf %239, %240 : vector<112x64xf32>
    %242 = vector.broadcast %223 : vector<1x64xf32> to vector<112x64xf32>
    %243 = arith.addf %241, %242 : vector<112x64xf32>
    %cst_118 = arith.constant 0.000000e+00 : f32
    %244 = vector.broadcast %cst_118 : f32 to vector<112x64xf32>
    %245 = arith.maximumf %243, %244 : vector<112x64xf32>
    %246 = arith.truncf %245 : vector<112x64xf32> to vector<112x64xbf16>
    %c2_119 = arith.constant 2 : index
    %c0_120 = arith.constant 0 : index
    %c0_121 = arith.constant 0 : index
    %247 = vector.load %arg12[%c2_119, %c0_120, %c0_121] : memref<3x64x64xbf16, #tpu.memory_space<vmem>>, vector<1x64x64xbf16>
    %248 = vector.shape_cast %247 : vector<1x64x64xbf16> to vector<64x64xbf16>
    %cst_122 = arith.constant dense<0.000000e+00> : vector<112x64xf32>
    %249 = tpu.matmul %246, %248, %cst_122 {dimension_numbers = #tpu.dot_dimension_numbers<[1], [0], [0], [1], [0, 0, 1, 1], [], []>} : vector<112x64xbf16>, vector<64x64xbf16>, vector<112x64xf32> -> vector<112x64xf32>
    %c2_123 = arith.constant 2 : index
    %c0_124 = arith.constant 0 : index
    %250 = vector.load %arg13[%c2_123, %c0_124] : memref<3x64xf32, #tpu.memory_space<vmem>>, vector<1x64xf32>
    %251 = vector.broadcast %250 : vector<1x64xf32> to vector<112x64xf32>
    %252 = arith.addf %249, %251 : vector<112x64xf32>
    %c2_125 = arith.constant 2 : index
    %c0_126 = arith.constant 0 : index
    %253 = vector.load %arg16[%c2_125, %c0_126] : memref<3x64xf32, #tpu.memory_space<vmem>>, vector<1x64xf32>
    %c2_127 = arith.constant 2 : index
    %c0_128 = arith.constant 0 : index
    %254 = vector.load %arg17[%c2_127, %c0_128] : memref<3x64xf32, #tpu.memory_space<vmem>>, vector<1x64xf32>
    %cst_129 = arith.constant dense<0.000000e+00> : vector<112xf32>
    %255 = vector.multi_reduction <add>, %252, %cst_129 [1] : vector<112x64xf32> to vector<112xf32>
    %256 = vector.shape_cast %255 : vector<112xf32> to vector<112x1xf32>
    %cst_130 = arith.constant 6.400000e+01 : f32
    %257 = vector.broadcast %cst_130 : f32 to vector<112x1xf32>
    %258 = arith.divf %256, %257 : vector<112x1xf32>
    %259 = vector.broadcast %258 : vector<112x1xf32> to vector<112x64xf32>
    %260 = arith.subf %252, %259 : vector<112x64xf32>
    %261 = arith.mulf %260, %260 : vector<112x64xf32>
    %cst_131 = arith.constant dense<0.000000e+00> : vector<112xf32>
    %262 = vector.multi_reduction <add>, %261, %cst_131 [1] : vector<112x64xf32> to vector<112xf32>
    %263 = vector.shape_cast %262 : vector<112xf32> to vector<112x1xf32>
    %cst_132 = arith.constant 6.400000e+01 : f32
    %264 = vector.broadcast %cst_132 : f32 to vector<112x1xf32>
    %265 = arith.divf %263, %264 : vector<112x1xf32>
    %cst_133 = arith.constant 9.99999974E-6 : f32
    %266 = vector.broadcast %cst_133 : f32 to vector<112x1xf32>
    %267 = arith.addf %265, %266 : vector<112x1xf32>
    %268 = math.rsqrt %267 : vector<112x1xf32>
    %269 = vector.broadcast %268 : vector<112x1xf32> to vector<112x64xf32>
    %270 = arith.mulf %260, %269 : vector<112x64xf32>
    %271 = vector.broadcast %253 : vector<1x64xf32> to vector<112x64xf32>
    %272 = arith.mulf %270, %271 : vector<112x64xf32>
    %273 = vector.broadcast %254 : vector<1x64xf32> to vector<112x64xf32>
    %274 = arith.addf %272, %273 : vector<112x64xf32>
    %275 = vector.extract_strided_slice %220 {offsets = [0, 64], sizes = [112, 64], strides = [1, 1]} : vector<112x128xf32> to vector<112x64xf32>
    %c2_134 = arith.constant 2 : index
    %c0_135 = arith.constant 0 : index
    %276 = vector.load %arg18[%c2_134, %c0_135] : memref<3x64xf32, #tpu.memory_space<vmem>>, vector<1x64xf32>
    %c2_136 = arith.constant 2 : index
    %c0_137 = arith.constant 0 : index
    %277 = vector.load %arg19[%c2_136, %c0_137] : memref<3x64xf32, #tpu.memory_space<vmem>>, vector<1x64xf32>
    %cst_138 = arith.constant dense<0.000000e+00> : vector<112xf32>
    %278 = vector.multi_reduction <add>, %275, %cst_138 [1] : vector<112x64xf32> to vector<112xf32>
    %279 = vector.shape_cast %278 : vector<112xf32> to vector<112x1xf32>
    %cst_139 = arith.constant 6.400000e+01 : f32
    %280 = vector.broadcast %cst_139 : f32 to vector<112x1xf32>
    %281 = arith.divf %279, %280 : vector<112x1xf32>
    %282 = vector.broadcast %281 : vector<112x1xf32> to vector<112x64xf32>
    %283 = arith.subf %275, %282 : vector<112x64xf32>
    %284 = arith.mulf %283, %283 : vector<112x64xf32>
    %cst_140 = arith.constant dense<0.000000e+00> : vector<112xf32>
    %285 = vector.multi_reduction <add>, %284, %cst_140 [1] : vector<112x64xf32> to vector<112xf32>
    %286 = vector.shape_cast %285 : vector<112xf32> to vector<112x1xf32>
    %cst_141 = arith.constant 6.400000e+01 : f32
    %287 = vector.broadcast %cst_141 : f32 to vector<112x1xf32>
    %288 = arith.divf %286, %287 : vector<112x1xf32>
    %cst_142 = arith.constant 9.99999974E-6 : f32
    %289 = vector.broadcast %cst_142 : f32 to vector<112x1xf32>
    %290 = arith.addf %288, %289 : vector<112x1xf32>
    %291 = math.rsqrt %290 : vector<112x1xf32>
    %292 = vector.broadcast %291 : vector<112x1xf32> to vector<112x64xf32>
    %293 = arith.mulf %283, %292 : vector<112x64xf32>
    %294 = vector.broadcast %276 : vector<1x64xf32> to vector<112x64xf32>
    %295 = arith.mulf %293, %294 : vector<112x64xf32>
    %296 = vector.broadcast %277 : vector<1x64xf32> to vector<112x64xf32>
    %297 = arith.addf %295, %296 : vector<112x64xf32>
    %298 = arith.addf %274, %297 : vector<112x64xf32>
    %cst_143 = arith.constant 0.000000e+00 : f32
    %299 = vector.broadcast %cst_143 : f32 to vector<112x64xf32>
    %300 = arith.maximumf %298, %299 : vector<112x64xf32>
    %301 = vector.shape_cast %300 : vector<112x64xf32> to vector<1x112x64xf32>
    %cst_144 = arith.constant -9.99999986E+14 : f32
    %302 = vector.shape_cast %6 : vector<16x112x1xi1> to vector<16x112x1xi1>
    %303 = vector.broadcast %302 : vector<16x112x1xi1> to vector<16x112x64xi1>
    %304 = vector.shape_cast %301 : vector<1x112x64xf32> to vector<1x112x64xf32>
    %305 = vector.broadcast %304 : vector<1x112x64xf32> to vector<16x112x64xf32>
    %306 = vector.broadcast %cst_144 : f32 to vector<16x112x64xf32>
    %307 = arith.select %303, %305, %306 : vector<16x112x64xi1>, vector<16x112x64xf32>
    %cst_145 = arith.constant dense<0xFF800000> : vector<16x64xf32>
    %308 = vector.multi_reduction <maximumf>, %307, %cst_145 [1] : vector<16x112x64xf32> to vector<16x64xf32>
    %309 = arith.truncf %308 : vector<16x64xf32> to vector<16x64xbf16>
    %cst_146 = arith.constant dense<0.000000e+00> : vector<112x64xf32>
    %310 = tpu.matmul %8, %309, %cst_146 {dimension_numbers = #tpu.dot_dimension_numbers<[1], [0], [0], [1], [0, 0, 1, 1], [], []>} : vector<112x16xbf16>, vector<16x64xbf16>, vector<112x64xf32> -> vector<112x64xf32>
    %311 = arith.truncf %300 : vector<112x64xf32> to vector<112x64xbf16>
    %c0_147 = arith.constant 0 : index
    %c0_148 = arith.constant 0 : index
    %312 = vector.load %arg20[%c0_147, %c0_148] : memref<64x64xbf16, #tpu.memory_space<vmem>>, vector<64x64xbf16>
    %cst_149 = arith.constant dense<0.000000e+00> : vector<112x64xf32>
    %313 = tpu.matmul %311, %312, %cst_149 {dimension_numbers = #tpu.dot_dimension_numbers<[1], [0], [0], [1], [0, 0, 1, 1], [], []>} : vector<112x64xbf16>, vector<64x64xbf16>, vector<112x64xf32> -> vector<112x64xf32>
    %314 = arith.truncf %310 : vector<112x64xf32> to vector<112x64xbf16>
    %c0_150 = arith.constant 0 : index
    %c0_151 = arith.constant 0 : index
    %315 = vector.load %arg21[%c0_150, %c0_151] : memref<64x64xbf16, #tpu.memory_space<vmem>>, vector<64x64xbf16>
    %cst_152 = arith.constant dense<0.000000e+00> : vector<112x64xf32>
    %316 = tpu.matmul %314, %315, %cst_152 {dimension_numbers = #tpu.dot_dimension_numbers<[1], [0], [0], [1], [0, 0, 1, 1], [], []>} : vector<112x64xbf16>, vector<64x64xbf16>, vector<112x64xf32> -> vector<112x64xf32>
    %317 = arith.addf %313, %316 : vector<112x64xf32>
    %c0_153 = arith.constant 0 : index
    %c0_154 = arith.constant 0 : index
    %318 = vector.load %arg22[%c0_153, %c0_154] : memref<1x64xf32, #tpu.memory_space<vmem>>, vector<1x64xf32>
    %319 = vector.broadcast %318 : vector<1x64xf32> to vector<112x64xf32>
    %320 = arith.addf %317, %319 : vector<112x64xf32>
    %321 = vector.shape_cast %320 : vector<112x64xf32> to vector<1x112x64xf32>
    %cst_155 = arith.constant -9.99999986E+14 : f32
    %322 = vector.shape_cast %6 : vector<16x112x1xi1> to vector<16x112x1xi1>
    %323 = vector.broadcast %322 : vector<16x112x1xi1> to vector<16x112x64xi1>
    %324 = vector.shape_cast %321 : vector<1x112x64xf32> to vector<1x112x64xf32>
    %325 = vector.broadcast %324 : vector<1x112x64xf32> to vector<16x112x64xf32>
    %326 = vector.broadcast %cst_155 : f32 to vector<16x112x64xf32>
    %327 = arith.select %323, %325, %326 : vector<16x112x64xi1>, vector<16x112x64xf32>
    %cst_156 = arith.constant dense<0xFF800000> : vector<16x64xf32>
    %328 = vector.multi_reduction <maximumf>, %327, %cst_156 [1] : vector<16x112x64xf32> to vector<16x64xf32>
    %329 = arith.mulf %328, %328 : vector<16x64xf32>
    %cst_157 = arith.constant dense<0.000000e+00> : vector<16xf32>
    %330 = vector.multi_reduction <add>, %329, %cst_157 [1] : vector<16x64xf32> to vector<16xf32>
    %331 = vector.shape_cast %330 : vector<16xf32> to vector<16x1xf32>
    %332 = math.sqrt %331 : vector<16x1xf32>
    %cst_158 = arith.constant 9.99999996E-13 : f32
    %333 = vector.broadcast %cst_158 : f32 to vector<16x1xf32>
    %334 = arith.maximumf %332, %333 : vector<16x1xf32>
    %335 = vector.broadcast %334 : vector<16x1xf32> to vector<16x64xf32>
    %336 = arith.divf %328, %335 : vector<16x64xf32>
    %337 = arith.truncf %336 : vector<16x64xf32> to vector<16x64xbf16>
    %c0_159 = arith.constant 0 : index
    %c0_160 = arith.constant 0 : index
    %338 = vector.load %arg23[%c0_159, %c0_160] : memref<64x192xbf16, #tpu.memory_space<vmem>>, vector<64x192xbf16>
    %cst_161 = arith.constant dense<0.000000e+00> : vector<16x192xf32>
    %339 = tpu.matmul %337, %338, %cst_161 {dimension_numbers = #tpu.dot_dimension_numbers<[1], [0], [0], [1], [0, 0, 1, 1], [], []>} : vector<16x64xbf16>, vector<64x192xbf16>, vector<16x192xf32> -> vector<16x192xf32>
    %c0_162 = arith.constant 0 : index
    %c0_163 = arith.constant 0 : index
    %c0_164 = arith.constant 0 : index
    %340 = vector.load %arg4[%c0_162, %c0_163, %c0_164] : memref<1x16x64xf32, #tpu.memory_space<vmem>>, vector<1x16x64xf32>
    %341 = vector.shape_cast %340 : vector<1x16x64xf32> to vector<16x64xf32>
    %342 = arith.truncf %341 : vector<16x64xf32> to vector<16x64xbf16>
    %c0_165 = arith.constant 0 : index
    %c0_166 = arith.constant 0 : index
    %343 = vector.load %arg24[%c0_165, %c0_166] : memref<64x192xbf16, #tpu.memory_space<vmem>>, vector<64x192xbf16>
    %cst_167 = arith.constant dense<0.000000e+00> : vector<16x192xf32>
    %344 = tpu.matmul %342, %343, %cst_167 {dimension_numbers = #tpu.dot_dimension_numbers<[1], [0], [0], [1], [0, 0, 1, 1], [], []>} : vector<16x64xbf16>, vector<64x192xbf16>, vector<16x192xf32> -> vector<16x192xf32>
    %345 = arith.addf %339, %344 : vector<16x192xf32>
    %c0_168 = arith.constant 0 : index
    %c0_169 = arith.constant 0 : index
    %346 = vector.load %arg25[%c0_168, %c0_169] : memref<1x192xf32, #tpu.memory_space<vmem>>, vector<1x192xf32>
    %347 = vector.broadcast %346 : vector<1x192xf32> to vector<16x192xf32>
    %348 = arith.addf %345, %347 : vector<16x192xf32>
    %349 = vector.extract_strided_slice %348 {offsets = [0, 0], sizes = [16, 64], strides = [1, 1]} : vector<16x192xf32> to vector<16x64xf32>
    %350 = vector.extract_strided_slice %348 {offsets = [0, 64], sizes = [16, 64], strides = [1, 1]} : vector<16x192xf32> to vector<16x64xf32>
    %351 = vector.extract_strided_slice %348 {offsets = [0, 128], sizes = [16, 64], strides = [1, 1]} : vector<16x192xf32> to vector<16x64xf32>
    %352 = arith.truncf %349 : vector<16x64xf32> to vector<16x64xbf16>
    %353 = arith.truncf %350 : vector<16x64xf32> to vector<16x64xbf16>
    %cst_170 = arith.constant dense<0.000000e+00> : vector<16x16xf32>
    %354 = tpu.matmul %352, %353, %cst_170 {dimension_numbers = #tpu.dot_dimension_numbers<[1], [1], [0], [0], [0, 0, 1, 0], [], []>} : vector<16x64xbf16>, vector<16x64xbf16>, vector<16x16xf32> -> vector<16x16xf32>
    %c0_171 = arith.constant 0 : index
    %c0_172 = arith.constant 0 : index
    %355 = vector.load %arg6[%c0_171, %c0_172] : memref<16x16xf32, #tpu.memory_space<vmem>>, vector<16x16xf32>
    %356 = arith.addf %354, %355 : vector<16x16xf32>
    %cst_173 = arith.constant dense<0xFF800000> : vector<16xf32>
    %357 = vector.multi_reduction <maximumf>, %356, %cst_173 [1] : vector<16x16xf32> to vector<16xf32>
    %358 = vector.shape_cast %357 : vector<16xf32> to vector<16x1xf32>
    %359 = vector.broadcast %358 : vector<16x1xf32> to vector<16x16xf32>
    %360 = arith.subf %356, %359 : vector<16x16xf32>
    %361 = math.exp %360 : vector<16x16xf32>
    %cst_174 = arith.constant dense<0.000000e+00> : vector<16xf32>
    %362 = vector.multi_reduction <add>, %361, %cst_174 [1] : vector<16x16xf32> to vector<16xf32>
    %363 = vector.shape_cast %362 : vector<16xf32> to vector<16x1xf32>
    %364 = vector.broadcast %363 : vector<16x1xf32> to vector<16x16xf32>
    %365 = arith.divf %361, %364 : vector<16x16xf32>
    %366 = arith.truncf %365 : vector<16x16xf32> to vector<16x16xbf16>
    %367 = arith.truncf %351 : vector<16x64xf32> to vector<16x64xbf16>
    %cst_175 = arith.constant dense<0.000000e+00> : vector<16x64xf32>
    %368 = tpu.matmul %366, %367, %cst_175 {dimension_numbers = #tpu.dot_dimension_numbers<[1], [0], [0], [1], [0, 0, 1, 1], [], []>} : vector<16x16xbf16>, vector<16x64xbf16>, vector<16x64xf32> -> vector<16x64xf32>
    %c0_176 = arith.constant 0 : index
    %c0_177 = arith.constant 0 : index
    %c0_178 = arith.constant 0 : index
    %369 = vector.load %arg26[%c0_176, %c0_177, %c0_178] : memref<1x16x64xf32, #tpu.memory_space<vmem>>, vector<1x16x64xf32>
    %370 = vector.shape_cast %369 : vector<1x16x64xf32> to vector<16x64xf32>
    %371 = vector.shape_cast %368 : vector<16x64xf32> to vector<1x16x64xf32>
    tpu.vector_store %arg26[%c0_176, %c0_177, %c0_178], %371 {strides = array<i32>} : memref<1x16x64xf32, #tpu.memory_space<vmem>>, vector<1x16x64xf32>,
    return
  }
  func.func @transform_0(%arg0: i32) -> (i32, i32, i32) {
    %c0_i32 = arith.constant 0 : i32
    %c0_i32_0 = arith.constant 0 : i32
    %c0_i32_1 = arith.constant 0 : i32
    return %arg0, %c0_i32, %c0_i32_0 : i32, i32, i32
  }
  func.func @transform_1(%arg0: i32) -> (i32, i32, i32) {
    %c0_i32 = arith.constant 0 : i32
    %c0_i32_0 = arith.constant 0 : i32
    %c0_i32_1 = arith.constant 0 : i32
    return %arg0, %c0_i32, %c0_i32_0 : i32, i32, i32
  }
  func.func @transform_2(%arg0: i32) -> (i32, i32, i32) {
    %c0_i32 = arith.constant 0 : i32
    %c0_i32_0 = arith.constant 0 : i32
    %c0_i32_1 = arith.constant 0 : i32
    return %arg0, %c0_i32, %c0_i32_0 : i32, i32, i32
  }
  func.func @transform_3(%arg0: i32) -> (i32, i32, i32) {
    %c0_i32 = arith.constant 0 : i32
    %c0_i32_0 = arith.constant 0 : i32
    %c0_i32_1 = arith.constant 0 : i32
    return %arg0, %c0_i32, %c0_i32_0 : i32, i32, i32
  }
  func.func @transform_4(%arg0: i32) -> (i32, i32, i32) {
    %c0_i32 = arith.constant 0 : i32
    %c0_i32_0 = arith.constant 0 : i32
    %c0_i32_1 = arith.constant 0 : i32
    %c0_i32_2 = arith.constant 0 : i32
    return %c0_i32, %c0_i32_0, %c0_i32_1 : i32, i32, i32
  }
  func.func @transform_5(%arg0: i32) -> (i32, i32) {
    %c0_i32 = arith.constant 0 : i32
    %c0_i32_0 = arith.constant 0 : i32
    %c0_i32_1 = arith.constant 0 : i32
    return %c0_i32, %c0_i32_0 : i32, i32
  }
  func.func @transform_6(%arg0: i32) -> (i32, i32) {
    %c0_i32 = arith.constant 0 : i32
    %c0_i32_0 = arith.constant 0 : i32
    %c0_i32_1 = arith.constant 0 : i32
    return %c0_i32, %c0_i32_0 : i32, i32
  }
  func.func @transform_7(%arg0: i32) -> (i32, i32) {
    %c0_i32 = arith.constant 0 : i32
    %c0_i32_0 = arith.constant 0 : i32
    %c0_i32_1 = arith.constant 0 : i32
    return %c0_i32, %c0_i32_0 : i32, i32
  }
  func.func @transform_8(%arg0: i32) -> (i32, i32, i32) {
    %c0_i32 = arith.constant 0 : i32
    %c0_i32_0 = arith.constant 0 : i32
    %c0_i32_1 = arith.constant 0 : i32
    %c0_i32_2 = arith.constant 0 : i32
    return %c0_i32, %c0_i32_0, %c0_i32_1 : i32, i32, i32
  }
  func.func @transform_9(%arg0: i32) -> (i32, i32, i32) {
    %c0_i32 = arith.constant 0 : i32
    %c0_i32_0 = arith.constant 0 : i32
    %c0_i32_1 = arith.constant 0 : i32
    %c0_i32_2 = arith.constant 0 : i32
    return %c0_i32, %c0_i32_0, %c0_i32_1 : i32, i32, i32
  }
  func.func @transform_10(%arg0: i32) -> (i32, i32) {
    %c0_i32 = arith.constant 0 : i32
    %c0_i32_0 = arith.constant 0 : i32
    %c0_i32_1 = arith.constant 0 : i32
    return %c0_i32, %c0_i32_0 : i32, i32
  }
  func.func @transform_11(%arg0: i32) -> (i32, i32, i32) {
    %c0_i32 = arith.constant 0 : i32
    %c0_i32_0 = arith.constant 0 : i32
    %c0_i32_1 = arith.constant 0 : i32
    %c0_i32_2 = arith.constant 0 : i32
    return %c0_i32, %c0_i32_0, %c0_i32_1 : i32, i32, i32
  }
  func.func @transform_12(%arg0: i32) -> (i32, i32) {
    %c0_i32 = arith.constant 0 : i32
    %c0_i32_0 = arith.constant 0 : i32
    %c0_i32_1 = arith.constant 0 : i32
    return %c0_i32, %c0_i32_0 : i32, i32
  }
  func.func @transform_13(%arg0: i32) -> (i32, i32) {
    %c0_i32 = arith.constant 0 : i32
    %c0_i32_0 = arith.constant 0 : i32
    %c0_i32_1 = arith.constant 0 : i32
    return %c0_i32, %c0_i32_0 : i32, i32
  }
  func.func @transform_14(%arg0: i32) -> (i32, i32) {
    %c0_i32 = arith.constant 0 : i32
    %c0_i32_0 = arith.constant 0 : i32
    %c0_i32_1 = arith.constant 0 : i32
    return %c0_i32, %c0_i32_0 : i32, i32
  }
  func.func @transform_15(%arg0: i32) -> (i32, i32) {
    %c0_i32 = arith.constant 0 : i32
    %c0_i32_0 = arith.constant 0 : i32
    %c0_i32_1 = arith.constant 0 : i32
    return %c0_i32, %c0_i32_0 : i32, i32
  }
  func.func @transform_16(%arg0: i32) -> (i32, i32) {
    %c0_i32 = arith.constant 0 : i32
    %c0_i32_0 = arith.constant 0 : i32
    %c0_i32_1 = arith.constant 0 : i32
    return %c0_i32, %c0_i32_0 : i32, i32
  }
  func.func @transform_17(%arg0: i32) -> (i32, i32) {
    %c0_i32 = arith.constant 0 : i32
    %c0_i32_0 = arith.constant 0 : i32
    %c0_i32_1 = arith.constant 0 : i32
    return %c0_i32, %c0_i32_0 : i32, i32
  }
  func.func @transform_18(%arg0: i32) -> (i32, i32) {
    %c0_i32 = arith.constant 0 : i32
    %c0_i32_0 = arith.constant 0 : i32
    %c0_i32_1 = arith.constant 0 : i32
    return %c0_i32, %c0_i32_0 : i32, i32
  }
  func.func @transform_19(%arg0: i32) -> (i32, i32) {
    %c0_i32 = arith.constant 0 : i32
    %c0_i32_0 = arith.constant 0 : i32
    %c0_i32_1 = arith.constant 0 : i32
    return %c0_i32, %c0_i32_0 : i32, i32
  }
  func.func @transform_20(%arg0: i32) -> (i32, i32) {
    %c0_i32 = arith.constant 0 : i32
    %c0_i32_0 = arith.constant 0 : i32
    %c0_i32_1 = arith.constant 0 : i32
    return %c0_i32, %c0_i32_0 : i32, i32
  }
  func.func @transform_21(%arg0: i32) -> (i32, i32) {
    %c0_i32 = arith.constant 0 : i32
    %c0_i32_0 = arith.constant 0 : i32
    %c0_i32_1 = arith.constant 0 : i32
    return %c0_i32, %c0_i32_0 : i32, i32
  }
  func.func @transform_22(%arg0: i32) -> (i32, i32) {
    %c0_i32 = arith.constant 0 : i32
    %c0_i32_0 = arith.constant 0 : i32
    %c0_i32_1 = arith.constant 0 : i32
    return %c0_i32, %c0_i32_0 : i32, i32
  }
  func.func @transform_23(%arg0: i32) -> (i32, i32) {
    %c0_i32 = arith.constant 0 : i32
    %c0_i32_0 = arith.constant 0 : i32
    %c0_i32_1 = arith.constant 0 : i32
    return %c0_i32, %c0_i32_0 : i32, i32
  }
  func.func @transform_24(%arg0: i32) -> (i32, i32) {
    %c0_i32 = arith.constant 0 : i32
    %c0_i32_0 = arith.constant 0 : i32
    %c0_i32_1 = arith.constant 0 : i32
    return %c0_i32, %c0_i32_0 : i32, i32
  }
  func.func @transform_25(%arg0: i32) -> (i32, i32, i32) {
    %c0_i32 = arith.constant 0 : i32
    %c0_i32_0 = arith.constant 0 : i32
    %c0_i32_1 = arith.constant 0 : i32
    return %arg0, %c0_i32, %c0_i32_0 : i32, i32, i32
  }
}

</mosaic_0001>

<llo_original>
// kernel: tpu_custom_call.1
$region0: #{tpu_custom_call.1}
  #allocation0 [shape = 'u32[]', space=smem, size = 0x4, offset = 0x4, fixed_abs, tag = 'smem constant byte address 0x4 - core index']
  #allocation1 [shape = 'u32[144,128]{1,0:T(1,128)}', space=vmem, size = 0x12000, scoped, tag = 'internal scratch']
  %s0 = inlined_call_operand.vmem [shape: f32[2,112,8], index: 0, kind: input, shape index: {}]
  %s1 = inlined_call_operand.vmem [shape: bf16[2,112,16], index: 1, kind: input, shape index: {}]
  %s2 = inlined_call_operand.vmem [shape: s32[2,112,1], index: 2, kind: input, shape index: {}]
  %s3 = inlined_call_operand.vmem [shape: f32[2,16,64], index: 3, kind: input, shape index: {}]
  %s4 = inlined_call_operand.vmem [shape: s32[16,1,1], index: 4, kind: input, shape index: {}]
  %s5 = inlined_call_operand.vmem [shape: f32[16,16], index: 5, kind: input, shape index: {}]
  %s6 = inlined_call_operand.vmem [shape: bf16[8,128], index: 6, kind: input, shape index: {}]
  %s7 = inlined_call_operand.vmem [shape: f32[1,128], index: 7, kind: input, shape index: {}]
  %s8 = inlined_call_operand.vmem [shape: bf16[2,64,128], index: 8, kind: input, shape index: {}]
  %s9 = inlined_call_operand.vmem [shape: bf16[2,64,128], index: 9, kind: input, shape index: {}]
  %s10 = inlined_call_operand.vmem [shape: f32[2,128], index: 10, kind: input, shape index: {}]
  %s11 = inlined_call_operand.vmem [shape: bf16[3,64,64], index: 11, kind: input, shape index: {}]
  %s12 = inlined_call_operand.vmem [shape: f32[3,64], index: 12, kind: input, shape index: {}]
  %s13 = inlined_call_operand.vmem [shape: f32[3,64], index: 13, kind: input, shape index: {}]
  %s14 = inlined_call_operand.vmem [shape: f32[3,64], index: 14, kind: input, shape index: {}]
  %s15 = inlined_call_operand.vmem [shape: f32[3,64], index: 15, kind: input, shape index: {}]
  %s16 = inlined_call_operand.vmem [shape: f32[3,64], index: 16, kind: input, shape index: {}]
  %s17 = inlined_call_operand.vmem [shape: f32[3,64], index: 17, kind: input, shape index: {}]
  %s18 = inlined_call_operand.vmem [shape: f32[3,64], index: 18, kind: input, shape index: {}]
  %s19 = inlined_call_operand.vmem [shape: bf16[64,64], index: 19, kind: input, shape index: {}]
  %s20 = inlined_call_operand.vmem [shape: bf16[64,64], index: 20, kind: input, shape index: {}]
  %s21 = inlined_call_operand.vmem [shape: f32[1,64], index: 21, kind: input, shape index: {}]
  %s22 = inlined_call_operand.vmem [shape: bf16[64,192], index: 22, kind: input, shape index: {}]
  %s23 = inlined_call_operand.vmem [shape: bf16[64,192], index: 23, kind: input, shape index: {}]
  %s24 = inlined_call_operand.vmem [shape: f32[1,192], index: 24, kind: input, shape index: {}]
  %s25 = inlined_call_operand.hbm [shape: f32[2,16,64], index: 25, kind: output, shape index: {}]
  %s26 = sld [smem:[#allocation0]]
  $region133: #{tpu_custom_call.1} parent=0
    _
  %s28 = ssub.s32 1, %s26
  %s29 = scalar_select 0, %s28, %s26
  $region1: #{tpu_custom_call.1} parent=0
    #allocation2 [shape = 'u8[16384]{0}', space=vmem, size = 0x4000, scoped, tag = 'output window, operand 0']
    #allocation3 [shape = 's32[2]{0}', space=sflag, size = 0x8, scoped, tag = 'scoped memory for tpu_custom_call.1']
    %30 = vsyncpa [#allocation3], 0
    %s31 = scalar_lea.sflag [#allocation3], 1
    %32 = vsyncpa %s31, 0
    loop: start=0, step=1, limit=4
    $region2: #{tpu_custom_call.1} parent=1 // loop_pre_header
      _
    $region3: #{tpu_custom_call.1} parent=1 // loop_header
      %s34 = sphi 0, %s38
      %p35 = scmp.ge.s32.totalorder %s34, 4
      %s44 = sphi 0, %s46
      %s47 = sphi 0, %s44
      %s48 = sphi 0, %s47
      %s64 = sphi 0, %s48
      %s70 = sphi 0, %s72
      %s73 = sphi 0, %s70
      %s74 = sphi 0, %s73
      %s90 = sphi 0, %s74
      %s96 = sphi 0, %s98
      %s99 = sphi 0, %s96
      %s100 = sphi 0, %s99
      %s116 = sphi 0, %s100
      %s122 = sphi 0, %s124
      %s125 = sphi 0, %s122
      %s126 = sphi 0, %s125
      %s142 = sphi 0, %s126
      %s146 = sphi 0, %s146
      %s148 = sphi 0, %s146
      %s149 = sphi 0, %s148
      %s163 = sphi 0, %s149
      %s167 = sphi 0, %s167
      %s169 = sphi 0, %s167
      %s170 = sphi 0, %s169
      %s184 = sphi 0, %s170
      %s188 = sphi 0, %s188
      %s190 = sphi 0, %s188
      %s191 = sphi 0, %s190
      %s205 = sphi 0, %s191
      %s209 = sphi 0, %s209
      %s211 = sphi 0, %s209
      %s212 = sphi 0, %s211
      %s226 = sphi 0, %s212
      %s230 = sphi 0, %s230
      %s232 = sphi 0, %s230
      %s233 = sphi 0, %s232
      %s247 = sphi 0, %s233
      %s251 = sphi 0, %s251
      %s253 = sphi 0, %s251
      %s254 = sphi 0, %s253
      %s268 = sphi 0, %s254
      %s272 = sphi 0, %s272
      %s274 = sphi 0, %s272
      %s275 = sphi 0, %s274
      %s289 = sphi 0, %s275
      %s293 = sphi 0, %s293
      %s295 = sphi 0, %s293
      %s296 = sphi 0, %s295
      %s310 = sphi 0, %s296
      %s314 = sphi 0, %s314
      %s316 = sphi 0, %s314
      %s317 = sphi 0, %s316
      %s331 = sphi 0, %s317
      %s335 = sphi 0, %s335
      %s337 = sphi 0, %s335
      %s338 = sphi 0, %s337
      %s352 = sphi 0, %s338
      %s356 = sphi 0, %s356
      %s358 = sphi 0, %s356
      %s359 = sphi 0, %s358
      %s373 = sphi 0, %s359
      %s377 = sphi 0, %s377
      %s379 = sphi 0, %s377
      %s380 = sphi 0, %s379
      %s394 = sphi 0, %s380
      %s398 = sphi 0, %s398
      %s400 = sphi 0, %s398
      %s401 = sphi 0, %s400
      %s415 = sphi 0, %s401
      %s419 = sphi 0, %s419
      %s421 = sphi 0, %s419
      %s422 = sphi 0, %s421
      %s436 = sphi 0, %s422
      %s440 = sphi 0, %s440
      %s442 = sphi 0, %s440
      %s443 = sphi 0, %s442
      %s457 = sphi 0, %s443
      %s461 = sphi 0, %s461
      %s463 = sphi 0, %s461
      %s464 = sphi 0, %s463
      %s478 = sphi 0, %s464
      %s482 = sphi 0, %s482
      %s484 = sphi 0, %s482
      %s485 = sphi 0, %s484
      %s499 = sphi 0, %s485
      %s503 = sphi 0, %s503
      %s505 = sphi 0, %s503
      %s506 = sphi 0, %s505
      %s520 = sphi 0, %s506
      %s524 = sphi 0, %s524
      %s526 = sphi 0, %s524
      %s527 = sphi 0, %s526
      %s541 = sphi 0, %s527
      %s545 = sphi 0, %s545
      %s547 = sphi 0, %s545
      %s548 = sphi 0, %s547
      %s562 = sphi 0, %s548
      %s566 = sphi 0, %s566
      %s568 = sphi 0, %s566
      %s569 = sphi 0, %s568
      %s583 = sphi 0, %s569
      %s589 = sphi 0, %s591
      %s592 = sphi 0, %s589
      %s593 = sphi 0, %s592
      %s609 = sphi 0, %s593
    $region4: #{tpu_custom_call.1} parent=1 // loop_header_branch
      %37 = sbr.rel (%p35) target = $region8
    $region5: #{tpu_custom_call.1} parent=1 // loop_body
      %s39 = ssub.s32 %s34, 1
      %s40 = ssub.s32 %s34, 2
      %s41 = sadd.s32 %s34, 1
      %s42 = ssub.s32 %s34, %s41
      %p43 = scmp.eq.s32.totalorder %s42, 0
      %s45 = sadd.s32 %s44, 1
      %s46 = scalar_select %p43, %s44, %s45
      %p49 = pneg %p43
      %p50 = scmp.eq.s32.totalorder %s34, 1
      %p51 = por %p49, %p50
      %p52 = scmp.ne.s32.totalorder %s44, %s47
      %p53 = scmp.eq.s32.totalorder %s34, 0
      %p54 = por %p52, %p53
      %p55 = scmp.ne.s32.totalorder %s44, %s47
      %p56 = scmp.eq.s32.totalorder %s39, 1
      %p57 = por %p55, %p56
      %p58 = scmp.ne.s32.totalorder %s47, %s48
      %p59 = scmp.eq.s32.totalorder %s39, 0
      %p60 = por %p58, %p59
      %p61 = scmp.ne.s32.totalorder %s47, %s48
      %p62 = scmp.eq.s32.totalorder %s40, 1
      %p63 = por %p61, %p62
      %p65 = scmp.ne.s32.totalorder %s48, %s64
      %p66 = scmp.eq.s32.totalorder %s40, 0
      %p67 = por %p65, %p66
      %s68 = ssub.s32 %s34, %s41
      %p69 = scmp.eq.s32.totalorder %s68, 0
      %s71 = sadd.s32 %s70, 1
      %s72 = scalar_select %p69, %s70, %s71
      %p75 = pneg %p69
      %p76 = scmp.eq.s32.totalorder %s34, 1
      %p77 = por %p75, %p76
      %p78 = scmp.ne.s32.totalorder %s70, %s73
      %p79 = scmp.eq.s32.totalorder %s34, 0
      %p80 = por %p78, %p79
      %p81 = scmp.ne.s32.totalorder %s70, %s73
      %p82 = scmp.eq.s32.totalorder %s39, 1
      %p83 = por %p81, %p82
      %p84 = scmp.ne.s32.totalorder %s73, %s74
      %p85 = scmp.eq.s32.totalorder %s39, 0
      %p86 = por %p84, %p85
      %p87 = scmp.ne.s32.totalorder %s73, %s74
      %p88 = scmp.eq.s32.totalorder %s40, 1
      %p89 = por %p87, %p88
      %p91 = scmp.ne.s32.totalorder %s74, %s90
      %p92 = scmp.eq.s32.totalorder %s40, 0
      %p93 = por %p91, %p92
      %s94 = ssub.s32 %s34, %s41
      %p95 = scmp.eq.s32.totalorder %s94, 0
      %s97 = sadd.s32 %s96, 1
      %s98 = scalar_select %p95, %s96, %s97
      %p101 = pneg %p95
      %p102 = scmp.eq.s32.totalorder %s34, 1
      %p103 = por %p101, %p102
      %p104 = scmp.ne.s32.totalorder %s96, %s99
      %p105 = scmp.eq.s32.totalorder %s34, 0
      %p106 = por %p104, %p105
      %p107 = scmp.ne.s32.totalorder %s96, %s99
      %p108 = scmp.eq.s32.totalorder %s39, 1
      %p109 = por %p107, %p108
      %p110 = scmp.ne.s32.totalorder %s99, %s100
      %p111 = scmp.eq.s32.totalorder %s39, 0
      %p112 = por %p110, %p111
      %p113 = scmp.ne.s32.totalorder %s99, %s100
      %p114 = scmp.eq.s32.totalorder %s40, 1
      %p115 = por %p113, %p114
      %p117 = scmp.ne.s32.totalorder %s100, %s116
      %p118 = scmp.eq.s32.totalorder %s40, 0
      %p119 = por %p117, %p118
      %s120 = ssub.s32 %s34, %s41
      %p121 = scmp.eq.s32.totalorder %s120, 0
      %s123 = sadd.s32 %s122, 1
      %s124 = scalar_select %p121, %s122, %s123
      %p127 = pneg %p121
      %p128 = scmp.eq.s32.totalorder %s34, 1
      %p129 = por %p127, %p128
      %p130 = scmp.ne.s32.totalorder %s122, %s125
      %p131 = scmp.eq.s32.totalorder %s34, 0
      %p132 = por %p130, %p131
      %p133 = scmp.ne.s32.totalorder %s122, %s125
      %p134 = scmp.eq.s32.totalorder %s39, 1
      %p135 = por %p133, %p134
      %p136 = scmp.ne.s32.totalorder %s125, %s126
      %p137 = scmp.eq.s32.totalorder %s39, 0
      %p138 = por %p136, %p137
      %p139 = scmp.ne.s32.totalorder %s125, %s126
      %p140 = scmp.eq.s32.totalorder %s40, 1
      %p141 = por %p139, %p140
      %p143 = scmp.ne.s32.totalorder %s126, %s142
      %p144 = scmp.eq.s32.totalorder %s40, 0
      %p145 = por %p143, %p144
      %s147 = sadd.s32 %s146, 1
      %p150 = scmp.eq.s32.totalorder %s34, 1
      %p151 = scmp.ne.s32.totalorder %s146, %s148
      %p152 = scmp.eq.s32.totalorder %s34, 0
      %p153 = por %p151, %p152
      %p154 = scmp.ne.s32.totalorder %s146, %s148
      %p155 = scmp.eq.s32.totalorder %s39, 1
      %p156 = por %p154, %p155
      %p157 = scmp.ne.s32.totalorder %s148, %s149
      %p158 = scmp.eq.s32.totalorder %s39, 0
      %p159 = por %p157, %p158
      %p160 = scmp.ne.s32.totalorder %s148, %s149
      %p161 = scmp.eq.s32.totalorder %s40, 1
      %p162 = por %p160, %p161
      %p164 = scmp.ne.s32.totalorder %s149, %s163
      %p165 = scmp.eq.s32.totalorder %s40, 0
      %p166 = por %p164, %p165
      %s168 = sadd.s32 %s167, 1
      %p171 = scmp.eq.s32.totalorder %s34, 1
      %p172 = scmp.ne.s32.totalorder %s167, %s169
      %p173 = scmp.eq.s32.totalorder %s34, 0
      %p174 = por %p172, %p173
      %p175 = scmp.ne.s32.totalorder %s167, %s169
      %p176 = scmp.eq.s32.totalorder %s39, 1
      %p177 = por %p175, %p176
      %p178 = scmp.ne.s32.totalorder %s169, %s170
      %p179 = scmp.eq.s32.totalorder %s39, 0
      %p180 = por %p178, %p179
      %p181 = scmp.ne.s32.totalorder %s169, %s170
      %p182 = scmp.eq.s32.totalorder %s40, 1
      %p183 = por %p181, %p182
      %p185 = scmp.ne.s32.totalorder %s170, %s184
      %p186 = scmp.eq.s32.totalorder %s40, 0
      %p187 = por %p185, %p186
      %s189 = sadd.s32 %s188, 1
      %p192 = scmp.eq.s32.totalorder %s34, 1
      %p193 = scmp.ne.s32.totalorder %s188, %s190
      %p194 = scmp.eq.s32.totalorder %s34, 0
      %p195 = por %p193, %p194
      %p196 = scmp.ne.s32.totalorder %s188, %s190
      %p197 = scmp.eq.s32.totalorder %s39, 1
      %p198 = por %p196, %p197
      %p199 = scmp.ne.s32.totalorder %s190, %s191
      %p200 = scmp.eq.s32.totalorder %s39, 0
      %p201 = por %p199, %p200
      %p202 = scmp.ne.s32.totalorder %s190, %s191
      %p203 = scmp.eq.s32.totalorder %s40, 1
      %p204 = por %p202, %p203
      %p206 = scmp.ne.s32.totalorder %s191, %s205
      %p207 = scmp.eq.s32.totalorder %s40, 0
      %p208 = por %p206, %p207
      %s210 = sadd.s32 %s209, 1
      %p213 = scmp.eq.s32.totalorder %s34, 1
      %p214 = scmp.ne.s32.totalorder %s209, %s211
      %p215 = scmp.eq.s32.totalorder %s34, 0
      %p216 = por %p214, %p215
      %p217 = scmp.ne.s32.totalorder %s209, %s211
      %p218 = scmp.eq.s32.totalorder %s39, 1
      %p219 = por %p217, %p218
      %p220 = scmp.ne.s32.totalorder %s211, %s212
      %p221 = scmp.eq.s32.totalorder %s39, 0
      %p222 = por %p220, %p221
      %p223 = scmp.ne.s32.totalorder %s211, %s212
      %p224 = scmp.eq.s32.totalorder %s40, 1
      %p225 = por %p223, %p224
      %p227 = scmp.ne.s32.totalorder %s212, %s226
      %p228 = scmp.eq.s32.totalorder %s40, 0
      %p229 = por %p227, %p228
      %s231 = sadd.s32 %s230, 1
      %p234 = scmp.eq.s32.totalorder %s34, 1
      %p235 = scmp.ne.s32.totalorder %s230, %s232
      %p236 = scmp.eq.s32.totalorder %s34, 0
      %p237 = por %p235, %p236
      %p238 = scmp.ne.s32.totalorder %s230, %s232
      %p239 = scmp.eq.s32.totalorder %s39, 1
      %p240 = por %p238, %p239
      %p241 = scmp.ne.s32.totalorder %s232, %s233
      %p242 = scmp.eq.s32.totalorder %s39, 0
      %p243 = por %p241, %p242
      %p244 = scmp.ne.s32.totalorder %s232, %s233
      %p245 = scmp.eq.s32.totalorder %s40, 1
      %p246 = por %p244, %p245
      %p248 = scmp.ne.s32.totalorder %s233, %s247
      %p249 = scmp.eq.s32.totalorder %s40, 0
      %p250 = por %p248, %p249
      %s252 = sadd.s32 %s251, 1
      %p255 = scmp.eq.s32.totalorder %s34, 1
      %p256 = scmp.ne.s32.totalorder %s251, %s253
      %p257 = scmp.eq.s32.totalorder %s34, 0
      %p258 = por %p256, %p257
      %p259 = scmp.ne.s32.totalorder %s251, %s253
      %p260 = scmp.eq.s32.totalorder %s39, 1
      %p261 = por %p259, %p260
      %p262 = scmp.ne.s32.totalorder %s253, %s254
      %p263 = scmp.eq.s32.totalorder %s39, 0
      %p264 = por %p262, %p263
      %p265 = scmp.ne.s32.totalorder %s253, %s254
      %p266 = scmp.eq.s32.totalorder %s40, 1
      %p267 = por %p265, %p266
      %p269 = scmp.ne.s32.totalorder %s254, %s268
      %p270 = scmp.eq.s32.totalorder %s40, 0
      %p271 = por %p269, %p270
      %s273 = sadd.s32 %s272, 1
      %p276 = scmp.eq.s32.totalorder %s34, 1
      %p277 = scmp.ne.s32.totalorder %s272, %s274
      %p278 = scmp.eq.s32.totalorder %s34, 0
      %p279 = por %p277, %p278
      %p280 = scmp.ne.s32.totalorder %s272, %s274
      %p281 = scmp.eq.s32.totalorder %s39, 1
      %p282 = por %p280, %p281
      %p283 = scmp.ne.s32.totalorder %s274, %s275
      %p284 = scmp.eq.s32.totalorder %s39, 0
      %p285 = por %p283, %p284
      %p286 = scmp.ne.s32.totalorder %s274, %s275
      %p287 = scmp.eq.s32.totalorder %s40, 1
      %p288 = por %p286, %p287
      %p290 = scmp.ne.s32.totalorder %s275, %s289
      %p291 = scmp.eq.s32.totalorder %s40, 0
      %p292 = por %p290, %p291
      %s294 = sadd.s32 %s293, 1
      %p297 = scmp.eq.s32.totalorder %s34, 1
      %p298 = scmp.ne.s32.totalorder %s293, %s295
      %p299 = scmp.eq.s32.totalorder %s34, 0
      %p300 = por %p298, %p299
      %p301 = scmp.ne.s32.totalorder %s293, %s295
      %p302 = scmp.eq.s32.totalorder %s39, 1
      %p303 = por %p301, %p302
      %p304 = scmp.ne.s32.totalorder %s295, %s296
      %p305 = scmp.eq.s32.totalorder %s39, 0
      %p306 = por %p304, %p305
      %p307 = scmp.ne.s32.totalorder %s295, %s296
      %p308 = scmp.eq.s32.totalorder %s40, 1
      %p309 = por %p307, %p308
      %p311 = scmp.ne.s32.totalorder %s296, %s310
      %p312 = scmp.eq.s32.totalorder %s40, 0
      %p313 = por %p311, %p312
      %s315 = sadd.s32 %s314, 1
      %p318 = scmp.eq.s32.totalorder %s34, 1
      %p319 = scmp.ne.s32.totalorder %s314, %s316
      %p320 = scmp.eq.s32.totalorder %s34, 0
      %p321 = por %p319, %p320
      %p322 = scmp.ne.s32.totalorder %s314, %s316
      %p323 = scmp.eq.s32.totalorder %s39, 1
      %p324 = por %p322, %p323
      %p325 = scmp.ne.s32.totalorder %s316, %s317
      %p326 = scmp.eq.s32.totalorder %s39, 0
      %p327 = por %p325, %p326
      %p328 = scmp.ne.s32.totalorder %s316, %s317
      %p329 = scmp.eq.s32.totalorder %s40, 1
      %p330 = por %p328, %p329
      %p332 = scmp.ne.s32.totalorder %s317, %s331
      %p333 = scmp.eq.s32.totalorder %s40, 0
      %p334 = por %p332, %p333
      %s336 = sadd.s32 %s335, 1
      %p339 = scmp.eq.s32.totalorder %s34, 1
      %p340 = scmp.ne.s32.totalorder %s335, %s337
      %p341 = scmp.eq.s32.totalorder %s34, 0
      %p342 = por %p340, %p341
      %p343 = scmp.ne.s32.totalorder %s335, %s337
      %p344 = scmp.eq.s32.totalorder %s39, 1
      %p345 = por %p343, %p344
      %p346 = scmp.ne.s32.totalorder %s337, %s338
      %p347 = scmp.eq.s32.totalorder %s39, 0
      %p348 = por %p346, %p347
      %p349 = scmp.ne.s32.totalorder %s337, %s338
      %p350 = scmp.eq.s32.totalorder %s40, 1
      %p351 = por %p349, %p350
      %p353 = scmp.ne.s32.totalorder %s338, %s352
      %p354 = scmp.eq.s32.totalorder %s40, 0
      %p355 = por %p353, %p354
      %s357 = sadd.s32 %s356, 1
      %p360 = scmp.eq.s32.totalorder %s34, 1
      %p361 = scmp.ne.s32.totalorder %s356, %s358
      %p362 = scmp.eq.s32.totalorder %s34, 0
      %p363 = por %p361, %p362
      %p364 = scmp.ne.s32.totalorder %s356, %s358
      %p365 = scmp.eq.s32.totalorder %s39, 1
      %p366 = por %p364, %p365
      %p367 = scmp.ne.s32.totalorder %s358, %s359
      %p368 = scmp.eq.s32.totalorder %s39, 0
      %p369 = por %p367, %p368
      %p370 = scmp.ne.s32.totalorder %s358, %s359
      %p371 = scmp.eq.s32.totalorder %s40, 1
      %p372 = por %p370, %p371
      %p374 = scmp.ne.s32.totalorder %s359, %s373
      %p375 = scmp.eq.s32.totalorder %s40, 0
      %p376 = por %p374, %p375
      %s378 = sadd.s32 %s377, 1
      %p381 = scmp.eq.s32.totalorder %s34, 1
      %p382 = scmp.ne.s32.totalorder %s377, %s379
      %p383 = scmp.eq.s32.totalorder %s34, 0
      %p384 = por %p382, %p383
      %p385 = scmp.ne.s32.totalorder %s377, %s379
      %p386 = scmp.eq.s32.totalorder %s39, 1
      %p387 = por %p385, %p386
      %p388 = scmp.ne.s32.totalorder %s379, %s380
      %p389 = scmp.eq.s32.totalorder %s39, 0
      %p390 = por %p388, %p389
      %p391 = scmp.ne.s32.totalorder %s379, %s380
      %p392 = scmp.eq.s32.totalorder %s40, 1
      %p393 = por %p391, %p392
      %p395 = scmp.ne.s32.totalorder %s380, %s394
      %p396 = scmp.eq.s32.totalorder %s40, 0
      %p397 = por %p395, %p396
      %s399 = sadd.s32 %s398, 1
      %p402 = scmp.eq.s32.totalorder %s34, 1
      %p403 = scmp.ne.s32.totalorder %s398, %s400
      %p404 = scmp.eq.s32.totalorder %s34, 0
      %p405 = por %p403, %p404
      %p406 = scmp.ne.s32.totalorder %s398, %s400
      %p407 = scmp.eq.s32.totalorder %s39, 1
      %p408 = por %p406, %p407
      %p409 = scmp.ne.s32.totalorder %s400, %s401
      %p410 = scmp.eq.s32.totalorder %s39, 0
      %p411 = por %p409, %p410
      %p412 = scmp.ne.s32.totalorder %s400, %s401
      %p413 = scmp.eq.s32.totalorder %s40, 1
      %p414 = por %p412, %p413
      %p416 = scmp.ne.s32.totalorder %s401, %s415
      %p417 = scmp.eq.s32.totalorder %s40, 0
      %p418 = por %p416, %p417
      %s420 = sadd.s32 %s419, 1
      %p423 = scmp.eq.s32.totalorder %s34, 1
      %p424 = scmp.ne.s32.totalorder %s419, %s421
      %p425 = scmp.eq.s32.totalorder %s34, 0
      %p426 = por %p424, %p425
      %p427 = scmp.ne.s32.totalorder %s419, %s421
      %p428 = scmp.eq.s32.totalorder %s39, 1
      %p429 = por %p427, %p428
      %p430 = scmp.ne.s32.totalorder %s421, %s422
      %p431 = scmp.eq.s32.totalorder %s39, 0
      %p432 = por %p430, %p431
      %p433 = scmp.ne.s32.totalorder %s421, %s422
      %p434 = scmp.eq.s32.totalorder %s40, 1
      %p435 = por %p433, %p434
      %p437 = scmp.ne.s32.totalorder %s422, %s436
      %p438 = scmp.eq.s32.totalorder %s40, 0
      %p439 = por %p437, %p438
      %s441 = sadd.s32 %s440, 1
      %p444 = scmp.eq.s32.totalorder %s34, 1
      %p445 = scmp.ne.s32.totalorder %s440, %s442
      %p446 = scmp.eq.s32.totalorder %s34, 0
      %p447 = por %p445, %p446
      %p448 = scmp.ne.s32.totalorder %s440, %s442
      %p449 = scmp.eq.s32.totalorder %s39, 1
      %p450 = por %p448, %p449
      %p451 = scmp.ne.s32.totalorder %s442, %s443
      %p452 = scmp.eq.s32.totalorder %s39, 0
      %p453 = por %p451, %p452
      %p454 = scmp.ne.s32.totalorder %s442, %s443
      %p455 = scmp.eq.s32.totalorder %s40, 1
      %p456 = por %p454, %p455
      %p458 = scmp.ne.s32.totalorder %s443, %s457
      %p459 = scmp.eq.s32.totalorder %s40, 0
      %p460 = por %p458, %p459
      %s462 = sadd.s32 %s461, 1
      %p465 = scmp.eq.s32.totalorder %s34, 1
      %p466 = scmp.ne.s32.totalorder %s461, %s463
      %p467 = scmp.eq.s32.totalorder %s34, 0
      %p468 = por %p466, %p467
      %p469 = scmp.ne.s32.totalorder %s461, %s463
      %p470 = scmp.eq.s32.totalorder %s39, 1
      %p471 = por %p469, %p470
      %p472 = scmp.ne.s32.totalorder %s463, %s464
      %p473 = scmp.eq.s32.totalorder %s39, 0
      %p474 = por %p472, %p473
      %p475 = scmp.ne.s32.totalorder %s463, %s464
      %p476 = scmp.eq.s32.totalorder %s40, 1
      %p477 = por %p475, %p476
      %p479 = scmp.ne.s32.totalorder %s464, %s478
      %p480 = scmp.eq.s32.totalorder %s40, 0
      %p481 = por %p479, %p480
      %s483 = sadd.s32 %s482, 1
      %p486 = scmp.eq.s32.totalorder %s34, 1
      %p487 = scmp.ne.s32.totalorder %s482, %s484
      %p488 = scmp.eq.s32.totalorder %s34, 0
      %p489 = por %p487, %p488
      %p490 = scmp.ne.s32.totalorder %s482, %s484
      %p491 = scmp.eq.s32.totalorder %s39, 1
      %p492 = por %p490, %p491
      %p493 = scmp.ne.s32.totalorder %s484, %s485
      %p494 = scmp.eq.s32.totalorder %s39, 0
      %p495 = por %p493, %p494
      %p496 = scmp.ne.s32.totalorder %s484, %s485
      %p497 = scmp.eq.s32.totalorder %s40, 1
      %p498 = por %p496, %p497
      %p500 = scmp.ne.s32.totalorder %s485, %s499
      %p501 = scmp.eq.s32.totalorder %s40, 0
      %p502 = por %p500, %p501
      %s504 = sadd.s32 %s503, 1
      %p507 = scmp.eq.s32.totalorder %s34, 1
      %p508 = scmp.ne.s32.totalorder %s503, %s505
      %p509 = scmp.eq.s32.totalorder %s34, 0
      %p510 = por %p508, %p509
      %p511 = scmp.ne.s32.totalorder %s503, %s505
      %p512 = scmp.eq.s32.totalorder %s39, 1
      %p513 = por %p511, %p512
      %p514 = scmp.ne.s32.totalorder %s505, %s506
      %p515 = scmp.eq.s32.totalorder %s39, 0
      %p516 = por %p514, %p515
      %p517 = scmp.ne.s32.totalorder %s505, %s506
      %p518 = scmp.eq.s32.totalorder %s40, 1
      %p519 = por %p517, %p518
      %p521 = scmp.ne.s32.totalorder %s506, %s520
      %p522 = scmp.eq.s32.totalorder %s40, 0
      %p523 = por %p521, %p522
      %s525 = sadd.s32 %s524, 1
      %p528 = scmp.eq.s32.totalorder %s34, 1
      %p529 = scmp.ne.s32.totalorder %s524, %s526
      %p530 = scmp.eq.s32.totalorder %s34, 0
      %p531 = por %p529, %p530
      %p532 = scmp.ne.s32.totalorder %s524, %s526
      %p533 = scmp.eq.s32.totalorder %s39, 1
      %p534 = por %p532, %p533
      %p535 = scmp.ne.s32.totalorder %s526, %s527
      %p536 = scmp.eq.s32.totalorder %s39, 0
      %p537 = por %p535, %p536
      %p538 = scmp.ne.s32.totalorder %s526, %s527
      %p539 = scmp.eq.s32.totalorder %s40, 1
      %p540 = por %p538, %p539
      %p542 = scmp.ne.s32.totalorder %s527, %s541
      %p543 = scmp.eq.s32.totalorder %s40, 0
      %p544 = por %p542, %p543
      %s546 = sadd.s32 %s545, 1
      %p549 = scmp.eq.s32.totalorder %s34, 1
      %p550 = scmp.ne.s32.totalorder %s545, %s547
      %p551 = scmp.eq.s32.totalorder %s34, 0
      %p552 = por %p550, %p551
      %p553 = scmp.ne.s32.totalorder %s545, %s547
      %p554 = scmp.eq.s32.totalorder %s39, 1
      %p555 = por %p553, %p554
      %p556 = scmp.ne.s32.totalorder %s547, %s548
      %p557 = scmp.eq.s32.totalorder %s39, 0
      %p558 = por %p556, %p557
      %p559 = scmp.ne.s32.totalorder %s547, %s548
      %p560 = scmp.eq.s32.totalorder %s40, 1
      %p561 = por %p559, %p560
      %p563 = scmp.ne.s32.totalorder %s548, %s562
      %p564 = scmp.eq.s32.totalorder %s40, 0
      %p565 = por %p563, %p564
      %s567 = sadd.s32 %s566, 1
      %p570 = scmp.eq.s32.totalorder %s34, 1
      %p571 = scmp.ne.s32.totalorder %s566, %s568
      %p572 = scmp.eq.s32.totalorder %s34, 0
      %p573 = por %p571, %p572
      %p574 = scmp.ne.s32.totalorder %s566, %s568
      %p575 = scmp.eq.s32.totalorder %s39, 1
      %p576 = por %p574, %p575
      %p577 = scmp.ne.s32.totalorder %s568, %s569
      %p578 = scmp.eq.s32.totalorder %s39, 0
      %p579 = por %p577, %p578
      %p580 = scmp.ne.s32.totalorder %s568, %s569
      %p581 = scmp.eq.s32.totalorder %s40, 1
      %p582 = por %p580, %p581
      %p584 = scmp.ne.s32.totalorder %s569, %s583
      %p585 = scmp.eq.s32.totalorder %s40, 0
      %p586 = por %p584, %p585
      %s587 = ssub.s32 %s34, %s41
      %p588 = scmp.eq.s32.totalorder %s587, 0
      %s590 = sadd.s32 %s589, 1
      %s591 = scalar_select %p588, %s589, %s590
      %p594 = pneg %p588
      %p595 = scmp.eq.s32.totalorder %s34, 1
      %p596 = por %p594, %p595
      %p597 = scmp.ne.s32.totalorder %s589, %s592
      %p598 = scmp.eq.s32.totalorder %s34, 0
      %p599 = por %p597, %p598
      %p600 = scmp.ne.s32.totalorder %s589, %s592
      %p601 = scmp.eq.s32.totalorder %s39, 1
      %p602 = por %p600, %p601
      %p603 = scmp.ne.s32.totalorder %s592, %s593
      %p604 = scmp.eq.s32.totalorder %s39, 0
      %p605 = por %p603, %p604
      %p606 = scmp.ne.s32.totalorder %s592, %s593
      %p607 = scmp.eq.s32.totalorder %s40, 1
      %p608 = por %p606, %p607
      %p610 = scmp.ne.s32.totalorder %s593, %s609
      %p611 = scmp.eq.s32.totalorder %s40, 0
      %p612 = por %p610, %p611
      %p613 = scmp.le.s32.totalorder 1, %s34
      %p614 = scmp.lt.s32.totalorder %s34, 3
      %p615 = pnand %p613, %p614
      %p616 = pneg %p615
      // Predicated region
      $region9: #{tpu_custom_call.1} parent=5 // pred_check
        _
      $region10: #{tpu_custom_call.1} parent=5 // pred_check_branch
        %618 = sbr.rel (%p615) target = $region12
      $region11: #{tpu_custom_call.1} parent=5 // pred_region
        %s619 = ssub.s32 %s34, 1
        // Predicated region
        $region13: #{tpu_custom_call.1} parent=11 // pred_check
          %p620 = pneg %p159
        $region14: #{tpu_custom_call.1} parent=11 // pred_check_branch
          %622 = sbr.rel (%p620) target = $region16
        $region15: #{tpu_custom_call.1} parent=11 // pred_region
          _
        $region16: #{tpu_custom_call.1} parent=11 // pred_fallthru
          _
        // Predicated region
        $region17: #{tpu_custom_call.1} parent=11 // pred_check
          %p623 = pneg %p180
        $region18: #{tpu_custom_call.1} parent=11 // pred_check_branch
          %625 = sbr.rel (%p623) target = $region20
        $region19: #{tpu_custom_call.1} parent=11 // pred_region
          _
        $region20: #{tpu_custom_call.1} parent=11 // pred_fallthru
          _
        // Predicated region
        $region21: #{tpu_custom_call.1} parent=11 // pred_check
          %p626 = pneg %p201
        $region22: #{tpu_custom_call.1} parent=11 // pred_check_branch
          %628 = sbr.rel (%p626) target = $region24
        $region23: #{tpu_custom_call.1} parent=11 // pred_region
          _
        $region24: #{tpu_custom_call.1} parent=11 // pred_fallthru
          _
        // Predicated region
        $region25: #{tpu_custom_call.1} parent=11 // pred_check
          %p629 = pneg %p222
        $region26: #{tpu_custom_call.1} parent=11 // pred_check_branch
          %631 = sbr.rel (%p629) target = $region28
        $region27: #{tpu_custom_call.1} parent=11 // pred_region
          _
        $region28: #{tpu_custom_call.1} parent=11 // pred_fallthru
          _
        // Predicated region
        $region29: #{tpu_custom_call.1} parent=11 // pred_check
          %p632 = pneg %p243
        $region30: #{tpu_custom_call.1} parent=11 // pred_check_branch
          %634 = sbr.rel (%p632) target = $region32
        $region31: #{tpu_custom_call.1} parent=11 // pred_region
          _
        $region32: #{tpu_custom_call.1} parent=11 // pred_fallthru
          _
        // Predicated region
        $region33: #{tpu_custom_call.1} parent=11 // pred_check
          %p635 = pneg %p264
        $region34: #{tpu_custom_call.1} parent=11 // pred_check_branch
          %637 = sbr.rel (%p635) target = $region36
        $region35: #{tpu_custom_call.1} parent=11 // pred_region
          _
        $region36: #{tpu_custom_call.1} parent=11 // pred_fallthru
          _
        // Predicated region
        $region37: #{tpu_custom_call.1} parent=11 // pred_check
          %p638 = pneg %p285
        $region38: #{tpu_custom_call.1} parent=11 // pred_check_branch
          %640 = sbr.rel (%p638) target = $region40
        $region39: #{tpu_custom_call.1} parent=11 // pred_region
          _
        $region40: #{tpu_custom_call.1} parent=11 // pred_fallthru
          _
        // Predicated region
        $region41: #{tpu_custom_call.1} parent=11 // pred_check
          %p641 = pneg %p306
        $region42: #{tpu_custom_call.1} parent=11 // pred_check_branch
          %643 = sbr.rel (%p641) target = $region44
        $region43: #{tpu_custom_call.1} parent=11 // pred_region
          _
        $region44: #{tpu_custom_call.1} parent=11 // pred_fallthru
          _
        // Predicated region
        $region45: #{tpu_custom_call.1} parent=11 // pred_check
          %p644 = pneg %p327
        $region46: #{tpu_custom_call.1} parent=11 // pred_check_branch
          %646 = sbr.rel (%p644) target = $region48
        $region47: #{tpu_custom_call.1} parent=11 // pred_region
          _
        $region48: #{tpu_custom_call.1} parent=11 // pred_fallthru
          _
        // Predicated region
        $region49: #{tpu_custom_call.1} parent=11 // pred_check
          %p647 = pneg %p348
        $region50: #{tpu_custom_call.1} parent=11 // pred_check_branch
          %649 = sbr.rel (%p647) target = $region52
        $region51: #{tpu_custom_call.1} parent=11 // pred_region
          _
        $region52: #{tpu_custom_call.1} parent=11 // pred_fallthru
          _
        // Predicated region
        $region53: #{tpu_custom_call.1} parent=11 // pred_check
          %p650 = pneg %p369
        $region54: #{tpu_custom_call.1} parent=11 // pred_check_branch
          %652 = sbr.rel (%p650) target = $region56
        $region55: #{tpu_custom_call.1} parent=11 // pred_region
          _
        $region56: #{tpu_custom_call.1} parent=11 // pred_fallthru
          _
        // Predicated region
        $region57: #{tpu_custom_call.1} parent=11 // pred_check
          %p653 = pneg %p390
        $region58: #{tpu_custom_call.1} parent=11 // pred_check_branch
          %655 = sbr.rel (%p653) target = $region60
        $region59: #{tpu_custom_call.1} parent=11 // pred_region
          _
        $region60: #{tpu_custom_call.1} parent=11 // pred_fallthru
          _
        // Predicated region
        $region61: #{tpu_custom_call.1} parent=11 // pred_check
          %p656 = pneg %p411
        $region62: #{tpu_custom_call.1} parent=11 // pred_check_branch
          %658 = sbr.rel (%p656) target = $region64
        $region63: #{tpu_custom_call.1} parent=11 // pred_region
          _
        $region64: #{tpu_custom_call.1} parent=11 // pred_fallthru
          _
        // Predicated region
        $region65: #{tpu_custom_call.1} parent=11 // pred_check
          %p659 = pneg %p432
        $region66: #{tpu_custom_call.1} parent=11 // pred_check_branch
          %661 = sbr.rel (%p659) target = $region68
        $region67: #{tpu_custom_call.1} parent=11 // pred_region
          _
        $region68: #{tpu_custom_call.1} parent=11 // pred_fallthru
          _
        // Predicated region
        $region69: #{tpu_custom_call.1} parent=11 // pred_check
          %p662 = pneg %p453
        $region70: #{tpu_custom_call.1} parent=11 // pred_check_branch
          %664 = sbr.rel (%p662) target = $region72
        $region71: #{tpu_custom_call.1} parent=11 // pred_region
          _
        $region72: #{tpu_custom_call.1} parent=11 // pred_fallthru
          _
        // Predicated region
        $region73: #{tpu_custom_call.1} parent=11 // pred_check
          %p665 = pneg %p474
        $region74: #{tpu_custom_call.1} parent=11 // pred_check_branch
          %667 = sbr.rel (%p665) target = $region76
        $region75: #{tpu_custom_call.1} parent=11 // pred_region
          _
        $region76: #{tpu_custom_call.1} parent=11 // pred_fallthru
          _
        // Predicated region
        $region77: #{tpu_custom_call.1} parent=11 // pred_check
          %p668 = pneg %p495
        $region78: #{tpu_custom_call.1} parent=11 // pred_check_branch
          %670 = sbr.rel (%p668) target = $region80
        $region79: #{tpu_custom_call.1} parent=11 // pred_region
          _
        $region80: #{tpu_custom_call.1} parent=11 // pred_fallthru
          _
        // Predicated region
        $region81: #{tpu_custom_call.1} parent=11 // pred_check
          %p671 = pneg %p516
        $region82: #{tpu_custom_call.1} parent=11 // pred_check_branch
          %673 = sbr.rel (%p671) target = $region84
        $region83: #{tpu_custom_call.1} parent=11 // pred_region
          _
        $region84: #{tpu_custom_call.1} parent=11 // pred_fallthru
          _
        // Predicated region
        $region85: #{tpu_custom_call.1} parent=11 // pred_check
          %p674 = pneg %p537
        $region86: #{tpu_custom_call.1} parent=11 // pred_check_branch
          %676 = sbr.rel (%p674) target = $region88
        $region87: #{tpu_custom_call.1} parent=11 // pred_region
          _
        $region88: #{tpu_custom_call.1} parent=11 // pred_fallthru
          _
        // Predicated region
        $region89: #{tpu_custom_call.1} parent=11 // pred_check
          %p677 = pneg %p558
        $region90: #{tpu_custom_call.1} parent=11 // pred_check_branch
          %679 = sbr.rel (%p677) target = $region92
        $region91: #{tpu_custom_call.1} parent=11 // pred_region
          _
        $region92: #{tpu_custom_call.1} parent=11 // pred_fallthru
          _
        // Predicated region
        $region93: #{tpu_custom_call.1} parent=11 // pred_check
          %p680 = pneg %p579
        $region94: #{tpu_custom_call.1} parent=11 // pred_check_branch
          %682 = sbr.rel (%p680) target = $region96
        $region95: #{tpu_custom_call.1} parent=11 // pred_region
          _
        $region96: #{tpu_custom_call.1} parent=11 // pred_fallthru
          _
      $region12: #{tpu_custom_call.1} parent=5 // pred_fallthru
        _
      %p683 = scmp.lt.s32.totalorder %s34, 2
      // Predicated region
      $region97: #{tpu_custom_call.1} parent=5 // pred_check
        %p684 = pneg %p683
      $region98: #{tpu_custom_call.1} parent=5 // pred_check_branch
        %686 = sbr.rel (%p684) target = $region100
      $region99: #{tpu_custom_call.1} parent=5 // pred_region
        // Predicated region
        $region101: #{tpu_custom_call.1} parent=99 // pred_check
          %p687 = pneg %p54
        $region102: #{tpu_custom_call.1} parent=99 // pred_check_branch
          %689 = sbr.rel (%p687) target = $region104
        $region103: #{tpu_custom_call.1} parent=99 // pred_region
          %p690 = scmp.lt.s32.totalorder %s34, 1
          %s691 = scalar_select %p690, %s34, 1
          %s692 = smul.addr %s691, 14
          %s693 = smul.addr %s692, 8
          %s694 = scalar_lea.vmem %s0, %s693
        $region104: #{tpu_custom_call.1} parent=99 // pred_fallthru
          _
        // Predicated region
        $region105: #{tpu_custom_call.1} parent=99 // pred_check
          %p695 = pneg %p80
        $region106: #{tpu_custom_call.1} parent=99 // pred_check_branch
          %697 = sbr.rel (%p695) target = $region108
        $region107: #{tpu_custom_call.1} parent=99 // pred_region
          %p698 = scmp.lt.s32.totalorder %s34, 1
          %s699 = scalar_select %p698, %s34, 1
          %s700 = smul.addr %s699, 14
          %s701 = smul.addr %s700, 4
          %s702 = scalar_lea.vmem %s1, %s701
        $region108: #{tpu_custom_call.1} parent=99 // pred_fallthru
          _
        // Predicated region
        $region109: #{tpu_custom_call.1} parent=99 // pred_check
          %p703 = pneg %p106
        $region110: #{tpu_custom_call.1} parent=99 // pred_check_branch
          %705 = sbr.rel (%p703) target = $region112
        $region111: #{tpu_custom_call.1} parent=99 // pred_region
          %p706 = scmp.lt.s32.totalorder %s34, 1
          %s707 = scalar_select %p706, %s34, 1
          %s708 = smul.addr %s707, 14
          %s709 = smul.addr %s708, 8
          %s710 = scalar_lea.vmem %s2, %s709
        $region112: #{tpu_custom_call.1} parent=99 // pred_fallthru
          _
        // Predicated region
        $region113: #{tpu_custom_call.1} parent=99 // pred_check
          %p711 = pneg %p132
        $region114: #{tpu_custom_call.1} parent=99 // pred_check_branch
          %713 = sbr.rel (%p711) target = $region116
        $region115: #{tpu_custom_call.1} parent=99 // pred_region
          %p714 = scmp.lt.s32.totalorder %s34, 1
          %s715 = scalar_select %p714, %s34, 1
          %s716 = smul.addr %s715, 2
          %s717 = smul.addr %s716, 8
          %s718 = scalar_lea.vmem %s3, %s717
        $region116: #{tpu_custom_call.1} parent=99 // pred_fallthru
          _
      $region100: #{tpu_custom_call.1} parent=5 // pred_fallthru
        _
      %p719 = scmp.le.s32.totalorder 1, %s34
      %p720 = scmp.lt.s32.totalorder %s34, 3
      %p721 = pnand %p719, %p720
      %p722 = pneg %p721
      // Predicated region
      $region117: #{tpu_custom_call.1} parent=5 // pred_check
        _
      $region118: #{tpu_custom_call.1} parent=5 // pred_check_branch
        %724 = sbr.rel (%p721) target = $region120
      $region119: #{tpu_custom_call.1} parent=5 // pred_region
        %s725 = ssub.s32 %s34, 1
        %p726 = scmp.lt.s32.totalorder %s39, 1
        %s727 = scalar_select %p726, %s39, 1
        %s728 = smul.addr %s727, 14
        %s729 = smul.addr %s728, 8
        %s730 = scalar_lea.vmem %s0, %s729
        %p731 = pneg %p60
        %p732 = pneg %p57
        %p733 = scmp.lt.s32.totalorder %s39, 1
        %s734 = scalar_select %p733, %s39, 1
        %s735 = smul.addr %s734, 14
        %s736 = smul.addr %s735, 4
        %s737 = scalar_lea.vmem %s1, %s736
        %p738 = pneg %p86
        %p739 = pneg %p83
        %p740 = scmp.lt.s32.totalorder %s39, 1
        %s741 = scalar_select %p740, %s39, 1
        %s742 = smul.addr %s741, 14
        %s743 = smul.addr %s742, 8
        %s744 = scalar_lea.vmem %s2, %s743
        %p745 = pneg %p112
        %p746 = pneg %p109
        %p747 = scmp.lt.s32.totalorder %s39, 1
        %s748 = scalar_select %p747, %s39, 1
        %s749 = smul.addr %s748, 2
        %s750 = smul.addr %s749, 8
        %s751 = scalar_lea.vmem %s3, %s750
        %p752 = pneg %p138
        %p753 = pneg %p135
        %p754 = pneg %p159
        %p755 = pneg %p156
        %p756 = pneg %p180
        %p757 = pneg %p177
        %p758 = pneg %p201
        %p759 = pneg %p198
        %p760 = pneg %p222
        %p761 = pneg %p219
        %p762 = pneg %p243
        %p763 = pneg %p240
        %p764 = pneg %p264
        %p765 = pneg %p261
        %p766 = pneg %p285
        %p767 = pneg %p282
        %p768 = pneg %p306
        %p769 = pneg %p303
        %p770 = pneg %p327
        %p771 = pneg %p324
        %p772 = pneg %p348
        %p773 = pneg %p345
        %p774 = pneg %p369
        %p775 = pneg %p366
        %p776 = pneg %p390
        %p777 = pneg %p387
        %p778 = pneg %p411
        %p779 = pneg %p408
        %p780 = pneg %p432
        %p781 = pneg %p429
        %p782 = pneg %p453
        %p783 = pneg %p450
        %p784 = pneg %p474
        %p785 = pneg %p471
        %p786 = pneg %p495
        %p787 = pneg %p492
        %p788 = pneg %p516
        %p789 = pneg %p513
        %p790 = pneg %p537
        %p791 = pneg %p534
        %p792 = pneg %p558
        %p793 = pneg %p555
        %p794 = pneg %p579
        %p795 = pneg %p576
        %p796 = pneg %p605
        %p797 = pneg %p602
        %s798 = sand.u32 %s592, 1
        %s799 = scalar_lea.sflag [#allocation3], %s798
        %s800 = sand.u32 %s592, 1
        %s801 = smul.addr %s800, 16
        %s802 = scalar_lea.vmem [#allocation2], %s801
        %p803 = scmp.lt.s32.totalorder %s39, 1
        %s804 = scalar_select %p803, %s39, 1
        %s805 = smul.addr %s804, 14
        %s806 = smul.addr %s805, 8
        %s807 = scalar_lea.vmem %s0, %s806
        %p808 = scmp.lt.s32.totalorder %s39, 1
        %s809 = scalar_select %p808, %s39, 1
        %s810 = smul.addr %s809, 14
        %s811 = smul.addr %s810, 4
        %s812 = scalar_lea.vmem %s1, %s811
        %p813 = scmp.lt.s32.totalorder %s39, 1
        %s814 = scalar_select %p813, %s39, 1
        %s815 = smul.addr %s814, 14
        %s816 = smul.addr %s815, 8
        %s817 = scalar_lea.vmem %s2, %s816
        %p818 = scmp.lt.s32.totalorder %s39, 1
        %s819 = scalar_select %p818, %s39, 1
        %s820 = smul.addr %s819, 2
        %s821 = smul.addr %s820, 8
        %s822 = scalar_lea.vmem %s3, %s821
        %v824 = vld [vmem:[%s817] sm:$0xff]
        %v825 = vld [vmem:[%s817 + $0x8] sm:$0xff]
        %v826 = vld [vmem:[%s817 + $0x10] sm:$0xff]
        %v827 = vld [vmem:[%s817 + $0x18] sm:$0xff]
        %v828 = vld [vmem:[%s817 + $0x20] sm:$0xff]
        %v829 = vld [vmem:[%s817 + $0x28] sm:$0xff]
        %v830 = vld [vmem:[%s817 + $0x30] sm:$0xff]
        %v831 = vld [vmem:[%s817 + $0x38] sm:$0xff]
        %v832 = vld [vmem:[%s817 + $0x40] sm:$0xff]
        %v833 = vld [vmem:[%s817 + $0x48] sm:$0xff]
        %v834 = vld [vmem:[%s817 + $0x50] sm:$0xff]
        %v835 = vld [vmem:[%s817 + $0x58] sm:$0xff]
        %v836 = vld [vmem:[%s817 + $0x60] sm:$0xff]
        %v837 = vld [vmem:[%s817 + $0x68] sm:$0xff]
        %v838 = vld [vmem:[%s4] sm:$0x1]
        %v839 = vld [vmem:[%s4 + $0x1] sm:$0x1]
        %v840 = vld [vmem:[%s4 + $0x2] sm:$0x1]
        %v841 = vld [vmem:[%s4 + $0x3] sm:$0x1]
        %v842 = vld [vmem:[%s4 + $0x4] sm:$0x1]
        %v843 = vld [vmem:[%s4 + $0x5] sm:$0x1]
        %v844 = vld [vmem:[%s4 + $0x6] sm:$0x1]
        %v845 = vld [vmem:[%s4 + $0x7] sm:$0x1]
        %v846 = vld [vmem:[%s4 + $0x8] sm:$0x1]
        %v847 = vld [vmem:[%s4 + $0x9] sm:$0x1]
        %v848 = vld [vmem:[%s4 + $0xa] sm:$0x1]
        %v849 = vld [vmem:[%s4 + $0xb] sm:$0x1]
        %v850 = vld [vmem:[%s4 + $0xc] sm:$0x1]
        %v851 = vld [vmem:[%s4 + $0xd] sm:$0x1]
        %v852 = vld [vmem:[%s4 + $0xe] sm:$0x1]
        %v853 = vld [vmem:[%s4 + $0xf] sm:$0x1]
        %v854 = vlaneseq
        %v855 = vshrl.u32 %v854, 7
        %v856 = vsub.s32 0, %v855
        %v857 = vrot.slane %v838, %v856
        %v858 = vlaneseq
        %v859 = vshrl.u32 %v858, 7
        %v860 = vsub.s32 0, %v859
        %v861 = vrot.slane %v839, %v860
        %v862 = vlaneseq
        %v863 = vshrl.u32 %v862, 7
        %v864 = vsub.s32 0, %v863
        %v865 = vrot.slane %v840, %v864
        %v866 = vlaneseq
        %v867 = vshrl.u32 %v866, 7
        %v868 = vsub.s32 0, %v867
        %v869 = vrot.slane %v841, %v868
        %v870 = vlaneseq
        %v871 = vshrl.u32 %v870, 7
        %v872 = vsub.s32 0, %v871
        %v873 = vrot.slane %v842, %v872
        %v874 = vlaneseq
        %v875 = vshrl.u32 %v874, 7
        %v876 = vsub.s32 0, %v875
        %v877 = vrot.slane %v843, %v876
        %v878 = vlaneseq
        %v879 = vshrl.u32 %v878, 7
        %v880 = vsub.s32 0, %v879
        %v881 = vrot.slane %v844, %v880
        %v882 = vlaneseq
        %v883 = vshrl.u32 %v882, 7
        %v884 = vsub.s32 0, %v883
        %v885 = vrot.slane %v845, %v884
        %v886 = vlaneseq
        %v887 = vshrl.u32 %v886, 7
        %v888 = vsub.s32 0, %v887
        %v889 = vrot.slane %v846, %v888
        %v890 = vlaneseq
        %v891 = vshrl.u32 %v890, 7
        %v892 = vsub.s32 0, %v891
        %v893 = vrot.slane %v847, %v892
        %v894 = vlaneseq
        %v895 = vshrl.u32 %v894, 7
        %v896 = vsub.s32 0, %v895
        %v897 = vrot.slane %v848, %v896
        %v898 = vlaneseq
        %v899 = vshrl.u32 %v898, 7
        %v900 = vsub.s32 0, %v899
        %v901 = vrot.slane %v849, %v900
        %v902 = vlaneseq
        %v903 = vshrl.u32 %v902, 7
        %v904 = vsub.s32 0, %v903
        %v905 = vrot.slane %v850, %v904
        %v906 = vlaneseq
        %v907 = vshrl.u32 %v906, 7
        %v908 = vsub.s32 0, %v907
        %v909 = vrot.slane %v851, %v908
        %v910 = vlaneseq
        %v911 = vshrl.u32 %v910, 7
        %v912 = vsub.s32 0, %v911
        %v913 = vrot.slane %v852, %v912
        %v914 = vlaneseq
        %v915 = vshrl.u32 %v914, 7
        %v916 = vsub.s32 0, %v915
        %v917 = vrot.slane %v853, %v916
        %vm918 = vcmp.eq.s32.totalorder %v824, %v857
        %vm919 = vcmp.eq.s32.totalorder %v825, %v857
        %vm920 = vcmp.eq.s32.totalorder %v826, %v857
        %vm921 = vcmp.eq.s32.totalorder %v827, %v857
        %vm922 = vcmp.eq.s32.totalorder %v828, %v857
        %vm923 = vcmp.eq.s32.totalorder %v829, %v857
        %vm924 = vcmp.eq.s32.totalorder %v830, %v857
        %vm925 = vcmp.eq.s32.totalorder %v831, %v857
        %vm926 = vcmp.eq.s32.totalorder %v832, %v857
        %vm927 = vcmp.eq.s32.totalorder %v833, %v857
        %vm928 = vcmp.eq.s32.totalorder %v834, %v857
        %vm929 = vcmp.eq.s32.totalorder %v835, %v857
        %vm930 = vcmp.eq.s32.totalorder %v836, %v857
        %vm931 = vcmp.eq.s32.totalorder %v837, %v857
        %vm932 = vcmp.eq.s32.totalorder %v824, %v861
        %vm933 = vcmp.eq.s32.totalorder %v825, %v861
        %vm934 = vcmp.eq.s32.totalorder %v826, %v861
        %vm935 = vcmp.eq.s32.totalorder %v827, %v861
        %vm936 = vcmp.eq.s32.totalorder %v828, %v861
        %vm937 = vcmp.eq.s32.totalorder %v829, %v861
        %vm938 = vcmp.eq.s32.totalorder %v830, %v861
        %vm939 = vcmp.eq.s32.totalorder %v831, %v861
        %vm940 = vcmp.eq.s32.totalorder %v832, %v861
        %vm941 = vcmp.eq.s32.totalorder %v833, %v861
        %vm942 = vcmp.eq.s32.totalorder %v834, %v861
        %vm943 = vcmp.eq.s32.totalorder %v835, %v861
        %vm944 = vcmp.eq.s32.totalorder %v836, %v861
        %vm945 = vcmp.eq.s32.totalorder %v837, %v861
        %vm946 = vcmp.eq.s32.totalorder %v824, %v865
        %vm947 = vcmp.eq.s32.totalorder %v825, %v865
        %vm948 = vcmp.eq.s32.totalorder %v826, %v865
        %vm949 = vcmp.eq.s32.totalorder %v827, %v865
        %vm950 = vcmp.eq.s32.totalorder %v828, %v865
        %vm951 = vcmp.eq.s32.totalorder %v829, %v865
        %vm952 = vcmp.eq.s32.totalorder %v830, %v865
        %vm953 = vcmp.eq.s32.totalorder %v831, %v865
        %vm954 = vcmp.eq.s32.totalorder %v832, %v865
        %vm955 = vcmp.eq.s32.totalorder %v833, %v865
        %vm956 = vcmp.eq.s32.totalorder %v834, %v865
        %vm957 = vcmp.eq.s32.totalorder %v835, %v865
        %vm958 = vcmp.eq.s32.totalorder %v836, %v865
        %vm959 = vcmp.eq.s32.totalorder %v837, %v865
        %vm960 = vcmp.eq.s32.totalorder %v824, %v869
        %vm961 = vcmp.eq.s32.totalorder %v825, %v869
        %vm962 = vcmp.eq.s32.totalorder %v826, %v869
        %vm963 = vcmp.eq.s32.totalorder %v827, %v869
        %vm964 = vcmp.eq.s32.totalorder %v828, %v869
        %vm965 = vcmp.eq.s32.totalorder %v829, %v869
        %vm966 = vcmp.eq.s32.totalorder %v830, %v869
        %vm967 = vcmp.eq.s32.totalorder %v831, %v869
        %vm968 = vcmp.eq.s32.totalorder %v832, %v869
        %vm969 = vcmp.eq.s32.totalorder %v833, %v869
        %vm970 = vcmp.eq.s32.totalorder %v834, %v869
        %vm971 = vcmp.eq.s32.totalorder %v835, %v869
        %vm972 = vcmp.eq.s32.totalorder %v836, %v869
        %vm973 = vcmp.eq.s32.totalorder %v837, %v869
        %vm974 = vcmp.eq.s32.totalorder %v824, %v873
        %vm975 = vcmp.eq.s32.totalorder %v825, %v873
        %vm976 = vcmp.eq.s32.totalorder %v826, %v873
        %vm977 = vcmp.eq.s32.totalorder %v827, %v873
        %vm978 = vcmp.eq.s32.totalorder %v828, %v873
        %vm979 = vcmp.eq.s32.totalorder %v829, %v873
        %vm980 = vcmp.eq.s32.totalorder %v830, %v873
        %vm981 = vcmp.eq.s32.totalorder %v831, %v873
        %vm982 = vcmp.eq.s32.totalorder %v832, %v873
        %vm983 = vcmp.eq.s32.totalorder %v833, %v873
        %vm984 = vcmp.eq.s32.totalorder %v834, %v873
        %vm985 = vcmp.eq.s32.totalorder %v835, %v873
        %vm986 = vcmp.eq.s32.totalorder %v836, %v873
        %vm987 = vcmp.eq.s32.totalorder %v837, %v873
        %vm988 = vcmp.eq.s32.totalorder %v824, %v877
        %vm989 = vcmp.eq.s32.totalorder %v825, %v877
        %vm990 = vcmp.eq.s32.totalorder %v826, %v877
        %vm991 = vcmp.eq.s32.totalorder %v827, %v877
        %vm992 = vcmp.eq.s32.totalorder %v828, %v877
        %vm993 = vcmp.eq.s32.totalorder %v829, %v877
        %vm994 = vcmp.eq.s32.totalorder %v830, %v877
        %vm995 = vcmp.eq.s32.totalorder %v831, %v877
        %vm996 = vcmp.eq.s32.totalorder %v832, %v877
        %vm997 = vcmp.eq.s32.totalorder %v833, %v877
        %vm998 = vcmp.eq.s32.totalorder %v834, %v877
        %vm999 = vcmp.eq.s32.totalorder %v835, %v877
        %vm1000 = vcmp.eq.s32.totalorder %v836, %v877
        %vm1001 = vcmp.eq.s32.totalorder %v837, %v877
        %vm1002 = vcmp.eq.s32.totalorder %v824, %v881
        %vm1003 = vcmp.eq.s32.totalorder %v825, %v881
        %vm1004 = vcmp.eq.s32.totalorder %v826, %v881
        %vm1005 = vcmp.eq.s32.totalorder %v827, %v881
        %vm1006 = vcmp.eq.s32.totalorder %v828, %v881
        %vm1007 = vcmp.eq.s32.totalorder %v829, %v881
        %vm1008 = vcmp.eq.s32.totalorder %v830, %v881
        %vm1009 = vcmp.eq.s32.totalorder %v831, %v881
        %vm1010 = vcmp.eq.s32.totalorder %v832, %v881
        %vm1011 = vcmp.eq.s32.totalorder %v833, %v881
        %vm1012 = vcmp.eq.s32.totalorder %v834, %v881
        %vm1013 = vcmp.eq.s32.totalorder %v835, %v881
        %vm1014 = vcmp.eq.s32.totalorder %v836, %v881
        %vm1015 = vcmp.eq.s32.totalorder %v837, %v881
        %vm1016 = vcmp.eq.s32.totalorder %v824, %v885
        %vm1017 = vcmp.eq.s32.totalorder %v825, %v885
        %vm1018 = vcmp.eq.s32.totalorder %v826, %v885
        %vm1019 = vcmp.eq.s32.totalorder %v827, %v885
        %vm1020 = vcmp.eq.s32.totalorder %v828, %v885
        %vm1021 = vcmp.eq.s32.totalorder %v829, %v885
        %vm1022 = vcmp.eq.s32.totalorder %v830, %v885
        %vm1023 = vcmp.eq.s32.totalorder %v831, %v885
        %vm1024 = vcmp.eq.s32.totalorder %v832, %v885
        %vm1025 = vcmp.eq.s32.totalorder %v833, %v885
        %vm1026 = vcmp.eq.s32.totalorder %v834, %v885
        %vm1027 = vcmp.eq.s32.totalorder %v835, %v885
        %vm1028 = vcmp.eq.s32.totalorder %v836, %v885
        %vm1029 = vcmp.eq.s32.totalorder %v837, %v885
        %vm1030 = vcmp.eq.s32.totalorder %v824, %v889
        %vm1031 = vcmp.eq.s32.totalorder %v825, %v889
        %vm1032 = vcmp.eq.s32.totalorder %v826, %v889
        %vm1033 = vcmp.eq.s32.totalorder %v827, %v889
        %vm1034 = vcmp.eq.s32.totalorder %v828, %v889
        %vm1035 = vcmp.eq.s32.totalorder %v829, %v889
        %vm1036 = vcmp.eq.s32.totalorder %v830, %v889
        %vm1037 = vcmp.eq.s32.totalorder %v831, %v889
        %vm1038 = vcmp.eq.s32.totalorder %v832, %v889
        %vm1039 = vcmp.eq.s32.totalorder %v833, %v889
        %vm1040 = vcmp.eq.s32.totalorder %v834, %v889
        %vm1041 = vcmp.eq.s32.totalorder %v835, %v889
        %vm1042 = vcmp.eq.s32.totalorder %v836, %v889
        %vm1043 = vcmp.eq.s32.totalorder %v837, %v889
        %vm1044 = vcmp.eq.s32.totalorder %v824, %v893
        %vm1045 = vcmp.eq.s32.totalorder %v825, %v893
        %vm1046 = vcmp.eq.s32.totalorder %v826, %v893
        %vm1047 = vcmp.eq.s32.totalorder %v827, %v893
        %vm1048 = vcmp.eq.s32.totalorder %v828, %v893
        %vm1049 = vcmp.eq.s32.totalorder %v829, %v893
        %vm1050 = vcmp.eq.s32.totalorder %v830, %v893
        %vm1051 = vcmp.eq.s32.totalorder %v831, %v893
        %vm1052 = vcmp.eq.s32.totalorder %v832, %v893
        %vm1053 = vcmp.eq.s32.totalorder %v833, %v893
        %vm1054 = vcmp.eq.s32.totalorder %v834, %v893
        %vm1055 = vcmp.eq.s32.totalorder %v835, %v893
        %vm1056 = vcmp.eq.s32.totalorder %v836, %v893
        %vm1057 = vcmp.eq.s32.totalorder %v837, %v893
        %vm1058 = vcmp.eq.s32.totalorder %v824, %v897
        %vm1059 = vcmp.eq.s32.totalorder %v825, %v897
        %vm1060 = vcmp.eq.s32.totalorder %v826, %v897
        %vm1061 = vcmp.eq.s32.totalorder %v827, %v897
        %vm1062 = vcmp.eq.s32.totalorder %v828, %v897
        %vm1063 = vcmp.eq.s32.totalorder %v829, %v897
        %vm1064 = vcmp.eq.s32.totalorder %v830, %v897
        %vm1065 = vcmp.eq.s32.totalorder %v831, %v897
        %vm1066 = vcmp.eq.s32.totalorder %v832, %v897
        %vm1067 = vcmp.eq.s32.totalorder %v833, %v897
        %vm1068 = vcmp.eq.s32.totalorder %v834, %v897
        %vm1069 = vcmp.eq.s32.totalorder %v835, %v897
        %vm1070 = vcmp.eq.s32.totalorder %v836, %v897
        %vm1071 = vcmp.eq.s32.totalorder %v837, %v897
        %vm1072 = vcmp.eq.s32.totalorder %v824, %v901
        %vm1073 = vcmp.eq.s32.totalorder %v825, %v901
        %vm1074 = vcmp.eq.s32.totalorder %v826, %v901
        %vm1075 = vcmp.eq.s32.totalorder %v827, %v901
        %vm1076 = vcmp.eq.s32.totalorder %v828, %v901
        %vm1077 = vcmp.eq.s32.totalorder %v829, %v901
        %vm1078 = vcmp.eq.s32.totalorder %v830, %v901
        %vm1079 = vcmp.eq.s32.totalorder %v831, %v901
        %vm1080 = vcmp.eq.s32.totalorder %v832, %v901
        %vm1081 = vcmp.eq.s32.totalorder %v833, %v901
        %vm1082 = vcmp.eq.s32.totalorder %v834, %v901
        %vm1083 = vcmp.eq.s32.totalorder %v835, %v901
        %vm1084 = vcmp.eq.s32.totalorder %v836, %v901
        %vm1085 = vcmp.eq.s32.totalorder %v837, %v901
        %vm1086 = vcmp.eq.s32.totalorder %v824, %v905
        %vm1087 = vcmp.eq.s32.totalorder %v825, %v905
        %vm1088 = vcmp.eq.s32.totalorder %v826, %v905
        %vm1089 = vcmp.eq.s32.totalorder %v827, %v905
        %vm1090 = vcmp.eq.s32.totalorder %v828, %v905
        %vm1091 = vcmp.eq.s32.totalorder %v829, %v905
        %vm1092 = vcmp.eq.s32.totalorder %v830, %v905
        %vm1093 = vcmp.eq.s32.totalorder %v831, %v905
        %vm1094 = vcmp.eq.s32.totalorder %v832, %v905
        %vm1095 = vcmp.eq.s32.totalorder %v833, %v905
        %vm1096 = vcmp.eq.s32.totalorder %v834, %v905
        %vm1097 = vcmp.eq.s32.totalorder %v835, %v905
        %vm1098 = vcmp.eq.s32.totalorder %v836, %v905
        %vm1099 = vcmp.eq.s32.totalorder %v837, %v905
        %vm1100 = vcmp.eq.s32.totalorder %v824, %v909
        %vm1101 = vcmp.eq.s32.totalorder %v825, %v909
        %vm1102 = vcmp.eq.s32.totalorder %v826, %v909
        %vm1103 = vcmp.eq.s32.totalorder %v827, %v909
        %vm1104 = vcmp.eq.s32.totalorder %v828, %v909
        %vm1105 = vcmp.eq.s32.totalorder %v829, %v909
        %vm1106 = vcmp.eq.s32.totalorder %v830, %v909
        %vm1107 = vcmp.eq.s32.totalorder %v831, %v909
        %vm1108 = vcmp.eq.s32.totalorder %v832, %v909
        %vm1109 = vcmp.eq.s32.totalorder %v833, %v909
        %vm1110 = vcmp.eq.s32.totalorder %v834, %v909
        %vm1111 = vcmp.eq.s32.totalorder %v835, %v909
        %vm1112 = vcmp.eq.s32.totalorder %v836, %v909
        %vm1113 = vcmp.eq.s32.totalorder %v837, %v909
        %vm1114 = vcmp.eq.s32.totalorder %v824, %v913
        %vm1115 = vcmp.eq.s32.totalorder %v825, %v913
        %vm1116 = vcmp.eq.s32.totalorder %v826, %v913
        %vm1117 = vcmp.eq.s32.totalorder %v827, %v913
        %vm1118 = vcmp.eq.s32.totalorder %v828, %v913
        %vm1119 = vcmp.eq.s32.totalorder %v829, %v913
        %vm1120 = vcmp.eq.s32.totalorder %v830, %v913
        %vm1121 = vcmp.eq.s32.totalorder %v831, %v913
        %vm1122 = vcmp.eq.s32.totalorder %v832, %v913
        %vm1123 = vcmp.eq.s32.totalorder %v833, %v913
        %vm1124 = vcmp.eq.s32.totalorder %v834, %v913
        %vm1125 = vcmp.eq.s32.totalorder %v835, %v913
        %vm1126 = vcmp.eq.s32.totalorder %v836, %v913
        %vm1127 = vcmp.eq.s32.totalorder %v837, %v913
        %vm1128 = vcmp.eq.s32.totalorder %v824, %v917
        %vm1129 = vcmp.eq.s32.totalorder %v825, %v917
        %vm1130 = vcmp.eq.s32.totalorder %v826, %v917
        %vm1131 = vcmp.eq.s32.totalorder %v827, %v917
        %vm1132 = vcmp.eq.s32.totalorder %v828, %v917
        %vm1133 = vcmp.eq.s32.totalorder %v829, %v917
        %vm1134 = vcmp.eq.s32.totalorder %v830, %v917
        %vm1135 = vcmp.eq.s32.totalorder %v831, %v917
        %vm1136 = vcmp.eq.s32.totalorder %v832, %v917
        %vm1137 = vcmp.eq.s32.totalorder %v833, %v917
        %vm1138 = vcmp.eq.s32.totalorder %v834, %v917
        %vm1139 = vcmp.eq.s32.totalorder %v835, %v917
        %vm1140 = vcmp.eq.s32.totalorder %v836, %v917
        %vm1141 = vcmp.eq.s32.totalorder %v837, %v917
        %v1142 = vld [vmem:[%s812] sm:$0xf]
        %v1143 = vld [vmem:[%s812 + $0x4] sm:$0xf]
        %v1144 = vld [vmem:[%s812 + $0x8] sm:$0xf]
        %v1145 = vld [vmem:[%s812 + $0xc] sm:$0xf]
        %v1146 = vld [vmem:[%s812 + $0x10] sm:$0xf]
        %v1147 = vld [vmem:[%s812 + $0x14] sm:$0xf]
        %v1148 = vld [vmem:[%s812 + $0x18] sm:$0xf]
        %v1149 = vld [vmem:[%s812 + $0x1c] sm:$0xf]
        %v1150 = vld [vmem:[%s812 + $0x20] sm:$0xf]
        %v1151 = vld [vmem:[%s812 + $0x24] sm:$0xf]
        %v1152 = vld [vmem:[%s812 + $0x28] sm:$0xf]
        %v1153 = vld [vmem:[%s812 + $0x2c] sm:$0xf]
        %v1154 = vld [vmem:[%s812 + $0x30] sm:$0xf]
        %v1155 = vld [vmem:[%s812 + $0x34] sm:$0xf]
        %v1156 = vld [vmem:[%s807] sm:$0xff]
        %v1157 = vld [vmem:[%s807 + $0x8] sm:$0xff]
        %v1158 = vld [vmem:[%s807 + $0x10] sm:$0xff]
        %v1159 = vld [vmem:[%s807 + $0x18] sm:$0xff]
        %v1160 = vld [vmem:[%s807 + $0x20] sm:$0xff]
        %v1161 = vld [vmem:[%s807 + $0x28] sm:$0xff]
        %v1162 = vld [vmem:[%s807 + $0x30] sm:$0xff]
        %v1163 = vld [vmem:[%s807 + $0x38] sm:$0xff]
        %v1164 = vld [vmem:[%s807 + $0x40] sm:$0xff]
        %v1165 = vld [vmem:[%s807 + $0x48] sm:$0xff]
        %v1166 = vld [vmem:[%s807 + $0x50] sm:$0xff]
        %v1167 = vld [vmem:[%s807 + $0x58] sm:$0xff]
        %v1168 = vld [vmem:[%s807 + $0x60] sm:$0xff]
        %v1169 = vld [vmem:[%s807 + $0x68] sm:$0xff]
        %v1170 = vpack.c.bf16 %v1157, %v1156
        %v1171 = vpack.c.bf16 %v1159, %v1158
        %v1172 = vpack.c.bf16 %v1161, %v1160
        %v1173 = vpack.c.bf16 %v1163, %v1162
        %v1174 = vpack.c.bf16 %v1165, %v1164
        %v1175 = vpack.c.bf16 %v1167, %v1166
        %v1176 = vpack.c.bf16 %v1169, %v1168
        %v1177 = vld [vmem:[%s6] sm:$0xf]
        %v1178 = vld [vmem:[%s7] sm:$0x1]
        %v1180 = vlaneseq
        %v1181 = vshrl.u32 %v1180, 7
        %v1182 = vsub.s32 0, %v1181
        %v1183 = vrot.slane %v1178, %v1182
        %vm1185 = vcmask 64512
        %v1187 = vsel %vm1185, %v1170, 0
        %v1190 = vsel %vm1185, %v1171, 0
        %v1193 = vsel %vm1185, %v1172, 0
        %v1196 = vsel %vm1185, %v1173, 0
        %v1199 = vsel %vm1185, %v1174, 0
        %v1202 = vsel %vm1185, %v1175, 0
        %v1205 = vsel %vm1185, %v1176, 0
        %vm1207 = vcmask 1043456
        %v1209 = vsel %vm1207, %v1177, 0
        %1211 = vmatprep.subr.bf16.mxu0 0
        %1212 = vmatpush1.bf16.msra.mxu0 %v1209
        %1213 = vmatprep.subr.bf16.mxu0 0
        %1214 = vmatpush1.bf16.msra.mxu0 0
        %1215 = vmatprep.subr.bf16.mxu0 0
        %1216 = vmatpush1.bf16.msra.mxu0 0
        %1217 = vmatprep.subr.bf16.mxu0 0
        %1218 = vmatpush1.bf16.msra.mxu0 0
        %1219 = vmatprep.subr.bf16.mxu0 0
        %1220 = vmatpush1.bf16.msra.mxu0 0
        %1221 = vmatprep.subr.bf16.mxu0 0
        %1222 = vmatpush1.bf16.msra.mxu0 0
        %1223 = vmatprep.subr.bf16.mxu0 0
        %1224 = vmatpush1.bf16.msra.mxu0 0
        %1225 = vmatprep.subr.bf16.mxu0 0
        %1226 = vmatpush1.bf16.msra.mxu0 0
        %1227 = vmatprep.subr.bf16.mxu0 0
        %1228 = vmatpush1.bf16.msra.mxu0 0
        %1229 = vmatprep.subr.bf16.mxu0 0
        %1230 = vmatpush1.bf16.msra.mxu0 0
        %1231 = vmatprep.subr.bf16.mxu0 0
        %1232 = vmatpush1.bf16.msra.mxu0 0
        %1233 = vmatprep.subr.bf16.mxu0 0
        %1234 = vmatpush1.bf16.msra.mxu0 0
        %1235 = vmatprep.subr.bf16.mxu0 0
        %1236 = vmatpush1.bf16.msra.mxu0 0
        %1237 = vmatprep.subr.bf16.mxu0 0
        %1238 = vmatpush1.bf16.msra.mxu0 0
        %1239 = vmatprep.subr.bf16.mxu0 0
        %1240 = vmatpush1.bf16.msra.mxu0 0
        %1241 = vmatprep.subr.bf16.mxu0 0
        %1242 = vmatpush1.bf16.msra.mxu0 0
        %1243 = vmatprep.mubr.bf16.mxu0 0
        %1244 = vmatmul.mubr.bf16.gmra.mrb[0].mxu0 %v1187
        %v1245 = vpop.f32.mrb[0].mxu0
        %v1246 = vadd.f32 %v1183, %v1245
        %v1247 = vpop.f32.mrb[0].mxu0
        %v1248 = vpop.f32.mrb[0].mxu0
        %v1249 = vadd.f32 %v1183, %v1248
        %v1250 = vpop.f32.mrb[0].mxu0
        %1251 = vmatprep.mubr.bf16.mxu0 0
        %1252 = vmatmul.mubr.bf16.gmra.mrb[0].mxu0 %v1190
        %v1253 = vpop.f32.mrb[0].mxu0
        %v1254 = vadd.f32 %v1183, %v1253
        %v1255 = vpop.f32.mrb[0].mxu0
        %v1256 = vpop.f32.mrb[0].mxu0
        %v1257 = vadd.f32 %v1183, %v1256
        %v1258 = vpop.f32.mrb[0].mxu0
        %1259 = vmatprep.mubr.bf16.mxu0 0
        %1260 = vmatmul.mubr.bf16.gmra.mrb[0].mxu0 %v1193
        %v1261 = vpop.f32.mrb[0].mxu0
        %v1262 = vadd.f32 %v1183, %v1261
        %v1263 = vpop.f32.mrb[0].mxu0
        %v1264 = vpop.f32.mrb[0].mxu0
        %v1265 = vadd.f32 %v1183, %v1264
        %v1266 = vpop.f32.mrb[0].mxu0
        %1267 = vmatprep.mubr.bf16.mxu0 0
        %1268 = vmatmul.mubr.bf16.gmra.mrb[0].mxu0 %v1196
        %v1269 = vpop.f32.mrb[0].mxu0
        %v1270 = vadd.f32 %v1183, %v1269
        %v1271 = vpop.f32.mrb[0].mxu0
        %v1272 = vpop.f32.mrb[0].mxu0
        %v1273 = vadd.f32 %v1183, %v1272
        %v1274 = vpop.f32.mrb[0].mxu0
        %1275 = vmatprep.mubr.bf16.mxu0 0
        %1276 = vmatmul.mubr.bf16.gmra.mrb[0].mxu0 %v1199
        %v1277 = vpop.f32.mrb[0].mxu0
        %v1278 = vadd.f32 %v1183, %v1277
        %v1279 = vpop.f32.mrb[0].mxu0
        %v1280 = vpop.f32.mrb[0].mxu0
        %v1281 = vadd.f32 %v1183, %v1280
        %v1282 = vpop.f32.mrb[0].mxu0
        %1283 = vmatprep.mubr.bf16.mxu0 0
        %1284 = vmatmul.mubr.bf16.gmra.mrb[0].mxu0 %v1202
        %v1285 = vpop.f32.mrb[0].mxu0
        %v1286 = vadd.f32 %v1183, %v1285
        %v1287 = vpop.f32.mrb[0].mxu0
        %v1288 = vpop.f32.mrb[0].mxu0
        %v1289 = vadd.f32 %v1183, %v1288
        %v1290 = vpop.f32.mrb[0].mxu0
        %1291 = vmatprep.mubr.bf16.mxu0 0
        %1292 = vmatmul.mubr.bf16.gmra.mrb[0].mxu0 %v1205
        %v1293 = vpop.f32.mrb[0].mxu0
        %v1294 = vadd.f32 %v1183, %v1293
        %v1295 = vpop.f32.mrb[0].mxu0
        %v1296 = vpop.f32.mrb[0].mxu0
        %v1297 = vadd.f32 %v1183, %v1296
        %v1298 = vpop.f32.mrb[0].mxu0
        %1299 = vdwg.mxu0
        %v1300 = vld [vmem:[%s13] sm:$0x1]
        %v1301 = vld [vmem:[%s14] sm:$0x1]
        %vm1302 = vcmask 523264
        %v1303 = vsel %vm1302, %v1246, 0.0
        %1304 = vadd.xlane.f32.xlu0 %v1303
        %v1305 = vpop.xlane.xlu0 %1304
        %v1306 = vsel %vm1302, %v1249, 0.0
        %1307 = vadd.xlane.f32.xlu0 %v1306
        %v1308 = vpop.xlane.xlu0 %1307
        %v1309 = vsel %vm1302, %v1254, 0.0
        %1310 = vadd.xlane.f32.xlu0 %v1309
        %v1311 = vpop.xlane.xlu0 %1310
        %v1312 = vsel %vm1302, %v1257, 0.0
        %1313 = vadd.xlane.f32.xlu0 %v1312
        %v1314 = vpop.xlane.xlu0 %1313
        %v1315 = vsel %vm1302, %v1262, 0.0
        %1316 = vadd.xlane.f32.xlu0 %v1315
        %v1317 = vpop.xlane.xlu0 %1316
        %v1318 = vsel %vm1302, %v1265, 0.0
        %1319 = vadd.xlane.f32.xlu0 %v1318
        %v1320 = vpop.xlane.xlu0 %1319
        %v1321 = vsel %vm1302, %v1270, 0.0
        %1322 = vadd.xlane.f32.xlu0 %v1321
        %v1323 = vpop.xlane.xlu0 %1322
        %v1324 = vsel %vm1302, %v1273, 0.0
        %1325 = vadd.xlane.f32.xlu0 %v1324
        %v1326 = vpop.xlane.xlu0 %1325
        %v1327 = vsel %vm1302, %v1278, 0.0
        %1328 = vadd.xlane.f32.xlu0 %v1327
        %v1329 = vpop.xlane.xlu0 %1328
        %v1330 = vsel %vm1302, %v1281, 0.0
        %1331 = vadd.xlane.f32.xlu0 %v1330
        %v1332 = vpop.xlane.xlu0 %1331
        %v1333 = vsel %vm1302, %v1286, 0.0
        %1334 = vadd.xlane.f32.xlu0 %v1333
        %v1335 = vpop.xlane.xlu0 %1334
        %v1336 = vsel %vm1302, %v1289, 0.0
        %1337 = vadd.xlane.f32.xlu0 %v1336
        %v1338 = vpop.xlane.xlu0 %1337
        %v1339 = vsel %vm1302, %v1294, 0.0
        %1340 = vadd.xlane.f32.xlu0 %v1339
        %v1341 = vpop.xlane.xlu0 %1340
        %v1342 = vsel %vm1302, %v1297, 0.0
        %1343 = vadd.xlane.f32.xlu0 %v1342
        %v1344 = vpop.xlane.xlu0 %1343
        %v1345 = vrcp.pop 64.0
        %v1346 = vmul.f32 %v1305, %v1345
        %v1347 = vmul.f32 %v1308, %v1345
        %v1348 = vmul.f32 %v1311, %v1345
        %v1349 = vmul.f32 %v1314, %v1345
        %v1350 = vmul.f32 %v1317, %v1345
        %v1351 = vmul.f32 %v1320, %v1345
        %v1352 = vmul.f32 %v1323, %v1345
        %v1353 = vmul.f32 %v1326, %v1345
        %v1354 = vmul.f32 %v1329, %v1345
        %v1355 = vmul.f32 %v1332, %v1345
        %v1356 = vmul.f32 %v1335, %v1345
        %v1357 = vmul.f32 %v1338, %v1345
        %v1358 = vmul.f32 %v1341, %v1345
        %v1359 = vmul.f32 %v1344, %v1345
        %v1360 = vsub.f32 %v1246, %v1346
        %v1361 = vsub.f32 %v1249, %v1347
        %v1362 = vsub.f32 %v1254, %v1348
        %v1363 = vsub.f32 %v1257, %v1349
        %v1364 = vsub.f32 %v1262, %v1350
        %v1365 = vsub.f32 %v1265, %v1351
        %v1366 = vsub.f32 %v1270, %v1352
        %v1367 = vsub.f32 %v1273, %v1353
        %v1368 = vsub.f32 %v1278, %v1354
        %v1369 = vsub.f32 %v1281, %v1355
        %v1370 = vsub.f32 %v1286, %v1356
        %v1371 = vsub.f32 %v1289, %v1357
        %v1372 = vsub.f32 %v1294, %v1358
        %v1373 = vsub.f32 %v1297, %v1359
        %v1374 = vmul.f32 %v1360, %v1360
        %v1375 = vmul.f32 %v1361, %v1361
        %v1376 = vmul.f32 %v1362, %v1362
        %v1377 = vmul.f32 %v1363, %v1363
        %v1378 = vmul.f32 %v1364, %v1364
        %v1379 = vmul.f32 %v1365, %v1365
        %v1380 = vmul.f32 %v1366, %v1366
        %v1381 = vmul.f32 %v1367, %v1367
        %v1382 = vmul.f32 %v1368, %v1368
        %v1383 = vmul.f32 %v1369, %v1369
        %v1384 = vmul.f32 %v1370, %v1370
        %v1385 = vmul.f32 %v1371, %v1371
        %v1386 = vmul.f32 %v1372, %v1372
        %v1387 = vmul.f32 %v1373, %v1373
        %v1388 = vsel %vm1302, %v1374, 0.0
        %1389 = vadd.xlane.f32.xlu0 %v1388
        %v1390 = vpop.xlane.xlu0 %1389
        %v1391 = vsel %vm1302, %v1375, 0.0
        %1392 = vadd.xlane.f32.xlu0 %v1391
        %v1393 = vpop.xlane.xlu0 %1392
        %v1394 = vsel %vm1302, %v1376, 0.0
        %1395 = vadd.xlane.f32.xlu0 %v1394
        %v1396 = vpop.xlane.xlu0 %1395
        %v1397 = vsel %vm1302, %v1377, 0.0
        %1398 = vadd.xlane.f32.xlu0 %v1397
        %v1399 = vpop.xlane.xlu0 %1398
        %v1400 = vsel %vm1302, %v1378, 0.0
        %1401 = vadd.xlane.f32.xlu0 %v1400
        %v1402 = vpop.xlane.xlu0 %1401
        %v1403 = vsel %vm1302, %v1379, 0.0
        %1404 = vadd.xlane.f32.xlu0 %v1403
        %v1405 = vpop.xlane.xlu0 %1404
        %v1406 = vsel %vm1302, %v1380, 0.0
        %1407 = vadd.xlane.f32.xlu0 %v1406
        %v1408 = vpop.xlane.xlu0 %1407
        %v1409 = vsel %vm1302, %v1381, 0.0
        %1410 = vadd.xlane.f32.xlu0 %v1409
        %v1411 = vpop.xlane.xlu0 %1410
        %v1412 = vsel %vm1302, %v1382, 0.0
        %1413 = vadd.xlane.f32.xlu0 %v1412
        %v1414 = vpop.xlane.xlu0 %1413
        %v1415 = vsel %vm1302, %v1383, 0.0
        %1416 = vadd.xlane.f32.xlu0 %v1415
        %v1417 = vpop.xlane.xlu0 %1416
        %v1418 = vsel %vm1302, %v1384, 0.0
        %1419 = vadd.xlane.f32.xlu0 %v1418
        %v1420 = vpop.xlane.xlu0 %1419
        %v1421 = vsel %vm1302, %v1385, 0.0
        %1422 = vadd.xlane.f32.xlu0 %v1421
        %v1423 = vpop.xlane.xlu0 %1422
        %v1424 = vsel %vm1302, %v1386, 0.0
        %1425 = vadd.xlane.f32.xlu0 %v1424
        %v1426 = vpop.xlane.xlu0 %1425
        %v1427 = vsel %vm1302, %v1387, 0.0
        %1428 = vadd.xlane.f32.xlu0 %v1427
        %v1429 = vpop.xlane.xlu0 %1428
        %v1430 = vmul.f32 %v1390, %v1345
        %v1431 = vmul.f32 %v1393, %v1345
        %v1432 = vmul.f32 %v1396, %v1345
        %v1433 = vmul.f32 %v1399, %v1345
        %v1434 = vmul.f32 %v1402, %v1345
        %v1435 = vmul.f32 %v1405, %v1345
        %v1436 = vmul.f32 %v1408, %v1345
        %v1437 = vmul.f32 %v1411, %v1345
        %v1438 = vmul.f32 %v1414, %v1345
        %v1439 = vmul.f32 %v1417, %v1345
        %v1440 = vmul.f32 %v1420, %v1345
        %v1441 = vmul.f32 %v1423, %v1345
        %v1442 = vmul.f32 %v1426, %v1345
        %v1443 = vmul.f32 %v1429, %v1345
        %v1444 = vadd.f32 %v1430, 1e-05
        %v1445 = vadd.f32 %v1431, 1e-05
        %v1446 = vadd.f32 %v1432, 1e-05
        %v1447 = vadd.f32 %v1433, 1e-05
        %v1448 = vadd.f32 %v1434, 1e-05
        %v1449 = vadd.f32 %v1435, 1e-05
        %v1450 = vadd.f32 %v1436, 1e-05
        %v1451 = vadd.f32 %v1437, 1e-05
        %v1452 = vadd.f32 %v1438, 1e-05
        %v1453 = vadd.f32 %v1439, 1e-05
        %v1454 = vadd.f32 %v1440, 1e-05
        %v1455 = vadd.f32 %v1441, 1e-05
        %v1456 = vadd.f32 %v1442, 1e-05
        %v1457 = vadd.f32 %v1443, 1e-05
        %v1458 = vrsqrt.pop %v1444
        %v1459 = vrsqrt.pop %v1445
        %v1460 = vrsqrt.pop %v1446
        %v1461 = vrsqrt.pop %v1447
        %v1462 = vrsqrt.pop %v1448
        %v1463 = vrsqrt.pop %v1449
        %v1464 = vrsqrt.pop %v1450
        %v1465 = vrsqrt.pop %v1451
        %v1466 = vrsqrt.pop %v1452
        %v1467 = vrsqrt.pop %v1453
        %v1468 = vrsqrt.pop %v1454
        %v1469 = vrsqrt.pop %v1455
        %v1470 = vrsqrt.pop %v1456
        %v1471 = vrsqrt.pop %v1457
        %v1472 = vmul.f32 %v1360, %v1458
        %v1473 = vmul.f32 %v1361, %v1459
        %v1474 = vmul.f32 %v1362, %v1460
        %v1475 = vmul.f32 %v1363, %v1461
        %v1476 = vmul.f32 %v1364, %v1462
        %v1477 = vmul.f32 %v1365, %v1463
        %v1478 = vmul.f32 %v1366, %v1464
        %v1479 = vmul.f32 %v1367, %v1465
        %v1480 = vmul.f32 %v1368, %v1466
        %v1481 = vmul.f32 %v1369, %v1467
        %v1482 = vmul.f32 %v1370, %v1468
        %v1483 = vmul.f32 %v1371, %v1469
        %v1484 = vmul.f32 %v1372, %v1470
        %v1485 = vmul.f32 %v1373, %v1471
        %v1486 = vlaneseq
        %v1487 = vshrl.u32 %v1486, 7
        %v1488 = vsub.s32 0, %v1487
        %v1489 = vrot.slane %v1300, %v1488
        %v1490 = vmul.f32 %v1472, %v1489
        %v1491 = vmul.f32 %v1473, %v1489
        %v1492 = vmul.f32 %v1474, %v1489
        %v1493 = vmul.f32 %v1475, %v1489
        %v1494 = vmul.f32 %v1476, %v1489
        %v1495 = vmul.f32 %v1477, %v1489
        %v1496 = vmul.f32 %v1478, %v1489
        %v1497 = vmul.f32 %v1479, %v1489
        %v1498 = vmul.f32 %v1480, %v1489
        %v1499 = vmul.f32 %v1481, %v1489
        %v1500 = vmul.f32 %v1482, %v1489
        %v1501 = vmul.f32 %v1483, %v1489
        %v1502 = vmul.f32 %v1484, %v1489
        %v1503 = vmul.f32 %v1485, %v1489
        %v1504 = vlaneseq
        %v1505 = vshrl.u32 %v1504, 7
        %v1506 = vsub.s32 0, %v1505
        %v1507 = vrot.slane %v1301, %v1506
        %v1508 = vadd.f32 %v1490, %v1507
        %v1509 = vadd.f32 %v1491, %v1507
        %v1510 = vadd.f32 %v1492, %v1507
        %v1511 = vadd.f32 %v1493, %v1507
        %v1512 = vadd.f32 %v1494, %v1507
        %v1513 = vadd.f32 %v1495, %v1507
        %v1514 = vadd.f32 %v1496, %v1507
        %v1515 = vadd.f32 %v1497, %v1507
        %v1516 = vadd.f32 %v1498, %v1507
        %v1517 = vadd.f32 %v1499, %v1507
        %v1518 = vadd.f32 %v1500, %v1507
        %v1519 = vadd.f32 %v1501, %v1507
        %v1520 = vadd.f32 %v1502, %v1507
        %v1521 = vadd.f32 %v1503, %v1507
        %v1522 = vmax.f32 %v1508, 0.0
        %v1523 = vmax.f32 %v1509, 0.0
        %v1524 = vmax.f32 %v1510, 0.0
        %v1525 = vmax.f32 %v1511, 0.0
        %v1526 = vmax.f32 %v1512, 0.0
        %v1527 = vmax.f32 %v1513, 0.0
        %v1528 = vmax.f32 %v1514, 0.0
        %v1529 = vmax.f32 %v1515, 0.0
        %v1530 = vmax.f32 %v1516, 0.0
        %v1531 = vmax.f32 %v1517, 0.0
        %v1532 = vmax.f32 %v1518, 0.0
        %v1533 = vmax.f32 %v1519, 0.0
        %v1534 = vmax.f32 %v1520, 0.0
        %v1535 = vmax.f32 %v1521, 0.0
        %v1536 = vpack.c.bf16 %v1523, %v1522
        %v1537 = vpack.c.bf16 %v1525, %v1524
        %v1538 = vpack.c.bf16 %v1527, %v1526
        %v1539 = vpack.c.bf16 %v1529, %v1528
        %v1540 = vpack.c.bf16 %v1531, %v1530
        %v1541 = vpack.c.bf16 %v1533, %v1532
        %v1542 = vpack.c.bf16 %v1535, %v1534
        %v1543 = vld [vmem:[%s11] sm:$0xf]
        %v1544 = vld [vmem:[%s11 + $0x4] sm:$0xf]
        %v1545 = vld [vmem:[%s11 + $0x8] sm:$0xf]
        %v1546 = vld [vmem:[%s11 + $0xc] sm:$0xf]
        %v1547 = vld [vmem:[%s11 + $0x10] sm:$0xf]
        %v1548 = vld [vmem:[%s11 + $0x14] sm:$0xf]
        %v1549 = vld [vmem:[%s11 + $0x18] sm:$0xf]
        %v1550 = vld [vmem:[%s11 + $0x1c] sm:$0xf]
        %v1551 = vld [vmem:[%s12] sm:$0x1]
        %v1552 = vlaneseq
        %v1553 = vshrl.u32 %v1552, 7
        %v1554 = vsub.s32 0, %v1553
        %v1555 = vrot.slane %v1551, %v1554
        %v1564 = vunpack.c.l.b16 %v1543
        %v1565 = vunpack.c.l.b16 %v1544
        %v1566 = vunpack.c.l.b16 %v1545
        %v1567 = vunpack.c.l.b16 %v1546
        %v1568 = vunpack.c.l.b16 %v1547
        %v1569 = vunpack.c.l.b16 %v1548
        %v1570 = vunpack.c.l.b16 %v1549
        %v1571 = vunpack.c.l.b16 %v1550
        %v1572 = vpack.c.b16 %v1565, %v1564
        %v1573 = vpack.c.b16 %v1567, %v1566
        %v1574 = vpack.c.b16 %v1569, %v1568
        %v1575 = vpack.c.b16 %v1571, %v1570
        %v1581 = vsel %vm1302, %v1536, 0
        %v1584 = vsel %vm1302, %v1537, 0
        %v1587 = vsel %vm1302, %v1538, 0
        %v1590 = vsel %vm1302, %v1539, 0
        %v1593 = vsel %vm1302, %v1540, 0
        %v1596 = vsel %vm1302, %v1541, 0
        %v1599 = vsel %vm1302, %v1542, 0
        %1601 = vmatprep.subr.bf16.mxu0 0
        %1602 = vmatpush1.bf16.msra.mxu0 %v1572
        %1603 = vmatprep.subr.bf16.mxu0 0
        %1604 = vmatpush1.bf16.msra.mxu0 %v1573
        %1605 = vmatprep.subr.bf16.mxu0 0
        %1606 = vmatpush1.bf16.msra.mxu0 %v1574
        %1607 = vmatprep.subr.bf16.mxu0 0
        %1608 = vmatpush1.bf16.msra.mxu0 %v1575
        %1609 = vmatprep.subr.bf16.mxu0 0
        %1610 = vmatpush1.bf16.msra.mxu0 0
        %1611 = vmatprep.subr.bf16.mxu0 0
        %1612 = vmatpush1.bf16.msra.mxu0 0
        %1613 = vmatprep.subr.bf16.mxu0 0
        %1614 = vmatpush1.bf16.msra.mxu0 0
        %1615 = vmatprep.subr.bf16.mxu0 0
        %1616 = vmatpush1.bf16.msra.mxu0 0
        %1617 = vmatprep.subr.bf16.mxu0 0
        %1618 = vmatpush1.bf16.msra.mxu0 0
        %1619 = vmatprep.subr.bf16.mxu0 0
        %1620 = vmatpush1.bf16.msra.mxu0 0
        %1621 = vmatprep.subr.bf16.mxu0 0
        %1622 = vmatpush1.bf16.msra.mxu0 0
        %1623 = vmatprep.subr.bf16.mxu0 0
        %1624 = vmatpush1.bf16.msra.mxu0 0
        %1625 = vmatprep.subr.bf16.mxu0 0
        %1626 = vmatpush1.bf16.msra.mxu0 0
        %1627 = vmatprep.subr.bf16.mxu0 0
        %1628 = vmatpush1.bf16.msra.mxu0 0
        %1629 = vmatprep.subr.bf16.mxu0 0
        %1630 = vmatpush1.bf16.msra.mxu0 0
        %1631 = vmatprep.subr.bf16.mxu0 0
        %1632 = vmatpush1.bf16.msra.mxu0 0
        %1633 = vmatprep.mubr.bf16.mxu0 0
        %1634 = vmatmul.mubr.bf16.gmra.mrb[0].mxu0 %v1581
        %v1635 = vpop.f32.mrb[0].mxu0
        %v1636 = vadd.f32 %v1555, %v1635
        %v1637 = vpop.f32.mrb[0].mxu0
        %v1638 = vpop.f32.mrb[0].mxu0
        %v1639 = vadd.f32 %v1555, %v1638
        %v1640 = vpop.f32.mrb[0].mxu0
        %1641 = vmatprep.mubr.bf16.mxu0 0
        %1642 = vmatmul.mubr.bf16.gmra.mrb[0].mxu0 %v1584
        %v1643 = vpop.f32.mrb[0].mxu0
        %v1644 = vadd.f32 %v1555, %v1643
        %v1645 = vpop.f32.mrb[0].mxu0
        %v1646 = vpop.f32.mrb[0].mxu0
        %v1647 = vadd.f32 %v1555, %v1646
        %v1648 = vpop.f32.mrb[0].mxu0
        %1649 = vmatprep.mubr.bf16.mxu0 0
        %1650 = vmatmul.mubr.bf16.gmra.mrb[0].mxu0 %v1587
        %v1651 = vpop.f32.mrb[0].mxu0
        %v1652 = vadd.f32 %v1555, %v1651
        %v1653 = vpop.f32.mrb[0].mxu0
        %v1654 = vpop.f32.mrb[0].mxu0
        %v1655 = vadd.f32 %v1555, %v1654
        %v1656 = vpop.f32.mrb[0].mxu0
        %1657 = vmatprep.mubr.bf16.mxu0 0
        %1658 = vmatmul.mubr.bf16.gmra.mrb[0].mxu0 %v1590
        %v1659 = vpop.f32.mrb[0].mxu0
        %v1660 = vadd.f32 %v1555, %v1659
        %v1661 = vpop.f32.mrb[0].mxu0
        %v1662 = vpop.f32.mrb[0].mxu0
        %v1663 = vadd.f32 %v1555, %v1662
        %v1664 = vpop.f32.mrb[0].mxu0
        %1665 = vmatprep.mubr.bf16.mxu0 0
        %1666 = vmatmul.mubr.bf16.gmra.mrb[0].mxu0 %v1593
        %v1667 = vpop.f32.mrb[0].mxu0
        %v1668 = vadd.f32 %v1555, %v1667
        %v1669 = vpop.f32.mrb[0].mxu0
        %v1670 = vpop.f32.mrb[0].mxu0
        %v1671 = vadd.f32 %v1555, %v1670
        %v1672 = vpop.f32.mrb[0].mxu0
        %1673 = vmatprep.mubr.bf16.mxu0 0
        %1674 = vmatmul.mubr.bf16.gmra.mrb[0].mxu0 %v1596
        %v1675 = vpop.f32.mrb[0].mxu0
        %v1676 = vadd.f32 %v1555, %v1675
        %v1677 = vpop.f32.mrb[0].mxu0
        %v1678 = vpop.f32.mrb[0].mxu0
        %v1679 = vadd.f32 %v1555, %v1678
        %v1680 = vpop.f32.mrb[0].mxu0
        %1681 = vmatprep.mubr.bf16.mxu0 0
        %1682 = vmatmul.mubr.bf16.gmra.mrb[0].mxu0 %v1599
        %v1683 = vpop.f32.mrb[0].mxu0
        %v1684 = vadd.f32 %v1555, %v1683
        %v1685 = vpop.f32.mrb[0].mxu0
        %v1686 = vpop.f32.mrb[0].mxu0
        %v1687 = vadd.f32 %v1555, %v1686
        %v1688 = vpop.f32.mrb[0].mxu0
        %1689 = vdwg.mxu0
        %v1690 = vld [vmem:[%s15] sm:$0x1]
        %v1691 = vld [vmem:[%s16] sm:$0x1]
        %v1692 = vsel %vm1302, %v1636, 0.0
        %1693 = vadd.xlane.f32.xlu0 %v1692
        %v1694 = vpop.xlane.xlu0 %1693
        %v1695 = vsel %vm1302, %v1639, 0.0
        %1696 = vadd.xlane.f32.xlu0 %v1695
        %v1697 = vpop.xlane.xlu0 %1696
        %v1698 = vsel %vm1302, %v1644, 0.0
        %1699 = vadd.xlane.f32.xlu0 %v1698
        %v1700 = vpop.xlane.xlu0 %1699
        %v1701 = vsel %vm1302, %v1647, 0.0
        %1702 = vadd.xlane.f32.xlu0 %v1701
        %v1703 = vpop.xlane.xlu0 %1702
        %v1704 = vsel %vm1302, %v1652, 0.0
        %1705 = vadd.xlane.f32.xlu0 %v1704
        %v1706 = vpop.xlane.xlu0 %1705
        %v1707 = vsel %vm1302, %v1655, 0.0
        %1708 = vadd.xlane.f32.xlu0 %v1707
        %v1709 = vpop.xlane.xlu0 %1708
        %v1710 = vsel %vm1302, %v1660, 0.0
        %1711 = vadd.xlane.f32.xlu0 %v1710
        %v1712 = vpop.xlane.xlu0 %1711
        %v1713 = vsel %vm1302, %v1663, 0.0
        %1714 = vadd.xlane.f32.xlu0 %v1713
        %v1715 = vpop.xlane.xlu0 %1714
        %v1716 = vsel %vm1302, %v1668, 0.0
        %1717 = vadd.xlane.f32.xlu0 %v1716
        %v1718 = vpop.xlane.xlu0 %1717
        %v1719 = vsel %vm1302, %v1671, 0.0
        %1720 = vadd.xlane.f32.xlu0 %v1719
        %v1721 = vpop.xlane.xlu0 %1720
        %v1722 = vsel %vm1302, %v1676, 0.0
        %1723 = vadd.xlane.f32.xlu0 %v1722
        %v1724 = vpop.xlane.xlu0 %1723
        %v1725 = vsel %vm1302, %v1679, 0.0
        %1726 = vadd.xlane.f32.xlu0 %v1725
        %v1727 = vpop.xlane.xlu0 %1726
        %v1728 = vsel %vm1302, %v1684, 0.0
        %1729 = vadd.xlane.f32.xlu0 %v1728
        %v1730 = vpop.xlane.xlu0 %1729
        %v1731 = vsel %vm1302, %v1687, 0.0
        %1732 = vadd.xlane.f32.xlu0 %v1731
        %v1733 = vpop.xlane.xlu0 %1732
        %v1734 = vmul.f32 %v1694, %v1345
        %v1735 = vmul.f32 %v1697, %v1345
        %v1736 = vmul.f32 %v1700, %v1345
        %v1737 = vmul.f32 %v1703, %v1345
        %v1738 = vmul.f32 %v1706, %v1345
        %v1739 = vmul.f32 %v1709, %v1345
        %v1740 = vmul.f32 %v1712, %v1345
        %v1741 = vmul.f32 %v1715, %v1345
        %v1742 = vmul.f32 %v1718, %v1345
        %v1743 = vmul.f32 %v1721, %v1345
        %v1744 = vmul.f32 %v1724, %v1345
        %v1745 = vmul.f32 %v1727, %v1345
        %v1746 = vmul.f32 %v1730, %v1345
        %v1747 = vmul.f32 %v1733, %v1345
        %v1748 = vsub.f32 %v1636, %v1734
        %v1749 = vsub.f32 %v1639, %v1735
        %v1750 = vsub.f32 %v1644, %v1736
        %v1751 = vsub.f32 %v1647, %v1737
        %v1752 = vsub.f32 %v1652, %v1738
        %v1753 = vsub.f32 %v1655, %v1739
        %v1754 = vsub.f32 %v1660, %v1740
        %v1755 = vsub.f32 %v1663, %v1741
        %v1756 = vsub.f32 %v1668, %v1742
        %v1757 = vsub.f32 %v1671, %v1743
        %v1758 = vsub.f32 %v1676, %v1744
        %v1759 = vsub.f32 %v1679, %v1745
        %v1760 = vsub.f32 %v1684, %v1746
        %v1761 = vsub.f32 %v1687, %v1747
        %v1762 = vmul.f32 %v1748, %v1748
        %v1763 = vmul.f32 %v1749, %v1749
        %v1764 = vmul.f32 %v1750, %v1750
        %v1765 = vmul.f32 %v1751, %v1751
        %v1766 = vmul.f32 %v1752, %v1752
        %v1767 = vmul.f32 %v1753, %v1753
        %v1768 = vmul.f32 %v1754, %v1754
        %v1769 = vmul.f32 %v1755, %v1755
        %v1770 = vmul.f32 %v1756, %v1756
        %v1771 = vmul.f32 %v1757, %v1757
        %v1772 = vmul.f32 %v1758, %v1758
        %v1773 = vmul.f32 %v1759, %v1759
        %v1774 = vmul.f32 %v1760, %v1760
        %v1775 = vmul.f32 %v1761, %v1761
        %v1776 = vsel %vm1302, %v1762, 0.0
        %1777 = vadd.xlane.f32.xlu0 %v1776
        %v1778 = vpop.xlane.xlu0 %1777
        %v1779 = vsel %vm1302, %v1763, 0.0
        %1780 = vadd.xlane.f32.xlu0 %v1779
        %v1781 = vpop.xlane.xlu0 %1780
        %v1782 = vsel %vm1302, %v1764, 0.0
        %1783 = vadd.xlane.f32.xlu0 %v1782
        %v1784 = vpop.xlane.xlu0 %1783
        %v1785 = vsel %vm1302, %v1765, 0.0
        %1786 = vadd.xlane.f32.xlu0 %v1785
        %v1787 = vpop.xlane.xlu0 %1786
        %v1788 = vsel %vm1302, %v1766, 0.0
        %1789 = vadd.xlane.f32.xlu0 %v1788
        %v1790 = vpop.xlane.xlu0 %1789
        %v1791 = vsel %vm1302, %v1767, 0.0
        %1792 = vadd.xlane.f32.xlu0 %v1791
        %v1793 = vpop.xlane.xlu0 %1792
        %v1794 = vsel %vm1302, %v1768, 0.0
        %1795 = vadd.xlane.f32.xlu0 %v1794
        %v1796 = vpop.xlane.xlu0 %1795
        %v1797 = vsel %vm1302, %v1769, 0.0
        %1798 = vadd.xlane.f32.xlu0 %v1797
        %v1799 = vpop.xlane.xlu0 %1798
        %v1800 = vsel %vm1302, %v1770, 0.0
        %1801 = vadd.xlane.f32.xlu0 %v1800
        %v1802 = vpop.xlane.xlu0 %1801
        %v1803 = vsel %vm1302, %v1771, 0.0
        %1804 = vadd.xlane.f32.xlu0 %v1803
        %v1805 = vpop.xlane.xlu0 %1804
        %v1806 = vsel %vm1302, %v1772, 0.0
        %1807 = vadd.xlane.f32.xlu0 %v1806
        %v1808 = vpop.xlane.xlu0 %1807
        %v1809 = vsel %vm1302, %v1773, 0.0
        %1810 = vadd.xlane.f32.xlu0 %v1809
        %v1811 = vpop.xlane.xlu0 %1810
        %v1812 = vsel %vm1302, %v1774, 0.0
        %1813 = vadd.xlane.f32.xlu0 %v1812
        %v1814 = vpop.xlane.xlu0 %1813
        %v1815 = vsel %vm1302, %v1775, 0.0
        %1816 = vadd.xlane.f32.xlu0 %v1815
        %v1817 = vpop.xlane.xlu0 %1816
        %v1818 = vmul.f32 %v1778, %v1345
        %v1819 = vmul.f32 %v1781, %v1345
        %v1820 = vmul.f32 %v1784, %v1345
        %v1821 = vmul.f32 %v1787, %v1345
        %v1822 = vmul.f32 %v1790, %v1345
        %v1823 = vmul.f32 %v1793, %v1345
        %v1824 = vmul.f32 %v1796, %v1345
        %v1825 = vmul.f32 %v1799, %v1345
        %v1826 = vmul.f32 %v1802, %v1345
        %v1827 = vmul.f32 %v1805, %v1345
        %v1828 = vmul.f32 %v1808, %v1345
        %v1829 = vmul.f32 %v1811, %v1345
        %v1830 = vmul.f32 %v1814, %v1345
        %v1831 = vmul.f32 %v1817, %v1345
        %v1832 = vadd.f32 %v1818, 1e-05
        %v1833 = vadd.f32 %v1819, 1e-05
        %v1834 = vadd.f32 %v1820, 1e-05
        %v1835 = vadd.f32 %v1821, 1e-05
        %v1836 = vadd.f32 %v1822, 1e-05
        %v1837 = vadd.f32 %v1823, 1e-05
        %v1838 = vadd.f32 %v1824, 1e-05
        %v1839 = vadd.f32 %v1825, 1e-05
        %v1840 = vadd.f32 %v1826, 1e-05
        %v1841 = vadd.f32 %v1827, 1e-05
        %v1842 = vadd.f32 %v1828, 1e-05
        %v1843 = vadd.f32 %v1829, 1e-05
        %v1844 = vadd.f32 %v1830, 1e-05
        %v1845 = vadd.f32 %v1831, 1e-05
        %v1846 = vrsqrt.pop %v1832
        %v1847 = vrsqrt.pop %v1833
        %v1848 = vrsqrt.pop %v1834
        %v1849 = vrsqrt.pop %v1835
        %v1850 = vrsqrt.pop %v1836
        %v1851 = vrsqrt.pop %v1837
        %v1852 = vrsqrt.pop %v1838
        %v1853 = vrsqrt.pop %v1839
        %v1854 = vrsqrt.pop %v1840
        %v1855 = vrsqrt.pop %v1841
        %v1856 = vrsqrt.pop %v1842
        %v1857 = vrsqrt.pop %v1843
        %v1858 = vrsqrt.pop %v1844
        %v1859 = vrsqrt.pop %v1845
        %v1860 = vmul.f32 %v1748, %v1846
        %v1861 = vmul.f32 %v1749, %v1847
        %v1862 = vmul.f32 %v1750, %v1848
        %v1863 = vmul.f32 %v1751, %v1849
        %v1864 = vmul.f32 %v1752, %v1850
        %v1865 = vmul.f32 %v1753, %v1851
        %v1866 = vmul.f32 %v1754, %v1852
        %v1867 = vmul.f32 %v1755, %v1853
        %v1868 = vmul.f32 %v1756, %v1854
        %v1869 = vmul.f32 %v1757, %v1855
        %v1870 = vmul.f32 %v1758, %v1856
        %v1871 = vmul.f32 %v1759, %v1857
        %v1872 = vmul.f32 %v1760, %v1858
        %v1873 = vmul.f32 %v1761, %v1859
        %v1874 = vlaneseq
        %v1875 = vshrl.u32 %v1874, 7
        %v1876 = vsub.s32 0, %v1875
        %v1877 = vrot.slane %v1690, %v1876
        %v1878 = vmul.f32 %v1860, %v1877
        %v1879 = vmul.f32 %v1861, %v1877
        %v1880 = vmul.f32 %v1862, %v1877
        %v1881 = vmul.f32 %v1863, %v1877
        %v1882 = vmul.f32 %v1864, %v1877
        %v1883 = vmul.f32 %v1865, %v1877
        %v1884 = vmul.f32 %v1866, %v1877
        %v1885 = vmul.f32 %v1867, %v1877
        %v1886 = vmul.f32 %v1868, %v1877
        %v1887 = vmul.f32 %v1869, %v1877
        %v1888 = vmul.f32 %v1870, %v1877
        %v1889 = vmul.f32 %v1871, %v1877
        %v1890 = vmul.f32 %v1872, %v1877
        %v1891 = vmul.f32 %v1873, %v1877
        %v1892 = vlaneseq
        %v1893 = vshrl.u32 %v1892, 7
        %v1894 = vsub.s32 0, %v1893
        %v1895 = vrot.slane %v1691, %v1894
        %v1896 = vadd.f32 %v1878, %v1895
        %v1897 = vadd.f32 %v1879, %v1895
        %v1898 = vadd.f32 %v1880, %v1895
        %v1899 = vadd.f32 %v1881, %v1895
        %v1900 = vadd.f32 %v1882, %v1895
        %v1901 = vadd.f32 %v1883, %v1895
        %v1902 = vadd.f32 %v1884, %v1895
        %v1903 = vadd.f32 %v1885, %v1895
        %v1904 = vadd.f32 %v1886, %v1895
        %v1905 = vadd.f32 %v1887, %v1895
        %v1906 = vadd.f32 %v1888, %v1895
        %v1907 = vadd.f32 %v1889, %v1895
        %v1908 = vadd.f32 %v1890, %v1895
        %v1909 = vadd.f32 %v1891, %v1895
        %v1910 = vld [vmem:[%s17] sm:$0x1]
        %v1911 = vld [vmem:[%s18] sm:$0x1]
        %1926 = vrot.lane.b32.xlu0 %v1246, 64
        %v1927 = vpop.permute.xlu0 %1926
        %1928 = vrot.lane.b32.xlu0 %v1249, 64
        %v1929 = vpop.permute.xlu0 %1928
        %1930 = vrot.lane.b32.xlu0 %v1254, 64
        %v1931 = vpop.permute.xlu0 %1930
        %1932 = vrot.lane.b32.xlu0 %v1257, 64
        %v1933 = vpop.permute.xlu0 %1932
        %1934 = vrot.lane.b32.xlu0 %v1262, 64
        %v1935 = vpop.permute.xlu0 %1934
        %1936 = vrot.lane.b32.xlu0 %v1265, 64
        %v1937 = vpop.permute.xlu0 %1936
        %1938 = vrot.lane.b32.xlu0 %v1270, 64
        %v1939 = vpop.permute.xlu0 %1938
        %1940 = vrot.lane.b32.xlu0 %v1273, 64
        %v1941 = vpop.permute.xlu0 %1940
        %1942 = vrot.lane.b32.xlu0 %v1278, 64
        %v1943 = vpop.permute.xlu0 %1942
        %1944 = vrot.lane.b32.xlu0 %v1281, 64
        %v1945 = vpop.permute.xlu0 %1944
        %1946 = vrot.lane.b32.xlu0 %v1286, 64
        %v1947 = vpop.permute.xlu0 %1946
        %1948 = vrot.lane.b32.xlu0 %v1289, 64
        %v1949 = vpop.permute.xlu0 %1948
        %1950 = vrot.lane.b32.xlu0 %v1294, 64
        %v1951 = vpop.permute.xlu0 %1950
        %1952 = vrot.lane.b32.xlu0 %v1297, 64
        %v1953 = vpop.permute.xlu0 %1952
        %v1968 = vsel %vm1302, %v1927, 0.0
        %1969 = vadd.xlane.f32.xlu0 %v1968
        %v1970 = vpop.xlane.xlu0 %1969
        %v1971 = vsel %vm1302, %v1929, 0.0
        %1972 = vadd.xlane.f32.xlu0 %v1971
        %v1973 = vpop.xlane.xlu0 %1972
        %v1974 = vsel %vm1302, %v1931, 0.0
        %1975 = vadd.xlane.f32.xlu0 %v1974
        %v1976 = vpop.xlane.xlu0 %1975
        %v1977 = vsel %vm1302, %v1933, 0.0
        %1978 = vadd.xlane.f32.xlu0 %v1977
        %v1979 = vpop.xlane.xlu0 %1978
        %v1980 = vsel %vm1302, %v1935, 0.0
        %1981 = vadd.xlane.f32.xlu0 %v1980
        %v1982 = vpop.xlane.xlu0 %1981
        %v1983 = vsel %vm1302, %v1937, 0.0
        %1984 = vadd.xlane.f32.xlu0 %v1983
        %v1985 = vpop.xlane.xlu0 %1984
        %v1986 = vsel %vm1302, %v1939, 0.0
        %1987 = vadd.xlane.f32.xlu0 %v1986
        %v1988 = vpop.xlane.xlu0 %1987
        %v1989 = vsel %vm1302, %v1941, 0.0
        %1990 = vadd.xlane.f32.xlu0 %v1989
        %v1991 = vpop.xlane.xlu0 %1990
        %v1992 = vsel %vm1302, %v1943, 0.0
        %1993 = vadd.xlane.f32.xlu0 %v1992
        %v1994 = vpop.xlane.xlu0 %1993
        %v1995 = vsel %vm1302, %v1945, 0.0
        %1996 = vadd.xlane.f32.xlu0 %v1995
        %v1997 = vpop.xlane.xlu0 %1996
        %v1998 = vsel %vm1302, %v1947, 0.0
        %1999 = vadd.xlane.f32.xlu0 %v1998
        %v2000 = vpop.xlane.xlu0 %1999
        %v2001 = vsel %vm1302, %v1949, 0.0
        %2002 = vadd.xlane.f32.xlu0 %v2001
        %v2003 = vpop.xlane.xlu0 %2002
        %v2004 = vsel %vm1302, %v1951, 0.0
        %2005 = vadd.xlane.f32.xlu0 %v2004
        %v2006 = vpop.xlane.xlu0 %2005
        %v2007 = vsel %vm1302, %v1953, 0.0
        %2008 = vadd.xlane.f32.xlu0 %v2007
        %v2009 = vpop.xlane.xlu0 %2008
        %v2010 = vmul.f32 %v1970, %v1345
        %v2011 = vmul.f32 %v1973, %v1345
        %v2012 = vmul.f32 %v1976, %v1345
        %v2013 = vmul.f32 %v1979, %v1345
        %v2014 = vmul.f32 %v1982, %v1345
        %v2015 = vmul.f32 %v1985, %v1345
        %v2016 = vmul.f32 %v1988, %v1345
        %v2017 = vmul.f32 %v1991, %v1345
        %v2018 = vmul.f32 %v1994, %v1345
        %v2019 = vmul.f32 %v1997, %v1345
        %v2020 = vmul.f32 %v2000, %v1345
        %v2021 = vmul.f32 %v2003, %v1345
        %v2022 = vmul.f32 %v2006, %v1345
        %v2023 = vmul.f32 %v2009, %v1345
        %v2024 = vsub.f32 %v1246, %v2010
        %v2025 = vsub.f32 %v1249, %v2011
        %v2026 = vsub.f32 %v1254, %v2012
        %v2027 = vsub.f32 %v1257, %v2013
        %v2028 = vsub.f32 %v1262, %v2014
        %v2029 = vsub.f32 %v1265, %v2015
        %v2030 = vsub.f32 %v1270, %v2016
        %v2031 = vsub.f32 %v1273, %v2017
        %v2032 = vsub.f32 %v1278, %v2018
        %v2033 = vsub.f32 %v1281, %v2019
        %v2034 = vsub.f32 %v1286, %v2020
        %v2035 = vsub.f32 %v1289, %v2021
        %v2036 = vsub.f32 %v1294, %v2022
        %v2037 = vsub.f32 %v1297, %v2023
        %v2038 = vmul.f32 %v2024, %v2024
        %v2039 = vmul.f32 %v2025, %v2025
        %v2040 = vmul.f32 %v2026, %v2026
        %v2041 = vmul.f32 %v2027, %v2027
        %v2042 = vmul.f32 %v2028, %v2028
        %v2043 = vmul.f32 %v2029, %v2029
        %v2044 = vmul.f32 %v2030, %v2030
        %v2045 = vmul.f32 %v2031, %v2031
        %v2046 = vmul.f32 %v2032, %v2032
        %v2047 = vmul.f32 %v2033, %v2033
        %v2048 = vmul.f32 %v2034, %v2034
        %v2049 = vmul.f32 %v2035, %v2035
        %v2050 = vmul.f32 %v2036, %v2036
        %v2051 = vmul.f32 %v2037, %v2037
        %2066 = vrot.lane.b32.xlu0 %v2038, 64
        %v2067 = vpop.permute.xlu0 %2066
        %2068 = vrot.lane.b32.xlu0 %v2039, 64
        %v2069 = vpop.permute.xlu0 %2068
        %2070 = vrot.lane.b32.xlu0 %v2040, 64
        %v2071 = vpop.permute.xlu0 %2070
        %2072 = vrot.lane.b32.xlu0 %v2041, 64
        %v2073 = vpop.permute.xlu0 %2072
        %2074 = vrot.lane.b32.xlu0 %v2042, 64
        %v2075 = vpop.permute.xlu0 %2074
        %2076 = vrot.lane.b32.xlu0 %v2043, 64
        %v2077 = vpop.permute.xlu0 %2076
        %2078 = vrot.lane.b32.xlu0 %v2044, 64
        %v2079 = vpop.permute.xlu0 %2078
        %2080 = vrot.lane.b32.xlu0 %v2045, 64
        %v2081 = vpop.permute.xlu0 %2080
        %2082 = vrot.lane.b32.xlu0 %v2046, 64
        %v2083 = vpop.permute.xlu0 %2082
        %2084 = vrot.lane.b32.xlu0 %v2047, 64
        %v2085 = vpop.permute.xlu0 %2084
        %2086 = vrot.lane.b32.xlu0 %v2048, 64
        %v2087 = vpop.permute.xlu0 %2086
        %2088 = vrot.lane.b32.xlu0 %v2049, 64
        %v2089 = vpop.permute.xlu0 %2088
        %2090 = vrot.lane.b32.xlu0 %v2050, 64
        %v2091 = vpop.permute.xlu0 %2090
        %2092 = vrot.lane.b32.xlu0 %v2051, 64
        %v2093 = vpop.permute.xlu0 %2092
        %v2108 = vsel %vm1302, %v2067, 0.0
        %2109 = vadd.xlane.f32.xlu0 %v2108
        %v2110 = vpop.xlane.xlu0 %2109
        %v2111 = vsel %vm1302, %v2069, 0.0
        %2112 = vadd.xlane.f32.xlu0 %v2111
        %v2113 = vpop.xlane.xlu0 %2112
        %v2114 = vsel %vm1302, %v2071, 0.0
        %2115 = vadd.xlane.f32.xlu0 %v2114
        %v2116 = vpop.xlane.xlu0 %2115
        %v2117 = vsel %vm1302, %v2073, 0.0
        %2118 = vadd.xlane.f32.xlu0 %v2117
        %v2119 = vpop.xlane.xlu0 %2118
        %v2120 = vsel %vm1302, %v2075, 0.0
        %2121 = vadd.xlane.f32.xlu0 %v2120
        %v2122 = vpop.xlane.xlu0 %2121
        %v2123 = vsel %vm1302, %v2077, 0.0
        %2124 = vadd.xlane.f32.xlu0 %v2123
        %v2125 = vpop.xlane.xlu0 %2124
        %v2126 = vsel %vm1302, %v2079, 0.0
        %2127 = vadd.xlane.f32.xlu0 %v2126
        %v2128 = vpop.xlane.xlu0 %2127
        %v2129 = vsel %vm1302, %v2081, 0.0
        %2130 = vadd.xlane.f32.xlu0 %v2129
        %v2131 = vpop.xlane.xlu0 %2130
        %v2132 = vsel %vm1302, %v2083, 0.0
        %2133 = vadd.xlane.f32.xlu0 %v2132
        %v2134 = vpop.xlane.xlu0 %2133
        %v2135 = vsel %vm1302, %v2085, 0.0
        %2136 = vadd.xlane.f32.xlu0 %v2135
        %v2137 = vpop.xlane.xlu0 %2136
        %v2138 = vsel %vm1302, %v2087, 0.0
        %2139 = vadd.xlane.f32.xlu0 %v2138
        %v2140 = vpop.xlane.xlu0 %2139
        %v2141 = vsel %vm1302, %v2089, 0.0
        %2142 = vadd.xlane.f32.xlu0 %v2141
        %v2143 = vpop.xlane.xlu0 %2142
        %v2144 = vsel %vm1302, %v2091, 0.0
        %2145 = vadd.xlane.f32.xlu0 %v2144
        %v2146 = vpop.xlane.xlu0 %2145
        %v2147 = vsel %vm1302, %v2093, 0.0
        %2148 = vadd.xlane.f32.xlu0 %v2147
        %v2149 = vpop.xlane.xlu0 %2148
        %v2150 = vmul.f32 %v2110, %v1345
        %v2151 = vmul.f32 %v2113, %v1345
        %v2152 = vmul.f32 %v2116, %v1345
        %v2153 = vmul.f32 %v2119, %v1345
        %v2154 = vmul.f32 %v2122, %v1345
        %v2155 = vmul.f32 %v2125, %v1345
        %v2156 = vmul.f32 %v2128, %v1345
        %v2157 = vmul.f32 %v2131, %v1345
        %v2158 = vmul.f32 %v2134, %v1345
        %v2159 = vmul.f32 %v2137, %v1345
        %v2160 = vmul.f32 %v2140, %v1345
        %v2161 = vmul.f32 %v2143, %v1345
        %v2162 = vmul.f32 %v2146, %v1345
        %v2163 = vmul.f32 %v2149, %v1345
        %v2164 = vadd.f32 %v2150, 1e-05
        %v2165 = vadd.f32 %v2151, 1e-05
        %v2166 = vadd.f32 %v2152, 1e-05
        %v2167 = vadd.f32 %v2153, 1e-05
        %v2168 = vadd.f32 %v2154, 1e-05
        %v2169 = vadd.f32 %v2155, 1e-05
        %v2170 = vadd.f32 %v2156, 1e-05
        %v2171 = vadd.f32 %v2157, 1e-05
        %v2172 = vadd.f32 %v2158, 1e-05
        %v2173 = vadd.f32 %v2159, 1e-05
        %v2174 = vadd.f32 %v2160, 1e-05
        %v2175 = vadd.f32 %v2161, 1e-05
        %v2176 = vadd.f32 %v2162, 1e-05
        %v2177 = vadd.f32 %v2163, 1e-05
        %v2178 = vrsqrt.pop %v2164
        %v2179 = vrsqrt.pop %v2165
        %v2180 = vrsqrt.pop %v2166
        %v2181 = vrsqrt.pop %v2167
        %v2182 = vrsqrt.pop %v2168
        %v2183 = vrsqrt.pop %v2169
        %v2184 = vrsqrt.pop %v2170
        %v2185 = vrsqrt.pop %v2171
        %v2186 = vrsqrt.pop %v2172
        %v2187 = vrsqrt.pop %v2173
        %v2188 = vrsqrt.pop %v2174
        %v2189 = vrsqrt.pop %v2175
        %v2190 = vrsqrt.pop %v2176
        %v2191 = vrsqrt.pop %v2177
        %v2192 = vmul.f32 %v2024, %v2178
        %v2193 = vmul.f32 %v2025, %v2179
        %v2194 = vmul.f32 %v2026, %v2180
        %v2195 = vmul.f32 %v2027, %v2181
        %v2196 = vmul.f32 %v2028, %v2182
        %v2197 = vmul.f32 %v2029, %v2183
        %v2198 = vmul.f32 %v2030, %v2184
        %v2199 = vmul.f32 %v2031, %v2185
        %v2200 = vmul.f32 %v2032, %v2186
        %v2201 = vmul.f32 %v2033, %v2187
        %v2202 = vmul.f32 %v2034, %v2188
        %v2203 = vmul.f32 %v2035, %v2189
        %v2204 = vmul.f32 %v2036, %v2190
        %v2205 = vmul.f32 %v2037, %v2191
        %v2206 = vlaneseq
        %v2207 = vshrl.u32 %v2206, 7
        %v2208 = vsub.s32 0, %v2207
        %v2209 = vrot.slane %v1910, %v2208
        %2211 = vrot.lane.b32.xlu0 %v2209, 64
        %v2212 = vpop.permute.xlu0 %2211
        %v2214 = vmul.f32 %v2192, %v2212
        %v2215 = vmul.f32 %v2193, %v2212
        %v2216 = vmul.f32 %v2194, %v2212
        %v2217 = vmul.f32 %v2195, %v2212
        %v2218 = vmul.f32 %v2196, %v2212
        %v2219 = vmul.f32 %v2197, %v2212
        %v2220 = vmul.f32 %v2198, %v2212
        %v2221 = vmul.f32 %v2199, %v2212
        %v2222 = vmul.f32 %v2200, %v2212
        %v2223 = vmul.f32 %v2201, %v2212
        %v2224 = vmul.f32 %v2202, %v2212
        %v2225 = vmul.f32 %v2203, %v2212
        %v2226 = vmul.f32 %v2204, %v2212
        %v2227 = vmul.f32 %v2205, %v2212
        %v2228 = vlaneseq
        %v2229 = vshrl.u32 %v2228, 7
        %v2230 = vsub.s32 0, %v2229
        %v2231 = vrot.slane %v1911, %v2230
        %2233 = vrot.lane.b32.xlu0 %v2231, 64
        %v2234 = vpop.permute.xlu0 %2233
        %v2236 = vadd.f32 %v2214, %v2234
        %v2237 = vadd.f32 %v2215, %v2234
        %v2238 = vadd.f32 %v2216, %v2234
        %v2239 = vadd.f32 %v2217, %v2234
        %v2240 = vadd.f32 %v2218, %v2234
        %v2241 = vadd.f32 %v2219, %v2234
        %v2242 = vadd.f32 %v2220, %v2234
        %v2243 = vadd.f32 %v2221, %v2234
        %v2244 = vadd.f32 %v2222, %v2234
        %v2245 = vadd.f32 %v2223, %v2234
        %v2246 = vadd.f32 %v2224, %v2234
        %v2247 = vadd.f32 %v2225, %v2234
        %v2248 = vadd.f32 %v2226, %v2234
        %v2249 = vadd.f32 %v2227, %v2234
        %2264 = vrot.lane.b32.xlu0 %v2236, 64
        %v2265 = vpop.permute.xlu0 %2264
        %2266 = vrot.lane.b32.xlu0 %v2237, 64
        %v2267 = vpop.permute.xlu0 %2266
        %2268 = vrot.lane.b32.xlu0 %v2238, 64
        %v2269 = vpop.permute.xlu0 %2268
        %2270 = vrot.lane.b32.xlu0 %v2239, 64
        %v2271 = vpop.permute.xlu0 %2270
        %2272 = vrot.lane.b32.xlu0 %v2240, 64
        %v2273 = vpop.permute.xlu0 %2272
        %2274 = vrot.lane.b32.xlu0 %v2241, 64
        %v2275 = vpop.permute.xlu0 %2274
        %2276 = vrot.lane.b32.xlu0 %v2242, 64
        %v2277 = vpop.permute.xlu0 %2276
        %2278 = vrot.lane.b32.xlu0 %v2243, 64
        %v2279 = vpop.permute.xlu0 %2278
        %2280 = vrot.lane.b32.xlu0 %v2244, 64
        %v2281 = vpop.permute.xlu0 %2280
        %2282 = vrot.lane.b32.xlu0 %v2245, 64
        %v2283 = vpop.permute.xlu0 %2282
        %2284 = vrot.lane.b32.xlu0 %v2246, 64
        %v2285 = vpop.permute.xlu0 %2284
        %2286 = vrot.lane.b32.xlu0 %v2247, 64
        %v2287 = vpop.permute.xlu0 %2286
        %2288 = vrot.lane.b32.xlu0 %v2248, 64
        %v2289 = vpop.permute.xlu0 %2288
        %2290 = vrot.lane.b32.xlu0 %v2249, 64
        %v2291 = vpop.permute.xlu0 %2290
        %v2306 = vadd.f32 %v1896, %v2265
        %v2307 = vadd.f32 %v1897, %v2267
        %v2308 = vadd.f32 %v1898, %v2269
        %v2309 = vadd.f32 %v1899, %v2271
        %v2310 = vadd.f32 %v1900, %v2273
        %v2311 = vadd.f32 %v1901, %v2275
        %v2312 = vadd.f32 %v1902, %v2277
        %v2313 = vadd.f32 %v1903, %v2279
        %v2314 = vadd.f32 %v1904, %v2281
        %v2315 = vadd.f32 %v1905, %v2283
        %v2316 = vadd.f32 %v1906, %v2285
        %v2317 = vadd.f32 %v1907, %v2287
        %v2318 = vadd.f32 %v1908, %v2289
        %v2319 = vadd.f32 %v1909, %v2291
        %v2320 = vmax.f32 %v2306, 0.0
        %v2321 = vmax.f32 %v2307, 0.0
        %v2322 = vmax.f32 %v2308, 0.0
        %v2323 = vmax.f32 %v2309, 0.0
        %v2324 = vmax.f32 %v2310, 0.0
        %v2325 = vmax.f32 %v2311, 0.0
        %v2326 = vmax.f32 %v2312, 0.0
        %v2327 = vmax.f32 %v2313, 0.0
        %v2328 = vmax.f32 %v2314, 0.0
        %v2329 = vmax.f32 %v2315, 0.0
        %v2330 = vmax.f32 %v2316, 0.0
        %v2331 = vmax.f32 %v2317, 0.0
        %v2332 = vmax.f32 %v2318, 0.0
        %v2333 = vmax.f32 %v2319, 0.0
        %v2334 = vsel %vm918, 1, 0
        %v2335 = vsel %vm919, 1, 0
        %v2336 = vsel %vm920, 1, 0
        %v2337 = vsel %vm921, 1, 0
        %v2338 = vsel %vm922, 1, 0
        %v2339 = vsel %vm923, 1, 0
        %v2340 = vsel %vm924, 1, 0
        %v2341 = vsel %vm925, 1, 0
        %v2342 = vsel %vm926, 1, 0
        %v2343 = vsel %vm927, 1, 0
        %v2344 = vsel %vm928, 1, 0
        %v2345 = vsel %vm929, 1, 0
        %v2346 = vsel %vm930, 1, 0
        %v2347 = vsel %vm931, 1, 0
        %v2348 = vsel %vm932, 1, 0
        %v2349 = vsel %vm933, 1, 0
        %v2350 = vsel %vm934, 1, 0
        %v2351 = vsel %vm935, 1, 0
        %v2352 = vsel %vm936, 1, 0
        %v2353 = vsel %vm937, 1, 0
        %v2354 = vsel %vm938, 1, 0
        %v2355 = vsel %vm939, 1, 0
        %v2356 = vsel %vm940, 1, 0
        %v2357 = vsel %vm941, 1, 0
        %v2358 = vsel %vm942, 1, 0
        %v2359 = vsel %vm943, 1, 0
        %v2360 = vsel %vm944, 1, 0
        %v2361 = vsel %vm945, 1, 0
        %v2362 = vsel %vm946, 1, 0
        %v2363 = vsel %vm947, 1, 0
        %v2364 = vsel %vm948, 1, 0
        %v2365 = vsel %vm949, 1, 0
        %v2366 = vsel %vm950, 1, 0
        %v2367 = vsel %vm951, 1, 0
        %v2368 = vsel %vm952, 1, 0
        %v2369 = vsel %vm953, 1, 0
        %v2370 = vsel %vm954, 1, 0
        %v2371 = vsel %vm955, 1, 0
        %v2372 = vsel %vm956, 1, 0
        %v2373 = vsel %vm957, 1, 0
        %v2374 = vsel %vm958, 1, 0
        %v2375 = vsel %vm959, 1, 0
        %v2376 = vsel %vm960, 1, 0
        %v2377 = vsel %vm961, 1, 0
        %v2378 = vsel %vm962, 1, 0
        %v2379 = vsel %vm963, 1, 0
        %v2380 = vsel %vm964, 1, 0
        %v2381 = vsel %vm965, 1, 0
        %v2382 = vsel %vm966, 1, 0
        %v2383 = vsel %vm967, 1, 0
        %v2384 = vsel %vm968, 1, 0
        %v2385 = vsel %vm969, 1, 0
        %v2386 = vsel %vm970, 1, 0
        %v2387 = vsel %vm971, 1, 0
        %v2388 = vsel %vm972, 1, 0
        %v2389 = vsel %vm973, 1, 0
        %v2390 = vsel %vm974, 1, 0
        %v2391 = vsel %vm975, 1, 0
        %v2392 = vsel %vm976, 1, 0
        %v2393 = vsel %vm977, 1, 0
        %v2394 = vsel %vm978, 1, 0
        %v2395 = vsel %vm979, 1, 0
        %v2396 = vsel %vm980, 1, 0
        %v2397 = vsel %vm981, 1, 0
        %v2398 = vsel %vm982, 1, 0
        %v2399 = vsel %vm983, 1, 0
        %v2400 = vsel %vm984, 1, 0
        %v2401 = vsel %vm985, 1, 0
        %v2402 = vsel %vm986, 1, 0
        %v2403 = vsel %vm987, 1, 0
        %v2404 = vsel %vm988, 1, 0
        %v2405 = vsel %vm989, 1, 0
        %v2406 = vsel %vm990, 1, 0
        %v2407 = vsel %vm991, 1, 0
        %v2408 = vsel %vm992, 1, 0
        %v2409 = vsel %vm993, 1, 0
        %v2410 = vsel %vm994, 1, 0
        %v2411 = vsel %vm995, 1, 0
        %v2412 = vsel %vm996, 1, 0
        %v2413 = vsel %vm997, 1, 0
        %v2414 = vsel %vm998, 1, 0
        %v2415 = vsel %vm999, 1, 0
        %v2416 = vsel %vm1000, 1, 0
        %v2417 = vsel %vm1001, 1, 0
        %v2418 = vsel %vm1002, 1, 0
        %v2419 = vsel %vm1003, 1, 0
        %v2420 = vsel %vm1004, 1, 0
        %v2421 = vsel %vm1005, 1, 0
        %v2422 = vsel %vm1006, 1, 0
        %v2423 = vsel %vm1007, 1, 0
        %v2424 = vsel %vm1008, 1, 0
        %v2425 = vsel %vm1009, 1, 0
        %v2426 = vsel %vm1010, 1, 0
        %v2427 = vsel %vm1011, 1, 0
        %v2428 = vsel %vm1012, 1, 0
        %v2429 = vsel %vm1013, 1, 0
        %v2430 = vsel %vm1014, 1, 0
        %v2431 = vsel %vm1015, 1, 0
        %v2432 = vsel %vm1016, 1, 0
        %v2433 = vsel %vm1017, 1, 0
        %v2434 = vsel %vm1018, 1, 0
        %v2435 = vsel %vm1019, 1, 0
        %v2436 = vsel %vm1020, 1, 0
        %v2437 = vsel %vm1021, 1, 0
        %v2438 = vsel %vm1022, 1, 0
        %v2439 = vsel %vm1023, 1, 0
        %v2440 = vsel %vm1024, 1, 0
        %v2441 = vsel %vm1025, 1, 0
        %v2442 = vsel %vm1026, 1, 0
        %v2443 = vsel %vm1027, 1, 0
        %v2444 = vsel %vm1028, 1, 0
        %v2445 = vsel %vm1029, 1, 0
        %v2446 = vsel %vm1030, 1, 0
        %v2447 = vsel %vm1031, 1, 0
        %v2448 = vsel %vm1032, 1, 0
        %v2449 = vsel %vm1033, 1, 0
        %v2450 = vsel %vm1034, 1, 0
        %v2451 = vsel %vm1035, 1, 0
        %v2452 = vsel %vm1036, 1, 0
        %v2453 = vsel %vm1037, 1, 0
        %v2454 = vsel %vm1038, 1, 0
        %v2455 = vsel %vm1039, 1, 0
        %v2456 = vsel %vm1040, 1, 0
        %v2457 = vsel %vm1041, 1, 0
        %v2458 = vsel %vm1042, 1, 0
        %v2459 = vsel %vm1043, 1, 0
        %v2460 = vsel %vm1044, 1, 0
        %v2461 = vsel %vm1045, 1, 0
        %v2462 = vsel %vm1046, 1, 0
        %v2463 = vsel %vm1047, 1, 0
        %v2464 = vsel %vm1048, 1, 0
        %v2465 = vsel %vm1049, 1, 0
        %v2466 = vsel %vm1050, 1, 0
        %v2467 = vsel %vm1051, 1, 0
        %v2468 = vsel %vm1052, 1, 0
        %v2469 = vsel %vm1053, 1, 0
        %v2470 = vsel %vm1054, 1, 0
        %v2471 = vsel %vm1055, 1, 0
        %v2472 = vsel %vm1056, 1, 0
        %v2473 = vsel %vm1057, 1, 0
        %v2474 = vsel %vm1058, 1, 0
        %v2475 = vsel %vm1059, 1, 0
        %v2476 = vsel %vm1060, 1, 0
        %v2477 = vsel %vm1061, 1, 0
        %v2478 = vsel %vm1062, 1, 0
        %v2479 = vsel %vm1063, 1, 0
        %v2480 = vsel %vm1064, 1, 0
        %v2481 = vsel %vm1065, 1, 0
        %v2482 = vsel %vm1066, 1, 0
        %v2483 = vsel %vm1067, 1, 0
        %v2484 = vsel %vm1068, 1, 0
        %v2485 = vsel %vm1069, 1, 0
        %v2486 = vsel %vm1070, 1, 0
        %v2487 = vsel %vm1071, 1, 0
        %v2488 = vsel %vm1072, 1, 0
        %v2489 = vsel %vm1073, 1, 0
        %v2490 = vsel %vm1074, 1, 0
        %v2491 = vsel %vm1075, 1, 0
        %v2492 = vsel %vm1076, 1, 0
        %v2493 = vsel %vm1077, 1, 0
        %v2494 = vsel %vm1078, 1, 0
        %v2495 = vsel %vm1079, 1, 0
        %v2496 = vsel %vm1080, 1, 0
        %v2497 = vsel %vm1081, 1, 0
        %v2498 = vsel %vm1082, 1, 0
        %v2499 = vsel %vm1083, 1, 0
        %v2500 = vsel %vm1084, 1, 0
        %v2501 = vsel %vm1085, 1, 0
        %v2502 = vsel %vm1086, 1, 0
        %v2503 = vsel %vm1087, 1, 0
        %v2504 = vsel %vm1088, 1, 0
        %v2505 = vsel %vm1089, 1, 0
        %v2506 = vsel %vm1090, 1, 0
        %v2507 = vsel %vm1091, 1, 0
        %v2508 = vsel %vm1092, 1, 0
        %v2509 = vsel %vm1093, 1, 0
        %v2510 = vsel %vm1094, 1, 0
        %v2511 = vsel %vm1095, 1, 0
        %v2512 = vsel %vm1096, 1, 0
        %v2513 = vsel %vm1097, 1, 0
        %v2514 = vsel %vm1098, 1, 0
        %v2515 = vsel %vm1099, 1, 0
        %v2516 = vsel %vm1100, 1, 0
        %v2517 = vsel %vm1101, 1, 0
        %v2518 = vsel %vm1102, 1, 0
        %v2519 = vsel %vm1103, 1, 0
        %v2520 = vsel %vm1104, 1, 0
        %v2521 = vsel %vm1105, 1, 0
        %v2522 = vsel %vm1106, 1, 0
        %v2523 = vsel %vm1107, 1, 0
        %v2524 = vsel %vm1108, 1, 0
        %v2525 = vsel %vm1109, 1, 0
        %v2526 = vsel %vm1110, 1, 0
        %v2527 = vsel %vm1111, 1, 0
        %v2528 = vsel %vm1112, 1, 0
        %v2529 = vsel %vm1113, 1, 0
        %v2530 = vsel %vm1114, 1, 0
        %v2531 = vsel %vm1115, 1, 0
        %v2532 = vsel %vm1116, 1, 0
        %v2533 = vsel %vm1117, 1, 0
        %v2534 = vsel %vm1118, 1, 0
        %v2535 = vsel %vm1119, 1, 0
        %v2536 = vsel %vm1120, 1, 0
        %v2537 = vsel %vm1121, 1, 0
        %v2538 = vsel %vm1122, 1, 0
        %v2539 = vsel %vm1123, 1, 0
        %v2540 = vsel %vm1124, 1, 0
        %v2541 = vsel %vm1125, 1, 0
        %v2542 = vsel %vm1126, 1, 0
        %v2543 = vsel %vm1127, 1, 0
        %v2544 = vsel %vm1128, 1, 0
        %v2545 = vsel %vm1129, 1, 0
        %v2546 = vsel %vm1130, 1, 0
        %v2547 = vsel %vm1131, 1, 0
        %v2548 = vsel %vm1132, 1, 0
        %v2549 = vsel %vm1133, 1, 0
        %v2550 = vsel %vm1134, 1, 0
        %v2551 = vsel %vm1135, 1, 0
        %v2552 = vsel %vm1136, 1, 0
        %v2553 = vsel %vm1137, 1, 0
        %v2554 = vsel %vm1138, 1, 0
        %v2555 = vsel %vm1139, 1, 0
        %v2556 = vsel %vm1140, 1, 0
        %v2557 = vsel %vm1141, 1, 0
        %2558 = vset.pattern.permute.xlu0 0
        %2559 = vperm.xlu0 %2558, %v2334
        %v2560 = vpop.permute.xlu0 %2559
        %2561 = vset.pattern.permute.xlu0 0
        %2562 = vperm.xlu0 %2561, %v2335
        %v2563 = vpop.permute.xlu0 %2562
        %2564 = vset.pattern.permute.xlu0 0
        %2565 = vperm.xlu0 %2564, %v2336
        %v2566 = vpop.permute.xlu0 %2565
        %2567 = vset.pattern.permute.xlu0 0
        %2568 = vperm.xlu0 %2567, %v2337
        %v2569 = vpop.permute.xlu0 %2568
        %2570 = vset.pattern.permute.xlu0 0
        %2571 = vperm.xlu0 %2570, %v2338
        %v2572 = vpop.permute.xlu0 %2571
        %2573 = vset.pattern.permute.xlu0 0
        %2574 = vperm.xlu0 %2573, %v2339
        %v2575 = vpop.permute.xlu0 %2574
        %2576 = vset.pattern.permute.xlu0 0
        %2577 = vperm.xlu0 %2576, %v2340
        %v2578 = vpop.permute.xlu0 %2577
        %2579 = vset.pattern.permute.xlu0 0
        %2580 = vperm.xlu0 %2579, %v2341
        %v2581 = vpop.permute.xlu0 %2580
        %2582 = vset.pattern.permute.xlu0 0
        %2583 = vperm.xlu0 %2582, %v2342
        %v2584 = vpop.permute.xlu0 %2583
        %2585 = vset.pattern.permute.xlu0 0
        %2586 = vperm.xlu0 %2585, %v2343
        %v2587 = vpop.permute.xlu0 %2586
        %2588 = vset.pattern.permute.xlu0 0
        %2589 = vperm.xlu0 %2588, %v2344
        %v2590 = vpop.permute.xlu0 %2589
        %2591 = vset.pattern.permute.xlu0 0
        %2592 = vperm.xlu0 %2591, %v2345
        %v2593 = vpop.permute.xlu0 %2592
        %2594 = vset.pattern.permute.xlu0 0
        %2595 = vperm.xlu0 %2594, %v2346
        %v2596 = vpop.permute.xlu0 %2595
        %2597 = vset.pattern.permute.xlu0 0
        %2598 = vperm.xlu0 %2597, %v2347
        %v2599 = vpop.permute.xlu0 %2598
        %2600 = vset.pattern.permute.xlu0 0
        %2601 = vperm.xlu0 %2600, %v2348
        %v2602 = vpop.permute.xlu0 %2601
        %2603 = vset.pattern.permute.xlu0 0
        %2604 = vperm.xlu0 %2603, %v2349
        %v2605 = vpop.permute.xlu0 %2604
        %2606 = vset.pattern.permute.xlu0 0
        %2607 = vperm.xlu0 %2606, %v2350
        %v2608 = vpop.permute.xlu0 %2607
        %2609 = vset.pattern.permute.xlu0 0
        %2610 = vperm.xlu0 %2609, %v2351
        %v2611 = vpop.permute.xlu0 %2610
        %2612 = vset.pattern.permute.xlu0 0
        %2613 = vperm.xlu0 %2612, %v2352
        %v2614 = vpop.permute.xlu0 %2613
        %2615 = vset.pattern.permute.xlu0 0
        %2616 = vperm.xlu0 %2615, %v2353
        %v2617 = vpop.permute.xlu0 %2616
        %2618 = vset.pattern.permute.xlu0 0
        %2619 = vperm.xlu0 %2618, %v2354
        %v2620 = vpop.permute.xlu0 %2619
        %2621 = vset.pattern.permute.xlu0 0
        %2622 = vperm.xlu0 %2621, %v2355
        %v2623 = vpop.permute.xlu0 %2622
        %2624 = vset.pattern.permute.xlu0 0
        %2625 = vperm.xlu0 %2624, %v2356
        %v2626 = vpop.permute.xlu0 %2625
        %2627 = vset.pattern.permute.xlu0 0
        %2628 = vperm.xlu0 %2627, %v2357
        %v2629 = vpop.permute.xlu0 %2628
        %2630 = vset.pattern.permute.xlu0 0
        %2631 = vperm.xlu0 %2630, %v2358
        %v2632 = vpop.permute.xlu0 %2631
        %2633 = vset.pattern.permute.xlu0 0
        %2634 = vperm.xlu0 %2633, %v2359
        %v2635 = vpop.permute.xlu0 %2634
        %2636 = vset.pattern.permute.xlu0 0
        %2637 = vperm.xlu0 %2636, %v2360
        %v2638 = vpop.permute.xlu0 %2637
        %2639 = vset.pattern.permute.xlu0 0
        %2640 = vperm.xlu0 %2639, %v2361
        %v2641 = vpop.permute.xlu0 %2640
        %2642 = vset.pattern.permute.xlu0 0
        %2643 = vperm.xlu0 %2642, %v2362
        %v2644 = vpop.permute.xlu0 %2643
        %2645 = vset.pattern.permute.xlu0 0
        %2646 = vperm.xlu0 %2645, %v2363
        %v2647 = vpop.permute.xlu0 %2646
        %2648 = vset.pattern.permute.xlu0 0
        %2649 = vperm.xlu0 %2648, %v2364
        %v2650 = vpop.permute.xlu0 %2649
        %2651 = vset.pattern.permute.xlu0 0
        %2652 = vperm.xlu0 %2651, %v2365
        %v2653 = vpop.permute.xlu0 %2652
        %2654 = vset.pattern.permute.xlu0 0
        %2655 = vperm.xlu0 %2654, %v2366
        %v2656 = vpop.permute.xlu0 %2655
        %2657 = vset.pattern.permute.xlu0 0
        %2658 = vperm.xlu0 %2657, %v2367
        %v2659 = vpop.permute.xlu0 %2658
        %2660 = vset.pattern.permute.xlu0 0
        %2661 = vperm.xlu0 %2660, %v2368
        %v2662 = vpop.permute.xlu0 %2661
        %2663 = vset.pattern.permute.xlu0 0
        %2664 = vperm.xlu0 %2663, %v2369
        %v2665 = vpop.permute.xlu0 %2664
        %2666 = vset.pattern.permute.xlu0 0
        %2667 = vperm.xlu0 %2666, %v2370
        %v2668 = vpop.permute.xlu0 %2667
        %2669 = vset.pattern.permute.xlu0 0
        %2670 = vperm.xlu0 %2669, %v2371
        %v2671 = vpop.permute.xlu0 %2670
        %2672 = vset.pattern.permute.xlu0 0
        %2673 = vperm.xlu0 %2672, %v2372
        %v2674 = vpop.permute.xlu0 %2673
        %2675 = vset.pattern.permute.xlu0 0
        %2676 = vperm.xlu0 %2675, %v2373
        %v2677 = vpop.permute.xlu0 %2676
        %2678 = vset.pattern.permute.xlu0 0
        %2679 = vperm.xlu0 %2678, %v2374
        %v2680 = vpop.permute.xlu0 %2679
        %2681 = vset.pattern.permute.xlu0 0
        %2682 = vperm.xlu0 %2681, %v2375
        %v2683 = vpop.permute.xlu0 %2682
        %2684 = vset.pattern.permute.xlu0 0
        %2685 = vperm.xlu0 %2684, %v2376
        %v2686 = vpop.permute.xlu0 %2685
        %2687 = vset.pattern.permute.xlu0 0
        %2688 = vperm.xlu0 %2687, %v2377
        %v2689 = vpop.permute.xlu0 %2688
        %2690 = vset.pattern.permute.xlu0 0
        %2691 = vperm.xlu0 %2690, %v2378
        %v2692 = vpop.permute.xlu0 %2691
        %2693 = vset.pattern.permute.xlu0 0
        %2694 = vperm.xlu0 %2693, %v2379
        %v2695 = vpop.permute.xlu0 %2694
        %2696 = vset.pattern.permute.xlu0 0
        %2697 = vperm.xlu0 %2696, %v2380
        %v2698 = vpop.permute.xlu0 %2697
        %2699 = vset.pattern.permute.xlu0 0
        %2700 = vperm.xlu0 %2699, %v2381
        %v2701 = vpop.permute.xlu0 %2700
        %2702 = vset.pattern.permute.xlu0 0
        %2703 = vperm.xlu0 %2702, %v2382
        %v2704 = vpop.permute.xlu0 %2703
        %2705 = vset.pattern.permute.xlu0 0
        %2706 = vperm.xlu0 %2705, %v2383
        %v2707 = vpop.permute.xlu0 %2706
        %2708 = vset.pattern.permute.xlu0 0
        %2709 = vperm.xlu0 %2708, %v2384
        %v2710 = vpop.permute.xlu0 %2709
        %2711 = vset.pattern.permute.xlu0 0
        %2712 = vperm.xlu0 %2711, %v2385
        %v2713 = vpop.permute.xlu0 %2712
        %2714 = vset.pattern.permute.xlu0 0
        %2715 = vperm.xlu0 %2714, %v2386
        %v2716 = vpop.permute.xlu0 %2715
        %2717 = vset.pattern.permute.xlu0 0
        %2718 = vperm.xlu0 %2717, %v2387
        %v2719 = vpop.permute.xlu0 %2718
        %2720 = vset.pattern.permute.xlu0 0
        %2721 = vperm.xlu0 %2720, %v2388
        %v2722 = vpop.permute.xlu0 %2721
        %2723 = vset.pattern.permute.xlu0 0
        %2724 = vperm.xlu0 %2723, %v2389
        %v2725 = vpop.permute.xlu0 %2724
        %2726 = vset.pattern.permute.xlu0 0
        %2727 = vperm.xlu0 %2726, %v2390
        %v2728 = vpop.permute.xlu0 %2727
        %2729 = vset.pattern.permute.xlu0 0
        %2730 = vperm.xlu0 %2729, %v2391
        %v2731 = vpop.permute.xlu0 %2730
        %2732 = vset.pattern.permute.xlu0 0
        %2733 = vperm.xlu0 %2732, %v2392
        %v2734 = vpop.permute.xlu0 %2733
        %2735 = vset.pattern.permute.xlu0 0
        %2736 = vperm.xlu0 %2735, %v2393
        %v2737 = vpop.permute.xlu0 %2736
        %2738 = vset.pattern.permute.xlu0 0
        %2739 = vperm.xlu0 %2738, %v2394
        %v2740 = vpop.permute.xlu0 %2739
        %2741 = vset.pattern.permute.xlu0 0
        %2742 = vperm.xlu0 %2741, %v2395
        %v2743 = vpop.permute.xlu0 %2742
        %2744 = vset.pattern.permute.xlu0 0
        %2745 = vperm.xlu0 %2744, %v2396
        %v2746 = vpop.permute.xlu0 %2745
        %2747 = vset.pattern.permute.xlu0 0
        %2748 = vperm.xlu0 %2747, %v2397
        %v2749 = vpop.permute.xlu0 %2748
        %2750 = vset.pattern.permute.xlu0 0
        %2751 = vperm.xlu0 %2750, %v2398
        %v2752 = vpop.permute.xlu0 %2751
        %2753 = vset.pattern.permute.xlu0 0
        %2754 = vperm.xlu0 %2753, %v2399
        %v2755 = vpop.permute.xlu0 %2754
        %2756 = vset.pattern.permute.xlu0 0
        %2757 = vperm.xlu0 %2756, %v2400
        %v2758 = vpop.permute.xlu0 %2757
        %2759 = vset.pattern.permute.xlu0 0
        %2760 = vperm.xlu0 %2759, %v2401
        %v2761 = vpop.permute.xlu0 %2760
        %2762 = vset.pattern.permute.xlu0 0
        %2763 = vperm.xlu0 %2762, %v2402
        %v2764 = vpop.permute.xlu0 %2763
        %2765 = vset.pattern.permute.xlu0 0
        %2766 = vperm.xlu0 %2765, %v2403
        %v2767 = vpop.permute.xlu0 %2766
        %2768 = vset.pattern.permute.xlu0 0
        %2769 = vperm.xlu0 %2768, %v2404
        %v2770 = vpop.permute.xlu0 %2769
        %2771 = vset.pattern.permute.xlu0 0
        %2772 = vperm.xlu0 %2771, %v2405
        %v2773 = vpop.permute.xlu0 %2772
        %2774 = vset.pattern.permute.xlu0 0
        %2775 = vperm.xlu0 %2774, %v2406
        %v2776 = vpop.permute.xlu0 %2775
        %2777 = vset.pattern.permute.xlu0 0
        %2778 = vperm.xlu0 %2777, %v2407
        %v2779 = vpop.permute.xlu0 %2778
        %2780 = vset.pattern.permute.xlu0 0
        %2781 = vperm.xlu0 %2780, %v2408
        %v2782 = vpop.permute.xlu0 %2781
        %2783 = vset.pattern.permute.xlu0 0
        %2784 = vperm.xlu0 %2783, %v2409
        %v2785 = vpop.permute.xlu0 %2784
        %2786 = vset.pattern.permute.xlu0 0
        %2787 = vperm.xlu0 %2786, %v2410
        %v2788 = vpop.permute.xlu0 %2787
        %2789 = vset.pattern.permute.xlu0 0
        %2790 = vperm.xlu0 %2789, %v2411
        %v2791 = vpop.permute.xlu0 %2790
        %2792 = vset.pattern.permute.xlu0 0
        %2793 = vperm.xlu0 %2792, %v2412
        %v2794 = vpop.permute.xlu0 %2793
        %2795 = vset.pattern.permute.xlu0 0
        %2796 = vperm.xlu0 %2795, %v2413
        %v2797 = vpop.permute.xlu0 %2796
        %2798 = vset.pattern.permute.xlu0 0
        %2799 = vperm.xlu0 %2798, %v2414
        %v2800 = vpop.permute.xlu0 %2799
        %2801 = vset.pattern.permute.xlu0 0
        %2802 = vperm.xlu0 %2801, %v2415
        %v2803 = vpop.permute.xlu0 %2802
        %2804 = vset.pattern.permute.xlu0 0
        %2805 = vperm.xlu0 %2804, %v2416
        %v2806 = vpop.permute.xlu0 %2805
        %2807 = vset.pattern.permute.xlu0 0
        %2808 = vperm.xlu0 %2807, %v2417
        %v2809 = vpop.permute.xlu0 %2808
        %2810 = vset.pattern.permute.xlu0 0
        %2811 = vperm.xlu0 %2810, %v2418
        %v2812 = vpop.permute.xlu0 %2811
        %2813 = vset.pattern.permute.xlu0 0
        %2814 = vperm.xlu0 %2813, %v2419
        %v2815 = vpop.permute.xlu0 %2814
        %2816 = vset.pattern.permute.xlu0 0
        %2817 = vperm.xlu0 %2816, %v2420
        %v2818 = vpop.permute.xlu0 %2817
        %2819 = vset.pattern.permute.xlu0 0
        %2820 = vperm.xlu0 %2819, %v2421
        %v2821 = vpop.permute.xlu0 %2820
        %2822 = vset.pattern.permute.xlu0 0
        %2823 = vperm.xlu0 %2822, %v2422
        %v2824 = vpop.permute.xlu0 %2823
        %2825 = vset.pattern.permute.xlu0 0
        %2826 = vperm.xlu0 %2825, %v2423
        %v2827 = vpop.permute.xlu0 %2826
        %2828 = vset.pattern.permute.xlu0 0
        %2829 = vperm.xlu0 %2828, %v2424
        %v2830 = vpop.permute.xlu0 %2829
        %2831 = vset.pattern.permute.xlu0 0
        %2832 = vperm.xlu0 %2831, %v2425
        %v2833 = vpop.permute.xlu0 %2832
        %2834 = vset.pattern.permute.xlu0 0
        %2835 = vperm.xlu0 %2834, %v2426
        %v2836 = vpop.permute.xlu0 %2835
        %2837 = vset.pattern.permute.xlu0 0
        %2838 = vperm.xlu0 %2837, %v2427
        %v2839 = vpop.permute.xlu0 %2838
        %2840 = vset.pattern.permute.xlu0 0
        %2841 = vperm.xlu0 %2840, %v2428
        %v2842 = vpop.permute.xlu0 %2841
        %2843 = vset.pattern.permute.xlu0 0
        %2844 = vperm.xlu0 %2843, %v2429
        %v2845 = vpop.permute.xlu0 %2844
        %2846 = vset.pattern.permute.xlu0 0
        %2847 = vperm.xlu0 %2846, %v2430
        %v2848 = vpop.permute.xlu0 %2847
        %2849 = vset.pattern.permute.xlu0 0
        %2850 = vperm.xlu0 %2849, %v2431
        %v2851 = vpop.permute.xlu0 %2850
        %2852 = vset.pattern.permute.xlu0 0
        %2853 = vperm.xlu0 %2852, %v2432
        %v2854 = vpop.permute.xlu0 %2853
        %2855 = vset.pattern.permute.xlu0 0
        %2856 = vperm.xlu0 %2855, %v2433
        %v2857 = vpop.permute.xlu0 %2856
        %2858 = vset.pattern.permute.xlu0 0
        %2859 = vperm.xlu0 %2858, %v2434
        %v2860 = vpop.permute.xlu0 %2859
        %2861 = vset.pattern.permute.xlu0 0
        %2862 = vperm.xlu0 %2861, %v2435
        %v2863 = vpop.permute.xlu0 %2862
        %2864 = vset.pattern.permute.xlu0 0
        %2865 = vperm.xlu0 %2864, %v2436
        %v2866 = vpop.permute.xlu0 %2865
        %2867 = vset.pattern.permute.xlu0 0
        %2868 = vperm.xlu0 %2867, %v2437
        %v2869 = vpop.permute.xlu0 %2868
        %2870 = vset.pattern.permute.xlu0 0
        %2871 = vperm.xlu0 %2870, %v2438
        %v2872 = vpop.permute.xlu0 %2871
        %2873 = vset.pattern.permute.xlu0 0
        %2874 = vperm.xlu0 %2873, %v2439
        %v2875 = vpop.permute.xlu0 %2874
        %2876 = vset.pattern.permute.xlu0 0
        %2877 = vperm.xlu0 %2876, %v2440
        %v2878 = vpop.permute.xlu0 %2877
        %2879 = vset.pattern.permute.xlu0 0
        %2880 = vperm.xlu0 %2879, %v2441
        %v2881 = vpop.permute.xlu0 %2880
        %2882 = vset.pattern.permute.xlu0 0
        %2883 = vperm.xlu0 %2882, %v2442
        %v2884 = vpop.permute.xlu0 %2883
        %2885 = vset.pattern.permute.xlu0 0
        %2886 = vperm.xlu0 %2885, %v2443
        %v2887 = vpop.permute.xlu0 %2886
        %2888 = vset.pattern.permute.xlu0 0
        %2889 = vperm.xlu0 %2888, %v2444
        %v2890 = vpop.permute.xlu0 %2889
        %2891 = vset.pattern.permute.xlu0 0
        %2892 = vperm.xlu0 %2891, %v2445
        %v2893 = vpop.permute.xlu0 %2892
        %2894 = vset.pattern.permute.xlu0 0
        %2895 = vperm.xlu0 %2894, %v2446
        %v2896 = vpop.permute.xlu0 %2895
        %2897 = vset.pattern.permute.xlu0 0
        %2898 = vperm.xlu0 %2897, %v2447
        %v2899 = vpop.permute.xlu0 %2898
        %2900 = vset.pattern.permute.xlu0 0
        %2901 = vperm.xlu0 %2900, %v2448
        %v2902 = vpop.permute.xlu0 %2901
        %2903 = vset.pattern.permute.xlu0 0
        %2904 = vperm.xlu0 %2903, %v2449
        %v2905 = vpop.permute.xlu0 %2904
        %2906 = vset.pattern.permute.xlu0 0
        %2907 = vperm.xlu0 %2906, %v2450
        %v2908 = vpop.permute.xlu0 %2907
        %2909 = vset.pattern.permute.xlu0 0
        %2910 = vperm.xlu0 %2909, %v2451
        %v2911 = vpop.permute.xlu0 %2910
        %2912 = vset.pattern.permute.xlu0 0
        %2913 = vperm.xlu0 %2912, %v2452
        %v2914 = vpop.permute.xlu0 %2913
        %2915 = vset.pattern.permute.xlu0 0
        %2916 = vperm.xlu0 %2915, %v2453
        %v2917 = vpop.permute.xlu0 %2916
        %2918 = vset.pattern.permute.xlu0 0
        %2919 = vperm.xlu0 %2918, %v2454
        %v2920 = vpop.permute.xlu0 %2919
        %2921 = vset.pattern.permute.xlu0 0
        %2922 = vperm.xlu0 %2921, %v2455
        %v2923 = vpop.permute.xlu0 %2922
        %2924 = vset.pattern.permute.xlu0 0
        %2925 = vperm.xlu0 %2924, %v2456
        %v2926 = vpop.permute.xlu0 %2925
        %2927 = vset.pattern.permute.xlu0 0
        %2928 = vperm.xlu0 %2927, %v2457
        %v2929 = vpop.permute.xlu0 %2928
        %2930 = vset.pattern.permute.xlu0 0
        %2931 = vperm.xlu0 %2930, %v2458
        %v2932 = vpop.permute.xlu0 %2931
        %2933 = vset.pattern.permute.xlu0 0
        %2934 = vperm.xlu0 %2933, %v2459
        %v2935 = vpop.permute.xlu0 %2934
        %2936 = vset.pattern.permute.xlu0 0
        %2937 = vperm.xlu0 %2936, %v2460
        %v2938 = vpop.permute.xlu0 %2937
        %2939 = vset.pattern.permute.xlu0 0
        %2940 = vperm.xlu0 %2939, %v2461
        %v2941 = vpop.permute.xlu0 %2940
        %2942 = vset.pattern.permute.xlu0 0
        %2943 = vperm.xlu0 %2942, %v2462
        %v2944 = vpop.permute.xlu0 %2943
        %2945 = vset.pattern.permute.xlu0 0
        %2946 = vperm.xlu0 %2945, %v2463
        %v2947 = vpop.permute.xlu0 %2946
        %2948 = vset.pattern.permute.xlu0 0
        %2949 = vperm.xlu0 %2948, %v2464
        %v2950 = vpop.permute.xlu0 %2949
        %2951 = vset.pattern.permute.xlu0 0
        %2952 = vperm.xlu0 %2951, %v2465
        %v2953 = vpop.permute.xlu0 %2952
        %2954 = vset.pattern.permute.xlu0 0
        %2955 = vperm.xlu0 %2954, %v2466
        %v2956 = vpop.permute.xlu0 %2955
        %2957 = vset.pattern.permute.xlu0 0
        %2958 = vperm.xlu0 %2957, %v2467
        %v2959 = vpop.permute.xlu0 %2958
        %2960 = vset.pattern.permute.xlu0 0
        %2961 = vperm.xlu0 %2960, %v2468
        %v2962 = vpop.permute.xlu0 %2961
        %2963 = vset.pattern.permute.xlu0 0
        %2964 = vperm.xlu0 %2963, %v2469
        %v2965 = vpop.permute.xlu0 %2964
        %2966 = vset.pattern.permute.xlu0 0
        %2967 = vperm.xlu0 %2966, %v2470
        %v2968 = vpop.permute.xlu0 %2967
        %2969 = vset.pattern.permute.xlu0 0
        %2970 = vperm.xlu0 %2969, %v2471
        %v2971 = vpop.permute.xlu0 %2970
        %2972 = vset.pattern.permute.xlu0 0
        %2973 = vperm.xlu0 %2972, %v2472
        %v2974 = vpop.permute.xlu0 %2973
        %2975 = vset.pattern.permute.xlu0 0
        %2976 = vperm.xlu0 %2975, %v2473
        %v2977 = vpop.permute.xlu0 %2976
        %2978 = vset.pattern.permute.xlu0 0
        %2979 = vperm.xlu0 %2978, %v2474
        %v2980 = vpop.permute.xlu0 %2979
        %2981 = vset.pattern.permute.xlu0 0
        %2982 = vperm.xlu0 %2981, %v2475
        %v2983 = vpop.permute.xlu0 %2982
        %2984 = vset.pattern.permute.xlu0 0
        %2985 = vperm.xlu0 %2984, %v2476
        %v2986 = vpop.permute.xlu0 %2985
        %2987 = vset.pattern.permute.xlu0 0
        %2988 = vperm.xlu0 %2987, %v2477
        %v2989 = vpop.permute.xlu0 %2988
        %2990 = vset.pattern.permute.xlu0 0
        %2991 = vperm.xlu0 %2990, %v2478
        %v2992 = vpop.permute.xlu0 %2991
        %2993 = vset.pattern.permute.xlu0 0
        %2994 = vperm.xlu0 %2993, %v2479
        %v2995 = vpop.permute.xlu0 %2994
        %2996 = vset.pattern.permute.xlu0 0
        %2997 = vperm.xlu0 %2996, %v2480
        %v2998 = vpop.permute.xlu0 %2997
        %2999 = vset.pattern.permute.xlu0 0
        %3000 = vperm.xlu0 %2999, %v2481
        %v3001 = vpop.permute.xlu0 %3000
        %3002 = vset.pattern.permute.xlu0 0
        %3003 = vperm.xlu0 %3002, %v2482
        %v3004 = vpop.permute.xlu0 %3003
        %3005 = vset.pattern.permute.xlu0 0
        %3006 = vperm.xlu0 %3005, %v2483
        %v3007 = vpop.permute.xlu0 %3006
        %3008 = vset.pattern.permute.xlu0 0
        %3009 = vperm.xlu0 %3008, %v2484
        %v3010 = vpop.permute.xlu0 %3009
        %3011 = vset.pattern.permute.xlu0 0
        %3012 = vperm.xlu0 %3011, %v2485
        %v3013 = vpop.permute.xlu0 %3012
        %3014 = vset.pattern.permute.xlu0 0
        %3015 = vperm.xlu0 %3014, %v2486
        %v3016 = vpop.permute.xlu0 %3015
        %3017 = vset.pattern.permute.xlu0 0
        %3018 = vperm.xlu0 %3017, %v2487
        %v3019 = vpop.permute.xlu0 %3018
        %3020 = vset.pattern.permute.xlu0 0
        %3021 = vperm.xlu0 %3020, %v2488
        %v3022 = vpop.permute.xlu0 %3021
        %3023 = vset.pattern.permute.xlu0 0
        %3024 = vperm.xlu0 %3023, %v2489
        %v3025 = vpop.permute.xlu0 %3024
        %3026 = vset.pattern.permute.xlu0 0
        %3027 = vperm.xlu0 %3026, %v2490
        %v3028 = vpop.permute.xlu0 %3027
        %3029 = vset.pattern.permute.xlu0 0
        %3030 = vperm.xlu0 %3029, %v2491
        %v3031 = vpop.permute.xlu0 %3030
        %3032 = vset.pattern.permute.xlu0 0
        %3033 = vperm.xlu0 %3032, %v2492
        %v3034 = vpop.permute.xlu0 %3033
        %3035 = vset.pattern.permute.xlu0 0
        %3036 = vperm.xlu0 %3035, %v2493
        %v3037 = vpop.permute.xlu0 %3036
        %3038 = vset.pattern.permute.xlu0 0
        %3039 = vperm.xlu0 %3038, %v2494
        %v3040 = vpop.permute.xlu0 %3039
        %3041 = vset.pattern.permute.xlu0 0
        %3042 = vperm.xlu0 %3041, %v2495
        %v3043 = vpop.permute.xlu0 %3042
        %3044 = vset.pattern.permute.xlu0 0
        %3045 = vperm.xlu0 %3044, %v2496
        %v3046 = vpop.permute.xlu0 %3045
        %3047 = vset.pattern.permute.xlu0 0
        %3048 = vperm.xlu0 %3047, %v2497
        %v3049 = vpop.permute.xlu0 %3048
        %3050 = vset.pattern.permute.xlu0 0
        %3051 = vperm.xlu0 %3050, %v2498
        %v3052 = vpop.permute.xlu0 %3051
        %3053 = vset.pattern.permute.xlu0 0
        %3054 = vperm.xlu0 %3053, %v2499
        %v3055 = vpop.permute.xlu0 %3054
        %3056 = vset.pattern.permute.xlu0 0
        %3057 = vperm.xlu0 %3056, %v2500
        %v3058 = vpop.permute.xlu0 %3057
        %3059 = vset.pattern.permute.xlu0 0
        %3060 = vperm.xlu0 %3059, %v2501
        %v3061 = vpop.permute.xlu0 %3060
        %3062 = vset.pattern.permute.xlu0 0
        %3063 = vperm.xlu0 %3062, %v2502
        %v3064 = vpop.permute.xlu0 %3063
        %3065 = vset.pattern.permute.xlu0 0
        %3066 = vperm.xlu0 %3065, %v2503
        %v3067 = vpop.permute.xlu0 %3066
        %3068 = vset.pattern.permute.xlu0 0
        %3069 = vperm.xlu0 %3068, %v2504
        %v3070 = vpop.permute.xlu0 %3069
        %3071 = vset.pattern.permute.xlu0 0
        %3072 = vperm.xlu0 %3071, %v2505
        %v3073 = vpop.permute.xlu0 %3072
        %3074 = vset.pattern.permute.xlu0 0
        %3075 = vperm.xlu0 %3074, %v2506
        %v3076 = vpop.permute.xlu0 %3075
        %3077 = vset.pattern.permute.xlu0 0
        %3078 = vperm.xlu0 %3077, %v2507
        %v3079 = vpop.permute.xlu0 %3078
        %3080 = vset.pattern.permute.xlu0 0
        %3081 = vperm.xlu0 %3080, %v2508
        %v3082 = vpop.permute.xlu0 %3081
        %3083 = vset.pattern.permute.xlu0 0
        %3084 = vperm.xlu0 %3083, %v2509
        %v3085 = vpop.permute.xlu0 %3084
        %3086 = vset.pattern.permute.xlu0 0
        %3087 = vperm.xlu0 %3086, %v2510
        %v3088 = vpop.permute.xlu0 %3087
        %3089 = vset.pattern.permute.xlu0 0
        %3090 = vperm.xlu0 %3089, %v2511
        %v3091 = vpop.permute.xlu0 %3090
        %3092 = vset.pattern.permute.xlu0 0
        %3093 = vperm.xlu0 %3092, %v2512
        %v3094 = vpop.permute.xlu0 %3093
        %3095 = vset.pattern.permute.xlu0 0
        %3096 = vperm.xlu0 %3095, %v2513
        %v3097 = vpop.permute.xlu0 %3096
        %3098 = vset.pattern.permute.xlu0 0
        %3099 = vperm.xlu0 %3098, %v2514
        %v3100 = vpop.permute.xlu0 %3099
        %3101 = vset.pattern.permute.xlu0 0
        %3102 = vperm.xlu0 %3101, %v2515
        %v3103 = vpop.permute.xlu0 %3102
        %3104 = vset.pattern.permute.xlu0 0
        %3105 = vperm.xlu0 %3104, %v2516
        %v3106 = vpop.permute.xlu0 %3105
        %3107 = vset.pattern.permute.xlu0 0
        %3108 = vperm.xlu0 %3107, %v2517
        %v3109 = vpop.permute.xlu0 %3108
        %3110 = vset.pattern.permute.xlu0 0
        %3111 = vperm.xlu0 %3110, %v2518
        %v3112 = vpop.permute.xlu0 %3111
        %3113 = vset.pattern.permute.xlu0 0
        %3114 = vperm.xlu0 %3113, %v2519
        %v3115 = vpop.permute.xlu0 %3114
        %3116 = vset.pattern.permute.xlu0 0
        %3117 = vperm.xlu0 %3116, %v2520
        %v3118 = vpop.permute.xlu0 %3117
        %3119 = vset.pattern.permute.xlu0 0
        %3120 = vperm.xlu0 %3119, %v2521
        %v3121 = vpop.permute.xlu0 %3120
        %3122 = vset.pattern.permute.xlu0 0
        %3123 = vperm.xlu0 %3122, %v2522
        %v3124 = vpop.permute.xlu0 %3123
        %3125 = vset.pattern.permute.xlu0 0
        %3126 = vperm.xlu0 %3125, %v2523
        %v3127 = vpop.permute.xlu0 %3126
        %3128 = vset.pattern.permute.xlu0 0
        %3129 = vperm.xlu0 %3128, %v2524
        %v3130 = vpop.permute.xlu0 %3129
        %3131 = vset.pattern.permute.xlu0 0
        %3132 = vperm.xlu0 %3131, %v2525
        %v3133 = vpop.permute.xlu0 %3132
        %3134 = vset.pattern.permute.xlu0 0
        %3135 = vperm.xlu0 %3134, %v2526
        %v3136 = vpop.permute.xlu0 %3135
        %3137 = vset.pattern.permute.xlu0 0
        %3138 = vperm.xlu0 %3137, %v2527
        %v3139 = vpop.permute.xlu0 %3138
        %3140 = vset.pattern.permute.xlu0 0
        %3141 = vperm.xlu0 %3140, %v2528
        %v3142 = vpop.permute.xlu0 %3141
        %3143 = vset.pattern.permute.xlu0 0
        %3144 = vperm.xlu0 %3143, %v2529
        %v3145 = vpop.permute.xlu0 %3144
        %3146 = vset.pattern.permute.xlu0 0
        %3147 = vperm.xlu0 %3146, %v2530
        %v3148 = vpop.permute.xlu0 %3147
        %3149 = vset.pattern.permute.xlu0 0
        %3150 = vperm.xlu0 %3149, %v2531
        %v3151 = vpop.permute.xlu0 %3150
        %3152 = vset.pattern.permute.xlu0 0
        %3153 = vperm.xlu0 %3152, %v2532
        %v3154 = vpop.permute.xlu0 %3153
        %3155 = vset.pattern.permute.xlu0 0
        %3156 = vperm.xlu0 %3155, %v2533
        %v3157 = vpop.permute.xlu0 %3156
        %3158 = vset.pattern.permute.xlu0 0
        %3159 = vperm.xlu0 %3158, %v2534
        %v3160 = vpop.permute.xlu0 %3159
        %3161 = vset.pattern.permute.xlu0 0
        %3162 = vperm.xlu0 %3161, %v2535
        %v3163 = vpop.permute.xlu0 %3162
        %3164 = vset.pattern.permute.xlu0 0
        %3165 = vperm.xlu0 %3164, %v2536
        %v3166 = vpop.permute.xlu0 %3165
        %3167 = vset.pattern.permute.xlu0 0
        %3168 = vperm.xlu0 %3167, %v2537
        %v3169 = vpop.permute.xlu0 %3168
        %3170 = vset.pattern.permute.xlu0 0
        %3171 = vperm.xlu0 %3170, %v2538
        %v3172 = vpop.permute.xlu0 %3171
        %3173 = vset.pattern.permute.xlu0 0
        %3174 = vperm.xlu0 %3173, %v2539
        %v3175 = vpop.permute.xlu0 %3174
        %3176 = vset.pattern.permute.xlu0 0
        %3177 = vperm.xlu0 %3176, %v2540
        %v3178 = vpop.permute.xlu0 %3177
        %3179 = vset.pattern.permute.xlu0 0
        %3180 = vperm.xlu0 %3179, %v2541
        %v3181 = vpop.permute.xlu0 %3180
        %3182 = vset.pattern.permute.xlu0 0
        %3183 = vperm.xlu0 %3182, %v2542
        %v3184 = vpop.permute.xlu0 %3183
        %3185 = vset.pattern.permute.xlu0 0
        %3186 = vperm.xlu0 %3185, %v2543
        %v3187 = vpop.permute.xlu0 %3186
        %3188 = vset.pattern.permute.xlu0 0
        %3189 = vperm.xlu0 %3188, %v2544
        %v3190 = vpop.permute.xlu0 %3189
        %3191 = vset.pattern.permute.xlu0 0
        %3192 = vperm.xlu0 %3191, %v2545
        %v3193 = vpop.permute.xlu0 %3192
        %3194 = vset.pattern.permute.xlu0 0
        %3195 = vperm.xlu0 %3194, %v2546
        %v3196 = vpop.permute.xlu0 %3195
        %3197 = vset.pattern.permute.xlu0 0
        %3198 = vperm.xlu0 %3197, %v2547
        %v3199 = vpop.permute.xlu0 %3198
        %3200 = vset.pattern.permute.xlu0 0
        %3201 = vperm.xlu0 %3200, %v2548
        %v3202 = vpop.permute.xlu0 %3201
        %3203 = vset.pattern.permute.xlu0 0
        %3204 = vperm.xlu0 %3203, %v2549
        %v3205 = vpop.permute.xlu0 %3204
        %3206 = vset.pattern.permute.xlu0 0
        %3207 = vperm.xlu0 %3206, %v2550
        %v3208 = vpop.permute.xlu0 %3207
        %3209 = vset.pattern.permute.xlu0 0
        %3210 = vperm.xlu0 %3209, %v2551
        %v3211 = vpop.permute.xlu0 %3210
        %3212 = vset.pattern.permute.xlu0 0
        %3213 = vperm.xlu0 %3212, %v2552
        %v3214 = vpop.permute.xlu0 %3213
        %3215 = vset.pattern.permute.xlu0 0
        %3216 = vperm.xlu0 %3215, %v2553
        %v3217 = vpop.permute.xlu0 %3216
        %3218 = vset.pattern.permute.xlu0 0
        %3219 = vperm.xlu0 %3218, %v2554
        %v3220 = vpop.permute.xlu0 %3219
        %3221 = vset.pattern.permute.xlu0 0
        %3222 = vperm.xlu0 %3221, %v2555
        %v3223 = vpop.permute.xlu0 %3222
        %3224 = vset.pattern.permute.xlu0 0
        %3225 = vperm.xlu0 %3224, %v2556
        %v3226 = vpop.permute.xlu0 %3225
        %3227 = vset.pattern.permute.xlu0 0
        %3228 = vperm.xlu0 %3227, %v2557
        %v3229 = vpop.permute.xlu0 %3228
        %vm3230 = vcmp.eq.s32.totalorder %v2560, 1
        %vm3231 = vcmp.eq.s32.totalorder %v2563, 1
        %vm3232 = vcmp.eq.s32.totalorder %v2566, 1
        %vm3233 = vcmp.eq.s32.totalorder %v2569, 1
        %vm3234 = vcmp.eq.s32.totalorder %v2572, 1
        %vm3235 = vcmp.eq.s32.totalorder %v2575, 1
        %vm3236 = vcmp.eq.s32.totalorder %v2578, 1
        %vm3237 = vcmp.eq.s32.totalorder %v2581, 1
        %vm3238 = vcmp.eq.s32.totalorder %v2584, 1
        %vm3239 = vcmp.eq.s32.totalorder %v2587, 1
        %vm3240 = vcmp.eq.s32.totalorder %v2590, 1
        %vm3241 = vcmp.eq.s32.totalorder %v2593, 1
        %vm3242 = vcmp.eq.s32.totalorder %v2596, 1
        %vm3243 = vcmp.eq.s32.totalorder %v2599, 1
        %vm3244 = vcmp.eq.s32.totalorder %v2602, 1
        %vm3245 = vcmp.eq.s32.totalorder %v2605, 1
        %vm3246 = vcmp.eq.s32.totalorder %v2608, 1
        %vm3247 = vcmp.eq.s32.totalorder %v2611, 1
        %vm3248 = vcmp.eq.s32.totalorder %v2614, 1
        %vm3249 = vcmp.eq.s32.totalorder %v2617, 1
        %vm3250 = vcmp.eq.s32.totalorder %v2620, 1
        %vm3251 = vcmp.eq.s32.totalorder %v2623, 1
        %vm3252 = vcmp.eq.s32.totalorder %v2626, 1
        %vm3253 = vcmp.eq.s32.totalorder %v2629, 1
        %vm3254 = vcmp.eq.s32.totalorder %v2632, 1
        %vm3255 = vcmp.eq.s32.totalorder %v2635, 1
        %vm3256 = vcmp.eq.s32.totalorder %v2638, 1
        %vm3257 = vcmp.eq.s32.totalorder %v2641, 1
        %vm3258 = vcmp.eq.s32.totalorder %v2644, 1
        %vm3259 = vcmp.eq.s32.totalorder %v2647, 1
        %vm3260 = vcmp.eq.s32.totalorder %v2650, 1
        %vm3261 = vcmp.eq.s32.totalorder %v2653, 1
        %vm3262 = vcmp.eq.s32.totalorder %v2656, 1
        %vm3263 = vcmp.eq.s32.totalorder %v2659, 1
        %vm3264 = vcmp.eq.s32.totalorder %v2662, 1
        %vm3265 = vcmp.eq.s32.totalorder %v2665, 1
        %vm3266 = vcmp.eq.s32.totalorder %v2668, 1
        %vm3267 = vcmp.eq.s32.totalorder %v2671, 1
        %vm3268 = vcmp.eq.s32.totalorder %v2674, 1
        %vm3269 = vcmp.eq.s32.totalorder %v2677, 1
        %vm3270 = vcmp.eq.s32.totalorder %v2680, 1
        %vm3271 = vcmp.eq.s32.totalorder %v2683, 1
        %vm3272 = vcmp.eq.s32.totalorder %v2686, 1
        %vm3273 = vcmp.eq.s32.totalorder %v2689, 1
        %vm3274 = vcmp.eq.s32.totalorder %v2692, 1
        %vm3275 = vcmp.eq.s32.totalorder %v2695, 1
        %vm3276 = vcmp.eq.s32.totalorder %v2698, 1
        %vm3277 = vcmp.eq.s32.totalorder %v2701, 1
        %vm3278 = vcmp.eq.s32.totalorder %v2704, 1
        %vm3279 = vcmp.eq.s32.totalorder %v2707, 1
        %vm3280 = vcmp.eq.s32.totalorder %v2710, 1
        %vm3281 = vcmp.eq.s32.totalorder %v2713, 1
        %vm3282 = vcmp.eq.s32.totalorder %v2716, 1
        %vm3283 = vcmp.eq.s32.totalorder %v2719, 1
        %vm3284 = vcmp.eq.s32.totalorder %v2722, 1
        %vm3285 = vcmp.eq.s32.totalorder %v2725, 1
        %vm3286 = vcmp.eq.s32.totalorder %v2728, 1
        %vm3287 = vcmp.eq.s32.totalorder %v2731, 1
        %vm3288 = vcmp.eq.s32.totalorder %v2734, 1
        %vm3289 = vcmp.eq.s32.totalorder %v2737, 1
        %vm3290 = vcmp.eq.s32.totalorder %v2740, 1
        %vm3291 = vcmp.eq.s32.totalorder %v2743, 1
        %vm3292 = vcmp.eq.s32.totalorder %v2746, 1
        %vm3293 = vcmp.eq.s32.totalorder %v2749, 1
        %vm3294 = vcmp.eq.s32.totalorder %v2752, 1
        %vm3295 = vcmp.eq.s32.totalorder %v2755, 1
        %vm3296 = vcmp.eq.s32.totalorder %v2758, 1
        %vm3297 = vcmp.eq.s32.totalorder %v2761, 1
        %vm3298 = vcmp.eq.s32.totalorder %v2764, 1
        %vm3299 = vcmp.eq.s32.totalorder %v2767, 1
        %vm3300 = vcmp.eq.s32.totalorder %v2770, 1
        %vm3301 = vcmp.eq.s32.totalorder %v2773, 1
        %vm3302 = vcmp.eq.s32.totalorder %v2776, 1
        %vm3303 = vcmp.eq.s32.totalorder %v2779, 1
        %vm3304 = vcmp.eq.s32.totalorder %v2782, 1
        %vm3305 = vcmp.eq.s32.totalorder %v2785, 1
        %vm3306 = vcmp.eq.s32.totalorder %v2788, 1
        %vm3307 = vcmp.eq.s32.totalorder %v2791, 1
        %vm3308 = vcmp.eq.s32.totalorder %v2794, 1
        %vm3309 = vcmp.eq.s32.totalorder %v2797, 1
        %vm3310 = vcmp.eq.s32.totalorder %v2800, 1
        %vm3311 = vcmp.eq.s32.totalorder %v2803, 1
        %vm3312 = vcmp.eq.s32.totalorder %v2806, 1
        %vm3313 = vcmp.eq.s32.totalorder %v2809, 1
        %vm3314 = vcmp.eq.s32.totalorder %v2812, 1
        %vm3315 = vcmp.eq.s32.totalorder %v2815, 1
        %vm3316 = vcmp.eq.s32.totalorder %v2818, 1
        %vm3317 = vcmp.eq.s32.totalorder %v2821, 1
        %vm3318 = vcmp.eq.s32.totalorder %v2824, 1
        %vm3319 = vcmp.eq.s32.totalorder %v2827, 1
        %vm3320 = vcmp.eq.s32.totalorder %v2830, 1
        %vm3321 = vcmp.eq.s32.totalorder %v2833, 1
        %vm3322 = vcmp.eq.s32.totalorder %v2836, 1
        %vm3323 = vcmp.eq.s32.totalorder %v2839, 1
        %vm3324 = vcmp.eq.s32.totalorder %v2842, 1
        %vm3325 = vcmp.eq.s32.totalorder %v2845, 1
        %vm3326 = vcmp.eq.s32.totalorder %v2848, 1
        %vm3327 = vcmp.eq.s32.totalorder %v2851, 1
        %vm3328 = vcmp.eq.s32.totalorder %v2854, 1
        %vm3329 = vcmp.eq.s32.totalorder %v2857, 1
        %vm3330 = vcmp.eq.s32.totalorder %v2860, 1
        %vm3331 = vcmp.eq.s32.totalorder %v2863, 1
        %vm3332 = vcmp.eq.s32.totalorder %v2866, 1
        %vm3333 = vcmp.eq.s32.totalorder %v2869, 1
        %vm3334 = vcmp.eq.s32.totalorder %v2872, 1
        %vm3335 = vcmp.eq.s32.totalorder %v2875, 1
        %vm3336 = vcmp.eq.s32.totalorder %v2878, 1
        %vm3337 = vcmp.eq.s32.totalorder %v2881, 1
        %vm3338 = vcmp.eq.s32.totalorder %v2884, 1
        %vm3339 = vcmp.eq.s32.totalorder %v2887, 1
        %vm3340 = vcmp.eq.s32.totalorder %v2890, 1
        %vm3341 = vcmp.eq.s32.totalorder %v2893, 1
        %vm3342 = vcmp.eq.s32.totalorder %v2896, 1
        %vm3343 = vcmp.eq.s32.totalorder %v2899, 1
        %vm3344 = vcmp.eq.s32.totalorder %v2902, 1
        %vm3345 = vcmp.eq.s32.totalorder %v2905, 1
        %vm3346 = vcmp.eq.s32.totalorder %v2908, 1
        %vm3347 = vcmp.eq.s32.totalorder %v2911, 1
        %vm3348 = vcmp.eq.s32.totalorder %v2914, 1
        %vm3349 = vcmp.eq.s32.totalorder %v2917, 1
        %vm3350 = vcmp.eq.s32.totalorder %v2920, 1
        %vm3351 = vcmp.eq.s32.totalorder %v2923, 1
        %vm3352 = vcmp.eq.s32.totalorder %v2926, 1
        %vm3353 = vcmp.eq.s32.totalorder %v2929, 1
        %vm3354 = vcmp.eq.s32.totalorder %v2932, 1
        %vm3355 = vcmp.eq.s32.totalorder %v2935, 1
        %vm3356 = vcmp.eq.s32.totalorder %v2938, 1
        %vm3357 = vcmp.eq.s32.totalorder %v2941, 1
        %vm3358 = vcmp.eq.s32.totalorder %v2944, 1
        %vm3359 = vcmp.eq.s32.totalorder %v2947, 1
        %vm3360 = vcmp.eq.s32.totalorder %v2950, 1
        %vm3361 = vcmp.eq.s32.totalorder %v2953, 1
        %vm3362 = vcmp.eq.s32.totalorder %v2956, 1
        %vm3363 = vcmp.eq.s32.totalorder %v2959, 1
        %vm3364 = vcmp.eq.s32.totalorder %v2962, 1
        %vm3365 = vcmp.eq.s32.totalorder %v2965, 1
        %vm3366 = vcmp.eq.s32.totalorder %v2968, 1
        %vm3367 = vcmp.eq.s32.totalorder %v2971, 1
        %vm3368 = vcmp.eq.s32.totalorder %v2974, 1
        %vm3369 = vcmp.eq.s32.totalorder %v2977, 1
        %vm3370 = vcmp.eq.s32.totalorder %v2980, 1
        %vm3371 = vcmp.eq.s32.totalorder %v2983, 1
        %vm3372 = vcmp.eq.s32.totalorder %v2986, 1
        %vm3373 = vcmp.eq.s32.totalorder %v2989, 1
        %vm3374 = vcmp.eq.s32.totalorder %v2992, 1
        %vm3375 = vcmp.eq.s32.totalorder %v2995, 1
        %vm3376 = vcmp.eq.s32.totalorder %v2998, 1
        %vm3377 = vcmp.eq.s32.totalorder %v3001, 1
        %vm3378 = vcmp.eq.s32.totalorder %v3004, 1
        %vm3379 = vcmp.eq.s32.totalorder %v3007, 1
        %vm3380 = vcmp.eq.s32.totalorder %v3010, 1
        %vm3381 = vcmp.eq.s32.totalorder %v3013, 1
        %vm3382 = vcmp.eq.s32.totalorder %v3016, 1
        %vm3383 = vcmp.eq.s32.totalorder %v3019, 1
        %vm3384 = vcmp.eq.s32.totalorder %v3022, 1
        %vm3385 = vcmp.eq.s32.totalorder %v3025, 1
        %vm3386 = vcmp.eq.s32.totalorder %v3028, 1
        %vm3387 = vcmp.eq.s32.totalorder %v3031, 1
        %vm3388 = vcmp.eq.s32.totalorder %v3034, 1
        %vm3389 = vcmp.eq.s32.totalorder %v3037, 1
        %vm3390 = vcmp.eq.s32.totalorder %v3040, 1
        %vm3391 = vcmp.eq.s32.totalorder %v3043, 1
        %vm3392 = vcmp.eq.s32.totalorder %v3046, 1
        %vm3393 = vcmp.eq.s32.totalorder %v3049, 1
        %vm3394 = vcmp.eq.s32.totalorder %v3052, 1
        %vm3395 = vcmp.eq.s32.totalorder %v3055, 1
        %vm3396 = vcmp.eq.s32.totalorder %v3058, 1
        %vm3397 = vcmp.eq.s32.totalorder %v3061, 1
        %vm3398 = vcmp.eq.s32.totalorder %v3064, 1
        %vm3399 = vcmp.eq.s32.totalorder %v3067, 1
        %vm3400 = vcmp.eq.s32.totalorder %v3070, 1
        %vm3401 = vcmp.eq.s32.totalorder %v3073, 1
        %vm3402 = vcmp.eq.s32.totalorder %v3076, 1
        %vm3403 = vcmp.eq.s32.totalorder %v3079, 1
        %vm3404 = vcmp.eq.s32.totalorder %v3082, 1
        %vm3405 = vcmp.eq.s32.totalorder %v3085, 1
        %vm3406 = vcmp.eq.s32.totalorder %v3088, 1
        %vm3407 = vcmp.eq.s32.totalorder %v3091, 1
        %vm3408 = vcmp.eq.s32.totalorder %v3094, 1
        %vm3409 = vcmp.eq.s32.totalorder %v3097, 1
        %vm3410 = vcmp.eq.s32.totalorder %v3100, 1
        %vm3411 = vcmp.eq.s32.totalorder %v3103, 1
        %vm3412 = vcmp.eq.s32.totalorder %v3106, 1
        %vm3413 = vcmp.eq.s32.totalorder %v3109, 1
        %vm3414 = vcmp.eq.s32.totalorder %v3112, 1
        %vm3415 = vcmp.eq.s32.totalorder %v3115, 1
        %vm3416 = vcmp.eq.s32.totalorder %v3118, 1
        %vm3417 = vcmp.eq.s32.totalorder %v3121, 1
        %vm3418 = vcmp.eq.s32.totalorder %v3124, 1
        %vm3419 = vcmp.eq.s32.totalorder %v3127, 1
        %vm3420 = vcmp.eq.s32.totalorder %v3130, 1
        %vm3421 = vcmp.eq.s32.totalorder %v3133, 1
        %vm3422 = vcmp.eq.s32.totalorder %v3136, 1
        %vm3423 = vcmp.eq.s32.totalorder %v3139, 1
        %vm3424 = vcmp.eq.s32.totalorder %v3142, 1
        %vm3425 = vcmp.eq.s32.totalorder %v3145, 1
        %vm3426 = vcmp.eq.s32.totalorder %v3148, 1
        %vm3427 = vcmp.eq.s32.totalorder %v3151, 1
        %vm3428 = vcmp.eq.s32.totalorder %v3154, 1
        %vm3429 = vcmp.eq.s32.totalorder %v3157, 1
        %vm3430 = vcmp.eq.s32.totalorder %v3160, 1
        %vm3431 = vcmp.eq.s32.totalorder %v3163, 1
        %vm3432 = vcmp.eq.s32.totalorder %v3166, 1
        %vm3433 = vcmp.eq.s32.totalorder %v3169, 1
        %vm3434 = vcmp.eq.s32.totalorder %v3172, 1
        %vm3435 = vcmp.eq.s32.totalorder %v3175, 1
        %vm3436 = vcmp.eq.s32.totalorder %v3178, 1
        %vm3437 = vcmp.eq.s32.totalorder %v3181, 1
        %vm3438 = vcmp.eq.s32.totalorder %v3184, 1
        %vm3439 = vcmp.eq.s32.totalorder %v3187, 1
        %vm3440 = vcmp.eq.s32.totalorder %v3190, 1
        %vm3441 = vcmp.eq.s32.totalorder %v3193, 1
        %vm3442 = vcmp.eq.s32.totalorder %v3196, 1
        %vm3443 = vcmp.eq.s32.totalorder %v3199, 1
        %vm3444 = vcmp.eq.s32.totalorder %v3202, 1
        %vm3445 = vcmp.eq.s32.totalorder %v3205, 1
        %vm3446 = vcmp.eq.s32.totalorder %v3208, 1
        %vm3447 = vcmp.eq.s32.totalorder %v3211, 1
        %vm3448 = vcmp.eq.s32.totalorder %v3214, 1
        %vm3449 = vcmp.eq.s32.totalorder %v3217, 1
        %vm3450 = vcmp.eq.s32.totalorder %v3220, 1
        %vm3451 = vcmp.eq.s32.totalorder %v3223, 1
        %vm3452 = vcmp.eq.s32.totalorder %v3226, 1
        %vm3453 = vcmp.eq.s32.totalorder %v3229, 1
        %v3454 = vsel %vm3230, %v2320, -1e+15
        %v3455 = vsel %vm3231, %v2321, -1e+15
        %v3456 = vsel %vm3232, %v2322, -1e+15
        %v3457 = vsel %vm3233, %v2323, -1e+15
        %v3458 = vsel %vm3234, %v2324, -1e+15
        %v3459 = vsel %vm3235, %v2325, -1e+15
        %v3460 = vsel %vm3236, %v2326, -1e+15
        %v3461 = vsel %vm3237, %v2327, -1e+15
        %v3462 = vsel %vm3238, %v2328, -1e+15
        %v3463 = vsel %vm3239, %v2329, -1e+15
        %v3464 = vsel %vm3240, %v2330, -1e+15
        %v3465 = vsel %vm3241, %v2331, -1e+15
        %v3466 = vsel %vm3242, %v2332, -1e+15
        %v3467 = vsel %vm3243, %v2333, -1e+15
        %v3468 = vsel %vm3244, %v2320, -1e+15
        %v3469 = vsel %vm3245, %v2321, -1e+15
        %v3470 = vsel %vm3246, %v2322, -1e+15
        %v3471 = vsel %vm3247, %v2323, -1e+15
        %v3472 = vsel %vm3248, %v2324, -1e+15
        %v3473 = vsel %vm3249, %v2325, -1e+15
        %v3474 = vsel %vm3250, %v2326, -1e+15
        %v3475 = vsel %vm3251, %v2327, -1e+15
        %v3476 = vsel %vm3252, %v2328, -1e+15
        %v3477 = vsel %vm3253, %v2329, -1e+15
        %v3478 = vsel %vm3254, %v2330, -1e+15
        %v3479 = vsel %vm3255, %v2331, -1e+15
        %v3480 = vsel %vm3256, %v2332, -1e+15
        %v3481 = vsel %vm3257, %v2333, -1e+15
        %v3482 = vsel %vm3258, %v2320, -1e+15
        %v3483 = vsel %vm3259, %v2321, -1e+15
        %v3484 = vsel %vm3260, %v2322, -1e+15
        %v3485 = vsel %vm3261, %v2323, -1e+15
        %v3486 = vsel %vm3262, %v2324, -1e+15
        %v3487 = vsel %vm3263, %v2325, -1e+15
        %v3488 = vsel %vm3264, %v2326, -1e+15
        %v3489 = vsel %vm3265, %v2327, -1e+15
        %v3490 = vsel %vm3266, %v2328, -1e+15
        %v3491 = vsel %vm3267, %v2329, -1e+15
        %v3492 = vsel %vm3268, %v2330, -1e+15
        %v3493 = vsel %vm3269, %v2331, -1e+15
        %v3494 = vsel %vm3270, %v2332, -1e+15
        %v3495 = vsel %vm3271, %v2333, -1e+15
        %v3496 = vsel %vm3272, %v2320, -1e+15
        %v3497 = vsel %vm3273, %v2321, -1e+15
        %v3498 = vsel %vm3274, %v2322, -1e+15
        %v3499 = vsel %vm3275, %v2323, -1e+15
        %v3500 = vsel %vm3276, %v2324, -1e+15
        %v3501 = vsel %vm3277, %v2325, -1e+15
        %v3502 = vsel %vm3278, %v2326, -1e+15
        %v3503 = vsel %vm3279, %v2327, -1e+15
        %v3504 = vsel %vm3280, %v2328, -1e+15
        %v3505 = vsel %vm3281, %v2329, -1e+15
        %v3506 = vsel %vm3282, %v2330, -1e+15
        %v3507 = vsel %vm3283, %v2331, -1e+15
        %v3508 = vsel %vm3284, %v2332, -1e+15
        %v3509 = vsel %vm3285, %v2333, -1e+15
        %v3510 = vsel %vm3286, %v2320, -1e+15
        %v3511 = vsel %vm3287, %v2321, -1e+15
        %v3512 = vsel %vm3288, %v2322, -1e+15
        %v3513 = vsel %vm3289, %v2323, -1e+15
        %v3514 = vsel %vm3290, %v2324, -1e+15
        %v3515 = vsel %vm3291, %v2325, -1e+15
        %v3516 = vsel %vm3292, %v2326, -1e+15
        %v3517 = vsel %vm3293, %v2327, -1e+15
        %v3518 = vsel %vm3294, %v2328, -1e+15
        %v3519 = vsel %vm3295, %v2329, -1e+15
        %v3520 = vsel %vm3296, %v2330, -1e+15
        %v3521 = vsel %vm3297, %v2331, -1e+15
        %v3522 = vsel %vm3298, %v2332, -1e+15
        %v3523 = vsel %vm3299, %v2333, -1e+15
        %v3524 = vsel %vm3300, %v2320, -1e+15
        %v3525 = vsel %vm3301, %v2321, -1e+15
        %v3526 = vsel %vm3302, %v2322, -1e+15
        %v3527 = vsel %vm3303, %v2323, -1e+15
        %v3528 = vsel %vm3304, %v2324, -1e+15
        %v3529 = vsel %vm3305, %v2325, -1e+15
        %v3530 = vsel %vm3306, %v2326, -1e+15
        %v3531 = vsel %vm3307, %v2327, -1e+15
        %v3532 = vsel %vm3308, %v2328, -1e+15
        %v3533 = vsel %vm3309, %v2329, -1e+15
        %v3534 = vsel %vm3310, %v2330, -1e+15
        %v3535 = vsel %vm3311, %v2331, -1e+15
        %v3536 = vsel %vm3312, %v2332, -1e+15
        %v3537 = vsel %vm3313, %v2333, -1e+15
        %v3538 = vsel %vm3314, %v2320, -1e+15
        %v3539 = vsel %vm3315, %v2321, -1e+15
        %v3540 = vsel %vm3316, %v2322, -1e+15
        %v3541 = vsel %vm3317, %v2323, -1e+15
        %v3542 = vsel %vm3318, %v2324, -1e+15
        %v3543 = vsel %vm3319, %v2325, -1e+15
        %v3544 = vsel %vm3320, %v2326, -1e+15
        %v3545 = vsel %vm3321, %v2327, -1e+15
        %v3546 = vsel %vm3322, %v2328, -1e+15
        %v3547 = vsel %vm3323, %v2329, -1e+15
        %v3548 = vsel %vm3324, %v2330, -1e+15
        %v3549 = vsel %vm3325, %v2331, -1e+15
        %v3550 = vsel %vm3326, %v2332, -1e+15
        %v3551 = vsel %vm3327, %v2333, -1e+15
        %v3552 = vsel %vm3328, %v2320, -1e+15
        %v3553 = vsel %vm3329, %v2321, -1e+15
        %v3554 = vsel %vm3330, %v2322, -1e+15
        %v3555 = vsel %vm3331, %v2323, -1e+15
        %v3556 = vsel %vm3332, %v2324, -1e+15
        %v3557 = vsel %vm3333, %v2325, -1e+15
        %v3558 = vsel %vm3334, %v2326, -1e+15
        %v3559 = vsel %vm3335, %v2327, -1e+15
        %v3560 = vsel %vm3336, %v2328, -1e+15
        %v3561 = vsel %vm3337, %v2329, -1e+15
        %v3562 = vsel %vm3338, %v2330, -1e+15
        %v3563 = vsel %vm3339, %v2331, -1e+15
        %v3564 = vsel %vm3340, %v2332, -1e+15
        %v3565 = vsel %vm3341, %v2333, -1e+15
        %v3566 = vsel %vm3342, %v2320, -1e+15
        %v3567 = vsel %vm3343, %v2321, -1e+15
        %v3568 = vsel %vm3344, %v2322, -1e+15
        %v3569 = vsel %vm3345, %v2323, -1e+15
        %v3570 = vsel %vm3346, %v2324, -1e+15
        %v3571 = vsel %vm3347, %v2325, -1e+15
        %v3572 = vsel %vm3348, %v2326, -1e+15
        %v3573 = vsel %vm3349, %v2327, -1e+15
        %v3574 = vsel %vm3350, %v2328, -1e+15
        %v3575 = vsel %vm3351, %v2329, -1e+15
        %v3576 = vsel %vm3352, %v2330, -1e+15
        %v3577 = vsel %vm3353, %v2331, -1e+15
        %v3578 = vsel %vm3354, %v2332, -1e+15
        %v3579 = vsel %vm3355, %v2333, -1e+15
        %v3580 = vsel %vm3356, %v2320, -1e+15
        %v3581 = vsel %vm3357, %v2321, -1e+15
        %v3582 = vsel %vm3358, %v2322, -1e+15
        %v3583 = vsel %vm3359, %v2323, -1e+15
        %v3584 = vsel %vm3360, %v2324, -1e+15
        %v3585 = vsel %vm3361, %v2325, -1e+15
        %v3586 = vsel %vm3362, %v2326, -1e+15
        %v3587 = vsel %vm3363, %v2327, -1e+15
        %v3588 = vsel %vm3364, %v2328, -1e+15
        %v3589 = vsel %vm3365, %v2329, -1e+15
        %v3590 = vsel %vm3366, %v2330, -1e+15
        %v3591 = vsel %vm3367, %v2331, -1e+15
        %v3592 = vsel %vm3368, %v2332, -1e+15
        %v3593 = vsel %vm3369, %v2333, -1e+15
        %v3594 = vsel %vm3370, %v2320, -1e+15
        %v3595 = vsel %vm3371, %v2321, -1e+15
        %v3596 = vsel %vm3372, %v2322, -1e+15
        %v3597 = vsel %vm3373, %v2323, -1e+15
        %v3598 = vsel %vm3374, %v2324, -1e+15
        %v3599 = vsel %vm3375, %v2325, -1e+15
        %v3600 = vsel %vm3376, %v2326, -1e+15
        %v3601 = vsel %vm3377, %v2327, -1e+15
        %v3602 = vsel %vm3378, %v2328, -1e+15
        %v3603 = vsel %vm3379, %v2329, -1e+15
        %v3604 = vsel %vm3380, %v2330, -1e+15
        %v3605 = vsel %vm3381, %v2331, -1e+15
        %v3606 = vsel %vm3382, %v2332, -1e+15
        %v3607 = vsel %vm3383, %v2333, -1e+15
        %v3608 = vsel %vm3384, %v2320, -1e+15
        %v3609 = vsel %vm3385, %v2321, -1e+15
        %v3610 = vsel %vm3386, %v2322, -1e+15
        %v3611 = vsel %vm3387, %v2323, -1e+15
        %v3612 = vsel %vm3388, %v2324, -1e+15
        %v3613 = vsel %vm3389, %v2325, -1e+15
        %v3614 = vsel %vm3390, %v2326, -1e+15
        %v3615 = vsel %vm3391, %v2327, -1e+15
        %v3616 = vsel %vm3392, %v2328, -1e+15
        %v3617 = vsel %vm3393, %v2329, -1e+15
        %v3618 = vsel %vm3394, %v2330, -1e+15
        %v3619 = vsel %vm3395, %v2331, -1e+15
        %v3620 = vsel %vm3396, %v2332, -1e+15
        %v3621 = vsel %vm3397, %v2333, -1e+15
        %v3622 = vsel %vm3398, %v2320, -1e+15
        %v3623 = vsel %vm3399, %v2321, -1e+15
        %v3624 = vsel %vm3400, %v2322, -1e+15
        %v3625 = vsel %vm3401, %v2323, -1e+15
        %v3626 = vsel %vm3402, %v2324, -1e+15
        %v3627 = vsel %vm3403, %v2325, -1e+15
        %v3628 = vsel %vm3404, %v2326, -1e+15
        %v3629 = vsel %vm3405, %v2327, -1e+15
        %v3630 = vsel %vm3406, %v2328, -1e+15
        %v3631 = vsel %vm3407, %v2329, -1e+15
        %v3632 = vsel %vm3408, %v2330, -1e+15
        %v3633 = vsel %vm3409, %v2331, -1e+15
        %v3634 = vsel %vm3410, %v2332, -1e+15
        %v3635 = vsel %vm3411, %v2333, -1e+15
        %v3636 = vsel %vm3412, %v2320, -1e+15
        %v3637 = vsel %vm3413, %v2321, -1e+15
        %v3638 = vsel %vm3414, %v2322, -1e+15
        %v3639 = vsel %vm3415, %v2323, -1e+15
        %v3640 = vsel %vm3416, %v2324, -1e+15
        %v3641 = vsel %vm3417, %v2325, -1e+15
        %v3642 = vsel %vm3418, %v2326, -1e+15
        %v3643 = vsel %vm3419, %v2327, -1e+15
        %v3644 = vsel %vm3420, %v2328, -1e+15
        %v3645 = vsel %vm3421, %v2329, -1e+15
        %v3646 = vsel %vm3422, %v2330, -1e+15
        %v3647 = vsel %vm3423, %v2331, -1e+15
        %v3648 = vsel %vm3424, %v2332, -1e+15
        %v3649 = vsel %vm3425, %v2333, -1e+15
        %v3650 = vsel %vm3426, %v2320, -1e+15
        %v3651 = vsel %vm3427, %v2321, -1e+15
        %v3652 = vsel %vm3428, %v2322, -1e+15
        %v3653 = vsel %vm3429, %v2323, -1e+15
        %v3654 = vsel %vm3430, %v2324, -1e+15
        %v3655 = vsel %vm3431, %v2325, -1e+15
        %v3656 = vsel %vm3432, %v2326, -1e+15
        %v3657 = vsel %vm3433, %v2327, -1e+15
        %v3658 = vsel %vm3434, %v2328, -1e+15
        %v3659 = vsel %vm3435, %v2329, -1e+15
        %v3660 = vsel %vm3436, %v2330, -1e+15
        %v3661 = vsel %vm3437, %v2331, -1e+15
        %v3662 = vsel %vm3438, %v2332, -1e+15
        %v3663 = vsel %vm3439, %v2333, -1e+15
        %v3664 = vsel %vm3440, %v2320, -1e+15
        %v3665 = vsel %vm3441, %v2321, -1e+15
        %v3666 = vsel %vm3442, %v2322, -1e+15
        %v3667 = vsel %vm3443, %v2323, -1e+15
        %v3668 = vsel %vm3444, %v2324, -1e+15
        %v3669 = vsel %vm3445, %v2325, -1e+15
        %v3670 = vsel %vm3446, %v2326, -1e+15
        %v3671 = vsel %vm3447, %v2327, -1e+15
        %v3672 = vsel %vm3448, %v2328, -1e+15
        %v3673 = vsel %vm3449, %v2329, -1e+15
        %v3674 = vsel %vm3450, %v2330, -1e+15
        %v3675 = vsel %vm3451, %v2331, -1e+15
        %v3676 = vsel %vm3452, %v2332, -1e+15
        %v3677 = vsel %vm3453, %v2333, -1e+15
        %v3678 = vsel %vm1302, %v3454, -inf
        %v3679 = vsel %vm1302, %v3455, -inf
        %v3680 = vmax.f32 %v3678, %v3679
        %v3681 = vsel %vm1302, %v3456, -inf
        %v3682 = vmax.f32 %v3680, %v3681
        %v3683 = vsel %vm1302, %v3457, -inf
        %v3684 = vmax.f32 %v3682, %v3683
        %v3685 = vsel %vm1302, %v3458, -inf
        %v3686 = vmax.f32 %v3684, %v3685
        %v3687 = vsel %vm1302, %v3459, -inf
        %v3688 = vmax.f32 %v3686, %v3687
        %v3689 = vsel %vm1302, %v3460, -inf
        %v3690 = vmax.f32 %v3688, %v3689
        %v3691 = vsel %vm1302, %v3461, -inf
        %v3692 = vmax.f32 %v3690, %v3691
        %v3693 = vsel %vm1302, %v3462, -inf
        %v3694 = vmax.f32 %v3692, %v3693
        %v3695 = vsel %vm1302, %v3463, -inf
        %v3696 = vmax.f32 %v3694, %v3695
        %v3697 = vsel %vm1302, %v3464, -inf
        %v3698 = vmax.f32 %v3696, %v3697
        %v3699 = vsel %vm1302, %v3465, -inf
        %v3700 = vmax.f32 %v3698, %v3699
        %v3701 = vsel %vm1302, %v3466, -inf
        %v3702 = vmax.f32 %v3700, %v3701
        %v3703 = vsel %vm1302, %v3467, -inf
        %v3704 = vmax.f32 %v3702, %v3703
        %v3705 = vrot.slane %v3704, 4
        %v3706 = vmax.f32 %v3704, %v3705
        %v3707 = vrot.slane %v3706, 2
        %v3708 = vmax.f32 %v3706, %v3707
        %v3709 = vrot.slane %v3708, 1
        %v3710 = vmax.f32 %v3708, %v3709
        %v3711 = vsel %vm1302, %v3468, -inf
        %v3712 = vsel %vm1302, %v3469, -inf
        %v3713 = vmax.f32 %v3711, %v3712
        %v3714 = vsel %vm1302, %v3470, -inf
        %v3715 = vmax.f32 %v3713, %v3714
        %v3716 = vsel %vm1302, %v3471, -inf
        %v3717 = vmax.f32 %v3715, %v3716
        %v3718 = vsel %vm1302, %v3472, -inf
        %v3719 = vmax.f32 %v3717, %v3718
        %v3720 = vsel %vm1302, %v3473, -inf
        %v3721 = vmax.f32 %v3719, %v3720
        %v3722 = vsel %vm1302, %v3474, -inf
        %v3723 = vmax.f32 %v3721, %v3722
        %v3724 = vsel %vm1302, %v3475, -inf
        %v3725 = vmax.f32 %v3723, %v3724
        %v3726 = vsel %vm1302, %v3476, -inf
        %v3727 = vmax.f32 %v3725, %v3726
        %v3728 = vsel %vm1302, %v3477, -inf
        %v3729 = vmax.f32 %v3727, %v3728
        %v3730 = vsel %vm1302, %v3478, -inf
        %v3731 = vmax.f32 %v3729, %v3730
        %v3732 = vsel %vm1302, %v3479, -inf
        %v3733 = vmax.f32 %v3731, %v3732
        %v3734 = vsel %vm1302, %v3480, -inf
        %v3735 = vmax.f32 %v3733, %v3734
        %v3736 = vsel %vm1302, %v3481, -inf
        %v3737 = vmax.f32 %v3735, %v3736
        %v3738 = vrot.slane %v3737, 4
        %v3739 = vmax.f32 %v3737, %v3738
        %v3740 = vrot.slane %v3739, 2
        %v3741 = vmax.f32 %v3739, %v3740
        %v3742 = vrot.slane %v3741, 1
        %v3743 = vmax.f32 %v3741, %v3742
        %v3744 = vsel %vm1302, %v3482, -inf
        %v3745 = vsel %vm1302, %v3483, -inf
        %v3746 = vmax.f32 %v3744, %v3745
        %v3747 = vsel %vm1302, %v3484, -inf
        %v3748 = vmax.f32 %v3746, %v3747
        %v3749 = vsel %vm1302, %v3485, -inf
        %v3750 = vmax.f32 %v3748, %v3749
        %v3751 = vsel %vm1302, %v3486, -inf
        %v3752 = vmax.f32 %v3750, %v3751
        %v3753 = vsel %vm1302, %v3487, -inf
        %v3754 = vmax.f32 %v3752, %v3753
        %v3755 = vsel %vm1302, %v3488, -inf
        %v3756 = vmax.f32 %v3754, %v3755
        %v3757 = vsel %vm1302, %v3489, -inf
        %v3758 = vmax.f32 %v3756, %v3757
        %v3759 = vsel %vm1302, %v3490, -inf
        %v3760 = vmax.f32 %v3758, %v3759
        %v3761 = vsel %vm1302, %v3491, -inf
        %v3762 = vmax.f32 %v3760, %v3761
        %v3763 = vsel %vm1302, %v3492, -inf
        %v3764 = vmax.f32 %v3762, %v3763
        %v3765 = vsel %vm1302, %v3493, -inf
        %v3766 = vmax.f32 %v3764, %v3765
        %v3767 = vsel %vm1302, %v3494, -inf
        %v3768 = vmax.f32 %v3766, %v3767
        %v3769 = vsel %vm1302, %v3495, -inf
        %v3770 = vmax.f32 %v3768, %v3769
        %v3771 = vrot.slane %v3770, 4
        %v3772 = vmax.f32 %v3770, %v3771
        %v3773 = vrot.slane %v3772, 2
        %v3774 = vmax.f32 %v3772, %v3773
        %v3775 = vrot.slane %v3774, 1
        %v3776 = vmax.f32 %v3774, %v3775
        %v3777 = vsel %vm1302, %v3496, -inf
        %v3778 = vsel %vm1302, %v3497, -inf
        %v3779 = vmax.f32 %v3777, %v3778
        %v3780 = vsel %vm1302, %v3498, -inf
        %v3781 = vmax.f32 %v3779, %v3780
        %v3782 = vsel %vm1302, %v3499, -inf
        %v3783 = vmax.f32 %v3781, %v3782
        %v3784 = vsel %vm1302, %v3500, -inf
        %v3785 = vmax.f32 %v3783, %v3784
        %v3786 = vsel %vm1302, %v3501, -inf
        %v3787 = vmax.f32 %v3785, %v3786
        %v3788 = vsel %vm1302, %v3502, -inf
        %v3789 = vmax.f32 %v3787, %v3788
        %v3790 = vsel %vm1302, %v3503, -inf
        %v3791 = vmax.f32 %v3789, %v3790
        %v3792 = vsel %vm1302, %v3504, -inf
        %v3793 = vmax.f32 %v3791, %v3792
        %v3794 = vsel %vm1302, %v3505, -inf
        %v3795 = vmax.f32 %v3793, %v3794
        %v3796 = vsel %vm1302, %v3506, -inf
        %v3797 = vmax.f32 %v3795, %v3796
        %v3798 = vsel %vm1302, %v3507, -inf
        %v3799 = vmax.f32 %v3797, %v3798
        %v3800 = vsel %vm1302, %v3508, -inf
        %v3801 = vmax.f32 %v3799, %v3800
        %v3802 = vsel %vm1302, %v3509, -inf
        %v3803 = vmax.f32 %v3801, %v3802
        %v3804 = vrot.slane %v3803, 4
        %v3805 = vmax.f32 %v3803, %v3804
        %v3806 = vrot.slane %v3805, 2
        %v3807 = vmax.f32 %v3805, %v3806
        %v3808 = vrot.slane %v3807, 1
        %v3809 = vmax.f32 %v3807, %v3808
        %v3810 = vsel %vm1302, %v3510, -inf
        %v3811 = vsel %vm1302, %v3511, -inf
        %v3812 = vmax.f32 %v3810, %v3811
        %v3813 = vsel %vm1302, %v3512, -inf
        %v3814 = vmax.f32 %v3812, %v3813
        %v3815 = vsel %vm1302, %v3513, -inf
        %v3816 = vmax.f32 %v3814, %v3815
        %v3817 = vsel %vm1302, %v3514, -inf
        %v3818 = vmax.f32 %v3816, %v3817
        %v3819 = vsel %vm1302, %v3515, -inf
        %v3820 = vmax.f32 %v3818, %v3819
        %v3821 = vsel %vm1302, %v3516, -inf
        %v3822 = vmax.f32 %v3820, %v3821
        %v3823 = vsel %vm1302, %v3517, -inf
        %v3824 = vmax.f32 %v3822, %v3823
        %v3825 = vsel %vm1302, %v3518, -inf
        %v3826 = vmax.f32 %v3824, %v3825
        %v3827 = vsel %vm1302, %v3519, -inf
        %v3828 = vmax.f32 %v3826, %v3827
        %v3829 = vsel %vm1302, %v3520, -inf
        %v3830 = vmax.f32 %v3828, %v3829
        %v3831 = vsel %vm1302, %v3521, -inf
        %v3832 = vmax.f32 %v3830, %v3831
        %v3833 = vsel %vm1302, %v3522, -inf
        %v3834 = vmax.f32 %v3832, %v3833
        %v3835 = vsel %vm1302, %v3523, -inf
        %v3836 = vmax.f32 %v3834, %v3835
        %v3837 = vrot.slane %v3836, 4
        %v3838 = vmax.f32 %v3836, %v3837
        %v3839 = vrot.slane %v3838, 2
        %v3840 = vmax.f32 %v3838, %v3839
        %v3841 = vrot.slane %v3840, 1
        %v3842 = vmax.f32 %v3840, %v3841
        %v3843 = vsel %vm1302, %v3524, -inf
        %v3844 = vsel %vm1302, %v3525, -inf
        %v3845 = vmax.f32 %v3843, %v3844
        %v3846 = vsel %vm1302, %v3526, -inf
        %v3847 = vmax.f32 %v3845, %v3846
        %v3848 = vsel %vm1302, %v3527, -inf
        %v3849 = vmax.f32 %v3847, %v3848
        %v3850 = vsel %vm1302, %v3528, -inf
        %v3851 = vmax.f32 %v3849, %v3850
        %v3852 = vsel %vm1302, %v3529, -inf
        %v3853 = vmax.f32 %v3851, %v3852
        %v3854 = vsel %vm1302, %v3530, -inf
        %v3855 = vmax.f32 %v3853, %v3854
        %v3856 = vsel %vm1302, %v3531, -inf
        %v3857 = vmax.f32 %v3855, %v3856
        %v3858 = vsel %vm1302, %v3532, -inf
        %v3859 = vmax.f32 %v3857, %v3858
        %v3860 = vsel %vm1302, %v3533, -inf
        %v3861 = vmax.f32 %v3859, %v3860
        %v3862 = vsel %vm1302, %v3534, -inf
        %v3863 = vmax.f32 %v3861, %v3862
        %v3864 = vsel %vm1302, %v3535, -inf
        %v3865 = vmax.f32 %v3863, %v3864
        %v3866 = vsel %vm1302, %v3536, -inf
        %v3867 = vmax.f32 %v3865, %v3866
        %v3868 = vsel %vm1302, %v3537, -inf
        %v3869 = vmax.f32 %v3867, %v3868
        %v3870 = vrot.slane %v3869, 4
        %v3871 = vmax.f32 %v3869, %v3870
        %v3872 = vrot.slane %v3871, 2
        %v3873 = vmax.f32 %v3871, %v3872
        %v3874 = vrot.slane %v3873, 1
        %v3875 = vmax.f32 %v3873, %v3874
        %v3876 = vsel %vm1302, %v3538, -inf
        %v3877 = vsel %vm1302, %v3539, -inf
        %v3878 = vmax.f32 %v3876, %v3877
        %v3879 = vsel %vm1302, %v3540, -inf
        %v3880 = vmax.f32 %v3878, %v3879
        %v3881 = vsel %vm1302, %v3541, -inf
        %v3882 = vmax.f32 %v3880, %v3881
        %v3883 = vsel %vm1302, %v3542, -inf
        %v3884 = vmax.f32 %v3882, %v3883
        %v3885 = vsel %vm1302, %v3543, -inf
        %v3886 = vmax.f32 %v3884, %v3885
        %v3887 = vsel %vm1302, %v3544, -inf
        %v3888 = vmax.f32 %v3886, %v3887
        %v3889 = vsel %vm1302, %v3545, -inf
        %v3890 = vmax.f32 %v3888, %v3889
        %v3891 = vsel %vm1302, %v3546, -inf
        %v3892 = vmax.f32 %v3890, %v3891
        %v3893 = vsel %vm1302, %v3547, -inf
        %v3894 = vmax.f32 %v3892, %v3893
        %v3895 = vsel %vm1302, %v3548, -inf
        %v3896 = vmax.f32 %v3894, %v3895
        %v3897 = vsel %vm1302, %v3549, -inf
        %v3898 = vmax.f32 %v3896, %v3897
        %v3899 = vsel %vm1302, %v3550, -inf
        %v3900 = vmax.f32 %v3898, %v3899
        %v3901 = vsel %vm1302, %v3551, -inf
        %v3902 = vmax.f32 %v3900, %v3901
        %v3903 = vrot.slane %v3902, 4
        %v3904 = vmax.f32 %v3902, %v3903
        %v3905 = vrot.slane %v3904, 2
        %v3906 = vmax.f32 %v3904, %v3905
        %v3907 = vrot.slane %v3906, 1
        %v3908 = vmax.f32 %v3906, %v3907
        %v3909 = vsel %vm1302, %v3552, -inf
        %v3910 = vsel %vm1302, %v3553, -inf
        %v3911 = vmax.f32 %v3909, %v3910
        %v3912 = vsel %vm1302, %v3554, -inf
        %v3913 = vmax.f32 %v3911, %v3912
        %v3914 = vsel %vm1302, %v3555, -inf
        %v3915 = vmax.f32 %v3913, %v3914
        %v3916 = vsel %vm1302, %v3556, -inf
        %v3917 = vmax.f32 %v3915, %v3916
        %v3918 = vsel %vm1302, %v3557, -inf
        %v3919 = vmax.f32 %v3917, %v3918
        %v3920 = vsel %vm1302, %v3558, -inf
        %v3921 = vmax.f32 %v3919, %v3920
        %v3922 = vsel %vm1302, %v3559, -inf
        %v3923 = vmax.f32 %v3921, %v3922
        %v3924 = vsel %vm1302, %v3560, -inf
        %v3925 = vmax.f32 %v3923, %v3924
        %v3926 = vsel %vm1302, %v3561, -inf
        %v3927 = vmax.f32 %v3925, %v3926
        %v3928 = vsel %vm1302, %v3562, -inf
        %v3929 = vmax.f32 %v3927, %v3928
        %v3930 = vsel %vm1302, %v3563, -inf
        %v3931 = vmax.f32 %v3929, %v3930
        %v3932 = vsel %vm1302, %v3564, -inf
        %v3933 = vmax.f32 %v3931, %v3932
        %v3934 = vsel %vm1302, %v3565, -inf
        %v3935 = vmax.f32 %v3933, %v3934
        %v3936 = vrot.slane %v3935, 4
        %v3937 = vmax.f32 %v3935, %v3936
        %v3938 = vrot.slane %v3937, 2
        %v3939 = vmax.f32 %v3937, %v3938
        %v3940 = vrot.slane %v3939, 1
        %v3941 = vmax.f32 %v3939, %v3940
        %v3942 = vsel %vm1302, %v3566, -inf
        %v3943 = vsel %vm1302, %v3567, -inf
        %v3944 = vmax.f32 %v3942, %v3943
        %v3945 = vsel %vm1302, %v3568, -inf
        %v3946 = vmax.f32 %v3944, %v3945
        %v3947 = vsel %vm1302, %v3569, -inf
        %v3948 = vmax.f32 %v3946, %v3947
        %v3949 = vsel %vm1302, %v3570, -inf
        %v3950 = vmax.f32 %v3948, %v3949
        %v3951 = vsel %vm1302, %v3571, -inf
        %v3952 = vmax.f32 %v3950, %v3951
        %v3953 = vsel %vm1302, %v3572, -inf
        %v3954 = vmax.f32 %v3952, %v3953
        %v3955 = vsel %vm1302, %v3573, -inf
        %v3956 = vmax.f32 %v3954, %v3955
        %v3957 = vsel %vm1302, %v3574, -inf
        %v3958 = vmax.f32 %v3956, %v3957
        %v3959 = vsel %vm1302, %v3575, -inf
        %v3960 = vmax.f32 %v3958, %v3959
        %v3961 = vsel %vm1302, %v3576, -inf
        %v3962 = vmax.f32 %v3960, %v3961
        %v3963 = vsel %vm1302, %v3577, -inf
        %v3964 = vmax.f32 %v3962, %v3963
        %v3965 = vsel %vm1302, %v3578, -inf
        %v3966 = vmax.f32 %v3964, %v3965
        %v3967 = vsel %vm1302, %v3579, -inf
        %v3968 = vmax.f32 %v3966, %v3967
        %v3969 = vrot.slane %v3968, 4
        %v3970 = vmax.f32 %v3968, %v3969
        %v3971 = vrot.slane %v3970, 2
        %v3972 = vmax.f32 %v3970, %v3971
        %v3973 = vrot.slane %v3972, 1
        %v3974 = vmax.f32 %v3972, %v3973
        %v3975 = vsel %vm1302, %v3580, -inf
        %v3976 = vsel %vm1302, %v3581, -inf
        %v3977 = vmax.f32 %v3975, %v3976
        %v3978 = vsel %vm1302, %v3582, -inf
        %v3979 = vmax.f32 %v3977, %v3978
        %v3980 = vsel %vm1302, %v3583, -inf
        %v3981 = vmax.f32 %v3979, %v3980
        %v3982 = vsel %vm1302, %v3584, -inf
        %v3983 = vmax.f32 %v3981, %v3982
        %v3984 = vsel %vm1302, %v3585, -inf
        %v3985 = vmax.f32 %v3983, %v3984
        %v3986 = vsel %vm1302, %v3586, -inf
        %v3987 = vmax.f32 %v3985, %v3986
        %v3988 = vsel %vm1302, %v3587, -inf
        %v3989 = vmax.f32 %v3987, %v3988
        %v3990 = vsel %vm1302, %v3588, -inf
        %v3991 = vmax.f32 %v3989, %v3990
        %v3992 = vsel %vm1302, %v3589, -inf
        %v3993 = vmax.f32 %v3991, %v3992
        %v3994 = vsel %vm1302, %v3590, -inf
        %v3995 = vmax.f32 %v3993, %v3994
        %v3996 = vsel %vm1302, %v3591, -inf
        %v3997 = vmax.f32 %v3995, %v3996
        %v3998 = vsel %vm1302, %v3592, -inf
        %v3999 = vmax.f32 %v3997, %v3998
        %v4000 = vsel %vm1302, %v3593, -inf
        %v4001 = vmax.f32 %v3999, %v4000
        %v4002 = vrot.slane %v4001, 4
        %v4003 = vmax.f32 %v4001, %v4002
        %v4004 = vrot.slane %v4003, 2
        %v4005 = vmax.f32 %v4003, %v4004
        %v4006 = vrot.slane %v4005, 1
        %v4007 = vmax.f32 %v4005, %v4006
        %v4008 = vsel %vm1302, %v3594, -inf
        %v4009 = vsel %vm1302, %v3595, -inf
        %v4010 = vmax.f32 %v4008, %v4009
        %v4011 = vsel %vm1302, %v3596, -inf
        %v4012 = vmax.f32 %v4010, %v4011
        %v4013 = vsel %vm1302, %v3597, -inf
        %v4014 = vmax.f32 %v4012, %v4013
        %v4015 = vsel %vm1302, %v3598, -inf
        %v4016 = vmax.f32 %v4014, %v4015
        %v4017 = vsel %vm1302, %v3599, -inf
        %v4018 = vmax.f32 %v4016, %v4017
        %v4019 = vsel %vm1302, %v3600, -inf
        %v4020 = vmax.f32 %v4018, %v4019
        %v4021 = vsel %vm1302, %v3601, -inf
        %v4022 = vmax.f32 %v4020, %v4021
        %v4023 = vsel %vm1302, %v3602, -inf
        %v4024 = vmax.f32 %v4022, %v4023
        %v4025 = vsel %vm1302, %v3603, -inf
        %v4026 = vmax.f32 %v4024, %v4025
        %v4027 = vsel %vm1302, %v3604, -inf
        %v4028 = vmax.f32 %v4026, %v4027
        %v4029 = vsel %vm1302, %v3605, -inf
        %v4030 = vmax.f32 %v4028, %v4029
        %v4031 = vsel %vm1302, %v3606, -inf
        %v4032 = vmax.f32 %v4030, %v4031
        %v4033 = vsel %vm1302, %v3607, -inf
        %v4034 = vmax.f32 %v4032, %v4033
        %v4035 = vrot.slane %v4034, 4
        %v4036 = vmax.f32 %v4034, %v4035
        %v4037 = vrot.slane %v4036, 2
        %v4038 = vmax.f32 %v4036, %v4037
        %v4039 = vrot.slane %v4038, 1
        %v4040 = vmax.f32 %v4038, %v4039
        %v4041 = vsel %vm1302, %v3608, -inf
        %v4042 = vsel %vm1302, %v3609, -inf
        %v4043 = vmax.f32 %v4041, %v4042
        %v4044 = vsel %vm1302, %v3610, -inf
        %v4045 = vmax.f32 %v4043, %v4044
        %v4046 = vsel %vm1302, %v3611, -inf
        %v4047 = vmax.f32 %v4045, %v4046
        %v4048 = vsel %vm1302, %v3612, -inf
        %v4049 = vmax.f32 %v4047, %v4048
        %v4050 = vsel %vm1302, %v3613, -inf
        %v4051 = vmax.f32 %v4049, %v4050
        %v4052 = vsel %vm1302, %v3614, -inf
        %v4053 = vmax.f32 %v4051, %v4052
        %v4054 = vsel %vm1302, %v3615, -inf
        %v4055 = vmax.f32 %v4053, %v4054
        %v4056 = vsel %vm1302, %v3616, -inf
        %v4057 = vmax.f32 %v4055, %v4056
        %v4058 = vsel %vm1302, %v3617, -inf
        %v4059 = vmax.f32 %v4057, %v4058
        %v4060 = vsel %vm1302, %v3618, -inf
        %v4061 = vmax.f32 %v4059, %v4060
        %v4062 = vsel %vm1302, %v3619, -inf
        %v4063 = vmax.f32 %v4061, %v4062
        %v4064 = vsel %vm1302, %v3620, -inf
        %v4065 = vmax.f32 %v4063, %v4064
        %v4066 = vsel %vm1302, %v3621, -inf
        %v4067 = vmax.f32 %v4065, %v4066
        %v4068 = vrot.slane %v4067, 4
        %v4069 = vmax.f32 %v4067, %v4068
        %v4070 = vrot.slane %v4069, 2
        %v4071 = vmax.f32 %v4069, %v4070
        %v4072 = vrot.slane %v4071, 1
        %v4073 = vmax.f32 %v4071, %v4072
        %v4074 = vsel %vm1302, %v3622, -inf
        %v4075 = vsel %vm1302, %v3623, -inf
        %v4076 = vmax.f32 %v4074, %v4075
        %v4077 = vsel %vm1302, %v3624, -inf
        %v4078 = vmax.f32 %v4076, %v4077
        %v4079 = vsel %vm1302, %v3625, -inf
        %v4080 = vmax.f32 %v4078, %v4079
        %v4081 = vsel %vm1302, %v3626, -inf
        %v4082 = vmax.f32 %v4080, %v4081
        %v4083 = vsel %vm1302, %v3627, -inf
        %v4084 = vmax.f32 %v4082, %v4083
        %v4085 = vsel %vm1302, %v3628, -inf
        %v4086 = vmax.f32 %v4084, %v4085
        %v4087 = vsel %vm1302, %v3629, -inf
        %v4088 = vmax.f32 %v4086, %v4087
        %v4089 = vsel %vm1302, %v3630, -inf
        %v4090 = vmax.f32 %v4088, %v4089
        %v4091 = vsel %vm1302, %v3631, -inf
        %v4092 = vmax.f32 %v4090, %v4091
        %v4093 = vsel %vm1302, %v3632, -inf
        %v4094 = vmax.f32 %v4092, %v4093
        %v4095 = vsel %vm1302, %v3633, -inf
        %v4096 = vmax.f32 %v4094, %v4095
        %v4097 = vsel %vm1302, %v3634, -inf
        %v4098 = vmax.f32 %v4096, %v4097
        %v4099 = vsel %vm1302, %v3635, -inf
        %v4100 = vmax.f32 %v4098, %v4099
        %v4101 = vrot.slane %v4100, 4
        %v4102 = vmax.f32 %v4100, %v4101
        %v4103 = vrot.slane %v4102, 2
        %v4104 = vmax.f32 %v4102, %v4103
        %v4105 = vrot.slane %v4104, 1
        %v4106 = vmax.f32 %v4104, %v4105
        %v4107 = vsel %vm1302, %v3636, -inf
        %v4108 = vsel %vm1302, %v3637, -inf
        %v4109 = vmax.f32 %v4107, %v4108
        %v4110 = vsel %vm1302, %v3638, -inf
        %v4111 = vmax.f32 %v4109, %v4110
        %v4112 = vsel %vm1302, %v3639, -inf
        %v4113 = vmax.f32 %v4111, %v4112
        %v4114 = vsel %vm1302, %v3640, -inf
        %v4115 = vmax.f32 %v4113, %v4114
        %v4116 = vsel %vm1302, %v3641, -inf
        %v4117 = vmax.f32 %v4115, %v4116
        %v4118 = vsel %vm1302, %v3642, -inf
        %v4119 = vmax.f32 %v4117, %v4118
        %v4120 = vsel %vm1302, %v3643, -inf
        %v4121 = vmax.f32 %v4119, %v4120
        %v4122 = vsel %vm1302, %v3644, -inf
        %v4123 = vmax.f32 %v4121, %v4122
        %v4124 = vsel %vm1302, %v3645, -inf
        %v4125 = vmax.f32 %v4123, %v4124
        %v4126 = vsel %vm1302, %v3646, -inf
        %v4127 = vmax.f32 %v4125, %v4126
        %v4128 = vsel %vm1302, %v3647, -inf
        %v4129 = vmax.f32 %v4127, %v4128
        %v4130 = vsel %vm1302, %v3648, -inf
        %v4131 = vmax.f32 %v4129, %v4130
        %v4132 = vsel %vm1302, %v3649, -inf
        %v4133 = vmax.f32 %v4131, %v4132
        %v4134 = vrot.slane %v4133, 4
        %v4135 = vmax.f32 %v4133, %v4134
        %v4136 = vrot.slane %v4135, 2
        %v4137 = vmax.f32 %v4135, %v4136
        %v4138 = vrot.slane %v4137, 1
        %v4139 = vmax.f32 %v4137, %v4138
        %v4140 = vsel %vm1302, %v3650, -inf
        %v4141 = vsel %vm1302, %v3651, -inf
        %v4142 = vmax.f32 %v4140, %v4141
        %v4143 = vsel %vm1302, %v3652, -inf
        %v4144 = vmax.f32 %v4142, %v4143
        %v4145 = vsel %vm1302, %v3653, -inf
        %v4146 = vmax.f32 %v4144, %v4145
        %v4147 = vsel %vm1302, %v3654, -inf
        %v4148 = vmax.f32 %v4146, %v4147
        %v4149 = vsel %vm1302, %v3655, -inf
        %v4150 = vmax.f32 %v4148, %v4149
        %v4151 = vsel %vm1302, %v3656, -inf
        %v4152 = vmax.f32 %v4150, %v4151
        %v4153 = vsel %vm1302, %v3657, -inf
        %v4154 = vmax.f32 %v4152, %v4153
        %v4155 = vsel %vm1302, %v3658, -inf
        %v4156 = vmax.f32 %v4154, %v4155
        %v4157 = vsel %vm1302, %v3659, -inf
        %v4158 = vmax.f32 %v4156, %v4157
        %v4159 = vsel %vm1302, %v3660, -inf
        %v4160 = vmax.f32 %v4158, %v4159
        %v4161 = vsel %vm1302, %v3661, -inf
        %v4162 = vmax.f32 %v4160, %v4161
        %v4163 = vsel %vm1302, %v3662, -inf
        %v4164 = vmax.f32 %v4162, %v4163
        %v4165 = vsel %vm1302, %v3663, -inf
        %v4166 = vmax.f32 %v4164, %v4165
        %v4167 = vrot.slane %v4166, 4
        %v4168 = vmax.f32 %v4166, %v4167
        %v4169 = vrot.slane %v4168, 2
        %v4170 = vmax.f32 %v4168, %v4169
        %v4171 = vrot.slane %v4170, 1
        %v4172 = vmax.f32 %v4170, %v4171
        %v4173 = vsel %vm1302, %v3664, -inf
        %v4174 = vsel %vm1302, %v3665, -inf
        %v4175 = vmax.f32 %v4173, %v4174
        %v4176 = vsel %vm1302, %v3666, -inf
        %v4177 = vmax.f32 %v4175, %v4176
        %v4178 = vsel %vm1302, %v3667, -inf
        %v4179 = vmax.f32 %v4177, %v4178
        %v4180 = vsel %vm1302, %v3668, -inf
        %v4181 = vmax.f32 %v4179, %v4180
        %v4182 = vsel %vm1302, %v3669, -inf
        %v4183 = vmax.f32 %v4181, %v4182
        %v4184 = vsel %vm1302, %v3670, -inf
        %v4185 = vmax.f32 %v4183, %v4184
        %v4186 = vsel %vm1302, %v3671, -inf
        %v4187 = vmax.f32 %v4185, %v4186
        %v4188 = vsel %vm1302, %v3672, -inf
        %v4189 = vmax.f32 %v4187, %v4188
        %v4190 = vsel %vm1302, %v3673, -inf
        %v4191 = vmax.f32 %v4189, %v4190
        %v4192 = vsel %vm1302, %v3674, -inf
        %v4193 = vmax.f32 %v4191, %v4192
        %v4194 = vsel %vm1302, %v3675, -inf
        %v4195 = vmax.f32 %v4193, %v4194
        %v4196 = vsel %vm1302, %v3676, -inf
        %v4197 = vmax.f32 %v4195, %v4196
        %v4198 = vsel %vm1302, %v3677, -inf
        %v4199 = vmax.f32 %v4197, %v4198
        %v4200 = vrot.slane %v4199, 4
        %v4201 = vmax.f32 %v4199, %v4200
        %v4202 = vrot.slane %v4201, 2
        %v4203 = vmax.f32 %v4201, %v4202
        %v4204 = vrot.slane %v4203, 1
        %v4205 = vmax.f32 %v4203, %v4204
        %v4206 = vpack.c.bf16 %v3710, %v3710
        %v4207 = vpack.c.bf16 %v3743, %v3743
        %v4208 = vpack.c.bf16 %v3776, %v3776
        %v4209 = vpack.c.bf16 %v3809, %v3809
        %v4210 = vpack.c.bf16 %v3842, %v3842
        %v4211 = vpack.c.bf16 %v3875, %v3875
        %v4212 = vpack.c.bf16 %v3908, %v3908
        %v4213 = vpack.c.bf16 %v3941, %v3941
        %v4214 = vpack.c.bf16 %v3974, %v3974
        %v4215 = vpack.c.bf16 %v4007, %v4007
        %v4216 = vpack.c.bf16 %v4040, %v4040
        %v4217 = vpack.c.bf16 %v4073, %v4073
        %v4218 = vpack.c.bf16 %v4106, %v4106
        %v4219 = vpack.c.bf16 %v4139, %v4139
        %v4220 = vpack.c.bf16 %v4172, %v4172
        %v4221 = vpack.c.bf16 %v4205, %v4205
        %v4236 = vunpack.c.l.b16 %v1142
        %v4237 = vunpack.c.l.b16 %v1143
        %v4238 = vunpack.c.l.b16 %v1144
        %v4239 = vunpack.c.l.b16 %v1145
        %v4240 = vunpack.c.l.b16 %v1146
        %v4241 = vunpack.c.l.b16 %v1147
        %v4242 = vunpack.c.l.b16 %v1148
        %v4243 = vunpack.c.l.b16 %v1149
        %v4244 = vunpack.c.l.b16 %v1150
        %v4245 = vunpack.c.l.b16 %v1151
        %v4246 = vunpack.c.l.b16 %v1152
        %v4247 = vunpack.c.l.b16 %v1153
        %v4248 = vunpack.c.l.b16 %v1154
        %v4249 = vunpack.c.l.b16 %v1155
        %v4250 = vpack.c.b16 %v4237, %v4236
        %v4251 = vpack.c.b16 %v4239, %v4238
        %v4252 = vpack.c.b16 %v4241, %v4240
        %v4253 = vpack.c.b16 %v4243, %v4242
        %v4254 = vpack.c.b16 %v4245, %v4244
        %v4255 = vpack.c.b16 %v4247, %v4246
        %v4256 = vpack.c.b16 %v4249, %v4248
        %v4273 = vunpack.c.l.b16 %v4206
        %v4274 = vunpack.c.l.b16 %v4207
        %v4275 = vunpack.c.l.b16 %v4208
        %v4276 = vunpack.c.l.b16 %v4209
        %v4277 = vunpack.c.l.b16 %v4210
        %v4278 = vunpack.c.l.b16 %v4211
        %v4279 = vunpack.c.l.b16 %v4212
        %v4280 = vunpack.c.l.b16 %v4213
        %v4281 = vunpack.c.l.b16 %v4214
        %v4282 = vunpack.c.l.b16 %v4215
        %v4283 = vunpack.c.l.b16 %v4216
        %v4284 = vunpack.c.l.b16 %v4217
        %v4285 = vunpack.c.l.b16 %v4218
        %v4286 = vunpack.c.l.b16 %v4219
        %v4287 = vunpack.c.l.b16 %v4220
        %v4288 = vunpack.c.l.b16 %v4221
        %vm4289 = vcmask 1041409
        %v4290 = vsel %vm4289, %v4274, %v4273
        %vm4291 = vcmask 1042434
        %v4292 = vsel %vm4291, %v4275, %v4290
        %vm4293 = vcmask 1043459
        %v4294 = vsel %vm4293, %v4276, %v4292
        %vm4295 = vcmask 1044484
        %v4296 = vsel %vm4295, %v4277, %v4294
        %vm4297 = vcmask 1045509
        %v4298 = vsel %vm4297, %v4278, %v4296
        %vm4299 = vcmask 1046534
        %v4300 = vsel %vm4299, %v4279, %v4298
        %vm4301 = vcmask 1047559
        %v4302 = vsel %vm4301, %v4280, %v4300
        %v4303 = vsel %vm4289, %v4282, %v4281
        %v4304 = vsel %vm4291, %v4283, %v4303
        %v4305 = vsel %vm4293, %v4284, %v4304
        %v4306 = vsel %vm4295, %v4285, %v4305
        %v4307 = vsel %vm4297, %v4286, %v4306
        %v4308 = vsel %vm4299, %v4287, %v4307
        %v4309 = vsel %vm4301, %v4288, %v4308
        %v4310 = vpack.c.b16 %v4309, %v4302
        %vm4312 = vcmask 130048
        %v4314 = vsel %vm4312, %v4250, 0
        %v4317 = vsel %vm4312, %v4251, 0
        %v4320 = vsel %vm4312, %v4252, 0
        %v4323 = vsel %vm4312, %v4253, 0
        %v4326 = vsel %vm4312, %v4254, 0
        %v4329 = vsel %vm4312, %v4255, 0
        %v4332 = vsel %vm4312, %v4256, 0
        %4334 = vmatprep.subr.bf16.mxu0 0
        %4335 = vmatpush1.bf16.msra.mxu0 %v4310
        %4336 = vmatprep.subr.bf16.mxu0 0
        %4337 = vmatpush1.bf16.msra.mxu0 0
        %4338 = vmatprep.subr.bf16.mxu0 0
        %4339 = vmatpush1.bf16.msra.mxu0 0
        %4340 = vmatprep.subr.bf16.mxu0 0
        %4341 = vmatpush1.bf16.msra.mxu0 0
        %4342 = vmatprep.subr.bf16.mxu0 0
        %4343 = vmatpush1.bf16.msra.mxu0 0
        %4344 = vmatprep.subr.bf16.mxu0 0
        %4345 = vmatpush1.bf16.msra.mxu0 0
        %4346 = vmatprep.subr.bf16.mxu0 0
        %4347 = vmatpush1.bf16.msra.mxu0 0
        %4348 = vmatprep.subr.bf16.mxu0 0
        %4349 = vmatpush1.bf16.msra.mxu0 0
        %4350 = vmatprep.subr.bf16.mxu0 0
        %4351 = vmatpush1.bf16.msra.mxu0 0
        %4352 = vmatprep.subr.bf16.mxu0 0
        %4353 = vmatpush1.bf16.msra.mxu0 0
        %4354 = vmatprep.subr.bf16.mxu0 0
        %4355 = vmatpush1.bf16.msra.mxu0 0
        %4356 = vmatprep.subr.bf16.mxu0 0
        %4357 = vmatpush1.bf16.msra.mxu0 0
        %4358 = vmatprep.subr.bf16.mxu0 0
        %4359 = vmatpush1.bf16.msra.mxu0 0
        %4360 = vmatprep.subr.bf16.mxu0 0
        %4361 = vmatpush1.bf16.msra.mxu0 0
        %4362 = vmatprep.subr.bf16.mxu0 0
        %4363 = vmatpush1.bf16.msra.mxu0 0
        %4364 = vmatprep.subr.bf16.mxu0 0
        %4365 = vmatpush1.bf16.msra.mxu0 0
        %4366 = vmatprep.mubr.bf16.mxu0 0
        %4367 = vmatmul.mubr.bf16.gmra.mrb[0].mxu0 %v4314
        %v4368 = vpop.f32.mrb[0].mxu0
        %v4369 = vadd.f32 0.0, %v4368
        %v4370 = vpop.f32.mrb[0].mxu0
        %v4371 = vpop.f32.mrb[0].mxu0
        %v4372 = vadd.f32 0.0, %v4371
        %v4373 = vpop.f32.mrb[0].mxu0
        %4374 = vmatprep.mubr.bf16.mxu0 0
        %4375 = vmatmul.mubr.bf16.gmra.mrb[0].mxu0 %v4317
        %v4376 = vpop.f32.mrb[0].mxu0
        %v4377 = vadd.f32 0.0, %v4376
        %v4378 = vpop.f32.mrb[0].mxu0
        %v4379 = vpop.f32.mrb[0].mxu0
        %v4380 = vadd.f32 0.0, %v4379
        %v4381 = vpop.f32.mrb[0].mxu0
        %4382 = vmatprep.mubr.bf16.mxu0 0
        %4383 = vmatmul.mubr.bf16.gmra.mrb[0].mxu0 %v4320
        %v4384 = vpop.f32.mrb[0].mxu0
        %v4385 = vadd.f32 0.0, %v4384
        %v4386 = vpop.f32.mrb[0].mxu0
        %v4387 = vpop.f32.mrb[0].mxu0
        %v4388 = vadd.f32 0.0, %v4387
        %v4389 = vpop.f32.mrb[0].mxu0
        %4390 = vmatprep.mubr.bf16.mxu0 0
        %4391 = vmatmul.mubr.bf16.gmra.mrb[0].mxu0 %v4323
        %v4392 = vpop.f32.mrb[0].mxu0
        %v4393 = vadd.f32 0.0, %v4392
        %v4394 = vpop.f32.mrb[0].mxu0
        %v4395 = vpop.f32.mrb[0].mxu0
        %v4396 = vadd.f32 0.0, %v4395
        %v4397 = vpop.f32.mrb[0].mxu0
        %4398 = vmatprep.mubr.bf16.mxu0 0
        %4399 = vmatmul.mubr.bf16.gmra.mrb[0].mxu0 %v4326
        %v4400 = vpop.f32.mrb[0].mxu0
        %v4401 = vadd.f32 0.0, %v4400
        %v4402 = vpop.f32.mrb[0].mxu0
        %v4403 = vpop.f32.mrb[0].mxu0
        %v4404 = vadd.f32 0.0, %v4403
        %v4405 = vpop.f32.mrb[0].mxu0
        %4406 = vmatprep.mubr.bf16.mxu0 0
        %4407 = vmatmul.mubr.bf16.gmra.mrb[0].mxu0 %v4329
        %v4408 = vpop.f32.mrb[0].mxu0
        %v4409 = vadd.f32 0.0, %v4408
        %v4410 = vpop.f32.mrb[0].mxu0
        %v4411 = vpop.f32.mrb[0].mxu0
        %v4412 = vadd.f32 0.0, %v4411
        %v4413 = vpop.f32.mrb[0].mxu0
        %4414 = vmatprep.mubr.bf16.mxu0 0
        %4415 = vmatmul.mubr.bf16.gmra.mrb[0].mxu0 %v4332
        %v4416 = vpop.f32.mrb[0].mxu0
        %v4417 = vadd.f32 0.0, %v4416
        %v4418 = vpop.f32.mrb[0].mxu0
        %v4419 = vpop.f32.mrb[0].mxu0
        %v4420 = vadd.f32 0.0, %v4419
        %v4421 = vpop.f32.mrb[0].mxu0
        %4422 = vdwg.mxu0
        %v4423 = vpack.c.bf16 %v2321, %v2320
        %v4424 = vpack.c.bf16 %v2323, %v2322
        %v4425 = vpack.c.bf16 %v2325, %v2324
        %v4426 = vpack.c.bf16 %v2327, %v2326
        %v4427 = vpack.c.bf16 %v2329, %v2328
        %v4428 = vpack.c.bf16 %v2331, %v2330
        %v4429 = vpack.c.bf16 %v2333, %v2332
        %v4430 = vld [vmem:[%s8] sm:$0xf]
        %v4431 = vld [vmem:[%s8 + $0x4] sm:$0xf]
        %v4432 = vld [vmem:[%s8 + $0x8] sm:$0xf]
        %v4433 = vld [vmem:[%s8 + $0xc] sm:$0xf]
        %v4434 = vld [vmem:[%s8 + $0x10] sm:$0xf]
        %v4435 = vld [vmem:[%s8 + $0x14] sm:$0xf]
        %v4436 = vld [vmem:[%s8 + $0x18] sm:$0xf]
        %v4437 = vld [vmem:[%s8 + $0x1c] sm:$0xf]
        %v4438 = vpack.c.bf16 %v4372, %v4369
        %v4439 = vpack.c.bf16 %v4380, %v4377
        %v4440 = vpack.c.bf16 %v4388, %v4385
        %v4441 = vpack.c.bf16 %v4396, %v4393
        %v4442 = vpack.c.bf16 %v4404, %v4401
        %v4443 = vpack.c.bf16 %v4412, %v4409
        %v4444 = vpack.c.bf16 %v4420, %v4417
        %v4445 = vld [vmem:[%s9] sm:$0xf]
        %v4446 = vld [vmem:[%s9 + $0x4] sm:$0xf]
        %v4447 = vld [vmem:[%s9 + $0x8] sm:$0xf]
        %v4448 = vld [vmem:[%s9 + $0xc] sm:$0xf]
        %v4449 = vld [vmem:[%s9 + $0x10] sm:$0xf]
        %v4450 = vld [vmem:[%s9 + $0x14] sm:$0xf]
        %v4451 = vld [vmem:[%s9 + $0x18] sm:$0xf]
        %v4452 = vld [vmem:[%s9 + $0x1c] sm:$0xf]
        %v4461 = vunpack.c.l.b16 %v4445
        %v4462 = vunpack.c.l.b16 %v4446
        %v4463 = vunpack.c.l.b16 %v4447
        %v4464 = vunpack.c.l.b16 %v4448
        %v4465 = vunpack.c.l.b16 %v4449
        %v4466 = vunpack.c.l.b16 %v4450
        %v4467 = vunpack.c.l.b16 %v4451
        %v4468 = vunpack.c.l.b16 %v4452
        %v4469 = vpack.c.b16 %v4462, %v4461
        %v4470 = vpack.c.b16 %v4464, %v4463
        %v4471 = vpack.c.b16 %v4466, %v4465
        %v4472 = vpack.c.b16 %v4468, %v4467
        %v4478 = vsel %vm1302, %v4438, 0
        %v4481 = vsel %vm1302, %v4439, 0
        %v4484 = vsel %vm1302, %v4440, 0
        %v4487 = vsel %vm1302, %v4441, 0
        %v4490 = vsel %vm1302, %v4442, 0
        %v4493 = vsel %vm1302, %v4443, 0
        %v4496 = vsel %vm1302, %v4444, 0
        %4498 = vmatprep.subr.bf16.mxu0 0
        %4499 = vmatpush1.bf16.msra.mxu0 %v4469
        %4500 = vmatprep.subr.bf16.mxu0 0
        %4501 = vmatpush1.bf16.msra.mxu0 %v4470
        %4502 = vmatprep.subr.bf16.mxu0 0
        %4503 = vmatpush1.bf16.msra.mxu0 %v4471
        %4504 = vmatprep.subr.bf16.mxu0 0
        %4505 = vmatpush1.bf16.msra.mxu0 %v4472
        %4506 = vmatprep.subr.bf16.mxu0 0
        %4507 = vmatpush1.bf16.msra.mxu0 0
        %4508 = vmatprep.subr.bf16.mxu0 0
        %4509 = vmatpush1.bf16.msra.mxu0 0
        %4510 = vmatprep.subr.bf16.mxu0 0
        %4511 = vmatpush1.bf16.msra.mxu0 0
        %4512 = vmatprep.subr.bf16.mxu0 0
        %4513 = vmatpush1.bf16.msra.mxu0 0
        %4514 = vmatprep.subr.bf16.mxu0 0
        %4515 = vmatpush1.bf16.msra.mxu0 0
        %4516 = vmatprep.subr.bf16.mxu0 0
        %4517 = vmatpush1.bf16.msra.mxu0 0
        %4518 = vmatprep.subr.bf16.mxu0 0
        %4519 = vmatpush1.bf16.msra.mxu0 0
        %4520 = vmatprep.subr.bf16.mxu0 0
        %4521 = vmatpush1.bf16.msra.mxu0 0
        %4522 = vmatprep.subr.bf16.mxu0 0
        %4523 = vmatpush1.bf16.msra.mxu0 0
        %4524 = vmatprep.subr.bf16.mxu0 0
        %4525 = vmatpush1.bf16.msra.mxu0 0
        %4526 = vmatprep.subr.bf16.mxu0 0
        %4527 = vmatpush1.bf16.msra.mxu0 0
        %4528 = vmatprep.subr.bf16.mxu0 0
        %4529 = vmatpush1.bf16.msra.mxu0 0
        %4530 = vmatprep.mubr.bf16.mxu0 0
        %4531 = vmatmul.mubr.bf16.gmra.mrb[0].mxu0 %v4478
        %v4532 = vpop.f32.mrb[0].mxu0
        %v4533 = vadd.f32 0.0, %v4532
        %v4534 = vpop.f32.mrb[0].mxu0
        %v4535 = vpop.f32.mrb[0].mxu0
        %v4536 = vadd.f32 0.0, %v4535
        %v4537 = vpop.f32.mrb[0].mxu0
        %4538 = vmatprep.mubr.bf16.mxu0 0
        %4539 = vmatmul.mubr.bf16.gmra.mrb[0].mxu0 %v4481
        %v4540 = vpop.f32.mrb[0].mxu0
        %v4541 = vadd.f32 0.0, %v4540
        %v4542 = vpop.f32.mrb[0].mxu0
        %v4543 = vpop.f32.mrb[0].mxu0
        %v4544 = vadd.f32 0.0, %v4543
        %v4545 = vpop.f32.mrb[0].mxu0
        %4546 = vmatprep.mubr.bf16.mxu0 0
        %4547 = vmatmul.mubr.bf16.gmra.mrb[0].mxu0 %v4484
        %v4548 = vpop.f32.mrb[0].mxu0
        %v4549 = vadd.f32 0.0, %v4548
        %v4550 = vpop.f32.mrb[0].mxu0
        %v4551 = vpop.f32.mrb[0].mxu0
        %v4552 = vadd.f32 0.0, %v4551
        %v4553 = vpop.f32.mrb[0].mxu0
        %4554 = vmatprep.mubr.bf16.mxu0 0
        %4555 = vmatmul.mubr.bf16.gmra.mrb[0].mxu0 %v4487
        %v4556 = vpop.f32.mrb[0].mxu0
        %v4557 = vadd.f32 0.0, %v4556
        %v4558 = vpop.f32.mrb[0].mxu0
        %v4559 = vpop.f32.mrb[0].mxu0
        %v4560 = vadd.f32 0.0, %v4559
        %v4561 = vpop.f32.mrb[0].mxu0
        %4562 = vmatprep.mubr.bf16.mxu0 0
        %4563 = vmatmul.mubr.bf16.gmra.mrb[0].mxu0 %v4490
        %v4564 = vpop.f32.mrb[0].mxu0
        %v4565 = vadd.f32 0.0, %v4564
        %v4566 = vpop.f32.mrb[0].mxu0
        %v4567 = vpop.f32.mrb[0].mxu0
        %v4568 = vadd.f32 0.0, %v4567
        %v4569 = vpop.f32.mrb[0].mxu0
        %4570 = vmatprep.mubr.bf16.mxu0 0
        %4571 = vmatmul.mubr.bf16.gmra.mrb[0].mxu0 %v4493
        %v4572 = vpop.f32.mrb[0].mxu0
        %v4573 = vadd.f32 0.0, %v4572
        %v4574 = vpop.f32.mrb[0].mxu0
        %v4575 = vpop.f32.mrb[0].mxu0
        %v4576 = vadd.f32 0.0, %v4575
        %v4577 = vpop.f32.mrb[0].mxu0
        %4578 = vmatprep.mubr.bf16.mxu0 0
        %4579 = vmatmul.mubr.bf16.gmra.mrb[0].mxu0 %v4496
        %v4580 = vpop.f32.mrb[0].mxu0
        %v4581 = vadd.f32 0.0, %v4580
        %v4582 = vpop.f32.mrb[0].mxu0
        %v4583 = vpop.f32.mrb[0].mxu0
        %v4584 = vadd.f32 0.0, %v4583
        %v4585 = vpop.f32.mrb[0].mxu0
        %4586 = vdwg.mxu0
        %v4595 = vunpack.c.l.b16 %v4430
        %v4596 = vunpack.c.l.b16 %v4431
        %v4597 = vunpack.c.l.b16 %v4432
        %v4598 = vunpack.c.l.b16 %v4433
        %v4599 = vunpack.c.l.b16 %v4434
        %v4600 = vunpack.c.l.b16 %v4435
        %v4601 = vunpack.c.l.b16 %v4436
        %v4602 = vunpack.c.l.b16 %v4437
        %v4603 = vpack.c.b16 %v4596, %v4595
        %v4604 = vpack.c.b16 %v4598, %v4597
        %v4605 = vpack.c.b16 %v4600, %v4599
        %v4606 = vpack.c.b16 %v4602, %v4601
        %v4612 = vsel %vm1302, %v4423, 0
        %v4615 = vsel %vm1302, %v4424, 0
        %v4618 = vsel %vm1302, %v4425, 0
        %v4621 = vsel %vm1302, %v4426, 0
        %v4624 = vsel %vm1302, %v4427, 0
        %v4627 = vsel %vm1302, %v4428, 0
        %v4630 = vsel %vm1302, %v4429, 0
        %4632 = vmatprep.subr.bf16.mxu0 0
        %4633 = vmatpush1.bf16.msra.mxu0 %v4603
        %4634 = vmatprep.subr.bf16.mxu0 0
        %4635 = vmatpush1.bf16.msra.mxu0 %v4604
        %4636 = vmatprep.subr.bf16.mxu0 0
        %4637 = vmatpush1.bf16.msra.mxu0 %v4605
        %4638 = vmatprep.subr.bf16.mxu0 0
        %4639 = vmatpush1.bf16.msra.mxu0 %v4606
        %4640 = vmatprep.subr.bf16.mxu0 0
        %4641 = vmatpush1.bf16.msra.mxu0 0
        %4642 = vmatprep.subr.bf16.mxu0 0
        %4643 = vmatpush1.bf16.msra.mxu0 0
        %4644 = vmatprep.subr.bf16.mxu0 0
        %4645 = vmatpush1.bf16.msra.mxu0 0
        %4646 = vmatprep.subr.bf16.mxu0 0
        %4647 = vmatpush1.bf16.msra.mxu0 0
        %4648 = vmatprep.subr.bf16.mxu0 0
        %4649 = vmatpush1.bf16.msra.mxu0 0
        %4650 = vmatprep.subr.bf16.mxu0 0
        %4651 = vmatpush1.bf16.msra.mxu0 0
        %4652 = vmatprep.subr.bf16.mxu0 0
        %4653 = vmatpush1.bf16.msra.mxu0 0
        %4654 = vmatprep.subr.bf16.mxu0 0
        %4655 = vmatpush1.bf16.msra.mxu0 0
        %4656 = vmatprep.subr.bf16.mxu0 0
        %4657 = vmatpush1.bf16.msra.mxu0 0
        %4658 = vmatprep.subr.bf16.mxu0 0
        %4659 = vmatpush1.bf16.msra.mxu0 0
        %4660 = vmatprep.subr.bf16.mxu0 0
        %4661 = vmatpush1.bf16.msra.mxu0 0
        %4662 = vmatprep.subr.bf16.mxu0 0
        %4663 = vmatpush1.bf16.msra.mxu0 0
        %4664 = vmatprep.mubr.bf16.mxu0 0
        %4665 = vmatmul.mubr.bf16.gmra.mrb[0].mxu0 %v4612
        %v4666 = vpop.f32.mrb[0].mxu0
        %v4667 = vadd.f32 %v4533, %v4666
        %v4668 = vpop.f32.mrb[0].mxu0
        %v4669 = vpop.f32.mrb[0].mxu0
        %v4670 = vadd.f32 %v4536, %v4669
        %v4671 = vpop.f32.mrb[0].mxu0
        %4672 = vmatprep.mubr.bf16.mxu0 0
        %4673 = vmatmul.mubr.bf16.gmra.mrb[0].mxu0 %v4615
        %v4674 = vpop.f32.mrb[0].mxu0
        %v4675 = vadd.f32 %v4541, %v4674
        %v4676 = vpop.f32.mrb[0].mxu0
        %v4677 = vpop.f32.mrb[0].mxu0
        %v4678 = vadd.f32 %v4544, %v4677
        %v4679 = vpop.f32.mrb[0].mxu0
        %4680 = vmatprep.mubr.bf16.mxu0 0
        %4681 = vmatmul.mubr.bf16.gmra.mrb[0].mxu0 %v4618
        %v4682 = vpop.f32.mrb[0].mxu0
        %v4683 = vadd.f32 %v4549, %v4682
        %v4684 = vpop.f32.mrb[0].mxu0
        %v4685 = vpop.f32.mrb[0].mxu0
        %v4686 = vadd.f32 %v4552, %v4685
        %v4687 = vpop.f32.mrb[0].mxu0
        %4688 = vmatprep.mubr.bf16.mxu0 0
        %4689 = vmatmul.mubr.bf16.gmra.mrb[0].mxu0 %v4621
        %v4690 = vpop.f32.mrb[0].mxu0
        %v4691 = vadd.f32 %v4557, %v4690
        %v4692 = vpop.f32.mrb[0].mxu0
        %v4693 = vpop.f32.mrb[0].mxu0
        %v4694 = vadd.f32 %v4560, %v4693
        %v4695 = vpop.f32.mrb[0].mxu0
        %4696 = vmatprep.mubr.bf16.mxu0 0
        %4697 = vmatmul.mubr.bf16.gmra.mrb[0].mxu0 %v4624
        %v4698 = vpop.f32.mrb[0].mxu0
        %v4699 = vadd.f32 %v4565, %v4698
        %v4700 = vpop.f32.mrb[0].mxu0
        %v4701 = vpop.f32.mrb[0].mxu0
        %v4702 = vadd.f32 %v4568, %v4701
        %v4703 = vpop.f32.mrb[0].mxu0
        %4704 = vmatprep.mubr.bf16.mxu0 0
        %4705 = vmatmul.mubr.bf16.gmra.mrb[0].mxu0 %v4627
        %v4706 = vpop.f32.mrb[0].mxu0
        %v4707 = vadd.f32 %v4573, %v4706
        %v4708 = vpop.f32.mrb[0].mxu0
        %v4709 = vpop.f32.mrb[0].mxu0
        %v4710 = vadd.f32 %v4576, %v4709
        %v4711 = vpop.f32.mrb[0].mxu0
        %4712 = vmatprep.mubr.bf16.mxu0 0
        %4713 = vmatmul.mubr.bf16.gmra.mrb[0].mxu0 %v4630
        %v4714 = vpop.f32.mrb[0].mxu0
        %v4715 = vadd.f32 %v4581, %v4714
        %v4716 = vpop.f32.mrb[0].mxu0
        %v4717 = vpop.f32.mrb[0].mxu0
        %v4718 = vadd.f32 %v4584, %v4717
        %v4719 = vpop.f32.mrb[0].mxu0
        %4720 = vdwg.mxu0
        %v4721 = vld [vmem:[%s10] sm:$0x1]
        %v4722 = vlaneseq
        %v4723 = vshrl.u32 %v4722, 7
        %v4724 = vsub.s32 0, %v4723
        %v4725 = vrot.slane %v4721, %v4724
        %v4726 = vadd.f32 %v4667, %v4725
        %v4727 = vadd.f32 %v4670, %v4725
        %v4728 = vadd.f32 %v4675, %v4725
        %v4729 = vadd.f32 %v4678, %v4725
        %v4730 = vadd.f32 %v4683, %v4725
        %v4731 = vadd.f32 %v4686, %v4725
        %v4732 = vadd.f32 %v4691, %v4725
        %v4733 = vadd.f32 %v4694, %v4725
        %v4734 = vadd.f32 %v4699, %v4725
        %v4735 = vadd.f32 %v4702, %v4725
        %v4736 = vadd.f32 %v4707, %v4725
        %v4737 = vadd.f32 %v4710, %v4725
        %v4738 = vadd.f32 %v4715, %v4725
        %v4739 = vadd.f32 %v4718, %v4725
        %v4740 = vld [vmem:[%s13 + $0x1] sm:$0x1]
        %v4741 = vld [vmem:[%s14 + $0x1] sm:$0x1]
        %v4742 = vsel %vm1302, %v4726, 0.0
        %4743 = vadd.xlane.f32.xlu0 %v4742
        %v4744 = vpop.xlane.xlu0 %4743
        %v4745 = vsel %vm1302, %v4727, 0.0
        %4746 = vadd.xlane.f32.xlu0 %v4745
        %v4747 = vpop.xlane.xlu0 %4746
        %v4748 = vsel %vm1302, %v4728, 0.0
        %4749 = vadd.xlane.f32.xlu0 %v4748
        %v4750 = vpop.xlane.xlu0 %4749
        %v4751 = vsel %vm1302, %v4729, 0.0
        %4752 = vadd.xlane.f32.xlu0 %v4751
        %v4753 = vpop.xlane.xlu0 %4752
        %v4754 = vsel %vm1302, %v4730, 0.0
        %4755 = vadd.xlane.f32.xlu0 %v4754
        %v4756 = vpop.xlane.xlu0 %4755
        %v4757 = vsel %vm1302, %v4731, 0.0
        %4758 = vadd.xlane.f32.xlu0 %v4757
        %v4759 = vpop.xlane.xlu0 %4758
        %v4760 = vsel %vm1302, %v4732, 0.0
        %4761 = vadd.xlane.f32.xlu0 %v4760
        %v4762 = vpop.xlane.xlu0 %4761
        %v4763 = vsel %vm1302, %v4733, 0.0
        %4764 = vadd.xlane.f32.xlu0 %v4763
        %v4765 = vpop.xlane.xlu0 %4764
        %v4766 = vsel %vm1302, %v4734, 0.0
        %4767 = vadd.xlane.f32.xlu0 %v4766
        %v4768 = vpop.xlane.xlu0 %4767
        %v4769 = vsel %vm1302, %v4735, 0.0
        %4770 = vadd.xlane.f32.xlu0 %v4769
        %v4771 = vpop.xlane.xlu0 %4770
        %v4772 = vsel %vm1302, %v4736, 0.0
        %4773 = vadd.xlane.f32.xlu0 %v4772
        %v4774 = vpop.xlane.xlu0 %4773
        %v4775 = vsel %vm1302, %v4737, 0.0
        %4776 = vadd.xlane.f32.xlu0 %v4775
        %v4777 = vpop.xlane.xlu0 %4776
        %v4778 = vsel %vm1302, %v4738, 0.0
        %4779 = vadd.xlane.f32.xlu0 %v4778
        %v4780 = vpop.xlane.xlu0 %4779
        %v4781 = vsel %vm1302, %v4739, 0.0
        %4782 = vadd.xlane.f32.xlu0 %v4781
        %v4783 = vpop.xlane.xlu0 %4782
        %v4784 = vmul.f32 %v4744, %v1345
        %v4785 = vmul.f32 %v4747, %v1345
        %v4786 = vmul.f32 %v4750, %v1345
        %v4787 = vmul.f32 %v4753, %v1345
        %v4788 = vmul.f32 %v4756, %v1345
        %v4789 = vmul.f32 %v4759, %v1345
        %v4790 = vmul.f32 %v4762, %v1345
        %v4791 = vmul.f32 %v4765, %v1345
        %v4792 = vmul.f32 %v4768, %v1345
        %v4793 = vmul.f32 %v4771, %v1345
        %v4794 = vmul.f32 %v4774, %v1345
        %v4795 = vmul.f32 %v4777, %v1345
        %v4796 = vmul.f32 %v4780, %v1345
        %v4797 = vmul.f32 %v4783, %v1345
        %v4798 = vsub.f32 %v4726, %v4784
        %v4799 = vsub.f32 %v4727, %v4785
        %v4800 = vsub.f32 %v4728, %v4786
        %v4801 = vsub.f32 %v4729, %v4787
        %v4802 = vsub.f32 %v4730, %v4788
        %v4803 = vsub.f32 %v4731, %v4789
        %v4804 = vsub.f32 %v4732, %v4790
        %v4805 = vsub.f32 %v4733, %v4791
        %v4806 = vsub.f32 %v4734, %v4792
        %v4807 = vsub.f32 %v4735, %v4793
        %v4808 = vsub.f32 %v4736, %v4794
        %v4809 = vsub.f32 %v4737, %v4795
        %v4810 = vsub.f32 %v4738, %v4796
        %v4811 = vsub.f32 %v4739, %v4797
        %v4812 = vmul.f32 %v4798, %v4798
        %v4813 = vmul.f32 %v4799, %v4799
        %v4814 = vmul.f32 %v4800, %v4800
        %v4815 = vmul.f32 %v4801, %v4801
        %v4816 = vmul.f32 %v4802, %v4802
        %v4817 = vmul.f32 %v4803, %v4803
        %v4818 = vmul.f32 %v4804, %v4804
        %v4819 = vmul.f32 %v4805, %v4805
        %v4820 = vmul.f32 %v4806, %v4806
        %v4821 = vmul.f32 %v4807, %v4807
        %v4822 = vmul.f32 %v4808, %v4808
        %v4823 = vmul.f32 %v4809, %v4809
        %v4824 = vmul.f32 %v4810, %v4810
        %v4825 = vmul.f32 %v4811, %v4811
        %v4826 = vsel %vm1302, %v4812, 0.0
        %4827 = vadd.xlane.f32.xlu0 %v4826
        %v4828 = vpop.xlane.xlu0 %4827
        %v4829 = vsel %vm1302, %v4813, 0.0
        %4830 = vadd.xlane.f32.xlu0 %v4829
        %v4831 = vpop.xlane.xlu0 %4830
        %v4832 = vsel %vm1302, %v4814, 0.0
        %4833 = vadd.xlane.f32.xlu0 %v4832
        %v4834 = vpop.xlane.xlu0 %4833
        %v4835 = vsel %vm1302, %v4815, 0.0
        %4836 = vadd.xlane.f32.xlu0 %v4835
        %v4837 = vpop.xlane.xlu0 %4836
        %v4838 = vsel %vm1302, %v4816, 0.0
        %4839 = vadd.xlane.f32.xlu0 %v4838
        %v4840 = vpop.xlane.xlu0 %4839
        %v4841 = vsel %vm1302, %v4817, 0.0
        %4842 = vadd.xlane.f32.xlu0 %v4841
        %v4843 = vpop.xlane.xlu0 %4842
        %v4844 = vsel %vm1302, %v4818, 0.0
        %4845 = vadd.xlane.f32.xlu0 %v4844
        %v4846 = vpop.xlane.xlu0 %4845
        %v4847 = vsel %vm1302, %v4819, 0.0
        %4848 = vadd.xlane.f32.xlu0 %v4847
        %v4849 = vpop.xlane.xlu0 %4848
        %v4850 = vsel %vm1302, %v4820, 0.0
        %4851 = vadd.xlane.f32.xlu0 %v4850
        %v4852 = vpop.xlane.xlu0 %4851
        %v4853 = vsel %vm1302, %v4821, 0.0
        %4854 = vadd.xlane.f32.xlu0 %v4853
        %v4855 = vpop.xlane.xlu0 %4854
        %v4856 = vsel %vm1302, %v4822, 0.0
        %4857 = vadd.xlane.f32.xlu0 %v4856
        %v4858 = vpop.xlane.xlu0 %4857
        %v4859 = vsel %vm1302, %v4823, 0.0
        %4860 = vadd.xlane.f32.xlu0 %v4859
        %v4861 = vpop.xlane.xlu0 %4860
        %v4862 = vsel %vm1302, %v4824, 0.0
        %4863 = vadd.xlane.f32.xlu0 %v4862
        %v4864 = vpop.xlane.xlu0 %4863
        %v4865 = vsel %vm1302, %v4825, 0.0
        %4866 = vadd.xlane.f32.xlu0 %v4865
        %v4867 = vpop.xlane.xlu0 %4866
        %v4868 = vmul.f32 %v4828, %v1345
        %v4869 = vmul.f32 %v4831, %v1345
        %v4870 = vmul.f32 %v4834, %v1345
        %v4871 = vmul.f32 %v4837, %v1345
        %v4872 = vmul.f32 %v4840, %v1345
        %v4873 = vmul.f32 %v4843, %v1345
        %v4874 = vmul.f32 %v4846, %v1345
        %v4875 = vmul.f32 %v4849, %v1345
        %v4876 = vmul.f32 %v4852, %v1345
        %v4877 = vmul.f32 %v4855, %v1345
        %v4878 = vmul.f32 %v4858, %v1345
        %v4879 = vmul.f32 %v4861, %v1345
        %v4880 = vmul.f32 %v4864, %v1345
        %v4881 = vmul.f32 %v4867, %v1345
        %v4882 = vadd.f32 %v4868, 1e-05
        %v4883 = vadd.f32 %v4869, 1e-05
        %v4884 = vadd.f32 %v4870, 1e-05
        %v4885 = vadd.f32 %v4871, 1e-05
        %v4886 = vadd.f32 %v4872, 1e-05
        %v4887 = vadd.f32 %v4873, 1e-05
        %v4888 = vadd.f32 %v4874, 1e-05
        %v4889 = vadd.f32 %v4875, 1e-05
        %v4890 = vadd.f32 %v4876, 1e-05
        %v4891 = vadd.f32 %v4877, 1e-05
        %v4892 = vadd.f32 %v4878, 1e-05
        %v4893 = vadd.f32 %v4879, 1e-05
        %v4894 = vadd.f32 %v4880, 1e-05
        %v4895 = vadd.f32 %v4881, 1e-05
        %v4896 = vrsqrt.pop %v4882
        %v4897 = vrsqrt.pop %v4883
        %v4898 = vrsqrt.pop %v4884
        %v4899 = vrsqrt.pop %v4885
        %v4900 = vrsqrt.pop %v4886
        %v4901 = vrsqrt.pop %v4887
        %v4902 = vrsqrt.pop %v4888
        %v4903 = vrsqrt.pop %v4889
        %v4904 = vrsqrt.pop %v4890
        %v4905 = vrsqrt.pop %v4891
        %v4906 = vrsqrt.pop %v4892
        %v4907 = vrsqrt.pop %v4893
        %v4908 = vrsqrt.pop %v4894
        %v4909 = vrsqrt.pop %v4895
        %v4910 = vmul.f32 %v4798, %v4896
        %v4911 = vmul.f32 %v4799, %v4897
        %v4912 = vmul.f32 %v4800, %v4898
        %v4913 = vmul.f32 %v4801, %v4899
        %v4914 = vmul.f32 %v4802, %v4900
        %v4915 = vmul.f32 %v4803, %v4901
        %v4916 = vmul.f32 %v4804, %v4902
        %v4917 = vmul.f32 %v4805, %v4903
        %v4918 = vmul.f32 %v4806, %v4904
        %v4919 = vmul.f32 %v4807, %v4905
        %v4920 = vmul.f32 %v4808, %v4906
        %v4921 = vmul.f32 %v4809, %v4907
        %v4922 = vmul.f32 %v4810, %v4908
        %v4923 = vmul.f32 %v4811, %v4909
        %v4924 = vlaneseq
        %v4925 = vshrl.u32 %v4924, 7
        %v4926 = vsub.s32 0, %v4925
        %v4927 = vrot.slane %v4740, %v4926
        %v4928 = vmul.f32 %v4910, %v4927
        %v4929 = vmul.f32 %v4911, %v4927
        %v4930 = vmul.f32 %v4912, %v4927
        %v4931 = vmul.f32 %v4913, %v4927
        %v4932 = vmul.f32 %v4914, %v4927
        %v4933 = vmul.f32 %v4915, %v4927
        %v4934 = vmul.f32 %v4916, %v4927
        %v4935 = vmul.f32 %v4917, %v4927
        %v4936 = vmul.f32 %v4918, %v4927
        %v4937 = vmul.f32 %v4919, %v4927
        %v4938 = vmul.f32 %v4920, %v4927
        %v4939 = vmul.f32 %v4921, %v4927
        %v4940 = vmul.f32 %v4922, %v4927
        %v4941 = vmul.f32 %v4923, %v4927
        %v4942 = vlaneseq
        %v4943 = vshrl.u32 %v4942, 7
        %v4944 = vsub.s32 0, %v4943
        %v4945 = vrot.slane %v4741, %v4944
        %v4946 = vadd.f32 %v4928, %v4945
        %v4947 = vadd.f32 %v4929, %v4945
        %v4948 = vadd.f32 %v4930, %v4945
        %v4949 = vadd.f32 %v4931, %v4945
        %v4950 = vadd.f32 %v4932, %v4945
        %v4951 = vadd.f32 %v4933, %v4945
        %v4952 = vadd.f32 %v4934, %v4945
        %v4953 = vadd.f32 %v4935, %v4945
        %v4954 = vadd.f32 %v4936, %v4945
        %v4955 = vadd.f32 %v4937, %v4945
        %v4956 = vadd.f32 %v4938, %v4945
        %v4957 = vadd.f32 %v4939, %v4945
        %v4958 = vadd.f32 %v4940, %v4945
        %v4959 = vadd.f32 %v4941, %v4945
        %v4960 = vmax.f32 %v4946, 0.0
        %v4961 = vmax.f32 %v4947, 0.0
        %v4962 = vmax.f32 %v4948, 0.0
        %v4963 = vmax.f32 %v4949, 0.0
        %v4964 = vmax.f32 %v4950, 0.0
        %v4965 = vmax.f32 %v4951, 0.0
        %v4966 = vmax.f32 %v4952, 0.0
        %v4967 = vmax.f32 %v4953, 0.0
        %v4968 = vmax.f32 %v4954, 0.0
        %v4969 = vmax.f32 %v4955, 0.0
        %v4970 = vmax.f32 %v4956, 0.0
        %v4971 = vmax.f32 %v4957, 0.0
        %v4972 = vmax.f32 %v4958, 0.0
        %v4973 = vmax.f32 %v4959, 0.0
        %v4974 = vpack.c.bf16 %v4961, %v4960
        %v4975 = vpack.c.bf16 %v4963, %v4962
        %v4976 = vpack.c.bf16 %v4965, %v4964
        %v4977 = vpack.c.bf16 %v4967, %v4966
        %v4978 = vpack.c.bf16 %v4969, %v4968
        %v4979 = vpack.c.bf16 %v4971, %v4970
        %v4980 = vpack.c.bf16 %v4973, %v4972
        %s4981 = scalar_lea.vmem %s11, 32
        %v4982 = vld [vmem:[%s4981] sm:$0xf]
        %v4983 = vld [vmem:[%s4981 + $0x4] sm:$0xf]
        %v4984 = vld [vmem:[%s4981 + $0x8] sm:$0xf]
        %v4985 = vld [vmem:[%s4981 + $0xc] sm:$0xf]
        %v4986 = vld [vmem:[%s4981 + $0x10] sm:$0xf]
        %v4987 = vld [vmem:[%s4981 + $0x14] sm:$0xf]
        %v4988 = vld [vmem:[%s4981 + $0x18] sm:$0xf]
        %v4989 = vld [vmem:[%s4981 + $0x1c] sm:$0xf]
        %v4990 = vld [vmem:[%s12 + $0x1] sm:$0x1]
        %v4991 = vlaneseq
        %v4992 = vshrl.u32 %v4991, 7
        %v4993 = vsub.s32 0, %v4992
        %v4994 = vrot.slane %v4990, %v4993
        %v5003 = vunpack.c.l.b16 %v4982
        %v5004 = vunpack.c.l.b16 %v4983
        %v5005 = vunpack.c.l.b16 %v4984
        %v5006 = vunpack.c.l.b16 %v4985
        %v5007 = vunpack.c.l.b16 %v4986
        %v5008 = vunpack.c.l.b16 %v4987
        %v5009 = vunpack.c.l.b16 %v4988
        %v5010 = vunpack.c.l.b16 %v4989
        %v5011 = vpack.c.b16 %v5004, %v5003
        %v5012 = vpack.c.b16 %v5006, %v5005
        %v5013 = vpack.c.b16 %v5008, %v5007
        %v5014 = vpack.c.b16 %v5010, %v5009
        %v5020 = vsel %vm1302, %v4974, 0
        %v5023 = vsel %vm1302, %v4975, 0
        %v5026 = vsel %vm1302, %v4976, 0
        %v5029 = vsel %vm1302, %v4977, 0
        %v5032 = vsel %vm1302, %v4978, 0
        %v5035 = vsel %vm1302, %v4979, 0
        %v5038 = vsel %vm1302, %v4980, 0
        %5040 = vmatprep.subr.bf16.mxu0 0
        %5041 = vmatpush1.bf16.msra.mxu0 %v5011
        %5042 = vmatprep.subr.bf16.mxu0 0
        %5043 = vmatpush1.bf16.msra.mxu0 %v5012
        %5044 = vmatprep.subr.bf16.mxu0 0
        %5045 = vmatpush1.bf16.msra.mxu0 %v5013
        %5046 = vmatprep.subr.bf16.mxu0 0
        %5047 = vmatpush1.bf16.msra.mxu0 %v5014
        %5048 = vmatprep.subr.bf16.mxu0 0
        %5049 = vmatpush1.bf16.msra.mxu0 0
        %5050 = vmatprep.subr.bf16.mxu0 0
        %5051 = vmatpush1.bf16.msra.mxu0 0
        %5052 = vmatprep.subr.bf16.mxu0 0
        %5053 = vmatpush1.bf16.msra.mxu0 0
        %5054 = vmatprep.subr.bf16.mxu0 0
        %5055 = vmatpush1.bf16.msra.mxu0 0
        %5056 = vmatprep.subr.bf16.mxu0 0
        %5057 = vmatpush1.bf16.msra.mxu0 0
        %5058 = vmatprep.subr.bf16.mxu0 0
        %5059 = vmatpush1.bf16.msra.mxu0 0
        %5060 = vmatprep.subr.bf16.mxu0 0
        %5061 = vmatpush1.bf16.msra.mxu0 0
        %5062 = vmatprep.subr.bf16.mxu0 0
        %5063 = vmatpush1.bf16.msra.mxu0 0
        %5064 = vmatprep.subr.bf16.mxu0 0
        %5065 = vmatpush1.bf16.msra.mxu0 0
        %5066 = vmatprep.subr.bf16.mxu0 0
        %5067 = vmatpush1.bf16.msra.mxu0 0
        %5068 = vmatprep.subr.bf16.mxu0 0
        %5069 = vmatpush1.bf16.msra.mxu0 0
        %5070 = vmatprep.subr.bf16.mxu0 0
        %5071 = vmatpush1.bf16.msra.mxu0 0
        %5072 = vmatprep.mubr.bf16.mxu0 0
        %5073 = vmatmul.mubr.bf16.gmra.mrb[0].mxu0 %v5020
        %v5074 = vpop.f32.mrb[0].mxu0
        %v5075 = vadd.f32 %v4994, %v5074
        %v5076 = vpop.f32.mrb[0].mxu0
        %v5077 = vpop.f32.mrb[0].mxu0
        %v5078 = vadd.f32 %v4994, %v5077
        %v5079 = vpop.f32.mrb[0].mxu0
        %5080 = vmatprep.mubr.bf16.mxu0 0
        %5081 = vmatmul.mubr.bf16.gmra.mrb[0].mxu0 %v5023
        %v5082 = vpop.f32.mrb[0].mxu0
        %v5083 = vadd.f32 %v4994, %v5082
        %v5084 = vpop.f32.mrb[0].mxu0
        %v5085 = vpop.f32.mrb[0].mxu0
        %v5086 = vadd.f32 %v4994, %v5085
        %v5087 = vpop.f32.mrb[0].mxu0
        %5088 = vmatprep.mubr.bf16.mxu0 0
        %5089 = vmatmul.mubr.bf16.gmra.mrb[0].mxu0 %v5026
        %v5090 = vpop.f32.mrb[0].mxu0
        %v5091 = vadd.f32 %v4994, %v5090
        %v5092 = vpop.f32.mrb[0].mxu0
        %v5093 = vpop.f32.mrb[0].mxu0
        %v5094 = vadd.f32 %v4994, %v5093
        %v5095 = vpop.f32.mrb[0].mxu0
        %5096 = vmatprep.mubr.bf16.mxu0 0
        %5097 = vmatmul.mubr.bf16.gmra.mrb[0].mxu0 %v5029
        %v5098 = vpop.f32.mrb[0].mxu0
        %v5099 = vadd.f32 %v4994, %v5098
        %v5100 = vpop.f32.mrb[0].mxu0
        %v5101 = vpop.f32.mrb[0].mxu0
        %v5102 = vadd.f32 %v4994, %v5101
        %v5103 = vpop.f32.mrb[0].mxu0
        %5104 = vmatprep.mubr.bf16.mxu0 0
        %5105 = vmatmul.mubr.bf16.gmra.mrb[0].mxu0 %v5032
        %v5106 = vpop.f32.mrb[0].mxu0
        %v5107 = vadd.f32 %v4994, %v5106
        %v5108 = vpop.f32.mrb[0].mxu0
        %v5109 = vpop.f32.mrb[0].mxu0
        %v5110 = vadd.f32 %v4994, %v5109
        %v5111 = vpop.f32.mrb[0].mxu0
        %5112 = vmatprep.mubr.bf16.mxu0 0
        %5113 = vmatmul.mubr.bf16.gmra.mrb[0].mxu0 %v5035
        %v5114 = vpop.f32.mrb[0].mxu0
        %v5115 = vadd.f32 %v4994, %v5114
        %v5116 = vpop.f32.mrb[0].mxu0
        %v5117 = vpop.f32.mrb[0].mxu0
        %v5118 = vadd.f32 %v4994, %v5117
        %v5119 = vpop.f32.mrb[0].mxu0
        %5120 = vmatprep.mubr.bf16.mxu0 0
        %5121 = vmatmul.mubr.bf16.gmra.mrb[0].mxu0 %v5038
        %v5122 = vpop.f32.mrb[0].mxu0
        %v5123 = vadd.f32 %v4994, %v5122
        %v5124 = vpop.f32.mrb[0].mxu0
        %v5125 = vpop.f32.mrb[0].mxu0
        %v5126 = vadd.f32 %v4994, %v5125
        %v5127 = vpop.f32.mrb[0].mxu0
        %5128 = vdwg.mxu0
        %v5129 = vld [vmem:[%s15 + $0x1] sm:$0x1]
        %v5130 = vld [vmem:[%s16 + $0x1] sm:$0x1]
        %v5131 = vsel %vm1302, %v5075, 0.0
        %5132 = vadd.xlane.f32.xlu0 %v5131
        %v5133 = vpop.xlane.xlu0 %5132
        %v5134 = vsel %vm1302, %v5078, 0.0
        %5135 = vadd.xlane.f32.xlu0 %v5134
        %v5136 = vpop.xlane.xlu0 %5135
        %v5137 = vsel %vm1302, %v5083, 0.0
        %5138 = vadd.xlane.f32.xlu0 %v5137
        %v5139 = vpop.xlane.xlu0 %5138
        %v5140 = vsel %vm1302, %v5086, 0.0
        %5141 = vadd.xlane.f32.xlu0 %v5140
        %v5142 = vpop.xlane.xlu0 %5141
        %v5143 = vsel %vm1302, %v5091, 0.0
        %5144 = vadd.xlane.f32.xlu0 %v5143
        %v5145 = vpop.xlane.xlu0 %5144
        %v5146 = vsel %vm1302, %v5094, 0.0
        %5147 = vadd.xlane.f32.xlu0 %v5146
        %v5148 = vpop.xlane.xlu0 %5147
        %v5149 = vsel %vm1302, %v5099, 0.0
        %5150 = vadd.xlane.f32.xlu0 %v5149
        %v5151 = vpop.xlane.xlu0 %5150
        %v5152 = vsel %vm1302, %v5102, 0.0
        %5153 = vadd.xlane.f32.xlu0 %v5152
        %v5154 = vpop.xlane.xlu0 %5153
        %v5155 = vsel %vm1302, %v5107, 0.0
        %5156 = vadd.xlane.f32.xlu0 %v5155
        %v5157 = vpop.xlane.xlu0 %5156
        %v5158 = vsel %vm1302, %v5110, 0.0
        %5159 = vadd.xlane.f32.xlu0 %v5158
        %v5160 = vpop.xlane.xlu0 %5159
        %v5161 = vsel %vm1302, %v5115, 0.0
        %5162 = vadd.xlane.f32.xlu0 %v5161
        %v5163 = vpop.xlane.xlu0 %5162
        %v5164 = vsel %vm1302, %v5118, 0.0
        %5165 = vadd.xlane.f32.xlu0 %v5164
        %v5166 = vpop.xlane.xlu0 %5165
        %v5167 = vsel %vm1302, %v5123, 0.0
        %5168 = vadd.xlane.f32.xlu0 %v5167
        %v5169 = vpop.xlane.xlu0 %5168
        %v5170 = vsel %vm1302, %v5126, 0.0
        %5171 = vadd.xlane.f32.xlu0 %v5170
        %v5172 = vpop.xlane.xlu0 %5171
        %v5173 = vmul.f32 %v5133, %v1345
        %v5174 = vmul.f32 %v5136, %v1345
        %v5175 = vmul.f32 %v5139, %v1345
        %v5176 = vmul.f32 %v5142, %v1345
        %v5177 = vmul.f32 %v5145, %v1345
        %v5178 = vmul.f32 %v5148, %v1345
        %v5179 = vmul.f32 %v5151, %v1345
        %v5180 = vmul.f32 %v5154, %v1345
        %v5181 = vmul.f32 %v5157, %v1345
        %v5182 = vmul.f32 %v5160, %v1345
        %v5183 = vmul.f32 %v5163, %v1345
        %v5184 = vmul.f32 %v5166, %v1345
        %v5185 = vmul.f32 %v5169, %v1345
        %v5186 = vmul.f32 %v5172, %v1345
        %v5187 = vsub.f32 %v5075, %v5173
        %v5188 = vsub.f32 %v5078, %v5174
        %v5189 = vsub.f32 %v5083, %v5175
        %v5190 = vsub.f32 %v5086, %v5176
        %v5191 = vsub.f32 %v5091, %v5177
        %v5192 = vsub.f32 %v5094, %v5178
        %v5193 = vsub.f32 %v5099, %v5179
        %v5194 = vsub.f32 %v5102, %v5180
        %v5195 = vsub.f32 %v5107, %v5181
        %v5196 = vsub.f32 %v5110, %v5182
        %v5197 = vsub.f32 %v5115, %v5183
        %v5198 = vsub.f32 %v5118, %v5184
        %v5199 = vsub.f32 %v5123, %v5185
        %v5200 = vsub.f32 %v5126, %v5186
        %v5201 = vmul.f32 %v5187, %v5187
        %v5202 = vmul.f32 %v5188, %v5188
        %v5203 = vmul.f32 %v5189, %v5189
        %v5204 = vmul.f32 %v5190, %v5190
        %v5205 = vmul.f32 %v5191, %v5191
        %v5206 = vmul.f32 %v5192, %v5192
        %v5207 = vmul.f32 %v5193, %v5193
        %v5208 = vmul.f32 %v5194, %v5194
        %v5209 = vmul.f32 %v5195, %v5195
        %v5210 = vmul.f32 %v5196, %v5196
        %v5211 = vmul.f32 %v5197, %v5197
        %v5212 = vmul.f32 %v5198, %v5198
        %v5213 = vmul.f32 %v5199, %v5199
        %v5214 = vmul.f32 %v5200, %v5200
        %v5215 = vsel %vm1302, %v5201, 0.0
        %5216 = vadd.xlane.f32.xlu0 %v5215
        %v5217 = vpop.xlane.xlu0 %5216
        %v5218 = vsel %vm1302, %v5202, 0.0
        %5219 = vadd.xlane.f32.xlu0 %v5218
        %v5220 = vpop.xlane.xlu0 %5219
        %v5221 = vsel %vm1302, %v5203, 0.0
        %5222 = vadd.xlane.f32.xlu0 %v5221
        %v5223 = vpop.xlane.xlu0 %5222
        %v5224 = vsel %vm1302, %v5204, 0.0
        %5225 = vadd.xlane.f32.xlu0 %v5224
        %v5226 = vpop.xlane.xlu0 %5225
        %v5227 = vsel %vm1302, %v5205, 0.0
        %5228 = vadd.xlane.f32.xlu0 %v5227
        %v5229 = vpop.xlane.xlu0 %5228
        %v5230 = vsel %vm1302, %v5206, 0.0
        %5231 = vadd.xlane.f32.xlu0 %v5230
        %v5232 = vpop.xlane.xlu0 %5231
        %v5233 = vsel %vm1302, %v5207, 0.0
        %5234 = vadd.xlane.f32.xlu0 %v5233
        %v5235 = vpop.xlane.xlu0 %5234
        %v5236 = vsel %vm1302, %v5208, 0.0
        %5237 = vadd.xlane.f32.xlu0 %v5236
        %v5238 = vpop.xlane.xlu0 %5237
        %v5239 = vsel %vm1302, %v5209, 0.0
        %5240 = vadd.xlane.f32.xlu0 %v5239
        %v5241 = vpop.xlane.xlu0 %5240
        %v5242 = vsel %vm1302, %v5210, 0.0
        %5243 = vadd.xlane.f32.xlu0 %v5242
        %v5244 = vpop.xlane.xlu0 %5243
        %v5245 = vsel %vm1302, %v5211, 0.0
        %5246 = vadd.xlane.f32.xlu0 %v5245
        %v5247 = vpop.xlane.xlu0 %5246
        %v5248 = vsel %vm1302, %v5212, 0.0
        %5249 = vadd.xlane.f32.xlu0 %v5248
        %v5250 = vpop.xlane.xlu0 %5249
        %v5251 = vsel %vm1302, %v5213, 0.0
        %5252 = vadd.xlane.f32.xlu0 %v5251
        %v5253 = vpop.xlane.xlu0 %5252
        %v5254 = vsel %vm1302, %v5214, 0.0
        %5255 = vadd.xlane.f32.xlu0 %v5254
        %v5256 = vpop.xlane.xlu0 %5255
        %v5257 = vmul.f32 %v5217, %v1345
        %v5258 = vmul.f32 %v5220, %v1345
        %v5259 = vmul.f32 %v5223, %v1345
        %v5260 = vmul.f32 %v5226, %v1345
        %v5261 = vmul.f32 %v5229, %v1345
        %v5262 = vmul.f32 %v5232, %v1345
        %v5263 = vmul.f32 %v5235, %v1345
        %v5264 = vmul.f32 %v5238, %v1345
        %v5265 = vmul.f32 %v5241, %v1345
        %v5266 = vmul.f32 %v5244, %v1345
        %v5267 = vmul.f32 %v5247, %v1345
        %v5268 = vmul.f32 %v5250, %v1345
        %v5269 = vmul.f32 %v5253, %v1345
        %v5270 = vmul.f32 %v5256, %v1345
        %v5271 = vadd.f32 %v5257, 1e-05
        %v5272 = vadd.f32 %v5258, 1e-05
        %v5273 = vadd.f32 %v5259, 1e-05
        %v5274 = vadd.f32 %v5260, 1e-05
        %v5275 = vadd.f32 %v5261, 1e-05
        %v5276 = vadd.f32 %v5262, 1e-05
        %v5277 = vadd.f32 %v5263, 1e-05
        %v5278 = vadd.f32 %v5264, 1e-05
        %v5279 = vadd.f32 %v5265, 1e-05
        %v5280 = vadd.f32 %v5266, 1e-05
        %v5281 = vadd.f32 %v5267, 1e-05
        %v5282 = vadd.f32 %v5268, 1e-05
        %v5283 = vadd.f32 %v5269, 1e-05
        %v5284 = vadd.f32 %v5270, 1e-05
        %v5285 = vrsqrt.pop %v5271
        %v5286 = vrsqrt.pop %v5272
        %v5287 = vrsqrt.pop %v5273
        %v5288 = vrsqrt.pop %v5274
        %v5289 = vrsqrt.pop %v5275
        %v5290 = vrsqrt.pop %v5276
        %v5291 = vrsqrt.pop %v5277
        %v5292 = vrsqrt.pop %v5278
        %v5293 = vrsqrt.pop %v5279
        %v5294 = vrsqrt.pop %v5280
        %v5295 = vrsqrt.pop %v5281
        %v5296 = vrsqrt.pop %v5282
        %v5297 = vrsqrt.pop %v5283
        %v5298 = vrsqrt.pop %v5284
        %v5299 = vmul.f32 %v5187, %v5285
        %v5300 = vmul.f32 %v5188, %v5286
        %v5301 = vmul.f32 %v5189, %v5287
        %v5302 = vmul.f32 %v5190, %v5288
        %v5303 = vmul.f32 %v5191, %v5289
        %v5304 = vmul.f32 %v5192, %v5290
        %v5305 = vmul.f32 %v5193, %v5291
        %v5306 = vmul.f32 %v5194, %v5292
        %v5307 = vmul.f32 %v5195, %v5293
        %v5308 = vmul.f32 %v5196, %v5294
        %v5309 = vmul.f32 %v5197, %v5295
        %v5310 = vmul.f32 %v5198, %v5296
        %v5311 = vmul.f32 %v5199, %v5297
        %v5312 = vmul.f32 %v5200, %v5298
        %v5313 = vlaneseq
        %v5314 = vshrl.u32 %v5313, 7
        %v5315 = vsub.s32 0, %v5314
        %v5316 = vrot.slane %v5129, %v5315
        %v5317 = vmul.f32 %v5299, %v5316
        %v5318 = vmul.f32 %v5300, %v5316
        %v5319 = vmul.f32 %v5301, %v5316
        %v5320 = vmul.f32 %v5302, %v5316
        %v5321 = vmul.f32 %v5303, %v5316
        %v5322 = vmul.f32 %v5304, %v5316
        %v5323 = vmul.f32 %v5305, %v5316
        %v5324 = vmul.f32 %v5306, %v5316
        %v5325 = vmul.f32 %v5307, %v5316
        %v5326 = vmul.f32 %v5308, %v5316
        %v5327 = vmul.f32 %v5309, %v5316
        %v5328 = vmul.f32 %v5310, %v5316
        %v5329 = vmul.f32 %v5311, %v5316
        %v5330 = vmul.f32 %v5312, %v5316
        %v5331 = vlaneseq
        %v5332 = vshrl.u32 %v5331, 7
        %v5333 = vsub.s32 0, %v5332
        %v5334 = vrot.slane %v5130, %v5333
        %v5335 = vadd.f32 %v5317, %v5334
        %v5336 = vadd.f32 %v5318, %v5334
        %v5337 = vadd.f32 %v5319, %v5334
        %v5338 = vadd.f32 %v5320, %v5334
        %v5339 = vadd.f32 %v5321, %v5334
        %v5340 = vadd.f32 %v5322, %v5334
        %v5341 = vadd.f32 %v5323, %v5334
        %v5342 = vadd.f32 %v5324, %v5334
        %v5343 = vadd.f32 %v5325, %v5334
        %v5344 = vadd.f32 %v5326, %v5334
        %v5345 = vadd.f32 %v5327, %v5334
        %v5346 = vadd.f32 %v5328, %v5334
        %v5347 = vadd.f32 %v5329, %v5334
        %v5348 = vadd.f32 %v5330, %v5334
        %v5349 = vld [vmem:[%s17 + $0x1] sm:$0x1]
        %v5350 = vld [vmem:[%s18 + $0x1] sm:$0x1]
        %5365 = vrot.lane.b32.xlu0 %v4726, 64
        %v5366 = vpop.permute.xlu0 %5365
        %5367 = vrot.lane.b32.xlu0 %v4727, 64
        %v5368 = vpop.permute.xlu0 %5367
        %5369 = vrot.lane.b32.xlu0 %v4728, 64
        %v5370 = vpop.permute.xlu0 %5369
        %5371 = vrot.lane.b32.xlu0 %v4729, 64
        %v5372 = vpop.permute.xlu0 %5371
        %5373 = vrot.lane.b32.xlu0 %v4730, 64
        %v5374 = vpop.permute.xlu0 %5373
        %5375 = vrot.lane.b32.xlu0 %v4731, 64
        %v5376 = vpop.permute.xlu0 %5375
        %5377 = vrot.lane.b32.xlu0 %v4732, 64
        %v5378 = vpop.permute.xlu0 %5377
        %5379 = vrot.lane.b32.xlu0 %v4733, 64
        %v5380 = vpop.permute.xlu0 %5379
        %5381 = vrot.lane.b32.xlu0 %v4734, 64
        %v5382 = vpop.permute.xlu0 %5381
        %5383 = vrot.lane.b32.xlu0 %v4735, 64
        %v5384 = vpop.permute.xlu0 %5383
        %5385 = vrot.lane.b32.xlu0 %v4736, 64
        %v5386 = vpop.permute.xlu0 %5385
        %5387 = vrot.lane.b32.xlu0 %v4737, 64
        %v5388 = vpop.permute.xlu0 %5387
        %5389 = vrot.lane.b32.xlu0 %v4738, 64
        %v5390 = vpop.permute.xlu0 %5389
        %5391 = vrot.lane.b32.xlu0 %v4739, 64
        %v5392 = vpop.permute.xlu0 %5391
        %v5407 = vsel %vm1302, %v5366, 0.0
        %5408 = vadd.xlane.f32.xlu0 %v5407
        %v5409 = vpop.xlane.xlu0 %5408
        %v5410 = vsel %vm1302, %v5368, 0.0
        %5411 = vadd.xlane.f32.xlu0 %v5410
        %v5412 = vpop.xlane.xlu0 %5411
        %v5413 = vsel %vm1302, %v5370, 0.0
        %5414 = vadd.xlane.f32.xlu0 %v5413
        %v5415 = vpop.xlane.xlu0 %5414
        %v5416 = vsel %vm1302, %v5372, 0.0
        %5417 = vadd.xlane.f32.xlu0 %v5416
        %v5418 = vpop.xlane.xlu0 %5417
        %v5419 = vsel %vm1302, %v5374, 0.0
        %5420 = vadd.xlane.f32.xlu0 %v5419
        %v5421 = vpop.xlane.xlu0 %5420
        %v5422 = vsel %vm1302, %v5376, 0.0
        %5423 = vadd.xlane.f32.xlu0 %v5422
        %v5424 = vpop.xlane.xlu0 %5423
        %v5425 = vsel %vm1302, %v5378, 0.0
        %5426 = vadd.xlane.f32.xlu0 %v5425
        %v5427 = vpop.xlane.xlu0 %5426
        %v5428 = vsel %vm1302, %v5380, 0.0
        %5429 = vadd.xlane.f32.xlu0 %v5428
        %v5430 = vpop.xlane.xlu0 %5429
        %v5431 = vsel %vm1302, %v5382, 0.0
        %5432 = vadd.xlane.f32.xlu0 %v5431
        %v5433 = vpop.xlane.xlu0 %5432
        %v5434 = vsel %vm1302, %v5384, 0.0
        %5435 = vadd.xlane.f32.xlu0 %v5434
        %v5436 = vpop.xlane.xlu0 %5435
        %v5437 = vsel %vm1302, %v5386, 0.0
        %5438 = vadd.xlane.f32.xlu0 %v5437
        %v5439 = vpop.xlane.xlu0 %5438
        %v5440 = vsel %vm1302, %v5388, 0.0
        %5441 = vadd.xlane.f32.xlu0 %v5440
        %v5442 = vpop.xlane.xlu0 %5441
        %v5443 = vsel %vm1302, %v5390, 0.0
        %5444 = vadd.xlane.f32.xlu0 %v5443
        %v5445 = vpop.xlane.xlu0 %5444
        %v5446 = vsel %vm1302, %v5392, 0.0
        %5447 = vadd.xlane.f32.xlu0 %v5446
        %v5448 = vpop.xlane.xlu0 %5447
        %v5449 = vmul.f32 %v5409, %v1345
        %v5450 = vmul.f32 %v5412, %v1345
        %v5451 = vmul.f32 %v5415, %v1345
        %v5452 = vmul.f32 %v5418, %v1345
        %v5453 = vmul.f32 %v5421, %v1345
        %v5454 = vmul.f32 %v5424, %v1345
        %v5455 = vmul.f32 %v5427, %v1345
        %v5456 = vmul.f32 %v5430, %v1345
        %v5457 = vmul.f32 %v5433, %v1345
        %v5458 = vmul.f32 %v5436, %v1345
        %v5459 = vmul.f32 %v5439, %v1345
        %v5460 = vmul.f32 %v5442, %v1345
        %v5461 = vmul.f32 %v5445, %v1345
        %v5462 = vmul.f32 %v5448, %v1345
        %v5463 = vsub.f32 %v4726, %v5449
        %v5464 = vsub.f32 %v4727, %v5450
        %v5465 = vsub.f32 %v4728, %v5451
        %v5466 = vsub.f32 %v4729, %v5452
        %v5467 = vsub.f32 %v4730, %v5453
        %v5468 = vsub.f32 %v4731, %v5454
        %v5469 = vsub.f32 %v4732, %v5455
        %v5470 = vsub.f32 %v4733, %v5456
        %v5471 = vsub.f32 %v4734, %v5457
        %v5472 = vsub.f32 %v4735, %v5458
        %v5473 = vsub.f32 %v4736, %v5459
        %v5474 = vsub.f32 %v4737, %v5460
        %v5475 = vsub.f32 %v4738, %v5461
        %v5476 = vsub.f32 %v4739, %v5462
        %v5477 = vmul.f32 %v5463, %v5463
        %v5478 = vmul.f32 %v5464, %v5464
        %v5479 = vmul.f32 %v5465, %v5465
        %v5480 = vmul.f32 %v5466, %v5466
        %v5481 = vmul.f32 %v5467, %v5467
        %v5482 = vmul.f32 %v5468, %v5468
        %v5483 = vmul.f32 %v5469, %v5469
        %v5484 = vmul.f32 %v5470, %v5470
        %v5485 = vmul.f32 %v5471, %v5471
        %v5486 = vmul.f32 %v5472, %v5472
        %v5487 = vmul.f32 %v5473, %v5473
        %v5488 = vmul.f32 %v5474, %v5474
        %v5489 = vmul.f32 %v5475, %v5475
        %v5490 = vmul.f32 %v5476, %v5476
        %5505 = vrot.lane.b32.xlu0 %v5477, 64
        %v5506 = vpop.permute.xlu0 %5505
        %5507 = vrot.lane.b32.xlu0 %v5478, 64
        %v5508 = vpop.permute.xlu0 %5507
        %5509 = vrot.lane.b32.xlu0 %v5479, 64
        %v5510 = vpop.permute.xlu0 %5509
        %5511 = vrot.lane.b32.xlu0 %v5480, 64
        %v5512 = vpop.permute.xlu0 %5511
        %5513 = vrot.lane.b32.xlu0 %v5481, 64
        %v5514 = vpop.permute.xlu0 %5513
        %5515 = vrot.lane.b32.xlu0 %v5482, 64
        %v5516 = vpop.permute.xlu0 %5515
        %5517 = vrot.lane.b32.xlu0 %v5483, 64
        %v5518 = vpop.permute.xlu0 %5517
        %5519 = vrot.lane.b32.xlu0 %v5484, 64
        %v5520 = vpop.permute.xlu0 %5519
        %5521 = vrot.lane.b32.xlu0 %v5485, 64
        %v5522 = vpop.permute.xlu0 %5521
        %5523 = vrot.lane.b32.xlu0 %v5486, 64
        %v5524 = vpop.permute.xlu0 %5523
        %5525 = vrot.lane.b32.xlu0 %v5487, 64
        %v5526 = vpop.permute.xlu0 %5525
        %5527 = vrot.lane.b32.xlu0 %v5488, 64
        %v5528 = vpop.permute.xlu0 %5527
        %5529 = vrot.lane.b32.xlu0 %v5489, 64
        %v5530 = vpop.permute.xlu0 %5529
        %5531 = vrot.lane.b32.xlu0 %v5490, 64
        %v5532 = vpop.permute.xlu0 %5531
        %v5547 = vsel %vm1302, %v5506, 0.0
        %5548 = vadd.xlane.f32.xlu0 %v5547
        %v5549 = vpop.xlane.xlu0 %5548
        %v5550 = vsel %vm1302, %v5508, 0.0
        %5551 = vadd.xlane.f32.xlu0 %v5550
        %v5552 = vpop.xlane.xlu0 %5551
        %v5553 = vsel %vm1302, %v5510, 0.0
        %5554 = vadd.xlane.f32.xlu0 %v5553
        %v5555 = vpop.xlane.xlu0 %5554
        %v5556 = vsel %vm1302, %v5512, 0.0
        %5557 = vadd.xlane.f32.xlu0 %v5556
        %v5558 = vpop.xlane.xlu0 %5557
        %v5559 = vsel %vm1302, %v5514, 0.0
        %5560 = vadd.xlane.f32.xlu0 %v5559
        %v5561 = vpop.xlane.xlu0 %5560
        %v5562 = vsel %vm1302, %v5516, 0.0
        %5563 = vadd.xlane.f32.xlu0 %v5562
        %v5564 = vpop.xlane.xlu0 %5563
        %v5565 = vsel %vm1302, %v5518, 0.0
        %5566 = vadd.xlane.f32.xlu0 %v5565
        %v5567 = vpop.xlane.xlu0 %5566
        %v5568 = vsel %vm1302, %v5520, 0.0
        %5569 = vadd.xlane.f32.xlu0 %v5568
        %v5570 = vpop.xlane.xlu0 %5569
        %v5571 = vsel %vm1302, %v5522, 0.0
        %5572 = vadd.xlane.f32.xlu0 %v5571
        %v5573 = vpop.xlane.xlu0 %5572
        %v5574 = vsel %vm1302, %v5524, 0.0
        %5575 = vadd.xlane.f32.xlu0 %v5574
        %v5576 = vpop.xlane.xlu0 %5575
        %v5577 = vsel %vm1302, %v5526, 0.0
        %5578 = vadd.xlane.f32.xlu0 %v5577
        %v5579 = vpop.xlane.xlu0 %5578
        %v5580 = vsel %vm1302, %v5528, 0.0
        %5581 = vadd.xlane.f32.xlu0 %v5580
        %v5582 = vpop.xlane.xlu0 %5581
        %v5583 = vsel %vm1302, %v5530, 0.0
        %5584 = vadd.xlane.f32.xlu0 %v5583
        %v5585 = vpop.xlane.xlu0 %5584
        %v5586 = vsel %vm1302, %v5532, 0.0
        %5587 = vadd.xlane.f32.xlu0 %v5586
        %v5588 = vpop.xlane.xlu0 %5587
        %v5589 = vmul.f32 %v5549, %v1345
        %v5590 = vmul.f32 %v5552, %v1345
        %v5591 = vmul.f32 %v5555, %v1345
        %v5592 = vmul.f32 %v5558, %v1345
        %v5593 = vmul.f32 %v5561, %v1345
        %v5594 = vmul.f32 %v5564, %v1345
        %v5595 = vmul.f32 %v5567, %v1345
        %v5596 = vmul.f32 %v5570, %v1345
        %v5597 = vmul.f32 %v5573, %v1345
        %v5598 = vmul.f32 %v5576, %v1345
        %v5599 = vmul.f32 %v5579, %v1345
        %v5600 = vmul.f32 %v5582, %v1345
        %v5601 = vmul.f32 %v5585, %v1345
        %v5602 = vmul.f32 %v5588, %v1345
        %v5603 = vadd.f32 %v5589, 1e-05
        %v5604 = vadd.f32 %v5590, 1e-05
        %v5605 = vadd.f32 %v5591, 1e-05
        %v5606 = vadd.f32 %v5592, 1e-05
        %v5607 = vadd.f32 %v5593, 1e-05
        %v5608 = vadd.f32 %v5594, 1e-05
        %v5609 = vadd.f32 %v5595, 1e-05
        %v5610 = vadd.f32 %v5596, 1e-05
        %v5611 = vadd.f32 %v5597, 1e-05
        %v5612 = vadd.f32 %v5598, 1e-05
        %v5613 = vadd.f32 %v5599, 1e-05
        %v5614 = vadd.f32 %v5600, 1e-05
        %v5615 = vadd.f32 %v5601, 1e-05
        %v5616 = vadd.f32 %v5602, 1e-05
        %v5617 = vrsqrt.pop %v5603
        %v5618 = vrsqrt.pop %v5604
        %v5619 = vrsqrt.pop %v5605
        %v5620 = vrsqrt.pop %v5606
        %v5621 = vrsqrt.pop %v5607
        %v5622 = vrsqrt.pop %v5608
        %v5623 = vrsqrt.pop %v5609
        %v5624 = vrsqrt.pop %v5610
        %v5625 = vrsqrt.pop %v5611
        %v5626 = vrsqrt.pop %v5612
        %v5627 = vrsqrt.pop %v5613
        %v5628 = vrsqrt.pop %v5614
        %v5629 = vrsqrt.pop %v5615
        %v5630 = vrsqrt.pop %v5616
        %v5631 = vmul.f32 %v5463, %v5617
        %v5632 = vmul.f32 %v5464, %v5618
        %v5633 = vmul.f32 %v5465, %v5619
        %v5634 = vmul.f32 %v5466, %v5620
        %v5635 = vmul.f32 %v5467, %v5621
        %v5636 = vmul.f32 %v5468, %v5622
        %v5637 = vmul.f32 %v5469, %v5623
        %v5638 = vmul.f32 %v5470, %v5624
        %v5639 = vmul.f32 %v5471, %v5625
        %v5640 = vmul.f32 %v5472, %v5626
        %v5641 = vmul.f32 %v5473, %v5627
        %v5642 = vmul.f32 %v5474, %v5628
        %v5643 = vmul.f32 %v5475, %v5629
        %v5644 = vmul.f32 %v5476, %v5630
        %v5645 = vlaneseq
        %v5646 = vshrl.u32 %v5645, 7
        %v5647 = vsub.s32 0, %v5646
        %v5648 = vrot.slane %v5349, %v5647
        %5650 = vrot.lane.b32.xlu0 %v5648, 64
        %v5651 = vpop.permute.xlu0 %5650
        %v5653 = vmul.f32 %v5631, %v5651
        %v5654 = vmul.f32 %v5632, %v5651
        %v5655 = vmul.f32 %v5633, %v5651
        %v5656 = vmul.f32 %v5634, %v5651
        %v5657 = vmul.f32 %v5635, %v5651
        %v5658 = vmul.f32 %v5636, %v5651
        %v5659 = vmul.f32 %v5637, %v5651
        %v5660 = vmul.f32 %v5638, %v5651
        %v5661 = vmul.f32 %v5639, %v5651
        %v5662 = vmul.f32 %v5640, %v5651
        %v5663 = vmul.f32 %v5641, %v5651
        %v5664 = vmul.f32 %v5642, %v5651
        %v5665 = vmul.f32 %v5643, %v5651
        %v5666 = vmul.f32 %v5644, %v5651
        %v5667 = vlaneseq
        %v5668 = vshrl.u32 %v5667, 7
        %v5669 = vsub.s32 0, %v5668
        %v5670 = vrot.slane %v5350, %v5669
        %5672 = vrot.lane.b32.xlu0 %v5670, 64
        %v5673 = vpop.permute.xlu0 %5672
        %v5675 = vadd.f32 %v5653, %v5673
        %v5676 = vadd.f32 %v5654, %v5673
        %v5677 = vadd.f32 %v5655, %v5673
        %v5678 = vadd.f32 %v5656, %v5673
        %v5679 = vadd.f32 %v5657, %v5673
        %v5680 = vadd.f32 %v5658, %v5673
        %v5681 = vadd.f32 %v5659, %v5673
        %v5682 = vadd.f32 %v5660, %v5673
        %v5683 = vadd.f32 %v5661, %v5673
        %v5684 = vadd.f32 %v5662, %v5673
        %v5685 = vadd.f32 %v5663, %v5673
        %v5686 = vadd.f32 %v5664, %v5673
        %v5687 = vadd.f32 %v5665, %v5673
        %v5688 = vadd.f32 %v5666, %v5673
        %5703 = vrot.lane.b32.xlu0 %v5675, 64
        %v5704 = vpop.permute.xlu0 %5703
        %5705 = vrot.lane.b32.xlu0 %v5676, 64
        %v5706 = vpop.permute.xlu0 %5705
        %5707 = vrot.lane.b32.xlu0 %v5677, 64
        %v5708 = vpop.permute.xlu0 %5707
        %5709 = vrot.lane.b32.xlu0 %v5678, 64
        %v5710 = vpop.permute.xlu0 %5709
        %5711 = vrot.lane.b32.xlu0 %v5679, 64
        %v5712 = vpop.permute.xlu0 %5711
        %5713 = vrot.lane.b32.xlu0 %v5680, 64
        %v5714 = vpop.permute.xlu0 %5713
        %5715 = vrot.lane.b32.xlu0 %v5681, 64
        %v5716 = vpop.permute.xlu0 %5715
        %5717 = vrot.lane.b32.xlu0 %v5682, 64
        %v5718 = vpop.permute.xlu0 %5717
        %5719 = vrot.lane.b32.xlu0 %v5683, 64
        %v5720 = vpop.permute.xlu0 %5719
        %5721 = vrot.lane.b32.xlu0 %v5684, 64
        %v5722 = vpop.permute.xlu0 %5721
        %5723 = vrot.lane.b32.xlu0 %v5685, 64
        %v5724 = vpop.permute.xlu0 %5723
        %5725 = vrot.lane.b32.xlu0 %v5686, 64
        %v5726 = vpop.permute.xlu0 %5725
        %5727 = vrot.lane.b32.xlu0 %v5687, 64
        %v5728 = vpop.permute.xlu0 %5727
        %5729 = vrot.lane.b32.xlu0 %v5688, 64
        %v5730 = vpop.permute.xlu0 %5729
        %v5745 = vadd.f32 %v5335, %v5704
        %v5746 = vadd.f32 %v5336, %v5706
        %v5747 = vadd.f32 %v5337, %v5708
        %v5748 = vadd.f32 %v5338, %v5710
        %v5749 = vadd.f32 %v5339, %v5712
        %v5750 = vadd.f32 %v5340, %v5714
        %v5751 = vadd.f32 %v5341, %v5716
        %v5752 = vadd.f32 %v5342, %v5718
        %v5753 = vadd.f32 %v5343, %v5720
        %v5754 = vadd.f32 %v5344, %v5722
        %v5755 = vadd.f32 %v5345, %v5724
        %v5756 = vadd.f32 %v5346, %v5726
        %v5757 = vadd.f32 %v5347, %v5728
        %v5758 = vadd.f32 %v5348, %v5730
        %v5759 = vmax.f32 %v5745, 0.0
        %v5760 = vmax.f32 %v5746, 0.0
        %v5761 = vmax.f32 %v5747, 0.0
        %v5762 = vmax.f32 %v5748, 0.0
        %v5763 = vmax.f32 %v5749, 0.0
        %v5764 = vmax.f32 %v5750, 0.0
        %v5765 = vmax.f32 %v5751, 0.0
        %v5766 = vmax.f32 %v5752, 0.0
        %v5767 = vmax.f32 %v5753, 0.0
        %v5768 = vmax.f32 %v5754, 0.0
        %v5769 = vmax.f32 %v5755, 0.0
        %v5770 = vmax.f32 %v5756, 0.0
        %v5771 = vmax.f32 %v5757, 0.0
        %v5772 = vmax.f32 %v5758, 0.0
        %v5773 = vsel %vm3230, %v5759, -1e+15
        %v5774 = vsel %vm3231, %v5760, -1e+15
        %v5775 = vsel %vm3232, %v5761, -1e+15
        %v5776 = vsel %vm3233, %v5762, -1e+15
        %v5777 = vsel %vm3234, %v5763, -1e+15
        %v5778 = vsel %vm3235, %v5764, -1e+15
        %v5779 = vsel %vm3236, %v5765, -1e+15
        %v5780 = vsel %vm3237, %v5766, -1e+15
        %v5781 = vsel %vm3238, %v5767, -1e+15
        %v5782 = vsel %vm3239, %v5768, -1e+15
        %v5783 = vsel %vm3240, %v5769, -1e+15
        %v5784 = vsel %vm3241, %v5770, -1e+15
        %v5785 = vsel %vm3242, %v5771, -1e+15
        %v5786 = vsel %vm3243, %v5772, -1e+15
        %v5787 = vsel %vm3244, %v5759, -1e+15
        %v5788 = vsel %vm3245, %v5760, -1e+15
        %v5789 = vsel %vm3246, %v5761, -1e+15
        %v5790 = vsel %vm3247, %v5762, -1e+15
        %v5791 = vsel %vm3248, %v5763, -1e+15
        %v5792 = vsel %vm3249, %v5764, -1e+15
        %v5793 = vsel %vm3250, %v5765, -1e+15
        %v5794 = vsel %vm3251, %v5766, -1e+15
        %v5795 = vsel %vm3252, %v5767, -1e+15
        %v5796 = vsel %vm3253, %v5768, -1e+15
        %v5797 = vsel %vm3254, %v5769, -1e+15
        %v5798 = vsel %vm3255, %v5770, -1e+15
        %v5799 = vsel %vm3256, %v5771, -1e+15
        %v5800 = vsel %vm3257, %v5772, -1e+15
        %v5801 = vsel %vm3258, %v5759, -1e+15
        %v5802 = vsel %vm3259, %v5760, -1e+15
        %v5803 = vsel %vm3260, %v5761, -1e+15
        %v5804 = vsel %vm3261, %v5762, -1e+15
        %v5805 = vsel %vm3262, %v5763, -1e+15
        %v5806 = vsel %vm3263, %v5764, -1e+15
        %v5807 = vsel %vm3264, %v5765, -1e+15
        %v5808 = vsel %vm3265, %v5766, -1e+15
        %v5809 = vsel %vm3266, %v5767, -1e+15
        %v5810 = vsel %vm3267, %v5768, -1e+15
        %v5811 = vsel %vm3268, %v5769, -1e+15
        %v5812 = vsel %vm3269, %v5770, -1e+15
        %v5813 = vsel %vm3270, %v5771, -1e+15
        %v5814 = vsel %vm3271, %v5772, -1e+15
        %v5815 = vsel %vm3272, %v5759, -1e+15
        %v5816 = vsel %vm3273, %v5760, -1e+15
        %v5817 = vsel %vm3274, %v5761, -1e+15
        %v5818 = vsel %vm3275, %v5762, -1e+15
        %v5819 = vsel %vm3276, %v5763, -1e+15
        %v5820 = vsel %vm3277, %v5764, -1e+15
        %v5821 = vsel %vm3278, %v5765, -1e+15
        %v5822 = vsel %vm3279, %v5766, -1e+15
        %v5823 = vsel %vm3280, %v5767, -1e+15
        %v5824 = vsel %vm3281, %v5768, -1e+15
        %v5825 = vsel %vm3282, %v5769, -1e+15
        %v5826 = vsel %vm3283, %v5770, -1e+15
        %v5827 = vsel %vm3284, %v5771, -1e+15
        %v5828 = vsel %vm3285, %v5772, -1e+15
        %v5829 = vsel %vm3286, %v5759, -1e+15
        %v5830 = vsel %vm3287, %v5760, -1e+15
        %v5831 = vsel %vm3288, %v5761, -1e+15
        %v5832 = vsel %vm3289, %v5762, -1e+15
        %v5833 = vsel %vm3290, %v5763, -1e+15
        %v5834 = vsel %vm3291, %v5764, -1e+15
        %v5835 = vsel %vm3292, %v5765, -1e+15
        %v5836 = vsel %vm3293, %v5766, -1e+15
        %v5837 = vsel %vm3294, %v5767, -1e+15
        %v5838 = vsel %vm3295, %v5768, -1e+15
        %v5839 = vsel %vm3296, %v5769, -1e+15
        %v5840 = vsel %vm3297, %v5770, -1e+15
        %v5841 = vsel %vm3298, %v5771, -1e+15
        %v5842 = vsel %vm3299, %v5772, -1e+15
        %v5843 = vsel %vm3300, %v5759, -1e+15
        %v5844 = vsel %vm3301, %v5760, -1e+15
        %v5845 = vsel %vm3302, %v5761, -1e+15
        %v5846 = vsel %vm3303, %v5762, -1e+15
        %v5847 = vsel %vm3304, %v5763, -1e+15
        %v5848 = vsel %vm3305, %v5764, -1e+15
        %v5849 = vsel %vm3306, %v5765, -1e+15
        %v5850 = vsel %vm3307, %v5766, -1e+15
        %v5851 = vsel %vm3308, %v5767, -1e+15
        %v5852 = vsel %vm3309, %v5768, -1e+15
        %v5853 = vsel %vm3310, %v5769, -1e+15
        %v5854 = vsel %vm3311, %v5770, -1e+15
        %v5855 = vsel %vm3312, %v5771, -1e+15
        %v5856 = vsel %vm3313, %v5772, -1e+15
        %v5857 = vsel %vm3314, %v5759, -1e+15
        %v5858 = vsel %vm3315, %v5760, -1e+15
        %v5859 = vsel %vm3316, %v5761, -1e+15
        %v5860 = vsel %vm3317, %v5762, -1e+15
        %v5861 = vsel %vm3318, %v5763, -1e+15
        %v5862 = vsel %vm3319, %v5764, -1e+15
        %v5863 = vsel %vm3320, %v5765, -1e+15
        %v5864 = vsel %vm3321, %v5766, -1e+15
        %v5865 = vsel %vm3322, %v5767, -1e+15
        %v5866 = vsel %vm3323, %v5768, -1e+15
        %v5867 = vsel %vm3324, %v5769, -1e+15
        %v5868 = vsel %vm3325, %v5770, -1e+15
        %v5869 = vsel %vm3326, %v5771, -1e+15
        %v5870 = vsel %vm3327, %v5772, -1e+15
        %v5871 = vsel %vm3328, %v5759, -1e+15
        %v5872 = vsel %vm3329, %v5760, -1e+15
        %v5873 = vsel %vm3330, %v5761, -1e+15
        %v5874 = vsel %vm3331, %v5762, -1e+15
        %v5875 = vsel %vm3332, %v5763, -1e+15
        %v5876 = vsel %vm3333, %v5764, -1e+15
        %v5877 = vsel %vm3334, %v5765, -1e+15
        %v5878 = vsel %vm3335, %v5766, -1e+15
        %v5879 = vsel %vm3336, %v5767, -1e+15
        %v5880 = vsel %vm3337, %v5768, -1e+15
        %v5881 = vsel %vm3338, %v5769, -1e+15
        %v5882 = vsel %vm3339, %v5770, -1e+15
        %v5883 = vsel %vm3340, %v5771, -1e+15
        %v5884 = vsel %vm3341, %v5772, -1e+15
        %v5885 = vsel %vm3342, %v5759, -1e+15
        %v5886 = vsel %vm3343, %v5760, -1e+15
        %v5887 = vsel %vm3344, %v5761, -1e+15
        %v5888 = vsel %vm3345, %v5762, -1e+15
        %v5889 = vsel %vm3346, %v5763, -1e+15
        %v5890 = vsel %vm3347, %v5764, -1e+15
        %v5891 = vsel %vm3348, %v5765, -1e+15
        %v5892 = vsel %vm3349, %v5766, -1e+15
        %v5893 = vsel %vm3350, %v5767, -1e+15
        %v5894 = vsel %vm3351, %v5768, -1e+15
        %v5895 = vsel %vm3352, %v5769, -1e+15
        %v5896 = vsel %vm3353, %v5770, -1e+15
        %v5897 = vsel %vm3354, %v5771, -1e+15
        %v5898 = vsel %vm3355, %v5772, -1e+15
        %v5899 = vsel %vm3356, %v5759, -1e+15
        %v5900 = vsel %vm3357, %v5760, -1e+15
        %v5901 = vsel %vm3358, %v5761, -1e+15
        %v5902 = vsel %vm3359, %v5762, -1e+15
        %v5903 = vsel %vm3360, %v5763, -1e+15
        %v5904 = vsel %vm3361, %v5764, -1e+15
        %v5905 = vsel %vm3362, %v5765, -1e+15
        %v5906 = vsel %vm3363, %v5766, -1e+15
        %v5907 = vsel %vm3364, %v5767, -1e+15
        %v5908 = vsel %vm3365, %v5768, -1e+15
        %v5909 = vsel %vm3366, %v5769, -1e+15
        %v5910 = vsel %vm3367, %v5770, -1e+15
        %v5911 = vsel %vm3368, %v5771, -1e+15
        %v5912 = vsel %vm3369, %v5772, -1e+15
        %v5913 = vsel %vm3370, %v5759, -1e+15
        %v5914 = vsel %vm3371, %v5760, -1e+15
        %v5915 = vsel %vm3372, %v5761, -1e+15
        %v5916 = vsel %vm3373, %v5762, -1e+15
        %v5917 = vsel %vm3374, %v5763, -1e+15
        %v5918 = vsel %vm3375, %v5764, -1e+15
        %v5919 = vsel %vm3376, %v5765, -1e+15
        %v5920 = vsel %vm3377, %v5766, -1e+15
        %v5921 = vsel %vm3378, %v5767, -1e+15
        %v5922 = vsel %vm3379, %v5768, -1e+15
        %v5923 = vsel %vm3380, %v5769, -1e+15
        %v5924 = vsel %vm3381, %v5770, -1e+15
        %v5925 = vsel %vm3382, %v5771, -1e+15
        %v5926 = vsel %vm3383, %v5772, -1e+15
        %v5927 = vsel %vm3384, %v5759, -1e+15
        %v5928 = vsel %vm3385, %v5760, -1e+15
        %v5929 = vsel %vm3386, %v5761, -1e+15
        %v5930 = vsel %vm3387, %v5762, -1e+15
        %v5931 = vsel %vm3388, %v5763, -1e+15
        %v5932 = vsel %vm3389, %v5764, -1e+15
        %v5933 = vsel %vm3390, %v5765, -1e+15
        %v5934 = vsel %vm3391, %v5766, -1e+15
        %v5935 = vsel %vm3392, %v5767, -1e+15
        %v5936 = vsel %vm3393, %v5768, -1e+15
        %v5937 = vsel %vm3394, %v5769, -1e+15
        %v5938 = vsel %vm3395, %v5770, -1e+15
        %v5939 = vsel %vm3396, %v5771, -1e+15
        %v5940 = vsel %vm3397, %v5772, -1e+15
        %v5941 = vsel %vm3398, %v5759, -1e+15
        %v5942 = vsel %vm3399, %v5760, -1e+15
        %v5943 = vsel %vm3400, %v5761, -1e+15
        %v5944 = vsel %vm3401, %v5762, -1e+15
        %v5945 = vsel %vm3402, %v5763, -1e+15
        %v5946 = vsel %vm3403, %v5764, -1e+15
        %v5947 = vsel %vm3404, %v5765, -1e+15
        %v5948 = vsel %vm3405, %v5766, -1e+15
        %v5949 = vsel %vm3406, %v5767, -1e+15
        %v5950 = vsel %vm3407, %v5768, -1e+15
        %v5951 = vsel %vm3408, %v5769, -1e+15
        %v5952 = vsel %vm3409, %v5770, -1e+15
        %v5953 = vsel %vm3410, %v5771, -1e+15
        %v5954 = vsel %vm3411, %v5772, -1e+15
        %v5955 = vsel %vm3412, %v5759, -1e+15
        %v5956 = vsel %vm3413, %v5760, -1e+15
        %v5957 = vsel %vm3414, %v5761, -1e+15
        %v5958 = vsel %vm3415, %v5762, -1e+15
        %v5959 = vsel %vm3416, %v5763, -1e+15
        %v5960 = vsel %vm3417, %v5764, -1e+15
        %v5961 = vsel %vm3418, %v5765, -1e+15
        %v5962 = vsel %vm3419, %v5766, -1e+15
        %v5963 = vsel %vm3420, %v5767, -1e+15
        %v5964 = vsel %vm3421, %v5768, -1e+15
        %v5965 = vsel %vm3422, %v5769, -1e+15
        %v5966 = vsel %vm3423, %v5770, -1e+15
        %v5967 = vsel %vm3424, %v5771, -1e+15
        %v5968 = vsel %vm3425, %v5772, -1e+15
        %v5969 = vsel %vm3426, %v5759, -1e+15
        %v5970 = vsel %vm3427, %v5760, -1e+15
        %v5971 = vsel %vm3428, %v5761, -1e+15
        %v5972 = vsel %vm3429, %v5762, -1e+15
        %v5973 = vsel %vm3430, %v5763, -1e+15
        %v5974 = vsel %vm3431, %v5764, -1e+15
        %v5975 = vsel %vm3432, %v5765, -1e+15
        %v5976 = vsel %vm3433, %v5766, -1e+15
        %v5977 = vsel %vm3434, %v5767, -1e+15
        %v5978 = vsel %vm3435, %v5768, -1e+15
        %v5979 = vsel %vm3436, %v5769, -1e+15
        %v5980 = vsel %vm3437, %v5770, -1e+15
        %v5981 = vsel %vm3438, %v5771, -1e+15
        %v5982 = vsel %vm3439, %v5772, -1e+15
        %v5983 = vsel %vm3440, %v5759, -1e+15
        %v5984 = vsel %vm3441, %v5760, -1e+15
        %v5985 = vsel %vm3442, %v5761, -1e+15
        %v5986 = vsel %vm3443, %v5762, -1e+15
        %v5987 = vsel %vm3444, %v5763, -1e+15
        %v5988 = vsel %vm3445, %v5764, -1e+15
        %v5989 = vsel %vm3446, %v5765, -1e+15
        %v5990 = vsel %vm3447, %v5766, -1e+15
        %v5991 = vsel %vm3448, %v5767, -1e+15
        %v5992 = vsel %vm3449, %v5768, -1e+15
        %v5993 = vsel %vm3450, %v5769, -1e+15
        %v5994 = vsel %vm3451, %v5770, -1e+15
        %v5995 = vsel %vm3452, %v5771, -1e+15
        %v5996 = vsel %vm3453, %v5772, -1e+15
        %v5997 = vsel %vm1302, %v5773, -inf
        %v5998 = vsel %vm1302, %v5774, -inf
        %v5999 = vmax.f32 %v5997, %v5998
        %v6000 = vsel %vm1302, %v5775, -inf
        %v6001 = vmax.f32 %v5999, %v6000
        %v6002 = vsel %vm1302, %v5776, -inf
        %v6003 = vmax.f32 %v6001, %v6002
        %v6004 = vsel %vm1302, %v5777, -inf
        %v6005 = vmax.f32 %v6003, %v6004
        %v6006 = vsel %vm1302, %v5778, -inf
        %v6007 = vmax.f32 %v6005, %v6006
        %v6008 = vsel %vm1302, %v5779, -inf
        %v6009 = vmax.f32 %v6007, %v6008
        %v6010 = vsel %vm1302, %v5780, -inf
        %v6011 = vmax.f32 %v6009, %v6010
        %v6012 = vsel %vm1302, %v5781, -inf
        %v6013 = vmax.f32 %v6011, %v6012
        %v6014 = vsel %vm1302, %v5782, -inf
        %v6015 = vmax.f32 %v6013, %v6014
        %v6016 = vsel %vm1302, %v5783, -inf
        %v6017 = vmax.f32 %v6015, %v6016
        %v6018 = vsel %vm1302, %v5784, -inf
        %v6019 = vmax.f32 %v6017, %v6018
        %v6020 = vsel %vm1302, %v5785, -inf
        %v6021 = vmax.f32 %v6019, %v6020
        %v6022 = vsel %vm1302, %v5786, -inf
        %v6023 = vmax.f32 %v6021, %v6022
        %v6024 = vrot.slane %v6023, 4
        %v6025 = vmax.f32 %v6023, %v6024
        %v6026 = vrot.slane %v6025, 2
        %v6027 = vmax.f32 %v6025, %v6026
        %v6028 = vrot.slane %v6027, 1
        %v6029 = vmax.f32 %v6027, %v6028
        %v6030 = vsel %vm1302, %v5787, -inf
        %v6031 = vsel %vm1302, %v5788, -inf
        %v6032 = vmax.f32 %v6030, %v6031
        %v6033 = vsel %vm1302, %v5789, -inf
        %v6034 = vmax.f32 %v6032, %v6033
        %v6035 = vsel %vm1302, %v5790, -inf
        %v6036 = vmax.f32 %v6034, %v6035
        %v6037 = vsel %vm1302, %v5791, -inf
        %v6038 = vmax.f32 %v6036, %v6037
        %v6039 = vsel %vm1302, %v5792, -inf
        %v6040 = vmax.f32 %v6038, %v6039
        %v6041 = vsel %vm1302, %v5793, -inf
        %v6042 = vmax.f32 %v6040, %v6041
        %v6043 = vsel %vm1302, %v5794, -inf
        %v6044 = vmax.f32 %v6042, %v6043
        %v6045 = vsel %vm1302, %v5795, -inf
        %v6046 = vmax.f32 %v6044, %v6045
        %v6047 = vsel %vm1302, %v5796, -inf
        %v6048 = vmax.f32 %v6046, %v6047
        %v6049 = vsel %vm1302, %v5797, -inf
        %v6050 = vmax.f32 %v6048, %v6049
        %v6051 = vsel %vm1302, %v5798, -inf
        %v6052 = vmax.f32 %v6050, %v6051
        %v6053 = vsel %vm1302, %v5799, -inf
        %v6054 = vmax.f32 %v6052, %v6053
        %v6055 = vsel %vm1302, %v5800, -inf
        %v6056 = vmax.f32 %v6054, %v6055
        %v6057 = vrot.slane %v6056, 4
        %v6058 = vmax.f32 %v6056, %v6057
        %v6059 = vrot.slane %v6058, 2
        %v6060 = vmax.f32 %v6058, %v6059
        %v6061 = vrot.slane %v6060, 1
        %v6062 = vmax.f32 %v6060, %v6061
        %v6063 = vsel %vm1302, %v5801, -inf
        %v6064 = vsel %vm1302, %v5802, -inf
        %v6065 = vmax.f32 %v6063, %v6064
        %v6066 = vsel %vm1302, %v5803, -inf
        %v6067 = vmax.f32 %v6065, %v6066
        %v6068 = vsel %vm1302, %v5804, -inf
        %v6069 = vmax.f32 %v6067, %v6068
        %v6070 = vsel %vm1302, %v5805, -inf
        %v6071 = vmax.f32 %v6069, %v6070
        %v6072 = vsel %vm1302, %v5806, -inf
        %v6073 = vmax.f32 %v6071, %v6072
        %v6074 = vsel %vm1302, %v5807, -inf
        %v6075 = vmax.f32 %v6073, %v6074
        %v6076 = vsel %vm1302, %v5808, -inf
        %v6077 = vmax.f32 %v6075, %v6076
        %v6078 = vsel %vm1302, %v5809, -inf
        %v6079 = vmax.f32 %v6077, %v6078
        %v6080 = vsel %vm1302, %v5810, -inf
        %v6081 = vmax.f32 %v6079, %v6080
        %v6082 = vsel %vm1302, %v5811, -inf
        %v6083 = vmax.f32 %v6081, %v6082
        %v6084 = vsel %vm1302, %v5812, -inf
        %v6085 = vmax.f32 %v6083, %v6084
        %v6086 = vsel %vm1302, %v5813, -inf
        %v6087 = vmax.f32 %v6085, %v6086
        %v6088 = vsel %vm1302, %v5814, -inf
        %v6089 = vmax.f32 %v6087, %v6088
        %v6090 = vrot.slane %v6089, 4
        %v6091 = vmax.f32 %v6089, %v6090
        %v6092 = vrot.slane %v6091, 2
        %v6093 = vmax.f32 %v6091, %v6092
        %v6094 = vrot.slane %v6093, 1
        %v6095 = vmax.f32 %v6093, %v6094
        %v6096 = vsel %vm1302, %v5815, -inf
        %v6097 = vsel %vm1302, %v5816, -inf
        %v6098 = vmax.f32 %v6096, %v6097
        %v6099 = vsel %vm1302, %v5817, -inf
        %v6100 = vmax.f32 %v6098, %v6099
        %v6101 = vsel %vm1302, %v5818, -inf
        %v6102 = vmax.f32 %v6100, %v6101
        %v6103 = vsel %vm1302, %v5819, -inf
        %v6104 = vmax.f32 %v6102, %v6103
        %v6105 = vsel %vm1302, %v5820, -inf
        %v6106 = vmax.f32 %v6104, %v6105
        %v6107 = vsel %vm1302, %v5821, -inf
        %v6108 = vmax.f32 %v6106, %v6107
        %v6109 = vsel %vm1302, %v5822, -inf
        %v6110 = vmax.f32 %v6108, %v6109
        %v6111 = vsel %vm1302, %v5823, -inf
        %v6112 = vmax.f32 %v6110, %v6111
        %v6113 = vsel %vm1302, %v5824, -inf
        %v6114 = vmax.f32 %v6112, %v6113
        %v6115 = vsel %vm1302, %v5825, -inf
        %v6116 = vmax.f32 %v6114, %v6115
        %v6117 = vsel %vm1302, %v5826, -inf
        %v6118 = vmax.f32 %v6116, %v6117
        %v6119 = vsel %vm1302, %v5827, -inf
        %v6120 = vmax.f32 %v6118, %v6119
        %v6121 = vsel %vm1302, %v5828, -inf
        %v6122 = vmax.f32 %v6120, %v6121
        %v6123 = vrot.slane %v6122, 4
        %v6124 = vmax.f32 %v6122, %v6123
        %v6125 = vrot.slane %v6124, 2
        %v6126 = vmax.f32 %v6124, %v6125
        %v6127 = vrot.slane %v6126, 1
        %v6128 = vmax.f32 %v6126, %v6127
        %v6129 = vsel %vm1302, %v5829, -inf
        %v6130 = vsel %vm1302, %v5830, -inf
        %v6131 = vmax.f32 %v6129, %v6130
        %v6132 = vsel %vm1302, %v5831, -inf
        %v6133 = vmax.f32 %v6131, %v6132
        %v6134 = vsel %vm1302, %v5832, -inf
        %v6135 = vmax.f32 %v6133, %v6134
        %v6136 = vsel %vm1302, %v5833, -inf
        %v6137 = vmax.f32 %v6135, %v6136
        %v6138 = vsel %vm1302, %v5834, -inf
        %v6139 = vmax.f32 %v6137, %v6138
        %v6140 = vsel %vm1302, %v5835, -inf
        %v6141 = vmax.f32 %v6139, %v6140
        %v6142 = vsel %vm1302, %v5836, -inf
        %v6143 = vmax.f32 %v6141, %v6142
        %v6144 = vsel %vm1302, %v5837, -inf
        %v6145 = vmax.f32 %v6143, %v6144
        %v6146 = vsel %vm1302, %v5838, -inf
        %v6147 = vmax.f32 %v6145, %v6146
        %v6148 = vsel %vm1302, %v5839, -inf
        %v6149 = vmax.f32 %v6147, %v6148
        %v6150 = vsel %vm1302, %v5840, -inf
        %v6151 = vmax.f32 %v6149, %v6150
        %v6152 = vsel %vm1302, %v5841, -inf
        %v6153 = vmax.f32 %v6151, %v6152
        %v6154 = vsel %vm1302, %v5842, -inf
        %v6155 = vmax.f32 %v6153, %v6154
        %v6156 = vrot.slane %v6155, 4
        %v6157 = vmax.f32 %v6155, %v6156
        %v6158 = vrot.slane %v6157, 2
        %v6159 = vmax.f32 %v6157, %v6158
        %v6160 = vrot.slane %v6159, 1
        %v6161 = vmax.f32 %v6159, %v6160
        %v6162 = vsel %vm1302, %v5843, -inf
        %v6163 = vsel %vm1302, %v5844, -inf
        %v6164 = vmax.f32 %v6162, %v6163
        %v6165 = vsel %vm1302, %v5845, -inf
        %v6166 = vmax.f32 %v6164, %v6165
        %v6167 = vsel %vm1302, %v5846, -inf
        %v6168 = vmax.f32 %v6166, %v6167
        %v6169 = vsel %vm1302, %v5847, -inf
        %v6170 = vmax.f32 %v6168, %v6169
        %v6171 = vsel %vm1302, %v5848, -inf
        %v6172 = vmax.f32 %v6170, %v6171
        %v6173 = vsel %vm1302, %v5849, -inf
        %v6174 = vmax.f32 %v6172, %v6173
        %v6175 = vsel %vm1302, %v5850, -inf
        %v6176 = vmax.f32 %v6174, %v6175
        %v6177 = vsel %vm1302, %v5851, -inf
        %v6178 = vmax.f32 %v6176, %v6177
        %v6179 = vsel %vm1302, %v5852, -inf
        %v6180 = vmax.f32 %v6178, %v6179
        %v6181 = vsel %vm1302, %v5853, -inf
        %v6182 = vmax.f32 %v6180, %v6181
        %v6183 = vsel %vm1302, %v5854, -inf
        %v6184 = vmax.f32 %v6182, %v6183
        %v6185 = vsel %vm1302, %v5855, -inf
        %v6186 = vmax.f32 %v6184, %v6185
        %v6187 = vsel %vm1302, %v5856, -inf
        %v6188 = vmax.f32 %v6186, %v6187
        %v6189 = vrot.slane %v6188, 4
        %v6190 = vmax.f32 %v6188, %v6189
        %v6191 = vrot.slane %v6190, 2
        %v6192 = vmax.f32 %v6190, %v6191
        %v6193 = vrot.slane %v6192, 1
        %v6194 = vmax.f32 %v6192, %v6193
        %v6195 = vsel %vm1302, %v5857, -inf
        %v6196 = vsel %vm1302, %v5858, -inf
        %v6197 = vmax.f32 %v6195, %v6196
        %v6198 = vsel %vm1302, %v5859, -inf
        %v6199 = vmax.f32 %v6197, %v6198
        %v6200 = vsel %vm1302, %v5860, -inf
        %v6201 = vmax.f32 %v6199, %v6200
        %v6202 = vsel %vm1302, %v5861, -inf
        %v6203 = vmax.f32 %v6201, %v6202
        %v6204 = vsel %vm1302, %v5862, -inf
        %v6205 = vmax.f32 %v6203, %v6204
        %v6206 = vsel %vm1302, %v5863, -inf
        %v6207 = vmax.f32 %v6205, %v6206
        %v6208 = vsel %vm1302, %v5864, -inf
        %v6209 = vmax.f32 %v6207, %v6208
        %v6210 = vsel %vm1302, %v5865, -inf
        %v6211 = vmax.f32 %v6209, %v6210
        %v6212 = vsel %vm1302, %v5866, -inf
        %v6213 = vmax.f32 %v6211, %v6212
        %v6214 = vsel %vm1302, %v5867, -inf
        %v6215 = vmax.f32 %v6213, %v6214
        %v6216 = vsel %vm1302, %v5868, -inf
        %v6217 = vmax.f32 %v6215, %v6216
        %v6218 = vsel %vm1302, %v5869, -inf
        %v6219 = vmax.f32 %v6217, %v6218
        %v6220 = vsel %vm1302, %v5870, -inf
        %v6221 = vmax.f32 %v6219, %v6220
        %v6222 = vrot.slane %v6221, 4
        %v6223 = vmax.f32 %v6221, %v6222
        %v6224 = vrot.slane %v6223, 2
        %v6225 = vmax.f32 %v6223, %v6224
        %v6226 = vrot.slane %v6225, 1
        %v6227 = vmax.f32 %v6225, %v6226
        %v6228 = vsel %vm1302, %v5871, -inf
        %v6229 = vsel %vm1302, %v5872, -inf
        %v6230 = vmax.f32 %v6228, %v6229
        %v6231 = vsel %vm1302, %v5873, -inf
        %v6232 = vmax.f32 %v6230, %v6231
        %v6233 = vsel %vm1302, %v5874, -inf
        %v6234 = vmax.f32 %v6232, %v6233
        %v6235 = vsel %vm1302, %v5875, -inf
        %v6236 = vmax.f32 %v6234, %v6235
        %v6237 = vsel %vm1302, %v5876, -inf
        %v6238 = vmax.f32 %v6236, %v6237
        %v6239 = vsel %vm1302, %v5877, -inf
        %v6240 = vmax.f32 %v6238, %v6239
        %v6241 = vsel %vm1302, %v5878, -inf
        %v6242 = vmax.f32 %v6240, %v6241
        %v6243 = vsel %vm1302, %v5879, -inf
        %v6244 = vmax.f32 %v6242, %v6243
        %v6245 = vsel %vm1302, %v5880, -inf
        %v6246 = vmax.f32 %v6244, %v6245
        %v6247 = vsel %vm1302, %v5881, -inf
        %v6248 = vmax.f32 %v6246, %v6247
        %v6249 = vsel %vm1302, %v5882, -inf
        %v6250 = vmax.f32 %v6248, %v6249
        %v6251 = vsel %vm1302, %v5883, -inf
        %v6252 = vmax.f32 %v6250, %v6251
        %v6253 = vsel %vm1302, %v5884, -inf
        %v6254 = vmax.f32 %v6252, %v6253
        %v6255 = vrot.slane %v6254, 4
        %v6256 = vmax.f32 %v6254, %v6255
        %v6257 = vrot.slane %v6256, 2
        %v6258 = vmax.f32 %v6256, %v6257
        %v6259 = vrot.slane %v6258, 1
        %v6260 = vmax.f32 %v6258, %v6259
        %v6261 = vsel %vm1302, %v5885, -inf
        %v6262 = vsel %vm1302, %v5886, -inf
        %v6263 = vmax.f32 %v6261, %v6262
        %v6264 = vsel %vm1302, %v5887, -inf
        %v6265 = vmax.f32 %v6263, %v6264
        %v6266 = vsel %vm1302, %v5888, -inf
        %v6267 = vmax.f32 %v6265, %v6266
        %v6268 = vsel %vm1302, %v5889, -inf
        %v6269 = vmax.f32 %v6267, %v6268
        %v6270 = vsel %vm1302, %v5890, -inf
        %v6271 = vmax.f32 %v6269, %v6270
        %v6272 = vsel %vm1302, %v5891, -inf
        %v6273 = vmax.f32 %v6271, %v6272
        %v6274 = vsel %vm1302, %v5892, -inf
        %v6275 = vmax.f32 %v6273, %v6274
        %v6276 = vsel %vm1302, %v5893, -inf
        %v6277 = vmax.f32 %v6275, %v6276
        %v6278 = vsel %vm1302, %v5894, -inf
        %v6279 = vmax.f32 %v6277, %v6278
        %v6280 = vsel %vm1302, %v5895, -inf
        %v6281 = vmax.f32 %v6279, %v6280
        %v6282 = vsel %vm1302, %v5896, -inf
        %v6283 = vmax.f32 %v6281, %v6282
        %v6284 = vsel %vm1302, %v5897, -inf
        %v6285 = vmax.f32 %v6283, %v6284
        %v6286 = vsel %vm1302, %v5898, -inf
        %v6287 = vmax.f32 %v6285, %v6286
        %v6288 = vrot.slane %v6287, 4
        %v6289 = vmax.f32 %v6287, %v6288
        %v6290 = vrot.slane %v6289, 2
        %v6291 = vmax.f32 %v6289, %v6290
        %v6292 = vrot.slane %v6291, 1
        %v6293 = vmax.f32 %v6291, %v6292
        %v6294 = vsel %vm1302, %v5899, -inf
        %v6295 = vsel %vm1302, %v5900, -inf
        %v6296 = vmax.f32 %v6294, %v6295
        %v6297 = vsel %vm1302, %v5901, -inf
        %v6298 = vmax.f32 %v6296, %v6297
        %v6299 = vsel %vm1302, %v5902, -inf
        %v6300 = vmax.f32 %v6298, %v6299
        %v6301 = vsel %vm1302, %v5903, -inf
        %v6302 = vmax.f32 %v6300, %v6301
        %v6303 = vsel %vm1302, %v5904, -inf
        %v6304 = vmax.f32 %v6302, %v6303
        %v6305 = vsel %vm1302, %v5905, -inf
        %v6306 = vmax.f32 %v6304, %v6305
        %v6307 = vsel %vm1302, %v5906, -inf
        %v6308 = vmax.f32 %v6306, %v6307
        %v6309 = vsel %vm1302, %v5907, -inf
        %v6310 = vmax.f32 %v6308, %v6309
        %v6311 = vsel %vm1302, %v5908, -inf
        %v6312 = vmax.f32 %v6310, %v6311
        %v6313 = vsel %vm1302, %v5909, -inf
        %v6314 = vmax.f32 %v6312, %v6313
        %v6315 = vsel %vm1302, %v5910, -inf
        %v6316 = vmax.f32 %v6314, %v6315
        %v6317 = vsel %vm1302, %v5911, -inf
        %v6318 = vmax.f32 %v6316, %v6317
        %v6319 = vsel %vm1302, %v5912, -inf
        %v6320 = vmax.f32 %v6318, %v6319
        %v6321 = vrot.slane %v6320, 4
        %v6322 = vmax.f32 %v6320, %v6321
        %v6323 = vrot.slane %v6322, 2
        %v6324 = vmax.f32 %v6322, %v6323
        %v6325 = vrot.slane %v6324, 1
        %v6326 = vmax.f32 %v6324, %v6325
        %v6327 = vsel %vm1302, %v5913, -inf
        %v6328 = vsel %vm1302, %v5914, -inf
        %v6329 = vmax.f32 %v6327, %v6328
        %v6330 = vsel %vm1302, %v5915, -inf
        %v6331 = vmax.f32 %v6329, %v6330
        %v6332 = vsel %vm1302, %v5916, -inf
        %v6333 = vmax.f32 %v6331, %v6332
        %v6334 = vsel %vm1302, %v5917, -inf
        %v6335 = vmax.f32 %v6333, %v6334
        %v6336 = vsel %vm1302, %v5918, -inf
        %v6337 = vmax.f32 %v6335, %v6336
        %v6338 = vsel %vm1302, %v5919, -inf
        %v6339 = vmax.f32 %v6337, %v6338
        %v6340 = vsel %vm1302, %v5920, -inf
        %v6341 = vmax.f32 %v6339, %v6340
        %v6342 = vsel %vm1302, %v5921, -inf
        %v6343 = vmax.f32 %v6341, %v6342
        %v6344 = vsel %vm1302, %v5922, -inf
        %v6345 = vmax.f32 %v6343, %v6344
        %v6346 = vsel %vm1302, %v5923, -inf
        %v6347 = vmax.f32 %v6345, %v6346
        %v6348 = vsel %vm1302, %v5924, -inf
        %v6349 = vmax.f32 %v6347, %v6348
        %v6350 = vsel %vm1302, %v5925, -inf
        %v6351 = vmax.f32 %v6349, %v6350
        %v6352 = vsel %vm1302, %v5926, -inf
        %v6353 = vmax.f32 %v6351, %v6352
        %v6354 = vrot.slane %v6353, 4
        %v6355 = vmax.f32 %v6353, %v6354
        %v6356 = vrot.slane %v6355, 2
        %v6357 = vmax.f32 %v6355, %v6356
        %v6358 = vrot.slane %v6357, 1
        %v6359 = vmax.f32 %v6357, %v6358
        %v6360 = vsel %vm1302, %v5927, -inf
        %v6361 = vsel %vm1302, %v5928, -inf
        %v6362 = vmax.f32 %v6360, %v6361
        %v6363 = vsel %vm1302, %v5929, -inf
        %v6364 = vmax.f32 %v6362, %v6363
        %v6365 = vsel %vm1302, %v5930, -inf
        %v6366 = vmax.f32 %v6364, %v6365
        %v6367 = vsel %vm1302, %v5931, -inf
        %v6368 = vmax.f32 %v6366, %v6367
        %v6369 = vsel %vm1302, %v5932, -inf
        %v6370 = vmax.f32 %v6368, %v6369
        %v6371 = vsel %vm1302, %v5933, -inf
        %v6372 = vmax.f32 %v6370, %v6371
        %v6373 = vsel %vm1302, %v5934, -inf
        %v6374 = vmax.f32 %v6372, %v6373
        %v6375 = vsel %vm1302, %v5935, -inf
        %v6376 = vmax.f32 %v6374, %v6375
        %v6377 = vsel %vm1302, %v5936, -inf
        %v6378 = vmax.f32 %v6376, %v6377
        %v6379 = vsel %vm1302, %v5937, -inf
        %v6380 = vmax.f32 %v6378, %v6379
        %v6381 = vsel %vm1302, %v5938, -inf
        %v6382 = vmax.f32 %v6380, %v6381
        %v6383 = vsel %vm1302, %v5939, -inf
        %v6384 = vmax.f32 %v6382, %v6383
        %v6385 = vsel %vm1302, %v5940, -inf
        %v6386 = vmax.f32 %v6384, %v6385
        %v6387 = vrot.slane %v6386, 4
        %v6388 = vmax.f32 %v6386, %v6387
        %v6389 = vrot.slane %v6388, 2
        %v6390 = vmax.f32 %v6388, %v6389
        %v6391 = vrot.slane %v6390, 1
        %v6392 = vmax.f32 %v6390, %v6391
        %v6393 = vsel %vm1302, %v5941, -inf
        %v6394 = vsel %vm1302, %v5942, -inf
        %v6395 = vmax.f32 %v6393, %v6394
        %v6396 = vsel %vm1302, %v5943, -inf
        %v6397 = vmax.f32 %v6395, %v6396
        %v6398 = vsel %vm1302, %v5944, -inf
        %v6399 = vmax.f32 %v6397, %v6398
        %v6400 = vsel %vm1302, %v5945, -inf
        %v6401 = vmax.f32 %v6399, %v6400
        %v6402 = vsel %vm1302, %v5946, -inf
        %v6403 = vmax.f32 %v6401, %v6402
        %v6404 = vsel %vm1302, %v5947, -inf
        %v6405 = vmax.f32 %v6403, %v6404
        %v6406 = vsel %vm1302, %v5948, -inf
        %v6407 = vmax.f32 %v6405, %v6406
        %v6408 = vsel %vm1302, %v5949, -inf
        %v6409 = vmax.f32 %v6407, %v6408
        %v6410 = vsel %vm1302, %v5950, -inf
        %v6411 = vmax.f32 %v6409, %v6410
        %v6412 = vsel %vm1302, %v5951, -inf
        %v6413 = vmax.f32 %v6411, %v6412
        %v6414 = vsel %vm1302, %v5952, -inf
        %v6415 = vmax.f32 %v6413, %v6414
        %v6416 = vsel %vm1302, %v5953, -inf
        %v6417 = vmax.f32 %v6415, %v6416
        %v6418 = vsel %vm1302, %v5954, -inf
        %v6419 = vmax.f32 %v6417, %v6418
        %v6420 = vrot.slane %v6419, 4
        %v6421 = vmax.f32 %v6419, %v6420
        %v6422 = vrot.slane %v6421, 2
        %v6423 = vmax.f32 %v6421, %v6422
        %v6424 = vrot.slane %v6423, 1
        %v6425 = vmax.f32 %v6423, %v6424
        %v6426 = vsel %vm1302, %v5955, -inf
        %v6427 = vsel %vm1302, %v5956, -inf
        %v6428 = vmax.f32 %v6426, %v6427
        %v6429 = vsel %vm1302, %v5957, -inf
        %v6430 = vmax.f32 %v6428, %v6429
        %v6431 = vsel %vm1302, %v5958, -inf
        %v6432 = vmax.f32 %v6430, %v6431
        %v6433 = vsel %vm1302, %v5959, -inf
        %v6434 = vmax.f32 %v6432, %v6433
        %v6435 = vsel %vm1302, %v5960, -inf
        %v6436 = vmax.f32 %v6434, %v6435
        %v6437 = vsel %vm1302, %v5961, -inf
        %v6438 = vmax.f32 %v6436, %v6437
        %v6439 = vsel %vm1302, %v5962, -inf
        %v6440 = vmax.f32 %v6438, %v6439
        %v6441 = vsel %vm1302, %v5963, -inf
        %v6442 = vmax.f32 %v6440, %v6441
        %v6443 = vsel %vm1302, %v5964, -inf
        %v6444 = vmax.f32 %v6442, %v6443
        %v6445 = vsel %vm1302, %v5965, -inf
        %v6446 = vmax.f32 %v6444, %v6445
        %v6447 = vsel %vm1302, %v5966, -inf
        %v6448 = vmax.f32 %v6446, %v6447
        %v6449 = vsel %vm1302, %v5967, -inf
        %v6450 = vmax.f32 %v6448, %v6449
        %v6451 = vsel %vm1302, %v5968, -inf
        %v6452 = vmax.f32 %v6450, %v6451
        %v6453 = vrot.slane %v6452, 4
        %v6454 = vmax.f32 %v6452, %v6453
        %v6455 = vrot.slane %v6454, 2
        %v6456 = vmax.f32 %v6454, %v6455
        %v6457 = vrot.slane %v6456, 1
        %v6458 = vmax.f32 %v6456, %v6457
        %v6459 = vsel %vm1302, %v5969, -inf
        %v6460 = vsel %vm1302, %v5970, -inf
        %v6461 = vmax.f32 %v6459, %v6460
        %v6462 = vsel %vm1302, %v5971, -inf
        %v6463 = vmax.f32 %v6461, %v6462
        %v6464 = vsel %vm1302, %v5972, -inf
        %v6465 = vmax.f32 %v6463, %v6464
        %v6466 = vsel %vm1302, %v5973, -inf
        %v6467 = vmax.f32 %v6465, %v6466
        %v6468 = vsel %vm1302, %v5974, -inf
        %v6469 = vmax.f32 %v6467, %v6468
        %v6470 = vsel %vm1302, %v5975, -inf
        %v6471 = vmax.f32 %v6469, %v6470
        %v6472 = vsel %vm1302, %v5976, -inf
        %v6473 = vmax.f32 %v6471, %v6472
        %v6474 = vsel %vm1302, %v5977, -inf
        %v6475 = vmax.f32 %v6473, %v6474
        %v6476 = vsel %vm1302, %v5978, -inf
        %v6477 = vmax.f32 %v6475, %v6476
        %v6478 = vsel %vm1302, %v5979, -inf
        %v6479 = vmax.f32 %v6477, %v6478
        %v6480 = vsel %vm1302, %v5980, -inf
        %v6481 = vmax.f32 %v6479, %v6480
        %v6482 = vsel %vm1302, %v5981, -inf
        %v6483 = vmax.f32 %v6481, %v6482
        %v6484 = vsel %vm1302, %v5982, -inf
        %v6485 = vmax.f32 %v6483, %v6484
        %v6486 = vrot.slane %v6485, 4
        %v6487 = vmax.f32 %v6485, %v6486
        %v6488 = vrot.slane %v6487, 2
        %v6489 = vmax.f32 %v6487, %v6488
        %v6490 = vrot.slane %v6489, 1
        %v6491 = vmax.f32 %v6489, %v6490
        %v6492 = vsel %vm1302, %v5983, -inf
        %v6493 = vsel %vm1302, %v5984, -inf
        %v6494 = vmax.f32 %v6492, %v6493
        %v6495 = vsel %vm1302, %v5985, -inf
        %v6496 = vmax.f32 %v6494, %v6495
        %v6497 = vsel %vm1302, %v5986, -inf
        %v6498 = vmax.f32 %v6496, %v6497
        %v6499 = vsel %vm1302, %v5987, -inf
        %v6500 = vmax.f32 %v6498, %v6499
        %v6501 = vsel %vm1302, %v5988, -inf
        %v6502 = vmax.f32 %v6500, %v6501
        %v6503 = vsel %vm1302, %v5989, -inf
        %v6504 = vmax.f32 %v6502, %v6503
        %v6505 = vsel %vm1302, %v5990, -inf
        %v6506 = vmax.f32 %v6504, %v6505
        %v6507 = vsel %vm1302, %v5991, -inf
        %v6508 = vmax.f32 %v6506, %v6507
        %v6509 = vsel %vm1302, %v5992, -inf
        %v6510 = vmax.f32 %v6508, %v6509
        %v6511 = vsel %vm1302, %v5993, -inf
        %v6512 = vmax.f32 %v6510, %v6511
        %v6513 = vsel %vm1302, %v5994, -inf
        %v6514 = vmax.f32 %v6512, %v6513
        %v6515 = vsel %vm1302, %v5995, -inf
        %v6516 = vmax.f32 %v6514, %v6515
        %v6517 = vsel %vm1302, %v5996, -inf
        %v6518 = vmax.f32 %v6516, %v6517
        %v6519 = vrot.slane %v6518, 4
        %v6520 = vmax.f32 %v6518, %v6519
        %v6521 = vrot.slane %v6520, 2
        %v6522 = vmax.f32 %v6520, %v6521
        %v6523 = vrot.slane %v6522, 1
        %v6524 = vmax.f32 %v6522, %v6523
        %v6525 = vpack.c.bf16 %v6029, %v6029
        %v6526 = vpack.c.bf16 %v6062, %v6062
        %v6527 = vpack.c.bf16 %v6095, %v6095
        %v6528 = vpack.c.bf16 %v6128, %v6128
        %v6529 = vpack.c.bf16 %v6161, %v6161
        %v6530 = vpack.c.bf16 %v6194, %v6194
        %v6531 = vpack.c.bf16 %v6227, %v6227
        %v6532 = vpack.c.bf16 %v6260, %v6260
        %v6533 = vpack.c.bf16 %v6293, %v6293
        %v6534 = vpack.c.bf16 %v6326, %v6326
        %v6535 = vpack.c.bf16 %v6359, %v6359
        %v6536 = vpack.c.bf16 %v6392, %v6392
        %v6537 = vpack.c.bf16 %v6425, %v6425
        %v6538 = vpack.c.bf16 %v6458, %v6458
        %v6539 = vpack.c.bf16 %v6491, %v6491
        %v6540 = vpack.c.bf16 %v6524, %v6524
        %v6557 = vunpack.c.l.b16 %v6525
        %v6558 = vunpack.c.l.b16 %v6526
        %v6559 = vunpack.c.l.b16 %v6527
        %v6560 = vunpack.c.l.b16 %v6528
        %v6561 = vunpack.c.l.b16 %v6529
        %v6562 = vunpack.c.l.b16 %v6530
        %v6563 = vunpack.c.l.b16 %v6531
        %v6564 = vunpack.c.l.b16 %v6532
        %v6565 = vunpack.c.l.b16 %v6533
        %v6566 = vunpack.c.l.b16 %v6534
        %v6567 = vunpack.c.l.b16 %v6535
        %v6568 = vunpack.c.l.b16 %v6536
        %v6569 = vunpack.c.l.b16 %v6537
        %v6570 = vunpack.c.l.b16 %v6538
        %v6571 = vunpack.c.l.b16 %v6539
        %v6572 = vunpack.c.l.b16 %v6540
        %v6573 = vsel %vm4289, %v6558, %v6557
        %v6574 = vsel %vm4291, %v6559, %v6573
        %v6575 = vsel %vm4293, %v6560, %v6574
        %v6576 = vsel %vm4295, %v6561, %v6575
        %v6577 = vsel %vm4297, %v6562, %v6576
        %v6578 = vsel %vm4299, %v6563, %v6577
        %v6579 = vsel %vm4301, %v6564, %v6578
        %v6580 = vsel %vm4289, %v6566, %v6565
        %v6581 = vsel %vm4291, %v6567, %v6580
        %v6582 = vsel %vm4293, %v6568, %v6581
        %v6583 = vsel %vm4295, %v6569, %v6582
        %v6584 = vsel %vm4297, %v6570, %v6583
        %v6585 = vsel %vm4299, %v6571, %v6584
        %v6586 = vsel %vm4301, %v6572, %v6585
        %v6587 = vpack.c.b16 %v6586, %v6579
        %6589 = vmatprep.subr.bf16.mxu0 0
        %6590 = vmatpush1.bf16.msra.mxu0 %v6587
        %6591 = vmatprep.subr.bf16.mxu0 0
        %6592 = vmatpush1.bf16.msra.mxu0 0
        %6593 = vmatprep.subr.bf16.mxu0 0
        %6594 = vmatpush1.bf16.msra.mxu0 0
        %6595 = vmatprep.subr.bf16.mxu0 0
        %6596 = vmatpush1.bf16.msra.mxu0 0
        %6597 = vmatprep.subr.bf16.mxu0 0
        %6598 = vmatpush1.bf16.msra.mxu0 0
        %6599 = vmatprep.subr.bf16.mxu0 0
        %6600 = vmatpush1.bf16.msra.mxu0 0
        %6601 = vmatprep.subr.bf16.mxu0 0
        %6602 = vmatpush1.bf16.msra.mxu0 0
        %6603 = vmatprep.subr.bf16.mxu0 0
        %6604 = vmatpush1.bf16.msra.mxu0 0
        %6605 = vmatprep.subr.bf16.mxu0 0
        %6606 = vmatpush1.bf16.msra.mxu0 0
        %6607 = vmatprep.subr.bf16.mxu0 0
        %6608 = vmatpush1.bf16.msra.mxu0 0
        %6609 = vmatprep.subr.bf16.mxu0 0
        %6610 = vmatpush1.bf16.msra.mxu0 0
        %6611 = vmatprep.subr.bf16.mxu0 0
        %6612 = vmatpush1.bf16.msra.mxu0 0
        %6613 = vmatprep.subr.bf16.mxu0 0
        %6614 = vmatpush1.bf16.msra.mxu0 0
        %6615 = vmatprep.subr.bf16.mxu0 0
        %6616 = vmatpush1.bf16.msra.mxu0 0
        %6617 = vmatprep.subr.bf16.mxu0 0
        %6618 = vmatpush1.bf16.msra.mxu0 0
        %6619 = vmatprep.subr.bf16.mxu0 0
        %6620 = vmatpush1.bf16.msra.mxu0 0
        %6621 = vmatprep.mubr.bf16.mxu0 0
        %6622 = vmatmul.mubr.bf16.gmra.mrb[0].mxu0 %v4314
        %v6623 = vpop.f32.mrb[0].mxu0
        %v6624 = vadd.f32 0.0, %v6623
        %v6625 = vpop.f32.mrb[0].mxu0
        %v6626 = vpop.f32.mrb[0].mxu0
        %v6627 = vadd.f32 0.0, %v6626
        %v6628 = vpop.f32.mrb[0].mxu0
        %6629 = vmatprep.mubr.bf16.mxu0 0
        %6630 = vmatmul.mubr.bf16.gmra.mrb[0].mxu0 %v4317
        %v6631 = vpop.f32.mrb[0].mxu0
        %v6632 = vadd.f32 0.0, %v6631
        %v6633 = vpop.f32.mrb[0].mxu0
        %v6634 = vpop.f32.mrb[0].mxu0
        %v6635 = vadd.f32 0.0, %v6634
        %v6636 = vpop.f32.mrb[0].mxu0
        %6637 = vmatprep.mubr.bf16.mxu0 0
        %6638 = vmatmul.mubr.bf16.gmra.mrb[0].mxu0 %v4320
        %v6639 = vpop.f32.mrb[0].mxu0
        %v6640 = vadd.f32 0.0, %v6639
        %v6641 = vpop.f32.mrb[0].mxu0
        %v6642 = vpop.f32.mrb[0].mxu0
        %v6643 = vadd.f32 0.0, %v6642
        %v6644 = vpop.f32.mrb[0].mxu0
        %6645 = vmatprep.mubr.bf16.mxu0 0
        %6646 = vmatmul.mubr.bf16.gmra.mrb[0].mxu0 %v4323
        %v6647 = vpop.f32.mrb[0].mxu0
        %v6648 = vadd.f32 0.0, %v6647
        %v6649 = vpop.f32.mrb[0].mxu0
        %v6650 = vpop.f32.mrb[0].mxu0
        %v6651 = vadd.f32 0.0, %v6650
        %v6652 = vpop.f32.mrb[0].mxu0
        %6653 = vmatprep.mubr.bf16.mxu0 0
        %6654 = vmatmul.mubr.bf16.gmra.mrb[0].mxu0 %v4326
        %v6655 = vpop.f32.mrb[0].mxu0
        %v6656 = vadd.f32 0.0, %v6655
        %v6657 = vpop.f32.mrb[0].mxu0
        %v6658 = vpop.f32.mrb[0].mxu0
        %v6659 = vadd.f32 0.0, %v6658
        %v6660 = vpop.f32.mrb[0].mxu0
        %6661 = vmatprep.mubr.bf16.mxu0 0
        %6662 = vmatmul.mubr.bf16.gmra.mrb[0].mxu0 %v4329
        %v6663 = vpop.f32.mrb[0].mxu0
        %v6664 = vadd.f32 0.0, %v6663
        %v6665 = vpop.f32.mrb[0].mxu0
        %v6666 = vpop.f32.mrb[0].mxu0
        %v6667 = vadd.f32 0.0, %v6666
        %v6668 = vpop.f32.mrb[0].mxu0
        %6669 = vmatprep.mubr.bf16.mxu0 0
        %6670 = vmatmul.mubr.bf16.gmra.mrb[0].mxu0 %v4332
        %v6671 = vpop.f32.mrb[0].mxu0
        %v6672 = vadd.f32 0.0, %v6671
        %v6673 = vpop.f32.mrb[0].mxu0
        %v6674 = vpop.f32.mrb[0].mxu0
        %v6675 = vadd.f32 0.0, %v6674
        %v6676 = vpop.f32.mrb[0].mxu0
        %6677 = vdwg.mxu0
        %v6678 = vpack.c.bf16 %v5760, %v5759
        %v6679 = vpack.c.bf16 %v5762, %v5761
        %v6680 = vpack.c.bf16 %v5764, %v5763
        %v6681 = vpack.c.bf16 %v5766, %v5765
        %v6682 = vpack.c.bf16 %v5768, %v5767
        %v6683 = vpack.c.bf16 %v5770, %v5769
        %v6684 = vpack.c.bf16 %v5772, %v5771
        %s6685 = scalar_lea.vmem %s8, 32
        %v6686 = vld [vmem:[%s6685] sm:$0xf]
        %v6687 = vld [vmem:[%s6685 + $0x4] sm:$0xf]
        %v6688 = vld [vmem:[%s6685 + $0x8] sm:$0xf]
        %v6689 = vld [vmem:[%s6685 + $0xc] sm:$0xf]
        %v6690 = vld [vmem:[%s6685 + $0x10] sm:$0xf]
        %v6691 = vld [vmem:[%s6685 + $0x14] sm:$0xf]
        %v6692 = vld [vmem:[%s6685 + $0x18] sm:$0xf]
        %v6693 = vld [vmem:[%s6685 + $0x1c] sm:$0xf]
        %v6694 = vpack.c.bf16 %v6627, %v6624
        %v6695 = vpack.c.bf16 %v6635, %v6632
        %v6696 = vpack.c.bf16 %v6643, %v6640
        %v6697 = vpack.c.bf16 %v6651, %v6648
        %v6698 = vpack.c.bf16 %v6659, %v6656
        %v6699 = vpack.c.bf16 %v6667, %v6664
        %v6700 = vpack.c.bf16 %v6675, %v6672
        %s6701 = scalar_lea.vmem %s9, 32
        %v6702 = vld [vmem:[%s6701] sm:$0xf]
        %v6703 = vld [vmem:[%s6701 + $0x4] sm:$0xf]
        %v6704 = vld [vmem:[%s6701 + $0x8] sm:$0xf]
        %v6705 = vld [vmem:[%s6701 + $0xc] sm:$0xf]
        %v6706 = vld [vmem:[%s6701 + $0x10] sm:$0xf]
        %v6707 = vld [vmem:[%s6701 + $0x14] sm:$0xf]
        %v6708 = vld [vmem:[%s6701 + $0x18] sm:$0xf]
        %v6709 = vld [vmem:[%s6701 + $0x1c] sm:$0xf]
        %v6718 = vunpack.c.l.b16 %v6702
        %v6719 = vunpack.c.l.b16 %v6703
        %v6720 = vunpack.c.l.b16 %v6704
        %v6721 = vunpack.c.l.b16 %v6705
        %v6722 = vunpack.c.l.b16 %v6706
        %v6723 = vunpack.c.l.b16 %v6707
        %v6724 = vunpack.c.l.b16 %v6708
        %v6725 = vunpack.c.l.b16 %v6709
        %v6726 = vpack.c.b16 %v6719, %v6718
        %v6727 = vpack.c.b16 %v6721, %v6720
        %v6728 = vpack.c.b16 %v6723, %v6722
        %v6729 = vpack.c.b16 %v6725, %v6724
        %v6735 = vsel %vm1302, %v6694, 0
        %v6738 = vsel %vm1302, %v6695, 0
        %v6741 = vsel %vm1302, %v6696, 0
        %v6744 = vsel %vm1302, %v6697, 0
        %v6747 = vsel %vm1302, %v6698, 0
        %v6750 = vsel %vm1302, %v6699, 0
        %v6753 = vsel %vm1302, %v6700, 0
        %6755 = vmatprep.subr.bf16.mxu0 0
        %6756 = vmatpush1.bf16.msra.mxu0 %v6726
        %6757 = vmatprep.subr.bf16.mxu0 0
        %6758 = vmatpush1.bf16.msra.mxu0 %v6727
        %6759 = vmatprep.subr.bf16.mxu0 0
        %6760 = vmatpush1.bf16.msra.mxu0 %v6728
        %6761 = vmatprep.subr.bf16.mxu0 0
        %6762 = vmatpush1.bf16.msra.mxu0 %v6729
        %6763 = vmatprep.subr.bf16.mxu0 0
        %6764 = vmatpush1.bf16.msra.mxu0 0
        %6765 = vmatprep.subr.bf16.mxu0 0
        %6766 = vmatpush1.bf16.msra.mxu0 0
        %6767 = vmatprep.subr.bf16.mxu0 0
        %6768 = vmatpush1.bf16.msra.mxu0 0
        %6769 = vmatprep.subr.bf16.mxu0 0
        %6770 = vmatpush1.bf16.msra.mxu0 0
        %6771 = vmatprep.subr.bf16.mxu0 0
        %6772 = vmatpush1.bf16.msra.mxu0 0
        %6773 = vmatprep.subr.bf16.mxu0 0
        %6774 = vmatpush1.bf16.msra.mxu0 0
        %6775 = vmatprep.subr.bf16.mxu0 0
        %6776 = vmatpush1.bf16.msra.mxu0 0
        %6777 = vmatprep.subr.bf16.mxu0 0
        %6778 = vmatpush1.bf16.msra.mxu0 0
        %6779 = vmatprep.subr.bf16.mxu0 0
        %6780 = vmatpush1.bf16.msra.mxu0 0
        %6781 = vmatprep.subr.bf16.mxu0 0
        %6782 = vmatpush1.bf16.msra.mxu0 0
        %6783 = vmatprep.subr.bf16.mxu0 0
        %6784 = vmatpush1.bf16.msra.mxu0 0
        %6785 = vmatprep.subr.bf16.mxu0 0
        %6786 = vmatpush1.bf16.msra.mxu0 0
        %6787 = vmatprep.mubr.bf16.mxu0 0
        %6788 = vmatmul.mubr.bf16.gmra.mrb[0].mxu0 %v6735
        %v6789 = vpop.f32.mrb[0].mxu0
        %v6790 = vadd.f32 0.0, %v6789
        %v6791 = vpop.f32.mrb[0].mxu0
        %v6792 = vpop.f32.mrb[0].mxu0
        %v6793 = vadd.f32 0.0, %v6792
        %v6794 = vpop.f32.mrb[0].mxu0
        %6795 = vmatprep.mubr.bf16.mxu0 0
        %6796 = vmatmul.mubr.bf16.gmra.mrb[0].mxu0 %v6738
        %v6797 = vpop.f32.mrb[0].mxu0
        %v6798 = vadd.f32 0.0, %v6797
        %v6799 = vpop.f32.mrb[0].mxu0
        %v6800 = vpop.f32.mrb[0].mxu0
        %v6801 = vadd.f32 0.0, %v6800
        %v6802 = vpop.f32.mrb[0].mxu0
        %6803 = vmatprep.mubr.bf16.mxu0 0
        %6804 = vmatmul.mubr.bf16.gmra.mrb[0].mxu0 %v6741
        %v6805 = vpop.f32.mrb[0].mxu0
        %v6806 = vadd.f32 0.0, %v6805
        %v6807 = vpop.f32.mrb[0].mxu0
        %v6808 = vpop.f32.mrb[0].mxu0
        %v6809 = vadd.f32 0.0, %v6808
        %v6810 = vpop.f32.mrb[0].mxu0
        %6811 = vmatprep.mubr.bf16.mxu0 0
        %6812 = vmatmul.mubr.bf16.gmra.mrb[0].mxu0 %v6744
        %v6813 = vpop.f32.mrb[0].mxu0
        %v6814 = vadd.f32 0.0, %v6813
        %v6815 = vpop.f32.mrb[0].mxu0
        %v6816 = vpop.f32.mrb[0].mxu0
        %v6817 = vadd.f32 0.0, %v6816
        %v6818 = vpop.f32.mrb[0].mxu0
        %6819 = vmatprep.mubr.bf16.mxu0 0
        %6820 = vmatmul.mubr.bf16.gmra.mrb[0].mxu0 %v6747
        %v6821 = vpop.f32.mrb[0].mxu0
        %v6822 = vadd.f32 0.0, %v6821
        %v6823 = vpop.f32.mrb[0].mxu0
        %v6824 = vpop.f32.mrb[0].mxu0
        %v6825 = vadd.f32 0.0, %v6824
        %v6826 = vpop.f32.mrb[0].mxu0
        %6827 = vmatprep.mubr.bf16.mxu0 0
        %6828 = vmatmul.mubr.bf16.gmra.mrb[0].mxu0 %v6750
        %v6829 = vpop.f32.mrb[0].mxu0
        %v6830 = vadd.f32 0.0, %v6829
        %v6831 = vpop.f32.mrb[0].mxu0
        %v6832 = vpop.f32.mrb[0].mxu0
        %v6833 = vadd.f32 0.0, %v6832
        %v6834 = vpop.f32.mrb[0].mxu0
        %6835 = vmatprep.mubr.bf16.mxu0 0
        %6836 = vmatmul.mubr.bf16.gmra.mrb[0].mxu0 %v6753
        %v6837 = vpop.f32.mrb[0].mxu0
        %v6838 = vadd.f32 0.0, %v6837
        %v6839 = vpop.f32.mrb[0].mxu0
        %v6840 = vpop.f32.mrb[0].mxu0
        %v6841 = vadd.f32 0.0, %v6840
        %v6842 = vpop.f32.mrb[0].mxu0
        %6843 = vdwg.mxu0
        %v6852 = vunpack.c.l.b16 %v6686
        %v6853 = vunpack.c.l.b16 %v6687
        %v6854 = vunpack.c.l.b16 %v6688
        %v6855 = vunpack.c.l.b16 %v6689
        %v6856 = vunpack.c.l.b16 %v6690
        %v6857 = vunpack.c.l.b16 %v6691
        %v6858 = vunpack.c.l.b16 %v6692
        %v6859 = vunpack.c.l.b16 %v6693
        %v6860 = vpack.c.b16 %v6853, %v6852
        %v6861 = vpack.c.b16 %v6855, %v6854
        %v6862 = vpack.c.b16 %v6857, %v6856
        %v6863 = vpack.c.b16 %v6859, %v6858
        %v6869 = vsel %vm1302, %v6678, 0
        %v6872 = vsel %vm1302, %v6679, 0
        %v6875 = vsel %vm1302, %v6680, 0
        %v6878 = vsel %vm1302, %v6681, 0
        %v6881 = vsel %vm1302, %v6682, 0
        %v6884 = vsel %vm1302, %v6683, 0
        %v6887 = vsel %vm1302, %v6684, 0
        %6889 = vmatprep.subr.bf16.mxu0 0
        %6890 = vmatpush1.bf16.msra.mxu0 %v6860
        %6891 = vmatprep.subr.bf16.mxu0 0
        %6892 = vmatpush1.bf16.msra.mxu0 %v6861
        %6893 = vmatprep.subr.bf16.mxu0 0
        %6894 = vmatpush1.bf16.msra.mxu0 %v6862
        %6895 = vmatprep.subr.bf16.mxu0 0
        %6896 = vmatpush1.bf16.msra.mxu0 %v6863
        %6897 = vmatprep.subr.bf16.mxu0 0
        %6898 = vmatpush1.bf16.msra.mxu0 0
        %6899 = vmatprep.subr.bf16.mxu0 0
        %6900 = vmatpush1.bf16.msra.mxu0 0
        %6901 = vmatprep.subr.bf16.mxu0 0
        %6902 = vmatpush1.bf16.msra.mxu0 0
        %6903 = vmatprep.subr.bf16.mxu0 0
        %6904 = vmatpush1.bf16.msra.mxu0 0
        %6905 = vmatprep.subr.bf16.mxu0 0
        %6906 = vmatpush1.bf16.msra.mxu0 0
        %6907 = vmatprep.subr.bf16.mxu0 0
        %6908 = vmatpush1.bf16.msra.mxu0 0
        %6909 = vmatprep.subr.bf16.mxu0 0
        %6910 = vmatpush1.bf16.msra.mxu0 0
        %6911 = vmatprep.subr.bf16.mxu0 0
        %6912 = vmatpush1.bf16.msra.mxu0 0
        %6913 = vmatprep.subr.bf16.mxu0 0
        %6914 = vmatpush1.bf16.msra.mxu0 0
        %6915 = vmatprep.subr.bf16.mxu0 0
        %6916 = vmatpush1.bf16.msra.mxu0 0
        %6917 = vmatprep.subr.bf16.mxu0 0
        %6918 = vmatpush1.bf16.msra.mxu0 0
        %6919 = vmatprep.subr.bf16.mxu0 0
        %6920 = vmatpush1.bf16.msra.mxu0 0
        %6921 = vmatprep.mubr.bf16.mxu0 0
        %6922 = vmatmul.mubr.bf16.gmra.mrb[0].mxu0 %v6869
        %v6923 = vpop.f32.mrb[0].mxu0
        %v6924 = vadd.f32 %v6790, %v6923
        %v6925 = vpop.f32.mrb[0].mxu0
        %v6926 = vpop.f32.mrb[0].mxu0
        %v6927 = vadd.f32 %v6793, %v6926
        %v6928 = vpop.f32.mrb[0].mxu0
        %6929 = vmatprep.mubr.bf16.mxu0 0
        %6930 = vmatmul.mubr.bf16.gmra.mrb[0].mxu0 %v6872
        %v6931 = vpop.f32.mrb[0].mxu0
        %v6932 = vadd.f32 %v6798, %v6931
        %v6933 = vpop.f32.mrb[0].mxu0
        %v6934 = vpop.f32.mrb[0].mxu0
        %v6935 = vadd.f32 %v6801, %v6934
        %v6936 = vpop.f32.mrb[0].mxu0
        %6937 = vmatprep.mubr.bf16.mxu0 0
        %6938 = vmatmul.mubr.bf16.gmra.mrb[0].mxu0 %v6875
        %v6939 = vpop.f32.mrb[0].mxu0
        %v6940 = vadd.f32 %v6806, %v6939
        %v6941 = vpop.f32.mrb[0].mxu0
        %v6942 = vpop.f32.mrb[0].mxu0
        %v6943 = vadd.f32 %v6809, %v6942
        %v6944 = vpop.f32.mrb[0].mxu0
        %6945 = vmatprep.mubr.bf16.mxu0 0
        %6946 = vmatmul.mubr.bf16.gmra.mrb[0].mxu0 %v6878
        %v6947 = vpop.f32.mrb[0].mxu0
        %v6948 = vadd.f32 %v6814, %v6947
        %v6949 = vpop.f32.mrb[0].mxu0
        %v6950 = vpop.f32.mrb[0].mxu0
        %v6951 = vadd.f32 %v6817, %v6950
        %v6952 = vpop.f32.mrb[0].mxu0
        %6953 = vmatprep.mubr.bf16.mxu0 0
        %6954 = vmatmul.mubr.bf16.gmra.mrb[0].mxu0 %v6881
        %v6955 = vpop.f32.mrb[0].mxu0
        %v6956 = vadd.f32 %v6822, %v6955
        %v6957 = vpop.f32.mrb[0].mxu0
        %v6958 = vpop.f32.mrb[0].mxu0
        %v6959 = vadd.f32 %v6825, %v6958
        %v6960 = vpop.f32.mrb[0].mxu0
        %6961 = vmatprep.mubr.bf16.mxu0 0
        %6962 = vmatmul.mubr.bf16.gmra.mrb[0].mxu0 %v6884
        %v6963 = vpop.f32.mrb[0].mxu0
        %v6964 = vadd.f32 %v6830, %v6963
        %v6965 = vpop.f32.mrb[0].mxu0
        %v6966 = vpop.f32.mrb[0].mxu0
        %v6967 = vadd.f32 %v6833, %v6966
        %v6968 = vpop.f32.mrb[0].mxu0
        %6969 = vmatprep.mubr.bf16.mxu0 0
        %6970 = vmatmul.mubr.bf16.gmra.mrb[0].mxu0 %v6887
        %v6971 = vpop.f32.mrb[0].mxu0
        %v6972 = vadd.f32 %v6838, %v6971
        %v6973 = vpop.f32.mrb[0].mxu0
        %v6974 = vpop.f32.mrb[0].mxu0
        %v6975 = vadd.f32 %v6841, %v6974
        %v6976 = vpop.f32.mrb[0].mxu0
        %6977 = vdwg.mxu0
        %v6978 = vld [vmem:[%s10 + $0x1] sm:$0x1]
        %v6979 = vlaneseq
        %v6980 = vshrl.u32 %v6979, 7
        %v6981 = vsub.s32 0, %v6980
        %v6982 = vrot.slane %v6978, %v6981
        %v6983 = vadd.f32 %v6924, %v6982
        %v6984 = vadd.f32 %v6927, %v6982
        %v6985 = vadd.f32 %v6932, %v6982
        %v6986 = vadd.f32 %v6935, %v6982
        %v6987 = vadd.f32 %v6940, %v6982
        %v6988 = vadd.f32 %v6943, %v6982
        %v6989 = vadd.f32 %v6948, %v6982
        %v6990 = vadd.f32 %v6951, %v6982
        %v6991 = vadd.f32 %v6956, %v6982
        %v6992 = vadd.f32 %v6959, %v6982
        %v6993 = vadd.f32 %v6964, %v6982
        %v6994 = vadd.f32 %v6967, %v6982
        %v6995 = vadd.f32 %v6972, %v6982
        %v6996 = vadd.f32 %v6975, %v6982
        %v6997 = vld [vmem:[%s13 + $0x2] sm:$0x1]
        %v6998 = vld [vmem:[%s14 + $0x2] sm:$0x1]
        %v6999 = vsel %vm1302, %v6983, 0.0
        %7000 = vadd.xlane.f32.xlu0 %v6999
        %v7001 = vpop.xlane.xlu0 %7000
        %v7002 = vsel %vm1302, %v6984, 0.0
        %7003 = vadd.xlane.f32.xlu0 %v7002
        %v7004 = vpop.xlane.xlu0 %7003
        %v7005 = vsel %vm1302, %v6985, 0.0
        %7006 = vadd.xlane.f32.xlu0 %v7005
        %v7007 = vpop.xlane.xlu0 %7006
        %v7008 = vsel %vm1302, %v6986, 0.0
        %7009 = vadd.xlane.f32.xlu0 %v7008
        %v7010 = vpop.xlane.xlu0 %7009
        %v7011 = vsel %vm1302, %v6987, 0.0
        %7012 = vadd.xlane.f32.xlu0 %v7011
        %v7013 = vpop.xlane.xlu0 %7012
        %v7014 = vsel %vm1302, %v6988, 0.0
        %7015 = vadd.xlane.f32.xlu0 %v7014
        %v7016 = vpop.xlane.xlu0 %7015
        %v7017 = vsel %vm1302, %v6989, 0.0
        %7018 = vadd.xlane.f32.xlu0 %v7017
        %v7019 = vpop.xlane.xlu0 %7018
        %v7020 = vsel %vm1302, %v6990, 0.0
        %7021 = vadd.xlane.f32.xlu0 %v7020
        %v7022 = vpop.xlane.xlu0 %7021
        %v7023 = vsel %vm1302, %v6991, 0.0
        %7024 = vadd.xlane.f32.xlu0 %v7023
        %v7025 = vpop.xlane.xlu0 %7024
        %v7026 = vsel %vm1302, %v6992, 0.0
        %7027 = vadd.xlane.f32.xlu0 %v7026
        %v7028 = vpop.xlane.xlu0 %7027
        %v7029 = vsel %vm1302, %v6993, 0.0
        %7030 = vadd.xlane.f32.xlu0 %v7029
        %v7031 = vpop.xlane.xlu0 %7030
        %v7032 = vsel %vm1302, %v6994, 0.0
        %7033 = vadd.xlane.f32.xlu0 %v7032
        %v7034 = vpop.xlane.xlu0 %7033
        %v7035 = vsel %vm1302, %v6995, 0.0
        %7036 = vadd.xlane.f32.xlu0 %v7035
        %v7037 = vpop.xlane.xlu0 %7036
        %v7038 = vsel %vm1302, %v6996, 0.0
        %7039 = vadd.xlane.f32.xlu0 %v7038
        %v7040 = vpop.xlane.xlu0 %7039
        %v7041 = vmul.f32 %v7001, %v1345
        %v7042 = vmul.f32 %v7004, %v1345
        %v7043 = vmul.f32 %v7007, %v1345
        %v7044 = vmul.f32 %v7010, %v1345
        %v7045 = vmul.f32 %v7013, %v1345
        %v7046 = vmul.f32 %v7016, %v1345
        %v7047 = vmul.f32 %v7019, %v1345
        %v7048 = vmul.f32 %v7022, %v1345
        %v7049 = vmul.f32 %v7025, %v1345
        %v7050 = vmul.f32 %v7028, %v1345
        %v7051 = vmul.f32 %v7031, %v1345
        %v7052 = vmul.f32 %v7034, %v1345
        %v7053 = vmul.f32 %v7037, %v1345
        %v7054 = vmul.f32 %v7040, %v1345
        %v7055 = vsub.f32 %v6983, %v7041
        %v7056 = vsub.f32 %v6984, %v7042
        %v7057 = vsub.f32 %v6985, %v7043
        %v7058 = vsub.f32 %v6986, %v7044
        %v7059 = vsub.f32 %v6987, %v7045
        %v7060 = vsub.f32 %v6988, %v7046
        %v7061 = vsub.f32 %v6989, %v7047
        %v7062 = vsub.f32 %v6990, %v7048
        %v7063 = vsub.f32 %v6991, %v7049
        %v7064 = vsub.f32 %v6992, %v7050
        %v7065 = vsub.f32 %v6993, %v7051
        %v7066 = vsub.f32 %v6994, %v7052
        %v7067 = vsub.f32 %v6995, %v7053
        %v7068 = vsub.f32 %v6996, %v7054
        %v7069 = vmul.f32 %v7055, %v7055
        %v7070 = vmul.f32 %v7056, %v7056
        %v7071 = vmul.f32 %v7057, %v7057
        %v7072 = vmul.f32 %v7058, %v7058
        %v7073 = vmul.f32 %v7059, %v7059
        %v7074 = vmul.f32 %v7060, %v7060
        %v7075 = vmul.f32 %v7061, %v7061
        %v7076 = vmul.f32 %v7062, %v7062
        %v7077 = vmul.f32 %v7063, %v7063
        %v7078 = vmul.f32 %v7064, %v7064
        %v7079 = vmul.f32 %v7065, %v7065
        %v7080 = vmul.f32 %v7066, %v7066
        %v7081 = vmul.f32 %v7067, %v7067
        %v7082 = vmul.f32 %v7068, %v7068
        %v7083 = vsel %vm1302, %v7069, 0.0
        %7084 = vadd.xlane.f32.xlu0 %v7083
        %v7085 = vpop.xlane.xlu0 %7084
        %v7086 = vsel %vm1302, %v7070, 0.0
        %7087 = vadd.xlane.f32.xlu0 %v7086
        %v7088 = vpop.xlane.xlu0 %7087
        %v7089 = vsel %vm1302, %v7071, 0.0
        %7090 = vadd.xlane.f32.xlu0 %v7089
        %v7091 = vpop.xlane.xlu0 %7090
        %v7092 = vsel %vm1302, %v7072, 0.0
        %7093 = vadd.xlane.f32.xlu0 %v7092
        %v7094 = vpop.xlane.xlu0 %7093
        %v7095 = vsel %vm1302, %v7073, 0.0
        %7096 = vadd.xlane.f32.xlu0 %v7095
        %v7097 = vpop.xlane.xlu0 %7096
        %v7098 = vsel %vm1302, %v7074, 0.0
        %7099 = vadd.xlane.f32.xlu0 %v7098
        %v7100 = vpop.xlane.xlu0 %7099
        %v7101 = vsel %vm1302, %v7075, 0.0
        %7102 = vadd.xlane.f32.xlu0 %v7101
        %v7103 = vpop.xlane.xlu0 %7102
        %v7104 = vsel %vm1302, %v7076, 0.0
        %7105 = vadd.xlane.f32.xlu0 %v7104
        %v7106 = vpop.xlane.xlu0 %7105
        %v7107 = vsel %vm1302, %v7077, 0.0
        %7108 = vadd.xlane.f32.xlu0 %v7107
        %v7109 = vpop.xlane.xlu0 %7108
        %v7110 = vsel %vm1302, %v7078, 0.0
        %7111 = vadd.xlane.f32.xlu0 %v7110
        %v7112 = vpop.xlane.xlu0 %7111
        %v7113 = vsel %vm1302, %v7079, 0.0
        %7114 = vadd.xlane.f32.xlu0 %v7113
        %v7115 = vpop.xlane.xlu0 %7114
        %v7116 = vsel %vm1302, %v7080, 0.0
        %7117 = vadd.xlane.f32.xlu0 %v7116
        %v7118 = vpop.xlane.xlu0 %7117
        %v7119 = vsel %vm1302, %v7081, 0.0
        %7120 = vadd.xlane.f32.xlu0 %v7119
        %v7121 = vpop.xlane.xlu0 %7120
        %v7122 = vsel %vm1302, %v7082, 0.0
        %7123 = vadd.xlane.f32.xlu0 %v7122
        %v7124 = vpop.xlane.xlu0 %7123
        %v7125 = vmul.f32 %v7085, %v1345
        %v7126 = vmul.f32 %v7088, %v1345
        %v7127 = vmul.f32 %v7091, %v1345
        %v7128 = vmul.f32 %v7094, %v1345
        %v7129 = vmul.f32 %v7097, %v1345
        %v7130 = vmul.f32 %v7100, %v1345
        %v7131 = vmul.f32 %v7103, %v1345
        %v7132 = vmul.f32 %v7106, %v1345
        %v7133 = vmul.f32 %v7109, %v1345
        %v7134 = vmul.f32 %v7112, %v1345
        %v7135 = vmul.f32 %v7115, %v1345
        %v7136 = vmul.f32 %v7118, %v1345
        %v7137 = vmul.f32 %v7121, %v1345
        %v7138 = vmul.f32 %v7124, %v1345
        %v7139 = vadd.f32 %v7125, 1e-05
        %v7140 = vadd.f32 %v7126, 1e-05
        %v7141 = vadd.f32 %v7127, 1e-05
        %v7142 = vadd.f32 %v7128, 1e-05
        %v7143 = vadd.f32 %v7129, 1e-05
        %v7144 = vadd.f32 %v7130, 1e-05
        %v7145 = vadd.f32 %v7131, 1e-05
        %v7146 = vadd.f32 %v7132, 1e-05
        %v7147 = vadd.f32 %v7133, 1e-05
        %v7148 = vadd.f32 %v7134, 1e-05
        %v7149 = vadd.f32 %v7135, 1e-05
        %v7150 = vadd.f32 %v7136, 1e-05
        %v7151 = vadd.f32 %v7137, 1e-05
        %v7152 = vadd.f32 %v7138, 1e-05
        %v7153 = vrsqrt.pop %v7139
        %v7154 = vrsqrt.pop %v7140
        %v7155 = vrsqrt.pop %v7141
        %v7156 = vrsqrt.pop %v7142
        %v7157 = vrsqrt.pop %v7143
        %v7158 = vrsqrt.pop %v7144
        %v7159 = vrsqrt.pop %v7145
        %v7160 = vrsqrt.pop %v7146
        %v7161 = vrsqrt.pop %v7147
        %v7162 = vrsqrt.pop %v7148
        %v7163 = vrsqrt.pop %v7149
        %v7164 = vrsqrt.pop %v7150
        %v7165 = vrsqrt.pop %v7151
        %v7166 = vrsqrt.pop %v7152
        %v7167 = vmul.f32 %v7055, %v7153
        %v7168 = vmul.f32 %v7056, %v7154
        %v7169 = vmul.f32 %v7057, %v7155
        %v7170 = vmul.f32 %v7058, %v7156
        %v7171 = vmul.f32 %v7059, %v7157
        %v7172 = vmul.f32 %v7060, %v7158
        %v7173 = vmul.f32 %v7061, %v7159
        %v7174 = vmul.f32 %v7062, %v7160
        %v7175 = vmul.f32 %v7063, %v7161
        %v7176 = vmul.f32 %v7064, %v7162
        %v7177 = vmul.f32 %v7065, %v7163
        %v7178 = vmul.f32 %v7066, %v7164
        %v7179 = vmul.f32 %v7067, %v7165
        %v7180 = vmul.f32 %v7068, %v7166
        %v7181 = vlaneseq
        %v7182 = vshrl.u32 %v7181, 7
        %v7183 = vsub.s32 0, %v7182
        %v7184 = vrot.slane %v6997, %v7183
        %v7185 = vmul.f32 %v7167, %v7184
        %v7186 = vmul.f32 %v7168, %v7184
        %v7187 = vmul.f32 %v7169, %v7184
        %v7188 = vmul.f32 %v7170, %v7184
        %v7189 = vmul.f32 %v7171, %v7184
        %v7190 = vmul.f32 %v7172, %v7184
        %v7191 = vmul.f32 %v7173, %v7184
        %v7192 = vmul.f32 %v7174, %v7184
        %v7193 = vmul.f32 %v7175, %v7184
        %v7194 = vmul.f32 %v7176, %v7184
        %v7195 = vmul.f32 %v7177, %v7184
        %v7196 = vmul.f32 %v7178, %v7184
        %v7197 = vmul.f32 %v7179, %v7184
        %v7198 = vmul.f32 %v7180, %v7184
        %v7199 = vlaneseq
        %v7200 = vshrl.u32 %v7199, 7
        %v7201 = vsub.s32 0, %v7200
        %v7202 = vrot.slane %v6998, %v7201
        %v7203 = vadd.f32 %v7185, %v7202
        %v7204 = vadd.f32 %v7186, %v7202
        %v7205 = vadd.f32 %v7187, %v7202
        %v7206 = vadd.f32 %v7188, %v7202
        %v7207 = vadd.f32 %v7189, %v7202
        %v7208 = vadd.f32 %v7190, %v7202
        %v7209 = vadd.f32 %v7191, %v7202
        %v7210 = vadd.f32 %v7192, %v7202
        %v7211 = vadd.f32 %v7193, %v7202
        %v7212 = vadd.f32 %v7194, %v7202
        %v7213 = vadd.f32 %v7195, %v7202
        %v7214 = vadd.f32 %v7196, %v7202
        %v7215 = vadd.f32 %v7197, %v7202
        %v7216 = vadd.f32 %v7198, %v7202
        %v7217 = vmax.f32 %v7203, 0.0
        %v7218 = vmax.f32 %v7204, 0.0
        %v7219 = vmax.f32 %v7205, 0.0
        %v7220 = vmax.f32 %v7206, 0.0
        %v7221 = vmax.f32 %v7207, 0.0
        %v7222 = vmax.f32 %v7208, 0.0
        %v7223 = vmax.f32 %v7209, 0.0
        %v7224 = vmax.f32 %v7210, 0.0
        %v7225 = vmax.f32 %v7211, 0.0
        %v7226 = vmax.f32 %v7212, 0.0
        %v7227 = vmax.f32 %v7213, 0.0
        %v7228 = vmax.f32 %v7214, 0.0
        %v7229 = vmax.f32 %v7215, 0.0
        %v7230 = vmax.f32 %v7216, 0.0
        %v7231 = vpack.c.bf16 %v7218, %v7217
        %v7232 = vpack.c.bf16 %v7220, %v7219
        %v7233 = vpack.c.bf16 %v7222, %v7221
        %v7234 = vpack.c.bf16 %v7224, %v7223
        %v7235 = vpack.c.bf16 %v7226, %v7225
        %v7236 = vpack.c.bf16 %v7228, %v7227
        %v7237 = vpack.c.bf16 %v7230, %v7229
        %s7238 = scalar_lea.vmem %s11, 64
        %v7239 = vld [vmem:[%s7238] sm:$0xf]
        %v7240 = vld [vmem:[%s7238 + $0x4] sm:$0xf]
        %v7241 = vld [vmem:[%s7238 + $0x8] sm:$0xf]
        %v7242 = vld [vmem:[%s7238 + $0xc] sm:$0xf]
        %v7243 = vld [vmem:[%s7238 + $0x10] sm:$0xf]
        %v7244 = vld [vmem:[%s7238 + $0x14] sm:$0xf]
        %v7245 = vld [vmem:[%s7238 + $0x18] sm:$0xf]
        %v7246 = vld [vmem:[%s7238 + $0x1c] sm:$0xf]
        %v7247 = vld [vmem:[%s12 + $0x2] sm:$0x1]
        %v7248 = vlaneseq
        %v7249 = vshrl.u32 %v7248, 7
        %v7250 = vsub.s32 0, %v7249
        %v7251 = vrot.slane %v7247, %v7250
        %v7260 = vunpack.c.l.b16 %v7239
        %v7261 = vunpack.c.l.b16 %v7240
        %v7262 = vunpack.c.l.b16 %v7241
        %v7263 = vunpack.c.l.b16 %v7242
        %v7264 = vunpack.c.l.b16 %v7243
        %v7265 = vunpack.c.l.b16 %v7244
        %v7266 = vunpack.c.l.b16 %v7245
        %v7267 = vunpack.c.l.b16 %v7246
        %v7268 = vpack.c.b16 %v7261, %v7260
        %v7269 = vpack.c.b16 %v7263, %v7262
        %v7270 = vpack.c.b16 %v7265, %v7264
        %v7271 = vpack.c.b16 %v7267, %v7266
        %v7277 = vsel %vm1302, %v7231, 0
        %v7280 = vsel %vm1302, %v7232, 0
        %v7283 = vsel %vm1302, %v7233, 0
        %v7286 = vsel %vm1302, %v7234, 0
        %v7289 = vsel %vm1302, %v7235, 0
        %v7292 = vsel %vm1302, %v7236, 0
        %v7295 = vsel %vm1302, %v7237, 0
        %7297 = vmatprep.subr.bf16.mxu0 0
        %7298 = vmatpush1.bf16.msra.mxu0 %v7268
        %7299 = vmatprep.subr.bf16.mxu0 0
        %7300 = vmatpush1.bf16.msra.mxu0 %v7269
        %7301 = vmatprep.subr.bf16.mxu0 0
        %7302 = vmatpush1.bf16.msra.mxu0 %v7270
        %7303 = vmatprep.subr.bf16.mxu0 0
        %7304 = vmatpush1.bf16.msra.mxu0 %v7271
        %7305 = vmatprep.subr.bf16.mxu0 0
        %7306 = vmatpush1.bf16.msra.mxu0 0
        %7307 = vmatprep.subr.bf16.mxu0 0
        %7308 = vmatpush1.bf16.msra.mxu0 0
        %7309 = vmatprep.subr.bf16.mxu0 0
        %7310 = vmatpush1.bf16.msra.mxu0 0
        %7311 = vmatprep.subr.bf16.mxu0 0
        %7312 = vmatpush1.bf16.msra.mxu0 0
        %7313 = vmatprep.subr.bf16.mxu0 0
        %7314 = vmatpush1.bf16.msra.mxu0 0
        %7315 = vmatprep.subr.bf16.mxu0 0
        %7316 = vmatpush1.bf16.msra.mxu0 0
        %7317 = vmatprep.subr.bf16.mxu0 0
        %7318 = vmatpush1.bf16.msra.mxu0 0
        %7319 = vmatprep.subr.bf16.mxu0 0
        %7320 = vmatpush1.bf16.msra.mxu0 0
        %7321 = vmatprep.subr.bf16.mxu0 0
        %7322 = vmatpush1.bf16.msra.mxu0 0
        %7323 = vmatprep.subr.bf16.mxu0 0
        %7324 = vmatpush1.bf16.msra.mxu0 0
        %7325 = vmatprep.subr.bf16.mxu0 0
        %7326 = vmatpush1.bf16.msra.mxu0 0
        %7327 = vmatprep.subr.bf16.mxu0 0
        %7328 = vmatpush1.bf16.msra.mxu0 0
        %7329 = vmatprep.mubr.bf16.mxu0 0
        %7330 = vmatmul.mubr.bf16.gmra.mrb[0].mxu0 %v7277
        %v7331 = vpop.f32.mrb[0].mxu0
        %v7332 = vadd.f32 %v7251, %v7331
        %v7333 = vpop.f32.mrb[0].mxu0
        %v7334 = vpop.f32.mrb[0].mxu0
        %v7335 = vadd.f32 %v7251, %v7334
        %v7336 = vpop.f32.mrb[0].mxu0
        %7337 = vmatprep.mubr.bf16.mxu0 0
        %7338 = vmatmul.mubr.bf16.gmra.mrb[0].mxu0 %v7280
        %v7339 = vpop.f32.mrb[0].mxu0
        %v7340 = vadd.f32 %v7251, %v7339
        %v7341 = vpop.f32.mrb[0].mxu0
        %v7342 = vpop.f32.mrb[0].mxu0
        %v7343 = vadd.f32 %v7251, %v7342
        %v7344 = vpop.f32.mrb[0].mxu0
        %7345 = vmatprep.mubr.bf16.mxu0 0
        %7346 = vmatmul.mubr.bf16.gmra.mrb[0].mxu0 %v7283
        %v7347 = vpop.f32.mrb[0].mxu0
        %v7348 = vadd.f32 %v7251, %v7347
        %v7349 = vpop.f32.mrb[0].mxu0
        %v7350 = vpop.f32.mrb[0].mxu0
        %v7351 = vadd.f32 %v7251, %v7350
        %v7352 = vpop.f32.mrb[0].mxu0
        %7353 = vmatprep.mubr.bf16.mxu0 0
        %7354 = vmatmul.mubr.bf16.gmra.mrb[0].mxu0 %v7286
        %v7355 = vpop.f32.mrb[0].mxu0
        %v7356 = vadd.f32 %v7251, %v7355
        %v7357 = vpop.f32.mrb[0].mxu0
        %v7358 = vpop.f32.mrb[0].mxu0
        %v7359 = vadd.f32 %v7251, %v7358
        %v7360 = vpop.f32.mrb[0].mxu0
        %7361 = vmatprep.mubr.bf16.mxu0 0
        %7362 = vmatmul.mubr.bf16.gmra.mrb[0].mxu0 %v7289
        %v7363 = vpop.f32.mrb[0].mxu0
        %v7364 = vadd.f32 %v7251, %v7363
        %v7365 = vpop.f32.mrb[0].mxu0
        %v7366 = vpop.f32.mrb[0].mxu0
        %v7367 = vadd.f32 %v7251, %v7366
        %v7368 = vpop.f32.mrb[0].mxu0
        %7369 = vmatprep.mubr.bf16.mxu0 0
        %7370 = vmatmul.mubr.bf16.gmra.mrb[0].mxu0 %v7292
        %v7371 = vpop.f32.mrb[0].mxu0
        %v7372 = vadd.f32 %v7251, %v7371
        %v7373 = vpop.f32.mrb[0].mxu0
        %v7374 = vpop.f32.mrb[0].mxu0
        %v7375 = vadd.f32 %v7251, %v7374
        %v7376 = vpop.f32.mrb[0].mxu0
        %7377 = vmatprep.mubr.bf16.mxu0 0
        %7378 = vmatmul.mubr.bf16.gmra.mrb[0].mxu0 %v7295
        %v7379 = vpop.f32.mrb[0].mxu0
        %v7380 = vadd.f32 %v7251, %v7379
        %v7381 = vpop.f32.mrb[0].mxu0
        %v7382 = vpop.f32.mrb[0].mxu0
        %v7383 = vadd.f32 %v7251, %v7382
        %v7384 = vpop.f32.mrb[0].mxu0
        %7385 = vdwg.mxu0
        %v7386 = vld [vmem:[%s15 + $0x2] sm:$0x1]
        %v7387 = vld [vmem:[%s16 + $0x2] sm:$0x1]
        %v7388 = vsel %vm1302, %v7332, 0.0
        %7389 = vadd.xlane.f32.xlu0 %v7388
        %v7390 = vpop.xlane.xlu0 %7389
        %v7391 = vsel %vm1302, %v7335, 0.0
        %7392 = vadd.xlane.f32.xlu0 %v7391
        %v7393 = vpop.xlane.xlu0 %7392
        %v7394 = vsel %vm1302, %v7340, 0.0
        %7395 = vadd.xlane.f32.xlu0 %v7394
        %v7396 = vpop.xlane.xlu0 %7395
        %v7397 = vsel %vm1302, %v7343, 0.0
        %7398 = vadd.xlane.f32.xlu0 %v7397
        %v7399 = vpop.xlane.xlu0 %7398
        %v7400 = vsel %vm1302, %v7348, 0.0
        %7401 = vadd.xlane.f32.xlu0 %v7400
        %v7402 = vpop.xlane.xlu0 %7401
        %v7403 = vsel %vm1302, %v7351, 0.0
        %7404 = vadd.xlane.f32.xlu0 %v7403
        %v7405 = vpop.xlane.xlu0 %7404
        %v7406 = vsel %vm1302, %v7356, 0.0
        %7407 = vadd.xlane.f32.xlu0 %v7406
        %v7408 = vpop.xlane.xlu0 %7407
        %v7409 = vsel %vm1302, %v7359, 0.0
        %7410 = vadd.xlane.f32.xlu0 %v7409
        %v7411 = vpop.xlane.xlu0 %7410
        %v7412 = vsel %vm1302, %v7364, 0.0
        %7413 = vadd.xlane.f32.xlu0 %v7412
        %v7414 = vpop.xlane.xlu0 %7413
        %v7415 = vsel %vm1302, %v7367, 0.0
        %7416 = vadd.xlane.f32.xlu0 %v7415
        %v7417 = vpop.xlane.xlu0 %7416
        %v7418 = vsel %vm1302, %v7372, 0.0
        %7419 = vadd.xlane.f32.xlu0 %v7418
        %v7420 = vpop.xlane.xlu0 %7419
        %v7421 = vsel %vm1302, %v7375, 0.0
        %7422 = vadd.xlane.f32.xlu0 %v7421
        %v7423 = vpop.xlane.xlu0 %7422
        %v7424 = vsel %vm1302, %v7380, 0.0
        %7425 = vadd.xlane.f32.xlu0 %v7424
        %v7426 = vpop.xlane.xlu0 %7425
        %v7427 = vsel %vm1302, %v7383, 0.0
        %7428 = vadd.xlane.f32.xlu0 %v7427
        %v7429 = vpop.xlane.xlu0 %7428
        %v7430 = vmul.f32 %v7390, %v1345
        %v7431 = vmul.f32 %v7393, %v1345
        %v7432 = vmul.f32 %v7396, %v1345
        %v7433 = vmul.f32 %v7399, %v1345
        %v7434 = vmul.f32 %v7402, %v1345
        %v7435 = vmul.f32 %v7405, %v1345
        %v7436 = vmul.f32 %v7408, %v1345
        %v7437 = vmul.f32 %v7411, %v1345
        %v7438 = vmul.f32 %v7414, %v1345
        %v7439 = vmul.f32 %v7417, %v1345
        %v7440 = vmul.f32 %v7420, %v1345
        %v7441 = vmul.f32 %v7423, %v1345
        %v7442 = vmul.f32 %v7426, %v1345
        %v7443 = vmul.f32 %v7429, %v1345
        %v7444 = vsub.f32 %v7332, %v7430
        %v7445 = vsub.f32 %v7335, %v7431
        %v7446 = vsub.f32 %v7340, %v7432
        %v7447 = vsub.f32 %v7343, %v7433
        %v7448 = vsub.f32 %v7348, %v7434
        %v7449 = vsub.f32 %v7351, %v7435
        %v7450 = vsub.f32 %v7356, %v7436
        %v7451 = vsub.f32 %v7359, %v7437
        %v7452 = vsub.f32 %v7364, %v7438
        %v7453 = vsub.f32 %v7367, %v7439
        %v7454 = vsub.f32 %v7372, %v7440
        %v7455 = vsub.f32 %v7375, %v7441
        %v7456 = vsub.f32 %v7380, %v7442
        %v7457 = vsub.f32 %v7383, %v7443
        %v7458 = vmul.f32 %v7444, %v7444
        %v7459 = vmul.f32 %v7445, %v7445
        %v7460 = vmul.f32 %v7446, %v7446
        %v7461 = vmul.f32 %v7447, %v7447
        %v7462 = vmul.f32 %v7448, %v7448
        %v7463 = vmul.f32 %v7449, %v7449
        %v7464 = vmul.f32 %v7450, %v7450
        %v7465 = vmul.f32 %v7451, %v7451
        %v7466 = vmul.f32 %v7452, %v7452
        %v7467 = vmul.f32 %v7453, %v7453
        %v7468 = vmul.f32 %v7454, %v7454
        %v7469 = vmul.f32 %v7455, %v7455
        %v7470 = vmul.f32 %v7456, %v7456
        %v7471 = vmul.f32 %v7457, %v7457
        %v7472 = vsel %vm1302, %v7458, 0.0
        %7473 = vadd.xlane.f32.xlu0 %v7472
        %v7474 = vpop.xlane.xlu0 %7473
        %v7475 = vsel %vm1302, %v7459, 0.0
        %7476 = vadd.xlane.f32.xlu0 %v7475
        %v7477 = vpop.xlane.xlu0 %7476
        %v7478 = vsel %vm1302, %v7460, 0.0
        %7479 = vadd.xlane.f32.xlu0 %v7478
        %v7480 = vpop.xlane.xlu0 %7479
        %v7481 = vsel %vm1302, %v7461, 0.0
        %7482 = vadd.xlane.f32.xlu0 %v7481
        %v7483 = vpop.xlane.xlu0 %7482
        %v7484 = vsel %vm1302, %v7462, 0.0
        %7485 = vadd.xlane.f32.xlu0 %v7484
        %v7486 = vpop.xlane.xlu0 %7485
        %v7487 = vsel %vm1302, %v7463, 0.0
        %7488 = vadd.xlane.f32.xlu0 %v7487
        %v7489 = vpop.xlane.xlu0 %7488
        %v7490 = vsel %vm1302, %v7464, 0.0
        %7491 = vadd.xlane.f32.xlu0 %v7490
        %v7492 = vpop.xlane.xlu0 %7491
        %v7493 = vsel %vm1302, %v7465, 0.0
        %7494 = vadd.xlane.f32.xlu0 %v7493
        %v7495 = vpop.xlane.xlu0 %7494
        %v7496 = vsel %vm1302, %v7466, 0.0
        %7497 = vadd.xlane.f32.xlu0 %v7496
        %v7498 = vpop.xlane.xlu0 %7497
        %v7499 = vsel %vm1302, %v7467, 0.0
        %7500 = vadd.xlane.f32.xlu0 %v7499
        %v7501 = vpop.xlane.xlu0 %7500
        %v7502 = vsel %vm1302, %v7468, 0.0
        %7503 = vadd.xlane.f32.xlu0 %v7502
        %v7504 = vpop.xlane.xlu0 %7503
        %v7505 = vsel %vm1302, %v7469, 0.0
        %7506 = vadd.xlane.f32.xlu0 %v7505
        %v7507 = vpop.xlane.xlu0 %7506
        %v7508 = vsel %vm1302, %v7470, 0.0
        %7509 = vadd.xlane.f32.xlu0 %v7508
        %v7510 = vpop.xlane.xlu0 %7509
        %v7511 = vsel %vm1302, %v7471, 0.0
        %7512 = vadd.xlane.f32.xlu0 %v7511
        %v7513 = vpop.xlane.xlu0 %7512
        %v7514 = vmul.f32 %v7474, %v1345
        %v7515 = vmul.f32 %v7477, %v1345
        %v7516 = vmul.f32 %v7480, %v1345
        %v7517 = vmul.f32 %v7483, %v1345
        %v7518 = vmul.f32 %v7486, %v1345
        %v7519 = vmul.f32 %v7489, %v1345
        %v7520 = vmul.f32 %v7492, %v1345
        %v7521 = vmul.f32 %v7495, %v1345
        %v7522 = vmul.f32 %v7498, %v1345
        %v7523 = vmul.f32 %v7501, %v1345
        %v7524 = vmul.f32 %v7504, %v1345
        %v7525 = vmul.f32 %v7507, %v1345
        %v7526 = vmul.f32 %v7510, %v1345
        %v7527 = vmul.f32 %v7513, %v1345
        %v7528 = vadd.f32 %v7514, 1e-05
        %v7529 = vadd.f32 %v7515, 1e-05
        %v7530 = vadd.f32 %v7516, 1e-05
        %v7531 = vadd.f32 %v7517, 1e-05
        %v7532 = vadd.f32 %v7518, 1e-05
        %v7533 = vadd.f32 %v7519, 1e-05
        %v7534 = vadd.f32 %v7520, 1e-05
        %v7535 = vadd.f32 %v7521, 1e-05
        %v7536 = vadd.f32 %v7522, 1e-05
        %v7537 = vadd.f32 %v7523, 1e-05
        %v7538 = vadd.f32 %v7524, 1e-05
        %v7539 = vadd.f32 %v7525, 1e-05
        %v7540 = vadd.f32 %v7526, 1e-05
        %v7541 = vadd.f32 %v7527, 1e-05
        %v7542 = vrsqrt.pop %v7528
        %v7543 = vrsqrt.pop %v7529
        %v7544 = vrsqrt.pop %v7530
        %v7545 = vrsqrt.pop %v7531
        %v7546 = vrsqrt.pop %v7532
        %v7547 = vrsqrt.pop %v7533
        %v7548 = vrsqrt.pop %v7534
        %v7549 = vrsqrt.pop %v7535
        %v7550 = vrsqrt.pop %v7536
        %v7551 = vrsqrt.pop %v7537
        %v7552 = vrsqrt.pop %v7538
        %v7553 = vrsqrt.pop %v7539
        %v7554 = vrsqrt.pop %v7540
        %v7555 = vrsqrt.pop %v7541
        %v7556 = vmul.f32 %v7444, %v7542
        %v7557 = vmul.f32 %v7445, %v7543
        %v7558 = vmul.f32 %v7446, %v7544
        %v7559 = vmul.f32 %v7447, %v7545
        %v7560 = vmul.f32 %v7448, %v7546
        %v7561 = vmul.f32 %v7449, %v7547
        %v7562 = vmul.f32 %v7450, %v7548
        %v7563 = vmul.f32 %v7451, %v7549
        %v7564 = vmul.f32 %v7452, %v7550
        %v7565 = vmul.f32 %v7453, %v7551
        %v7566 = vmul.f32 %v7454, %v7552
        %v7567 = vmul.f32 %v7455, %v7553
        %v7568 = vmul.f32 %v7456, %v7554
        %v7569 = vmul.f32 %v7457, %v7555
        %v7570 = vlaneseq
        %v7571 = vshrl.u32 %v7570, 7
        %v7572 = vsub.s32 0, %v7571
        %v7573 = vrot.slane %v7386, %v7572
        %v7574 = vmul.f32 %v7556, %v7573
        %v7575 = vmul.f32 %v7557, %v7573
        %v7576 = vmul.f32 %v7558, %v7573
        %v7577 = vmul.f32 %v7559, %v7573
        %v7578 = vmul.f32 %v7560, %v7573
        %v7579 = vmul.f32 %v7561, %v7573
        %v7580 = vmul.f32 %v7562, %v7573
        %v7581 = vmul.f32 %v7563, %v7573
        %v7582 = vmul.f32 %v7564, %v7573
        %v7583 = vmul.f32 %v7565, %v7573
        %v7584 = vmul.f32 %v7566, %v7573
        %v7585 = vmul.f32 %v7567, %v7573
        %v7586 = vmul.f32 %v7568, %v7573
        %v7587 = vmul.f32 %v7569, %v7573
        %v7588 = vlaneseq
        %v7589 = vshrl.u32 %v7588, 7
        %v7590 = vsub.s32 0, %v7589
        %v7591 = vrot.slane %v7387, %v7590
        %v7592 = vadd.f32 %v7574, %v7591
        %v7593 = vadd.f32 %v7575, %v7591
        %v7594 = vadd.f32 %v7576, %v7591
        %v7595 = vadd.f32 %v7577, %v7591
        %v7596 = vadd.f32 %v7578, %v7591
        %v7597 = vadd.f32 %v7579, %v7591
        %v7598 = vadd.f32 %v7580, %v7591
        %v7599 = vadd.f32 %v7581, %v7591
        %v7600 = vadd.f32 %v7582, %v7591
        %v7601 = vadd.f32 %v7583, %v7591
        %v7602 = vadd.f32 %v7584, %v7591
        %v7603 = vadd.f32 %v7585, %v7591
        %v7604 = vadd.f32 %v7586, %v7591
        %v7605 = vadd.f32 %v7587, %v7591
        %v7606 = vld [vmem:[%s17 + $0x2] sm:$0x1]
        %v7607 = vld [vmem:[%s18 + $0x2] sm:$0x1]
        %7622 = vrot.lane.b32.xlu0 %v6983, 64
        %v7623 = vpop.permute.xlu0 %7622
        %7624 = vrot.lane.b32.xlu0 %v6984, 64
        %v7625 = vpop.permute.xlu0 %7624
        %7626 = vrot.lane.b32.xlu0 %v6985, 64
        %v7627 = vpop.permute.xlu0 %7626
        %7628 = vrot.lane.b32.xlu0 %v6986, 64
        %v7629 = vpop.permute.xlu0 %7628
        %7630 = vrot.lane.b32.xlu0 %v6987, 64
        %v7631 = vpop.permute.xlu0 %7630
        %7632 = vrot.lane.b32.xlu0 %v6988, 64
        %v7633 = vpop.permute.xlu0 %7632
        %7634 = vrot.lane.b32.xlu0 %v6989, 64
        %v7635 = vpop.permute.xlu0 %7634
        %7636 = vrot.lane.b32.xlu0 %v6990, 64
        %v7637 = vpop.permute.xlu0 %7636
        %7638 = vrot.lane.b32.xlu0 %v6991, 64
        %v7639 = vpop.permute.xlu0 %7638
        %7640 = vrot.lane.b32.xlu0 %v6992, 64
        %v7641 = vpop.permute.xlu0 %7640
        %7642 = vrot.lane.b32.xlu0 %v6993, 64
        %v7643 = vpop.permute.xlu0 %7642
        %7644 = vrot.lane.b32.xlu0 %v6994, 64
        %v7645 = vpop.permute.xlu0 %7644
        %7646 = vrot.lane.b32.xlu0 %v6995, 64
        %v7647 = vpop.permute.xlu0 %7646
        %7648 = vrot.lane.b32.xlu0 %v6996, 64
        %v7649 = vpop.permute.xlu0 %7648
        %v7664 = vsel %vm1302, %v7623, 0.0
        %7665 = vadd.xlane.f32.xlu0 %v7664
        %v7666 = vpop.xlane.xlu0 %7665
        %v7667 = vsel %vm1302, %v7625, 0.0
        %7668 = vadd.xlane.f32.xlu0 %v7667
        %v7669 = vpop.xlane.xlu0 %7668
        %v7670 = vsel %vm1302, %v7627, 0.0
        %7671 = vadd.xlane.f32.xlu0 %v7670
        %v7672 = vpop.xlane.xlu0 %7671
        %v7673 = vsel %vm1302, %v7629, 0.0
        %7674 = vadd.xlane.f32.xlu0 %v7673
        %v7675 = vpop.xlane.xlu0 %7674
        %v7676 = vsel %vm1302, %v7631, 0.0
        %7677 = vadd.xlane.f32.xlu0 %v7676
        %v7678 = vpop.xlane.xlu0 %7677
        %v7679 = vsel %vm1302, %v7633, 0.0
        %7680 = vadd.xlane.f32.xlu0 %v7679
        %v7681 = vpop.xlane.xlu0 %7680
        %v7682 = vsel %vm1302, %v7635, 0.0
        %7683 = vadd.xlane.f32.xlu0 %v7682
        %v7684 = vpop.xlane.xlu0 %7683
        %v7685 = vsel %vm1302, %v7637, 0.0
        %7686 = vadd.xlane.f32.xlu0 %v7685
        %v7687 = vpop.xlane.xlu0 %7686
        %v7688 = vsel %vm1302, %v7639, 0.0
        %7689 = vadd.xlane.f32.xlu0 %v7688
        %v7690 = vpop.xlane.xlu0 %7689
        %v7691 = vsel %vm1302, %v7641, 0.0
        %7692 = vadd.xlane.f32.xlu0 %v7691
        %v7693 = vpop.xlane.xlu0 %7692
        %v7694 = vsel %vm1302, %v7643, 0.0
        %7695 = vadd.xlane.f32.xlu0 %v7694
        %v7696 = vpop.xlane.xlu0 %7695
        %v7697 = vsel %vm1302, %v7645, 0.0
        %7698 = vadd.xlane.f32.xlu0 %v7697
        %v7699 = vpop.xlane.xlu0 %7698
        %v7700 = vsel %vm1302, %v7647, 0.0
        %7701 = vadd.xlane.f32.xlu0 %v7700
        %v7702 = vpop.xlane.xlu0 %7701
        %v7703 = vsel %vm1302, %v7649, 0.0
        %7704 = vadd.xlane.f32.xlu0 %v7703
        %v7705 = vpop.xlane.xlu0 %7704
        %v7706 = vmul.f32 %v7666, %v1345
        %v7707 = vmul.f32 %v7669, %v1345
        %v7708 = vmul.f32 %v7672, %v1345
        %v7709 = vmul.f32 %v7675, %v1345
        %v7710 = vmul.f32 %v7678, %v1345
        %v7711 = vmul.f32 %v7681, %v1345
        %v7712 = vmul.f32 %v7684, %v1345
        %v7713 = vmul.f32 %v7687, %v1345
        %v7714 = vmul.f32 %v7690, %v1345
        %v7715 = vmul.f32 %v7693, %v1345
        %v7716 = vmul.f32 %v7696, %v1345
        %v7717 = vmul.f32 %v7699, %v1345
        %v7718 = vmul.f32 %v7702, %v1345
        %v7719 = vmul.f32 %v7705, %v1345
        %v7720 = vsub.f32 %v6983, %v7706
        %v7721 = vsub.f32 %v6984, %v7707
        %v7722 = vsub.f32 %v6985, %v7708
        %v7723 = vsub.f32 %v6986, %v7709
        %v7724 = vsub.f32 %v6987, %v7710
        %v7725 = vsub.f32 %v6988, %v7711
        %v7726 = vsub.f32 %v6989, %v7712
        %v7727 = vsub.f32 %v6990, %v7713
        %v7728 = vsub.f32 %v6991, %v7714
        %v7729 = vsub.f32 %v6992, %v7715
        %v7730 = vsub.f32 %v6993, %v7716
        %v7731 = vsub.f32 %v6994, %v7717
        %v7732 = vsub.f32 %v6995, %v7718
        %v7733 = vsub.f32 %v6996, %v7719
        %v7734 = vmul.f32 %v7720, %v7720
        %v7735 = vmul.f32 %v7721, %v7721
        %v7736 = vmul.f32 %v7722, %v7722
        %v7737 = vmul.f32 %v7723, %v7723
        %v7738 = vmul.f32 %v7724, %v7724
        %v7739 = vmul.f32 %v7725, %v7725
        %v7740 = vmul.f32 %v7726, %v7726
        %v7741 = vmul.f32 %v7727, %v7727
        %v7742 = vmul.f32 %v7728, %v7728
        %v7743 = vmul.f32 %v7729, %v7729
        %v7744 = vmul.f32 %v7730, %v7730
        %v7745 = vmul.f32 %v7731, %v7731
        %v7746 = vmul.f32 %v7732, %v7732
        %v7747 = vmul.f32 %v7733, %v7733
        %7762 = vrot.lane.b32.xlu0 %v7734, 64
        %v7763 = vpop.permute.xlu0 %7762
        %7764 = vrot.lane.b32.xlu0 %v7735, 64
        %v7765 = vpop.permute.xlu0 %7764
        %7766 = vrot.lane.b32.xlu0 %v7736, 64
        %v7767 = vpop.permute.xlu0 %7766
        %7768 = vrot.lane.b32.xlu0 %v7737, 64
        %v7769 = vpop.permute.xlu0 %7768
        %7770 = vrot.lane.b32.xlu0 %v7738, 64
        %v7771 = vpop.permute.xlu0 %7770
        %7772 = vrot.lane.b32.xlu0 %v7739, 64
        %v7773 = vpop.permute.xlu0 %7772
        %7774 = vrot.lane.b32.xlu0 %v7740, 64
        %v7775 = vpop.permute.xlu0 %7774
        %7776 = vrot.lane.b32.xlu0 %v7741, 64
        %v7777 = vpop.permute.xlu0 %7776
        %7778 = vrot.lane.b32.xlu0 %v7742, 64
        %v7779 = vpop.permute.xlu0 %7778
        %7780 = vrot.lane.b32.xlu0 %v7743, 64
        %v7781 = vpop.permute.xlu0 %7780
        %7782 = vrot.lane.b32.xlu0 %v7744, 64
        %v7783 = vpop.permute.xlu0 %7782
        %7784 = vrot.lane.b32.xlu0 %v7745, 64
        %v7785 = vpop.permute.xlu0 %7784
        %7786 = vrot.lane.b32.xlu0 %v7746, 64
        %v7787 = vpop.permute.xlu0 %7786
        %7788 = vrot.lane.b32.xlu0 %v7747, 64
        %v7789 = vpop.permute.xlu0 %7788
        %v7804 = vsel %vm1302, %v7763, 0.0
        %7805 = vadd.xlane.f32.xlu0 %v7804
        %v7806 = vpop.xlane.xlu0 %7805
        %v7807 = vsel %vm1302, %v7765, 0.0
        %7808 = vadd.xlane.f32.xlu0 %v7807
        %v7809 = vpop.xlane.xlu0 %7808
        %v7810 = vsel %vm1302, %v7767, 0.0
        %7811 = vadd.xlane.f32.xlu0 %v7810
        %v7812 = vpop.xlane.xlu0 %7811
        %v7813 = vsel %vm1302, %v7769, 0.0
        %7814 = vadd.xlane.f32.xlu0 %v7813
        %v7815 = vpop.xlane.xlu0 %7814
        %v7816 = vsel %vm1302, %v7771, 0.0
        %7817 = vadd.xlane.f32.xlu0 %v7816
        %v7818 = vpop.xlane.xlu0 %7817
        %v7819 = vsel %vm1302, %v7773, 0.0
        %7820 = vadd.xlane.f32.xlu0 %v7819
        %v7821 = vpop.xlane.xlu0 %7820
        %v7822 = vsel %vm1302, %v7775, 0.0
        %7823 = vadd.xlane.f32.xlu0 %v7822
        %v7824 = vpop.xlane.xlu0 %7823
        %v7825 = vsel %vm1302, %v7777, 0.0
        %7826 = vadd.xlane.f32.xlu0 %v7825
        %v7827 = vpop.xlane.xlu0 %7826
        %v7828 = vsel %vm1302, %v7779, 0.0
        %7829 = vadd.xlane.f32.xlu0 %v7828
        %v7830 = vpop.xlane.xlu0 %7829
        %v7831 = vsel %vm1302, %v7781, 0.0
        %7832 = vadd.xlane.f32.xlu0 %v7831
        %v7833 = vpop.xlane.xlu0 %7832
        %v7834 = vsel %vm1302, %v7783, 0.0
        %7835 = vadd.xlane.f32.xlu0 %v7834
        %v7836 = vpop.xlane.xlu0 %7835
        %v7837 = vsel %vm1302, %v7785, 0.0
        %7838 = vadd.xlane.f32.xlu0 %v7837
        %v7839 = vpop.xlane.xlu0 %7838
        %v7840 = vsel %vm1302, %v7787, 0.0
        %7841 = vadd.xlane.f32.xlu0 %v7840
        %v7842 = vpop.xlane.xlu0 %7841
        %v7843 = vsel %vm1302, %v7789, 0.0
        %7844 = vadd.xlane.f32.xlu0 %v7843
        %v7845 = vpop.xlane.xlu0 %7844
        %v7846 = vmul.f32 %v7806, %v1345
        %v7847 = vmul.f32 %v7809, %v1345
        %v7848 = vmul.f32 %v7812, %v1345
        %v7849 = vmul.f32 %v7815, %v1345
        %v7850 = vmul.f32 %v7818, %v1345
        %v7851 = vmul.f32 %v7821, %v1345
        %v7852 = vmul.f32 %v7824, %v1345
        %v7853 = vmul.f32 %v7827, %v1345
        %v7854 = vmul.f32 %v7830, %v1345
        %v7855 = vmul.f32 %v7833, %v1345
        %v7856 = vmul.f32 %v7836, %v1345
        %v7857 = vmul.f32 %v7839, %v1345
        %v7858 = vmul.f32 %v7842, %v1345
        %v7859 = vmul.f32 %v7845, %v1345
        %v7860 = vadd.f32 %v7846, 1e-05
        %v7861 = vadd.f32 %v7847, 1e-05
        %v7862 = vadd.f32 %v7848, 1e-05
        %v7863 = vadd.f32 %v7849, 1e-05
        %v7864 = vadd.f32 %v7850, 1e-05
        %v7865 = vadd.f32 %v7851, 1e-05
        %v7866 = vadd.f32 %v7852, 1e-05
        %v7867 = vadd.f32 %v7853, 1e-05
        %v7868 = vadd.f32 %v7854, 1e-05
        %v7869 = vadd.f32 %v7855, 1e-05
        %v7870 = vadd.f32 %v7856, 1e-05
        %v7871 = vadd.f32 %v7857, 1e-05
        %v7872 = vadd.f32 %v7858, 1e-05
        %v7873 = vadd.f32 %v7859, 1e-05
        %v7874 = vrsqrt.pop %v7860
        %v7875 = vrsqrt.pop %v7861
        %v7876 = vrsqrt.pop %v7862
        %v7877 = vrsqrt.pop %v7863
        %v7878 = vrsqrt.pop %v7864
        %v7879 = vrsqrt.pop %v7865
        %v7880 = vrsqrt.pop %v7866
        %v7881 = vrsqrt.pop %v7867
        %v7882 = vrsqrt.pop %v7868
        %v7883 = vrsqrt.pop %v7869
        %v7884 = vrsqrt.pop %v7870
        %v7885 = vrsqrt.pop %v7871
        %v7886 = vrsqrt.pop %v7872
        %v7887 = vrsqrt.pop %v7873
        %v7888 = vmul.f32 %v7720, %v7874
        %v7889 = vmul.f32 %v7721, %v7875
        %v7890 = vmul.f32 %v7722, %v7876
        %v7891 = vmul.f32 %v7723, %v7877
        %v7892 = vmul.f32 %v7724, %v7878
        %v7893 = vmul.f32 %v7725, %v7879
        %v7894 = vmul.f32 %v7726, %v7880
        %v7895 = vmul.f32 %v7727, %v7881
        %v7896 = vmul.f32 %v7728, %v7882
        %v7897 = vmul.f32 %v7729, %v7883
        %v7898 = vmul.f32 %v7730, %v7884
        %v7899 = vmul.f32 %v7731, %v7885
        %v7900 = vmul.f32 %v7732, %v7886
        %v7901 = vmul.f32 %v7733, %v7887
        %v7902 = vlaneseq
        %v7903 = vshrl.u32 %v7902, 7
        %v7904 = vsub.s32 0, %v7903
        %v7905 = vrot.slane %v7606, %v7904
        %7907 = vrot.lane.b32.xlu0 %v7905, 64
        %v7908 = vpop.permute.xlu0 %7907
        %v7910 = vmul.f32 %v7888, %v7908
        %v7911 = vmul.f32 %v7889, %v7908
        %v7912 = vmul.f32 %v7890, %v7908
        %v7913 = vmul.f32 %v7891, %v7908
        %v7914 = vmul.f32 %v7892, %v7908
        %v7915 = vmul.f32 %v7893, %v7908
        %v7916 = vmul.f32 %v7894, %v7908
        %v7917 = vmul.f32 %v7895, %v7908
        %v7918 = vmul.f32 %v7896, %v7908
        %v7919 = vmul.f32 %v7897, %v7908
        %v7920 = vmul.f32 %v7898, %v7908
        %v7921 = vmul.f32 %v7899, %v7908
        %v7922 = vmul.f32 %v7900, %v7908
        %v7923 = vmul.f32 %v7901, %v7908
        %v7924 = vlaneseq
        %v7925 = vshrl.u32 %v7924, 7
        %v7926 = vsub.s32 0, %v7925
        %v7927 = vrot.slane %v7607, %v7926
        %7929 = vrot.lane.b32.xlu0 %v7927, 64
        %v7930 = vpop.permute.xlu0 %7929
        %v7932 = vadd.f32 %v7910, %v7930
        %v7933 = vadd.f32 %v7911, %v7930
        %v7934 = vadd.f32 %v7912, %v7930
        %v7935 = vadd.f32 %v7913, %v7930
        %v7936 = vadd.f32 %v7914, %v7930
        %v7937 = vadd.f32 %v7915, %v7930
        %v7938 = vadd.f32 %v7916, %v7930
        %v7939 = vadd.f32 %v7917, %v7930
        %v7940 = vadd.f32 %v7918, %v7930
        %v7941 = vadd.f32 %v7919, %v7930
        %v7942 = vadd.f32 %v7920, %v7930
        %v7943 = vadd.f32 %v7921, %v7930
        %v7944 = vadd.f32 %v7922, %v7930
        %v7945 = vadd.f32 %v7923, %v7930
        %7960 = vrot.lane.b32.xlu0 %v7932, 64
        %v7961 = vpop.permute.xlu0 %7960
        %7962 = vrot.lane.b32.xlu0 %v7933, 64
        %v7963 = vpop.permute.xlu0 %7962
        %7964 = vrot.lane.b32.xlu0 %v7934, 64
        %v7965 = vpop.permute.xlu0 %7964
        %7966 = vrot.lane.b32.xlu0 %v7935, 64
        %v7967 = vpop.permute.xlu0 %7966
        %7968 = vrot.lane.b32.xlu0 %v7936, 64
        %v7969 = vpop.permute.xlu0 %7968
        %7970 = vrot.lane.b32.xlu0 %v7937, 64
        %v7971 = vpop.permute.xlu0 %7970
        %7972 = vrot.lane.b32.xlu0 %v7938, 64
        %v7973 = vpop.permute.xlu0 %7972
        %7974 = vrot.lane.b32.xlu0 %v7939, 64
        %v7975 = vpop.permute.xlu0 %7974
        %7976 = vrot.lane.b32.xlu0 %v7940, 64
        %v7977 = vpop.permute.xlu0 %7976
        %7978 = vrot.lane.b32.xlu0 %v7941, 64
        %v7979 = vpop.permute.xlu0 %7978
        %7980 = vrot.lane.b32.xlu0 %v7942, 64
        %v7981 = vpop.permute.xlu0 %7980
        %7982 = vrot.lane.b32.xlu0 %v7943, 64
        %v7983 = vpop.permute.xlu0 %7982
        %7984 = vrot.lane.b32.xlu0 %v7944, 64
        %v7985 = vpop.permute.xlu0 %7984
        %7986 = vrot.lane.b32.xlu0 %v7945, 64
        %v7987 = vpop.permute.xlu0 %7986
        %v8002 = vadd.f32 %v7592, %v7961
        %v8003 = vadd.f32 %v7593, %v7963
        %v8004 = vadd.f32 %v7594, %v7965
        %v8005 = vadd.f32 %v7595, %v7967
        %v8006 = vadd.f32 %v7596, %v7969
        %v8007 = vadd.f32 %v7597, %v7971
        %v8008 = vadd.f32 %v7598, %v7973
        %v8009 = vadd.f32 %v7599, %v7975
        %v8010 = vadd.f32 %v7600, %v7977
        %v8011 = vadd.f32 %v7601, %v7979
        %v8012 = vadd.f32 %v7602, %v7981
        %v8013 = vadd.f32 %v7603, %v7983
        %v8014 = vadd.f32 %v7604, %v7985
        %v8015 = vadd.f32 %v7605, %v7987
        %v8016 = vmax.f32 %v8002, 0.0
        %v8017 = vmax.f32 %v8003, 0.0
        %v8018 = vmax.f32 %v8004, 0.0
        %v8019 = vmax.f32 %v8005, 0.0
        %v8020 = vmax.f32 %v8006, 0.0
        %v8021 = vmax.f32 %v8007, 0.0
        %v8022 = vmax.f32 %v8008, 0.0
        %v8023 = vmax.f32 %v8009, 0.0
        %v8024 = vmax.f32 %v8010, 0.0
        %v8025 = vmax.f32 %v8011, 0.0
        %v8026 = vmax.f32 %v8012, 0.0
        %v8027 = vmax.f32 %v8013, 0.0
        %v8028 = vmax.f32 %v8014, 0.0
        %v8029 = vmax.f32 %v8015, 0.0
        %v8030 = vsel %vm3230, %v8016, -1e+15
        %v8031 = vsel %vm3231, %v8017, -1e+15
        %v8032 = vsel %vm3232, %v8018, -1e+15
        %v8033 = vsel %vm3233, %v8019, -1e+15
        %v8034 = vsel %vm3234, %v8020, -1e+15
        %v8035 = vsel %vm3235, %v8021, -1e+15
        %v8036 = vsel %vm3236, %v8022, -1e+15
        %v8037 = vsel %vm3237, %v8023, -1e+15
        %v8038 = vsel %vm3238, %v8024, -1e+15
        %v8039 = vsel %vm3239, %v8025, -1e+15
        %v8040 = vsel %vm3240, %v8026, -1e+15
        %v8041 = vsel %vm3241, %v8027, -1e+15
        %v8042 = vsel %vm3242, %v8028, -1e+15
        %v8043 = vsel %vm3243, %v8029, -1e+15
        %v8044 = vsel %vm3244, %v8016, -1e+15
        %v8045 = vsel %vm3245, %v8017, -1e+15
        %v8046 = vsel %vm3246, %v8018, -1e+15
        %v8047 = vsel %vm3247, %v8019, -1e+15
        %v8048 = vsel %vm3248, %v8020, -1e+15
        %v8049 = vsel %vm3249, %v8021, -1e+15
        %v8050 = vsel %vm3250, %v8022, -1e+15
        %v8051 = vsel %vm3251, %v8023, -1e+15
        %v8052 = vsel %vm3252, %v8024, -1e+15
        %v8053 = vsel %vm3253, %v8025, -1e+15
        %v8054 = vsel %vm3254, %v8026, -1e+15
        %v8055 = vsel %vm3255, %v8027, -1e+15
        %v8056 = vsel %vm3256, %v8028, -1e+15
        %v8057 = vsel %vm3257, %v8029, -1e+15
        %v8058 = vsel %vm3258, %v8016, -1e+15
        %v8059 = vsel %vm3259, %v8017, -1e+15
        %v8060 = vsel %vm3260, %v8018, -1e+15
        %v8061 = vsel %vm3261, %v8019, -1e+15
        %v8062 = vsel %vm3262, %v8020, -1e+15
        %v8063 = vsel %vm3263, %v8021, -1e+15
        %v8064 = vsel %vm3264, %v8022, -1e+15
        %v8065 = vsel %vm3265, %v8023, -1e+15
        %v8066 = vsel %vm3266, %v8024, -1e+15
        %v8067 = vsel %vm3267, %v8025, -1e+15
        %v8068 = vsel %vm3268, %v8026, -1e+15
        %v8069 = vsel %vm3269, %v8027, -1e+15
        %v8070 = vsel %vm3270, %v8028, -1e+15
        %v8071 = vsel %vm3271, %v8029, -1e+15
        %v8072 = vsel %vm3272, %v8016, -1e+15
        %v8073 = vsel %vm3273, %v8017, -1e+15
        %v8074 = vsel %vm3274, %v8018, -1e+15
        %v8075 = vsel %vm3275, %v8019, -1e+15
        %v8076 = vsel %vm3276, %v8020, -1e+15
        %v8077 = vsel %vm3277, %v8021, -1e+15
        %v8078 = vsel %vm3278, %v8022, -1e+15
        %v8079 = vsel %vm3279, %v8023, -1e+15
        %v8080 = vsel %vm3280, %v8024, -1e+15
        %v8081 = vsel %vm3281, %v8025, -1e+15
        %v8082 = vsel %vm3282, %v8026, -1e+15
        %v8083 = vsel %vm3283, %v8027, -1e+15
        %v8084 = vsel %vm3284, %v8028, -1e+15
        %v8085 = vsel %vm3285, %v8029, -1e+15
        %v8086 = vsel %vm3286, %v8016, -1e+15
        %v8087 = vsel %vm3287, %v8017, -1e+15
        %v8088 = vsel %vm3288, %v8018, -1e+15
        %v8089 = vsel %vm3289, %v8019, -1e+15
        %v8090 = vsel %vm3290, %v8020, -1e+15
        %v8091 = vsel %vm3291, %v8021, -1e+15
        %v8092 = vsel %vm3292, %v8022, -1e+15
        %v8093 = vsel %vm3293, %v8023, -1e+15
        %v8094 = vsel %vm3294, %v8024, -1e+15
        %v8095 = vsel %vm3295, %v8025, -1e+15
        %v8096 = vsel %vm3296, %v8026, -1e+15
        %v8097 = vsel %vm3297, %v8027, -1e+15
        %v8098 = vsel %vm3298, %v8028, -1e+15
        %v8099 = vsel %vm3299, %v8029, -1e+15
        %v8100 = vsel %vm3300, %v8016, -1e+15
        %v8101 = vsel %vm3301, %v8017, -1e+15
        %v8102 = vsel %vm3302, %v8018, -1e+15
        %v8103 = vsel %vm3303, %v8019, -1e+15
        %v8104 = vsel %vm3304, %v8020, -1e+15
        %v8105 = vsel %vm3305, %v8021, -1e+15
        %v8106 = vsel %vm3306, %v8022, -1e+15
        %v8107 = vsel %vm3307, %v8023, -1e+15
        %v8108 = vsel %vm3308, %v8024, -1e+15
        %v8109 = vsel %vm3309, %v8025, -1e+15
        %v8110 = vsel %vm3310, %v8026, -1e+15
        %v8111 = vsel %vm3311, %v8027, -1e+15
        %v8112 = vsel %vm3312, %v8028, -1e+15
        %v8113 = vsel %vm3313, %v8029, -1e+15
        %v8114 = vsel %vm3314, %v8016, -1e+15
        %v8115 = vsel %vm3315, %v8017, -1e+15
        %v8116 = vsel %vm3316, %v8018, -1e+15
        %v8117 = vsel %vm3317, %v8019, -1e+15
        %v8118 = vsel %vm3318, %v8020, -1e+15
        %v8119 = vsel %vm3319, %v8021, -1e+15
        %v8120 = vsel %vm3320, %v8022, -1e+15
        %v8121 = vsel %vm3321, %v8023, -1e+15
        %v8122 = vsel %vm3322, %v8024, -1e+15
        %v8123 = vsel %vm3323, %v8025, -1e+15
        %v8124 = vsel %vm3324, %v8026, -1e+15
        %v8125 = vsel %vm3325, %v8027, -1e+15
        %v8126 = vsel %vm3326, %v8028, -1e+15
        %v8127 = vsel %vm3327, %v8029, -1e+15
        %v8128 = vsel %vm3328, %v8016, -1e+15
        %v8129 = vsel %vm3329, %v8017, -1e+15
        %v8130 = vsel %vm3330, %v8018, -1e+15
        %v8131 = vsel %vm3331, %v8019, -1e+15
        %v8132 = vsel %vm3332, %v8020, -1e+15
        %v8133 = vsel %vm3333, %v8021, -1e+15
        %v8134 = vsel %vm3334, %v8022, -1e+15
        %v8135 = vsel %vm3335, %v8023, -1e+15
        %v8136 = vsel %vm3336, %v8024, -1e+15
        %v8137 = vsel %vm3337, %v8025, -1e+15
        %v8138 = vsel %vm3338, %v8026, -1e+15
        %v8139 = vsel %vm3339, %v8027, -1e+15
        %v8140 = vsel %vm3340, %v8028, -1e+15
        %v8141 = vsel %vm3341, %v8029, -1e+15
        %v8142 = vsel %vm3342, %v8016, -1e+15
        %v8143 = vsel %vm3343, %v8017, -1e+15
        %v8144 = vsel %vm3344, %v8018, -1e+15
        %v8145 = vsel %vm3345, %v8019, -1e+15
        %v8146 = vsel %vm3346, %v8020, -1e+15
        %v8147 = vsel %vm3347, %v8021, -1e+15
        %v8148 = vsel %vm3348, %v8022, -1e+15
        %v8149 = vsel %vm3349, %v8023, -1e+15
        %v8150 = vsel %vm3350, %v8024, -1e+15
        %v8151 = vsel %vm3351, %v8025, -1e+15
        %v8152 = vsel %vm3352, %v8026, -1e+15
        %v8153 = vsel %vm3353, %v8027, -1e+15
        %v8154 = vsel %vm3354, %v8028, -1e+15
        %v8155 = vsel %vm3355, %v8029, -1e+15
        %v8156 = vsel %vm3356, %v8016, -1e+15
        %v8157 = vsel %vm3357, %v8017, -1e+15
        %v8158 = vsel %vm3358, %v8018, -1e+15
        %v8159 = vsel %vm3359, %v8019, -1e+15
        %v8160 = vsel %vm3360, %v8020, -1e+15
        %v8161 = vsel %vm3361, %v8021, -1e+15
        %v8162 = vsel %vm3362, %v8022, -1e+15
        %v8163 = vsel %vm3363, %v8023, -1e+15
        %v8164 = vsel %vm3364, %v8024, -1e+15
        %v8165 = vsel %vm3365, %v8025, -1e+15
        %v8166 = vsel %vm3366, %v8026, -1e+15
        %v8167 = vsel %vm3367, %v8027, -1e+15
        %v8168 = vsel %vm3368, %v8028, -1e+15
        %v8169 = vsel %vm3369, %v8029, -1e+15
        %v8170 = vsel %vm3370, %v8016, -1e+15
        %v8171 = vsel %vm3371, %v8017, -1e+15
        %v8172 = vsel %vm3372, %v8018, -1e+15
        %v8173 = vsel %vm3373, %v8019, -1e+15
        %v8174 = vsel %vm3374, %v8020, -1e+15
        %v8175 = vsel %vm3375, %v8021, -1e+15
        %v8176 = vsel %vm3376, %v8022, -1e+15
        %v8177 = vsel %vm3377, %v8023, -1e+15
        %v8178 = vsel %vm3378, %v8024, -1e+15
        %v8179 = vsel %vm3379, %v8025, -1e+15
        %v8180 = vsel %vm3380, %v8026, -1e+15
        %v8181 = vsel %vm3381, %v8027, -1e+15
        %v8182 = vsel %vm3382, %v8028, -1e+15
        %v8183 = vsel %vm3383, %v8029, -1e+15
        %v8184 = vsel %vm3384, %v8016, -1e+15
        %v8185 = vsel %vm3385, %v8017, -1e+15
        %v8186 = vsel %vm3386, %v8018, -1e+15
        %v8187 = vsel %vm3387, %v8019, -1e+15
        %v8188 = vsel %vm3388, %v8020, -1e+15
        %v8189 = vsel %vm3389, %v8021, -1e+15
        %v8190 = vsel %vm3390, %v8022, -1e+15
        %v8191 = vsel %vm3391, %v8023, -1e+15
        %v8192 = vsel %vm3392, %v8024, -1e+15
        %v8193 = vsel %vm3393, %v8025, -1e+15
        %v8194 = vsel %vm3394, %v8026, -1e+15
        %v8195 = vsel %vm3395, %v8027, -1e+15
        %v8196 = vsel %vm3396, %v8028, -1e+15
        %v8197 = vsel %vm3397, %v8029, -1e+15
        %v8198 = vsel %vm3398, %v8016, -1e+15
        %v8199 = vsel %vm3399, %v8017, -1e+15
        %v8200 = vsel %vm3400, %v8018, -1e+15
        %v8201 = vsel %vm3401, %v8019, -1e+15
        %v8202 = vsel %vm3402, %v8020, -1e+15
        %v8203 = vsel %vm3403, %v8021, -1e+15
        %v8204 = vsel %vm3404, %v8022, -1e+15
        %v8205 = vsel %vm3405, %v8023, -1e+15
        %v8206 = vsel %vm3406, %v8024, -1e+15
        %v8207 = vsel %vm3407, %v8025, -1e+15
        %v8208 = vsel %vm3408, %v8026, -1e+15
        %v8209 = vsel %vm3409, %v8027, -1e+15
        %v8210 = vsel %vm3410, %v8028, -1e+15
        %v8211 = vsel %vm3411, %v8029, -1e+15
        %v8212 = vsel %vm3412, %v8016, -1e+15
        %v8213 = vsel %vm3413, %v8017, -1e+15
        %v8214 = vsel %vm3414, %v8018, -1e+15
        %v8215 = vsel %vm3415, %v8019, -1e+15
        %v8216 = vsel %vm3416, %v8020, -1e+15
        %v8217 = vsel %vm3417, %v8021, -1e+15
        %v8218 = vsel %vm3418, %v8022, -1e+15
        %v8219 = vsel %vm3419, %v8023, -1e+15
        %v8220 = vsel %vm3420, %v8024, -1e+15
        %v8221 = vsel %vm3421, %v8025, -1e+15
        %v8222 = vsel %vm3422, %v8026, -1e+15
        %v8223 = vsel %vm3423, %v8027, -1e+15
        %v8224 = vsel %vm3424, %v8028, -1e+15
        %v8225 = vsel %vm3425, %v8029, -1e+15
        %v8226 = vsel %vm3426, %v8016, -1e+15
        %v8227 = vsel %vm3427, %v8017, -1e+15
        %v8228 = vsel %vm3428, %v8018, -1e+15
        %v8229 = vsel %vm3429, %v8019, -1e+15
        %v8230 = vsel %vm3430, %v8020, -1e+15
        %v8231 = vsel %vm3431, %v8021, -1e+15
        %v8232 = vsel %vm3432, %v8022, -1e+15
        %v8233 = vsel %vm3433, %v8023, -1e+15
        %v8234 = vsel %vm3434, %v8024, -1e+15
        %v8235 = vsel %vm3435, %v8025, -1e+15
        %v8236 = vsel %vm3436, %v8026, -1e+15
        %v8237 = vsel %vm3437, %v8027, -1e+15
        %v8238 = vsel %vm3438, %v8028, -1e+15
        %v8239 = vsel %vm3439, %v8029, -1e+15
        %v8240 = vsel %vm3440, %v8016, -1e+15
        %v8241 = vsel %vm3441, %v8017, -1e+15
        %v8242 = vsel %vm3442, %v8018, -1e+15
        %v8243 = vsel %vm3443, %v8019, -1e+15
        %v8244 = vsel %vm3444, %v8020, -1e+15
        %v8245 = vsel %vm3445, %v8021, -1e+15
        %v8246 = vsel %vm3446, %v8022, -1e+15
        %v8247 = vsel %vm3447, %v8023, -1e+15
        %v8248 = vsel %vm3448, %v8024, -1e+15
        %v8249 = vsel %vm3449, %v8025, -1e+15
        %v8250 = vsel %vm3450, %v8026, -1e+15
        %v8251 = vsel %vm3451, %v8027, -1e+15
        %v8252 = vsel %vm3452, %v8028, -1e+15
        %v8253 = vsel %vm3453, %v8029, -1e+15
        %v8254 = vsel %vm1302, %v8030, -inf
        %v8255 = vsel %vm1302, %v8031, -inf
        %v8256 = vmax.f32 %v8254, %v8255
        %v8257 = vsel %vm1302, %v8032, -inf
        %v8258 = vmax.f32 %v8256, %v8257
        %v8259 = vsel %vm1302, %v8033, -inf
        %v8260 = vmax.f32 %v8258, %v8259
        %v8261 = vsel %vm1302, %v8034, -inf
        %v8262 = vmax.f32 %v8260, %v8261
        %v8263 = vsel %vm1302, %v8035, -inf
        %v8264 = vmax.f32 %v8262, %v8263
        %v8265 = vsel %vm1302, %v8036, -inf
        %v8266 = vmax.f32 %v8264, %v8265
        %v8267 = vsel %vm1302, %v8037, -inf
        %v8268 = vmax.f32 %v8266, %v8267
        %v8269 = vsel %vm1302, %v8038, -inf
        %v8270 = vmax.f32 %v8268, %v8269
        %v8271 = vsel %vm1302, %v8039, -inf
        %v8272 = vmax.f32 %v8270, %v8271
        %v8273 = vsel %vm1302, %v8040, -inf
        %v8274 = vmax.f32 %v8272, %v8273
        %v8275 = vsel %vm1302, %v8041, -inf
        %v8276 = vmax.f32 %v8274, %v8275
        %v8277 = vsel %vm1302, %v8042, -inf
        %v8278 = vmax.f32 %v8276, %v8277
        %v8279 = vsel %vm1302, %v8043, -inf
        %v8280 = vmax.f32 %v8278, %v8279
        %v8281 = vrot.slane %v8280, 4
        %v8282 = vmax.f32 %v8280, %v8281
        %v8283 = vrot.slane %v8282, 2
        %v8284 = vmax.f32 %v8282, %v8283
        %v8285 = vrot.slane %v8284, 1
        %v8286 = vmax.f32 %v8284, %v8285
        %v8287 = vsel %vm1302, %v8044, -inf
        %v8288 = vsel %vm1302, %v8045, -inf
        %v8289 = vmax.f32 %v8287, %v8288
        %v8290 = vsel %vm1302, %v8046, -inf
        %v8291 = vmax.f32 %v8289, %v8290
        %v8292 = vsel %vm1302, %v8047, -inf
        %v8293 = vmax.f32 %v8291, %v8292
        %v8294 = vsel %vm1302, %v8048, -inf
        %v8295 = vmax.f32 %v8293, %v8294
        %v8296 = vsel %vm1302, %v8049, -inf
        %v8297 = vmax.f32 %v8295, %v8296
        %v8298 = vsel %vm1302, %v8050, -inf
        %v8299 = vmax.f32 %v8297, %v8298
        %v8300 = vsel %vm1302, %v8051, -inf
        %v8301 = vmax.f32 %v8299, %v8300
        %v8302 = vsel %vm1302, %v8052, -inf
        %v8303 = vmax.f32 %v8301, %v8302
        %v8304 = vsel %vm1302, %v8053, -inf
        %v8305 = vmax.f32 %v8303, %v8304
        %v8306 = vsel %vm1302, %v8054, -inf
        %v8307 = vmax.f32 %v8305, %v8306
        %v8308 = vsel %vm1302, %v8055, -inf
        %v8309 = vmax.f32 %v8307, %v8308
        %v8310 = vsel %vm1302, %v8056, -inf
        %v8311 = vmax.f32 %v8309, %v8310
        %v8312 = vsel %vm1302, %v8057, -inf
        %v8313 = vmax.f32 %v8311, %v8312
        %v8314 = vrot.slane %v8313, 4
        %v8315 = vmax.f32 %v8313, %v8314
        %v8316 = vrot.slane %v8315, 2
        %v8317 = vmax.f32 %v8315, %v8316
        %v8318 = vrot.slane %v8317, 1
        %v8319 = vmax.f32 %v8317, %v8318
        %v8320 = vsel %vm1302, %v8058, -inf
        %v8321 = vsel %vm1302, %v8059, -inf
        %v8322 = vmax.f32 %v8320, %v8321
        %v8323 = vsel %vm1302, %v8060, -inf
        %v8324 = vmax.f32 %v8322, %v8323
        %v8325 = vsel %vm1302, %v8061, -inf
        %v8326 = vmax.f32 %v8324, %v8325
        %v8327 = vsel %vm1302, %v8062, -inf
        %v8328 = vmax.f32 %v8326, %v8327
        %v8329 = vsel %vm1302, %v8063, -inf
        %v8330 = vmax.f32 %v8328, %v8329
        %v8331 = vsel %vm1302, %v8064, -inf
        %v8332 = vmax.f32 %v8330, %v8331
        %v8333 = vsel %vm1302, %v8065, -inf
        %v8334 = vmax.f32 %v8332, %v8333
        %v8335 = vsel %vm1302, %v8066, -inf
        %v8336 = vmax.f32 %v8334, %v8335
        %v8337 = vsel %vm1302, %v8067, -inf
        %v8338 = vmax.f32 %v8336, %v8337
        %v8339 = vsel %vm1302, %v8068, -inf
        %v8340 = vmax.f32 %v8338, %v8339
        %v8341 = vsel %vm1302, %v8069, -inf
        %v8342 = vmax.f32 %v8340, %v8341
        %v8343 = vsel %vm1302, %v8070, -inf
        %v8344 = vmax.f32 %v8342, %v8343
        %v8345 = vsel %vm1302, %v8071, -inf
        %v8346 = vmax.f32 %v8344, %v8345
        %v8347 = vrot.slane %v8346, 4
        %v8348 = vmax.f32 %v8346, %v8347
        %v8349 = vrot.slane %v8348, 2
        %v8350 = vmax.f32 %v8348, %v8349
        %v8351 = vrot.slane %v8350, 1
        %v8352 = vmax.f32 %v8350, %v8351
        %v8353 = vsel %vm1302, %v8072, -inf
        %v8354 = vsel %vm1302, %v8073, -inf
        %v8355 = vmax.f32 %v8353, %v8354
        %v8356 = vsel %vm1302, %v8074, -inf
        %v8357 = vmax.f32 %v8355, %v8356
        %v8358 = vsel %vm1302, %v8075, -inf
        %v8359 = vmax.f32 %v8357, %v8358
        %v8360 = vsel %vm1302, %v8076, -inf
        %v8361 = vmax.f32 %v8359, %v8360
        %v8362 = vsel %vm1302, %v8077, -inf
        %v8363 = vmax.f32 %v8361, %v8362
        %v8364 = vsel %vm1302, %v8078, -inf
        %v8365 = vmax.f32 %v8363, %v8364
        %v8366 = vsel %vm1302, %v8079, -inf
        %v8367 = vmax.f32 %v8365, %v8366
        %v8368 = vsel %vm1302, %v8080, -inf
        %v8369 = vmax.f32 %v8367, %v8368
        %v8370 = vsel %vm1302, %v8081, -inf
        %v8371 = vmax.f32 %v8369, %v8370
        %v8372 = vsel %vm1302, %v8082, -inf
        %v8373 = vmax.f32 %v8371, %v8372
        %v8374 = vsel %vm1302, %v8083, -inf
        %v8375 = vmax.f32 %v8373, %v8374
        %v8376 = vsel %vm1302, %v8084, -inf
        %v8377 = vmax.f32 %v8375, %v8376
        %v8378 = vsel %vm1302, %v8085, -inf
        %v8379 = vmax.f32 %v8377, %v8378
        %v8380 = vrot.slane %v8379, 4
        %v8381 = vmax.f32 %v8379, %v8380
        %v8382 = vrot.slane %v8381, 2
        %v8383 = vmax.f32 %v8381, %v8382
        %v8384 = vrot.slane %v8383, 1
        %v8385 = vmax.f32 %v8383, %v8384
        %v8386 = vsel %vm1302, %v8086, -inf
        %v8387 = vsel %vm1302, %v8087, -inf
        %v8388 = vmax.f32 %v8386, %v8387
        %v8389 = vsel %vm1302, %v8088, -inf
        %v8390 = vmax.f32 %v8388, %v8389
        %v8391 = vsel %vm1302, %v8089, -inf
        %v8392 = vmax.f32 %v8390, %v8391
        %v8393 = vsel %vm1302, %v8090, -inf
        %v8394 = vmax.f32 %v8392, %v8393
        %v8395 = vsel %vm1302, %v8091, -inf
        %v8396 = vmax.f32 %v8394, %v8395
        %v8397 = vsel %vm1302, %v8092, -inf
        %v8398 = vmax.f32 %v8396, %v8397
        %v8399 = vsel %vm1302, %v8093, -inf
        %v8400 = vmax.f32 %v8398, %v8399
        %v8401 = vsel %vm1302, %v8094, -inf
        %v8402 = vmax.f32 %v8400, %v8401
        %v8403 = vsel %vm1302, %v8095, -inf
        %v8404 = vmax.f32 %v8402, %v8403
        %v8405 = vsel %vm1302, %v8096, -inf
        %v8406 = vmax.f32 %v8404, %v8405
        %v8407 = vsel %vm1302, %v8097, -inf
        %v8408 = vmax.f32 %v8406, %v8407
        %v8409 = vsel %vm1302, %v8098, -inf
        %v8410 = vmax.f32 %v8408, %v8409
        %v8411 = vsel %vm1302, %v8099, -inf
        %v8412 = vmax.f32 %v8410, %v8411
        %v8413 = vrot.slane %v8412, 4
        %v8414 = vmax.f32 %v8412, %v8413
        %v8415 = vrot.slane %v8414, 2
        %v8416 = vmax.f32 %v8414, %v8415
        %v8417 = vrot.slane %v8416, 1
        %v8418 = vmax.f32 %v8416, %v8417
        %v8419 = vsel %vm1302, %v8100, -inf
        %v8420 = vsel %vm1302, %v8101, -inf
        %v8421 = vmax.f32 %v8419, %v8420
        %v8422 = vsel %vm1302, %v8102, -inf
        %v8423 = vmax.f32 %v8421, %v8422
        %v8424 = vsel %vm1302, %v8103, -inf
        %v8425 = vmax.f32 %v8423, %v8424
        %v8426 = vsel %vm1302, %v8104, -inf
        %v8427 = vmax.f32 %v8425, %v8426
        %v8428 = vsel %vm1302, %v8105, -inf
        %v8429 = vmax.f32 %v8427, %v8428
        %v8430 = vsel %vm1302, %v8106, -inf
        %v8431 = vmax.f32 %v8429, %v8430
        %v8432 = vsel %vm1302, %v8107, -inf
        %v8433 = vmax.f32 %v8431, %v8432
        %v8434 = vsel %vm1302, %v8108, -inf
        %v8435 = vmax.f32 %v8433, %v8434
        %v8436 = vsel %vm1302, %v8109, -inf
        %v8437 = vmax.f32 %v8435, %v8436
        %v8438 = vsel %vm1302, %v8110, -inf
        %v8439 = vmax.f32 %v8437, %v8438
        %v8440 = vsel %vm1302, %v8111, -inf
        %v8441 = vmax.f32 %v8439, %v8440
        %v8442 = vsel %vm1302, %v8112, -inf
        %v8443 = vmax.f32 %v8441, %v8442
        %v8444 = vsel %vm1302, %v8113, -inf
        %v8445 = vmax.f32 %v8443, %v8444
        %v8446 = vrot.slane %v8445, 4
        %v8447 = vmax.f32 %v8445, %v8446
        %v8448 = vrot.slane %v8447, 2
        %v8449 = vmax.f32 %v8447, %v8448
        %v8450 = vrot.slane %v8449, 1
        %v8451 = vmax.f32 %v8449, %v8450
        %v8452 = vsel %vm1302, %v8114, -inf
        %v8453 = vsel %vm1302, %v8115, -inf
        %v8454 = vmax.f32 %v8452, %v8453
        %v8455 = vsel %vm1302, %v8116, -inf
        %v8456 = vmax.f32 %v8454, %v8455
        %v8457 = vsel %vm1302, %v8117, -inf
        %v8458 = vmax.f32 %v8456, %v8457
        %v8459 = vsel %vm1302, %v8118, -inf
        %v8460 = vmax.f32 %v8458, %v8459
        %v8461 = vsel %vm1302, %v8119, -inf
        %v8462 = vmax.f32 %v8460, %v8461
        %v8463 = vsel %vm1302, %v8120, -inf
        %v8464 = vmax.f32 %v8462, %v8463
        %v8465 = vsel %vm1302, %v8121, -inf
        %v8466 = vmax.f32 %v8464, %v8465
        %v8467 = vsel %vm1302, %v8122, -inf
        %v8468 = vmax.f32 %v8466, %v8467
        %v8469 = vsel %vm1302, %v8123, -inf
        %v8470 = vmax.f32 %v8468, %v8469
        %v8471 = vsel %vm1302, %v8124, -inf
        %v8472 = vmax.f32 %v8470, %v8471
        %v8473 = vsel %vm1302, %v8125, -inf
        %v8474 = vmax.f32 %v8472, %v8473
        %v8475 = vsel %vm1302, %v8126, -inf
        %v8476 = vmax.f32 %v8474, %v8475
        %v8477 = vsel %vm1302, %v8127, -inf
        %v8478 = vmax.f32 %v8476, %v8477
        %v8479 = vrot.slane %v8478, 4
        %v8480 = vmax.f32 %v8478, %v8479
        %v8481 = vrot.slane %v8480, 2
        %v8482 = vmax.f32 %v8480, %v8481
        %v8483 = vrot.slane %v8482, 1
        %v8484 = vmax.f32 %v8482, %v8483
        %v8485 = vsel %vm1302, %v8128, -inf
        %v8486 = vsel %vm1302, %v8129, -inf
        %v8487 = vmax.f32 %v8485, %v8486
        %v8488 = vsel %vm1302, %v8130, -inf
        %v8489 = vmax.f32 %v8487, %v8488
        %v8490 = vsel %vm1302, %v8131, -inf
        %v8491 = vmax.f32 %v8489, %v8490
        %v8492 = vsel %vm1302, %v8132, -inf
        %v8493 = vmax.f32 %v8491, %v8492
        %v8494 = vsel %vm1302, %v8133, -inf
        %v8495 = vmax.f32 %v8493, %v8494
        %v8496 = vsel %vm1302, %v8134, -inf
        %v8497 = vmax.f32 %v8495, %v8496
        %v8498 = vsel %vm1302, %v8135, -inf
        %v8499 = vmax.f32 %v8497, %v8498
        %v8500 = vsel %vm1302, %v8136, -inf
        %v8501 = vmax.f32 %v8499, %v8500
        %v8502 = vsel %vm1302, %v8137, -inf
        %v8503 = vmax.f32 %v8501, %v8502
        %v8504 = vsel %vm1302, %v8138, -inf
        %v8505 = vmax.f32 %v8503, %v8504
        %v8506 = vsel %vm1302, %v8139, -inf
        %v8507 = vmax.f32 %v8505, %v8506
        %v8508 = vsel %vm1302, %v8140, -inf
        %v8509 = vmax.f32 %v8507, %v8508
        %v8510 = vsel %vm1302, %v8141, -inf
        %v8511 = vmax.f32 %v8509, %v8510
        %v8512 = vrot.slane %v8511, 4
        %v8513 = vmax.f32 %v8511, %v8512
        %v8514 = vrot.slane %v8513, 2
        %v8515 = vmax.f32 %v8513, %v8514
        %v8516 = vrot.slane %v8515, 1
        %v8517 = vmax.f32 %v8515, %v8516
        %v8518 = vsel %vm1302, %v8142, -inf
        %v8519 = vsel %vm1302, %v8143, -inf
        %v8520 = vmax.f32 %v8518, %v8519
        %v8521 = vsel %vm1302, %v8144, -inf
        %v8522 = vmax.f32 %v8520, %v8521
        %v8523 = vsel %vm1302, %v8145, -inf
        %v8524 = vmax.f32 %v8522, %v8523
        %v8525 = vsel %vm1302, %v8146, -inf
        %v8526 = vmax.f32 %v8524, %v8525
        %v8527 = vsel %vm1302, %v8147, -inf
        %v8528 = vmax.f32 %v8526, %v8527
        %v8529 = vsel %vm1302, %v8148, -inf
        %v8530 = vmax.f32 %v8528, %v8529
        %v8531 = vsel %vm1302, %v8149, -inf
        %v8532 = vmax.f32 %v8530, %v8531
        %v8533 = vsel %vm1302, %v8150, -inf
        %v8534 = vmax.f32 %v8532, %v8533
        %v8535 = vsel %vm1302, %v8151, -inf
        %v8536 = vmax.f32 %v8534, %v8535
        %v8537 = vsel %vm1302, %v8152, -inf
        %v8538 = vmax.f32 %v8536, %v8537
        %v8539 = vsel %vm1302, %v8153, -inf
        %v8540 = vmax.f32 %v8538, %v8539
        %v8541 = vsel %vm1302, %v8154, -inf
        %v8542 = vmax.f32 %v8540, %v8541
        %v8543 = vsel %vm1302, %v8155, -inf
        %v8544 = vmax.f32 %v8542, %v8543
        %v8545 = vrot.slane %v8544, 4
        %v8546 = vmax.f32 %v8544, %v8545
        %v8547 = vrot.slane %v8546, 2
        %v8548 = vmax.f32 %v8546, %v8547
        %v8549 = vrot.slane %v8548, 1
        %v8550 = vmax.f32 %v8548, %v8549
        %v8551 = vsel %vm1302, %v8156, -inf
        %v8552 = vsel %vm1302, %v8157, -inf
        %v8553 = vmax.f32 %v8551, %v8552
        %v8554 = vsel %vm1302, %v8158, -inf
        %v8555 = vmax.f32 %v8553, %v8554
        %v8556 = vsel %vm1302, %v8159, -inf
        %v8557 = vmax.f32 %v8555, %v8556
        %v8558 = vsel %vm1302, %v8160, -inf
        %v8559 = vmax.f32 %v8557, %v8558
        %v8560 = vsel %vm1302, %v8161, -inf
        %v8561 = vmax.f32 %v8559, %v8560
        %v8562 = vsel %vm1302, %v8162, -inf
        %v8563 = vmax.f32 %v8561, %v8562
        %v8564 = vsel %vm1302, %v8163, -inf
        %v8565 = vmax.f32 %v8563, %v8564
        %v8566 = vsel %vm1302, %v8164, -inf
        %v8567 = vmax.f32 %v8565, %v8566
        %v8568 = vsel %vm1302, %v8165, -inf
        %v8569 = vmax.f32 %v8567, %v8568
        %v8570 = vsel %vm1302, %v8166, -inf
        %v8571 = vmax.f32 %v8569, %v8570
        %v8572 = vsel %vm1302, %v8167, -inf
        %v8573 = vmax.f32 %v8571, %v8572
        %v8574 = vsel %vm1302, %v8168, -inf
        %v8575 = vmax.f32 %v8573, %v8574
        %v8576 = vsel %vm1302, %v8169, -inf
        %v8577 = vmax.f32 %v8575, %v8576
        %v8578 = vrot.slane %v8577, 4
        %v8579 = vmax.f32 %v8577, %v8578
        %v8580 = vrot.slane %v8579, 2
        %v8581 = vmax.f32 %v8579, %v8580
        %v8582 = vrot.slane %v8581, 1
        %v8583 = vmax.f32 %v8581, %v8582
        %v8584 = vsel %vm1302, %v8170, -inf
        %v8585 = vsel %vm1302, %v8171, -inf
        %v8586 = vmax.f32 %v8584, %v8585
        %v8587 = vsel %vm1302, %v8172, -inf
        %v8588 = vmax.f32 %v8586, %v8587
        %v8589 = vsel %vm1302, %v8173, -inf
        %v8590 = vmax.f32 %v8588, %v8589
        %v8591 = vsel %vm1302, %v8174, -inf
        %v8592 = vmax.f32 %v8590, %v8591
        %v8593 = vsel %vm1302, %v8175, -inf
        %v8594 = vmax.f32 %v8592, %v8593
        %v8595 = vsel %vm1302, %v8176, -inf
        %v8596 = vmax.f32 %v8594, %v8595
        %v8597 = vsel %vm1302, %v8177, -inf
        %v8598 = vmax.f32 %v8596, %v8597
        %v8599 = vsel %vm1302, %v8178, -inf
        %v8600 = vmax.f32 %v8598, %v8599
        %v8601 = vsel %vm1302, %v8179, -inf
        %v8602 = vmax.f32 %v8600, %v8601
        %v8603 = vsel %vm1302, %v8180, -inf
        %v8604 = vmax.f32 %v8602, %v8603
        %v8605 = vsel %vm1302, %v8181, -inf
        %v8606 = vmax.f32 %v8604, %v8605
        %v8607 = vsel %vm1302, %v8182, -inf
        %v8608 = vmax.f32 %v8606, %v8607
        %v8609 = vsel %vm1302, %v8183, -inf
        %v8610 = vmax.f32 %v8608, %v8609
        %v8611 = vrot.slane %v8610, 4
        %v8612 = vmax.f32 %v8610, %v8611
        %v8613 = vrot.slane %v8612, 2
        %v8614 = vmax.f32 %v8612, %v8613
        %v8615 = vrot.slane %v8614, 1
        %v8616 = vmax.f32 %v8614, %v8615
        %v8617 = vsel %vm1302, %v8184, -inf
        %v8618 = vsel %vm1302, %v8185, -inf
        %v8619 = vmax.f32 %v8617, %v8618
        %v8620 = vsel %vm1302, %v8186, -inf
        %v8621 = vmax.f32 %v8619, %v8620
        %v8622 = vsel %vm1302, %v8187, -inf
        %v8623 = vmax.f32 %v8621, %v8622
        %v8624 = vsel %vm1302, %v8188, -inf
        %v8625 = vmax.f32 %v8623, %v8624
        %v8626 = vsel %vm1302, %v8189, -inf
        %v8627 = vmax.f32 %v8625, %v8626
        %v8628 = vsel %vm1302, %v8190, -inf
        %v8629 = vmax.f32 %v8627, %v8628
        %v8630 = vsel %vm1302, %v8191, -inf
        %v8631 = vmax.f32 %v8629, %v8630
        %v8632 = vsel %vm1302, %v8192, -inf
        %v8633 = vmax.f32 %v8631, %v8632
        %v8634 = vsel %vm1302, %v8193, -inf
        %v8635 = vmax.f32 %v8633, %v8634
        %v8636 = vsel %vm1302, %v8194, -inf
        %v8637 = vmax.f32 %v8635, %v8636
        %v8638 = vsel %vm1302, %v8195, -inf
        %v8639 = vmax.f32 %v8637, %v8638
        %v8640 = vsel %vm1302, %v8196, -inf
        %v8641 = vmax.f32 %v8639, %v8640
        %v8642 = vsel %vm1302, %v8197, -inf
        %v8643 = vmax.f32 %v8641, %v8642
        %v8644 = vrot.slane %v8643, 4
        %v8645 = vmax.f32 %v8643, %v8644
        %v8646 = vrot.slane %v8645, 2
        %v8647 = vmax.f32 %v8645, %v8646
        %v8648 = vrot.slane %v8647, 1
        %v8649 = vmax.f32 %v8647, %v8648
        %v8650 = vsel %vm1302, %v8198, -inf
        %v8651 = vsel %vm1302, %v8199, -inf
        %v8652 = vmax.f32 %v8650, %v8651
        %v8653 = vsel %vm1302, %v8200, -inf
        %v8654 = vmax.f32 %v8652, %v8653
        %v8655 = vsel %vm1302, %v8201, -inf
        %v8656 = vmax.f32 %v8654, %v8655
        %v8657 = vsel %vm1302, %v8202, -inf
        %v8658 = vmax.f32 %v8656, %v8657
        %v8659 = vsel %vm1302, %v8203, -inf
        %v8660 = vmax.f32 %v8658, %v8659
        %v8661 = vsel %vm1302, %v8204, -inf
        %v8662 = vmax.f32 %v8660, %v8661
        %v8663 = vsel %vm1302, %v8205, -inf
        %v8664 = vmax.f32 %v8662, %v8663
        %v8665 = vsel %vm1302, %v8206, -inf
        %v8666 = vmax.f32 %v8664, %v8665
        %v8667 = vsel %vm1302, %v8207, -inf
        %v8668 = vmax.f32 %v8666, %v8667
        %v8669 = vsel %vm1302, %v8208, -inf
        %v8670 = vmax.f32 %v8668, %v8669
        %v8671 = vsel %vm1302, %v8209, -inf
        %v8672 = vmax.f32 %v8670, %v8671
        %v8673 = vsel %vm1302, %v8210, -inf
        %v8674 = vmax.f32 %v8672, %v8673
        %v8675 = vsel %vm1302, %v8211, -inf
        %v8676 = vmax.f32 %v8674, %v8675
        %v8677 = vrot.slane %v8676, 4
        %v8678 = vmax.f32 %v8676, %v8677
        %v8679 = vrot.slane %v8678, 2
        %v8680 = vmax.f32 %v8678, %v8679
        %v8681 = vrot.slane %v8680, 1
        %v8682 = vmax.f32 %v8680, %v8681
        %v8683 = vsel %vm1302, %v8212, -inf
        %v8684 = vsel %vm1302, %v8213, -inf
        %v8685 = vmax.f32 %v8683, %v8684
        %v8686 = vsel %vm1302, %v8214, -inf
        %v8687 = vmax.f32 %v8685, %v8686
        %v8688 = vsel %vm1302, %v8215, -inf
        %v8689 = vmax.f32 %v8687, %v8688
        %v8690 = vsel %vm1302, %v8216, -inf
        %v8691 = vmax.f32 %v8689, %v8690
        %v8692 = vsel %vm1302, %v8217, -inf
        %v8693 = vmax.f32 %v8691, %v8692
        %v8694 = vsel %vm1302, %v8218, -inf
        %v8695 = vmax.f32 %v8693, %v8694
        %v8696 = vsel %vm1302, %v8219, -inf
        %v8697 = vmax.f32 %v8695, %v8696
        %v8698 = vsel %vm1302, %v8220, -inf
        %v8699 = vmax.f32 %v8697, %v8698
        %v8700 = vsel %vm1302, %v8221, -inf
        %v8701 = vmax.f32 %v8699, %v8700
        %v8702 = vsel %vm1302, %v8222, -inf
        %v8703 = vmax.f32 %v8701, %v8702
        %v8704 = vsel %vm1302, %v8223, -inf
        %v8705 = vmax.f32 %v8703, %v8704
        %v8706 = vsel %vm1302, %v8224, -inf
        %v8707 = vmax.f32 %v8705, %v8706
        %v8708 = vsel %vm1302, %v8225, -inf
        %v8709 = vmax.f32 %v8707, %v8708
        %v8710 = vrot.slane %v8709, 4
        %v8711 = vmax.f32 %v8709, %v8710
        %v8712 = vrot.slane %v8711, 2
        %v8713 = vmax.f32 %v8711, %v8712
        %v8714 = vrot.slane %v8713, 1
        %v8715 = vmax.f32 %v8713, %v8714
        %v8716 = vsel %vm1302, %v8226, -inf
        %v8717 = vsel %vm1302, %v8227, -inf
        %v8718 = vmax.f32 %v8716, %v8717
        %v8719 = vsel %vm1302, %v8228, -inf
        %v8720 = vmax.f32 %v8718, %v8719
        %v8721 = vsel %vm1302, %v8229, -inf
        %v8722 = vmax.f32 %v8720, %v8721
        %v8723 = vsel %vm1302, %v8230, -inf
        %v8724 = vmax.f32 %v8722, %v8723
        %v8725 = vsel %vm1302, %v8231, -inf
        %v8726 = vmax.f32 %v8724, %v8725
        %v8727 = vsel %vm1302, %v8232, -inf
        %v8728 = vmax.f32 %v8726, %v8727
        %v8729 = vsel %vm1302, %v8233, -inf
        %v8730 = vmax.f32 %v8728, %v8729
        %v8731 = vsel %vm1302, %v8234, -inf
        %v8732 = vmax.f32 %v8730, %v8731
        %v8733 = vsel %vm1302, %v8235, -inf
        %v8734 = vmax.f32 %v8732, %v8733
        %v8735 = vsel %vm1302, %v8236, -inf
        %v8736 = vmax.f32 %v8734, %v8735
        %v8737 = vsel %vm1302, %v8237, -inf
        %v8738 = vmax.f32 %v8736, %v8737
        %v8739 = vsel %vm1302, %v8238, -inf
        %v8740 = vmax.f32 %v8738, %v8739
        %v8741 = vsel %vm1302, %v8239, -inf
        %v8742 = vmax.f32 %v8740, %v8741
        %v8743 = vrot.slane %v8742, 4
        %v8744 = vmax.f32 %v8742, %v8743
        %v8745 = vrot.slane %v8744, 2
        %v8746 = vmax.f32 %v8744, %v8745
        %v8747 = vrot.slane %v8746, 1
        %v8748 = vmax.f32 %v8746, %v8747
        %v8749 = vsel %vm1302, %v8240, -inf
        %v8750 = vsel %vm1302, %v8241, -inf
        %v8751 = vmax.f32 %v8749, %v8750
        %v8752 = vsel %vm1302, %v8242, -inf
        %v8753 = vmax.f32 %v8751, %v8752
        %v8754 = vsel %vm1302, %v8243, -inf
        %v8755 = vmax.f32 %v8753, %v8754
        %v8756 = vsel %vm1302, %v8244, -inf
        %v8757 = vmax.f32 %v8755, %v8756
        %v8758 = vsel %vm1302, %v8245, -inf
        %v8759 = vmax.f32 %v8757, %v8758
        %v8760 = vsel %vm1302, %v8246, -inf
        %v8761 = vmax.f32 %v8759, %v8760
        %v8762 = vsel %vm1302, %v8247, -inf
        %v8763 = vmax.f32 %v8761, %v8762
        %v8764 = vsel %vm1302, %v8248, -inf
        %v8765 = vmax.f32 %v8763, %v8764
        %v8766 = vsel %vm1302, %v8249, -inf
        %v8767 = vmax.f32 %v8765, %v8766
        %v8768 = vsel %vm1302, %v8250, -inf
        %v8769 = vmax.f32 %v8767, %v8768
        %v8770 = vsel %vm1302, %v8251, -inf
        %v8771 = vmax.f32 %v8769, %v8770
        %v8772 = vsel %vm1302, %v8252, -inf
        %v8773 = vmax.f32 %v8771, %v8772
        %v8774 = vsel %vm1302, %v8253, -inf
        %v8775 = vmax.f32 %v8773, %v8774
        %v8776 = vrot.slane %v8775, 4
        %v8777 = vmax.f32 %v8775, %v8776
        %v8778 = vrot.slane %v8777, 2
        %v8779 = vmax.f32 %v8777, %v8778
        %v8780 = vrot.slane %v8779, 1
        %v8781 = vmax.f32 %v8779, %v8780
        %v8782 = vpack.c.bf16 %v8286, %v8286
        %v8783 = vpack.c.bf16 %v8319, %v8319
        %v8784 = vpack.c.bf16 %v8352, %v8352
        %v8785 = vpack.c.bf16 %v8385, %v8385
        %v8786 = vpack.c.bf16 %v8418, %v8418
        %v8787 = vpack.c.bf16 %v8451, %v8451
        %v8788 = vpack.c.bf16 %v8484, %v8484
        %v8789 = vpack.c.bf16 %v8517, %v8517
        %v8790 = vpack.c.bf16 %v8550, %v8550
        %v8791 = vpack.c.bf16 %v8583, %v8583
        %v8792 = vpack.c.bf16 %v8616, %v8616
        %v8793 = vpack.c.bf16 %v8649, %v8649
        %v8794 = vpack.c.bf16 %v8682, %v8682
        %v8795 = vpack.c.bf16 %v8715, %v8715
        %v8796 = vpack.c.bf16 %v8748, %v8748
        %v8797 = vpack.c.bf16 %v8781, %v8781
        %v8814 = vunpack.c.l.b16 %v8782
        %v8815 = vunpack.c.l.b16 %v8783
        %v8816 = vunpack.c.l.b16 %v8784
        %v8817 = vunpack.c.l.b16 %v8785
        %v8818 = vunpack.c.l.b16 %v8786
        %v8819 = vunpack.c.l.b16 %v8787
        %v8820 = vunpack.c.l.b16 %v8788
        %v8821 = vunpack.c.l.b16 %v8789
        %v8822 = vunpack.c.l.b16 %v8790
        %v8823 = vunpack.c.l.b16 %v8791
        %v8824 = vunpack.c.l.b16 %v8792
        %v8825 = vunpack.c.l.b16 %v8793
        %v8826 = vunpack.c.l.b16 %v8794
        %v8827 = vunpack.c.l.b16 %v8795
        %v8828 = vunpack.c.l.b16 %v8796
        %v8829 = vunpack.c.l.b16 %v8797
        %v8830 = vsel %vm4289, %v8815, %v8814
        %v8831 = vsel %vm4291, %v8816, %v8830
        %v8832 = vsel %vm4293, %v8817, %v8831
        %v8833 = vsel %vm4295, %v8818, %v8832
        %v8834 = vsel %vm4297, %v8819, %v8833
        %v8835 = vsel %vm4299, %v8820, %v8834
        %v8836 = vsel %vm4301, %v8821, %v8835
        %v8837 = vsel %vm4289, %v8823, %v8822
        %v8838 = vsel %vm4291, %v8824, %v8837
        %v8839 = vsel %vm4293, %v8825, %v8838
        %v8840 = vsel %vm4295, %v8826, %v8839
        %v8841 = vsel %vm4297, %v8827, %v8840
        %v8842 = vsel %vm4299, %v8828, %v8841
        %v8843 = vsel %vm4301, %v8829, %v8842
        %v8844 = vpack.c.b16 %v8843, %v8836
        %8846 = vmatprep.subr.bf16.mxu0 0
        %8847 = vmatpush1.bf16.msra.mxu0 %v8844
        %8848 = vmatprep.subr.bf16.mxu0 0
        %8849 = vmatpush1.bf16.msra.mxu0 0
        %8850 = vmatprep.subr.bf16.mxu0 0
        %8851 = vmatpush1.bf16.msra.mxu0 0
        %8852 = vmatprep.subr.bf16.mxu0 0
        %8853 = vmatpush1.bf16.msra.mxu0 0
        %8854 = vmatprep.subr.bf16.mxu0 0
        %8855 = vmatpush1.bf16.msra.mxu0 0
        %8856 = vmatprep.subr.bf16.mxu0 0
        %8857 = vmatpush1.bf16.msra.mxu0 0
        %8858 = vmatprep.subr.bf16.mxu0 0
        %8859 = vmatpush1.bf16.msra.mxu0 0
        %8860 = vmatprep.subr.bf16.mxu0 0
        %8861 = vmatpush1.bf16.msra.mxu0 0
        %8862 = vmatprep.subr.bf16.mxu0 0
        %8863 = vmatpush1.bf16.msra.mxu0 0
        %8864 = vmatprep.subr.bf16.mxu0 0
        %8865 = vmatpush1.bf16.msra.mxu0 0
        %8866 = vmatprep.subr.bf16.mxu0 0
        %8867 = vmatpush1.bf16.msra.mxu0 0
        %8868 = vmatprep.subr.bf16.mxu0 0
        %8869 = vmatpush1.bf16.msra.mxu0 0
        %8870 = vmatprep.subr.bf16.mxu0 0
        %8871 = vmatpush1.bf16.msra.mxu0 0
        %8872 = vmatprep.subr.bf16.mxu0 0
        %8873 = vmatpush1.bf16.msra.mxu0 0
        %8874 = vmatprep.subr.bf16.mxu0 0
        %8875 = vmatpush1.bf16.msra.mxu0 0
        %8876 = vmatprep.subr.bf16.mxu0 0
        %8877 = vmatpush1.bf16.msra.mxu0 0
        %8878 = vmatprep.mubr.bf16.mxu0 0
        %8879 = vmatmul.mubr.bf16.gmra.mrb[0].mxu0 %v4314
        %v8880 = vpop.f32.mrb[0].mxu0
        %v8881 = vadd.f32 0.0, %v8880
        %v8882 = vpop.f32.mrb[0].mxu0
        %v8883 = vpop.f32.mrb[0].mxu0
        %v8884 = vadd.f32 0.0, %v8883
        %v8885 = vpop.f32.mrb[0].mxu0
        %8886 = vmatprep.mubr.bf16.mxu0 0
        %8887 = vmatmul.mubr.bf16.gmra.mrb[0].mxu0 %v4317
        %v8888 = vpop.f32.mrb[0].mxu0
        %v8889 = vadd.f32 0.0, %v8888
        %v8890 = vpop.f32.mrb[0].mxu0
        %v8891 = vpop.f32.mrb[0].mxu0
        %v8892 = vadd.f32 0.0, %v8891
        %v8893 = vpop.f32.mrb[0].mxu0
        %8894 = vmatprep.mubr.bf16.mxu0 0
        %8895 = vmatmul.mubr.bf16.gmra.mrb[0].mxu0 %v4320
        %v8896 = vpop.f32.mrb[0].mxu0
        %v8897 = vadd.f32 0.0, %v8896
        %v8898 = vpop.f32.mrb[0].mxu0
        %v8899 = vpop.f32.mrb[0].mxu0
        %v8900 = vadd.f32 0.0, %v8899
        %v8901 = vpop.f32.mrb[0].mxu0
        %8902 = vmatprep.mubr.bf16.mxu0 0
        %8903 = vmatmul.mubr.bf16.gmra.mrb[0].mxu0 %v4323
        %v8904 = vpop.f32.mrb[0].mxu0
        %v8905 = vadd.f32 0.0, %v8904
        %v8906 = vpop.f32.mrb[0].mxu0
        %v8907 = vpop.f32.mrb[0].mxu0
        %v8908 = vadd.f32 0.0, %v8907
        %v8909 = vpop.f32.mrb[0].mxu0
        %8910 = vmatprep.mubr.bf16.mxu0 0
        %8911 = vmatmul.mubr.bf16.gmra.mrb[0].mxu0 %v4326
        %v8912 = vpop.f32.mrb[0].mxu0
        %v8913 = vadd.f32 0.0, %v8912
        %v8914 = vpop.f32.mrb[0].mxu0
        %v8915 = vpop.f32.mrb[0].mxu0
        %v8916 = vadd.f32 0.0, %v8915
        %v8917 = vpop.f32.mrb[0].mxu0
        %8918 = vmatprep.mubr.bf16.mxu0 0
        %8919 = vmatmul.mubr.bf16.gmra.mrb[0].mxu0 %v4329
        %v8920 = vpop.f32.mrb[0].mxu0
        %v8921 = vadd.f32 0.0, %v8920
        %v8922 = vpop.f32.mrb[0].mxu0
        %v8923 = vpop.f32.mrb[0].mxu0
        %v8924 = vadd.f32 0.0, %v8923
        %v8925 = vpop.f32.mrb[0].mxu0
        %8926 = vmatprep.mubr.bf16.mxu0 0
        %8927 = vmatmul.mubr.bf16.gmra.mrb[0].mxu0 %v4332
        %v8928 = vpop.f32.mrb[0].mxu0
        %v8929 = vadd.f32 0.0, %v8928
        %v8930 = vpop.f32.mrb[0].mxu0
        %v8931 = vpop.f32.mrb[0].mxu0
        %v8932 = vadd.f32 0.0, %v8931
        %v8933 = vpop.f32.mrb[0].mxu0
        %8934 = vdwg.mxu0
        %v8935 = vpack.c.bf16 %v8017, %v8016
        %v8936 = vpack.c.bf16 %v8019, %v8018
        %v8937 = vpack.c.bf16 %v8021, %v8020
        %v8938 = vpack.c.bf16 %v8023, %v8022
        %v8939 = vpack.c.bf16 %v8025, %v8024
        %v8940 = vpack.c.bf16 %v8027, %v8026
        %v8941 = vpack.c.bf16 %v8029, %v8028
        %v8942 = vld [vmem:[%s19] sm:$0xf]
        %v8943 = vld [vmem:[%s19 + $0x4] sm:$0xf]
        %v8944 = vld [vmem:[%s19 + $0x8] sm:$0xf]
        %v8945 = vld [vmem:[%s19 + $0xc] sm:$0xf]
        %v8946 = vld [vmem:[%s19 + $0x10] sm:$0xf]
        %v8947 = vld [vmem:[%s19 + $0x14] sm:$0xf]
        %v8948 = vld [vmem:[%s19 + $0x18] sm:$0xf]
        %v8949 = vld [vmem:[%s19 + $0x1c] sm:$0xf]
        %v8950 = vpack.c.bf16 %v8884, %v8881
        %v8951 = vpack.c.bf16 %v8892, %v8889
        %v8952 = vpack.c.bf16 %v8900, %v8897
        %v8953 = vpack.c.bf16 %v8908, %v8905
        %v8954 = vpack.c.bf16 %v8916, %v8913
        %v8955 = vpack.c.bf16 %v8924, %v8921
        %v8956 = vpack.c.bf16 %v8932, %v8929
        %v8957 = vld [vmem:[%s20] sm:$0xf]
        %v8958 = vld [vmem:[%s20 + $0x4] sm:$0xf]
        %v8959 = vld [vmem:[%s20 + $0x8] sm:$0xf]
        %v8960 = vld [vmem:[%s20 + $0xc] sm:$0xf]
        %v8961 = vld [vmem:[%s20 + $0x10] sm:$0xf]
        %v8962 = vld [vmem:[%s20 + $0x14] sm:$0xf]
        %v8963 = vld [vmem:[%s20 + $0x18] sm:$0xf]
        %v8964 = vld [vmem:[%s20 + $0x1c] sm:$0xf]
        %v8973 = vunpack.c.l.b16 %v8957
        %v8974 = vunpack.c.l.b16 %v8958
        %v8975 = vunpack.c.l.b16 %v8959
        %v8976 = vunpack.c.l.b16 %v8960
        %v8977 = vunpack.c.l.b16 %v8961
        %v8978 = vunpack.c.l.b16 %v8962
        %v8979 = vunpack.c.l.b16 %v8963
        %v8980 = vunpack.c.l.b16 %v8964
        %v8981 = vpack.c.b16 %v8974, %v8973
        %v8982 = vpack.c.b16 %v8976, %v8975
        %v8983 = vpack.c.b16 %v8978, %v8977
        %v8984 = vpack.c.b16 %v8980, %v8979
        %v8990 = vsel %vm1302, %v8950, 0
        %v8993 = vsel %vm1302, %v8951, 0
        %v8996 = vsel %vm1302, %v8952, 0
        %v8999 = vsel %vm1302, %v8953, 0
        %v9002 = vsel %vm1302, %v8954, 0
        %v9005 = vsel %vm1302, %v8955, 0
        %v9008 = vsel %vm1302, %v8956, 0
        %9010 = vmatprep.subr.bf16.mxu0 0
        %9011 = vmatpush1.bf16.msra.mxu0 %v8981
        %9012 = vmatprep.subr.bf16.mxu0 0
        %9013 = vmatpush1.bf16.msra.mxu0 %v8982
        %9014 = vmatprep.subr.bf16.mxu0 0
        %9015 = vmatpush1.bf16.msra.mxu0 %v8983
        %9016 = vmatprep.subr.bf16.mxu0 0
        %9017 = vmatpush1.bf16.msra.mxu0 %v8984
        %9018 = vmatprep.subr.bf16.mxu0 0
        %9019 = vmatpush1.bf16.msra.mxu0 0
        %9020 = vmatprep.subr.bf16.mxu0 0
        %9021 = vmatpush1.bf16.msra.mxu0 0
        %9022 = vmatprep.subr.bf16.mxu0 0
        %9023 = vmatpush1.bf16.msra.mxu0 0
        %9024 = vmatprep.subr.bf16.mxu0 0
        %9025 = vmatpush1.bf16.msra.mxu0 0
        %9026 = vmatprep.subr.bf16.mxu0 0
        %9027 = vmatpush1.bf16.msra.mxu0 0
        %9028 = vmatprep.subr.bf16.mxu0 0
        %9029 = vmatpush1.bf16.msra.mxu0 0
        %9030 = vmatprep.subr.bf16.mxu0 0
        %9031 = vmatpush1.bf16.msra.mxu0 0
        %9032 = vmatprep.subr.bf16.mxu0 0
        %9033 = vmatpush1.bf16.msra.mxu0 0
        %9034 = vmatprep.subr.bf16.mxu0 0
        %9035 = vmatpush1.bf16.msra.mxu0 0
        %9036 = vmatprep.subr.bf16.mxu0 0
        %9037 = vmatpush1.bf16.msra.mxu0 0
        %9038 = vmatprep.subr.bf16.mxu0 0
        %9039 = vmatpush1.bf16.msra.mxu0 0
        %9040 = vmatprep.subr.bf16.mxu0 0
        %9041 = vmatpush1.bf16.msra.mxu0 0
        %9042 = vmatprep.mubr.bf16.mxu0 0
        %9043 = vmatmul.mubr.bf16.gmra.mrb[0].mxu0 %v8990
        %v9044 = vpop.f32.mrb[0].mxu0
        %v9045 = vadd.f32 0.0, %v9044
        %v9046 = vpop.f32.mrb[0].mxu0
        %v9047 = vpop.f32.mrb[0].mxu0
        %v9048 = vadd.f32 0.0, %v9047
        %v9049 = vpop.f32.mrb[0].mxu0
        %9050 = vmatprep.mubr.bf16.mxu0 0
        %9051 = vmatmul.mubr.bf16.gmra.mrb[0].mxu0 %v8993
        %v9052 = vpop.f32.mrb[0].mxu0
        %v9053 = vadd.f32 0.0, %v9052
        %v9054 = vpop.f32.mrb[0].mxu0
        %v9055 = vpop.f32.mrb[0].mxu0
        %v9056 = vadd.f32 0.0, %v9055
        %v9057 = vpop.f32.mrb[0].mxu0
        %9058 = vmatprep.mubr.bf16.mxu0 0
        %9059 = vmatmul.mubr.bf16.gmra.mrb[0].mxu0 %v8996
        %v9060 = vpop.f32.mrb[0].mxu0
        %v9061 = vadd.f32 0.0, %v9060
        %v9062 = vpop.f32.mrb[0].mxu0
        %v9063 = vpop.f32.mrb[0].mxu0
        %v9064 = vadd.f32 0.0, %v9063
        %v9065 = vpop.f32.mrb[0].mxu0
        %9066 = vmatprep.mubr.bf16.mxu0 0
        %9067 = vmatmul.mubr.bf16.gmra.mrb[0].mxu0 %v8999
        %v9068 = vpop.f32.mrb[0].mxu0
        %v9069 = vadd.f32 0.0, %v9068
        %v9070 = vpop.f32.mrb[0].mxu0
        %v9071 = vpop.f32.mrb[0].mxu0
        %v9072 = vadd.f32 0.0, %v9071
        %v9073 = vpop.f32.mrb[0].mxu0
        %9074 = vmatprep.mubr.bf16.mxu0 0
        %9075 = vmatmul.mubr.bf16.gmra.mrb[0].mxu0 %v9002
        %v9076 = vpop.f32.mrb[0].mxu0
        %v9077 = vadd.f32 0.0, %v9076
        %v9078 = vpop.f32.mrb[0].mxu0
        %v9079 = vpop.f32.mrb[0].mxu0
        %v9080 = vadd.f32 0.0, %v9079
        %v9081 = vpop.f32.mrb[0].mxu0
        %9082 = vmatprep.mubr.bf16.mxu0 0
        %9083 = vmatmul.mubr.bf16.gmra.mrb[0].mxu0 %v9005
        %v9084 = vpop.f32.mrb[0].mxu0
        %v9085 = vadd.f32 0.0, %v9084
        %v9086 = vpop.f32.mrb[0].mxu0
        %v9087 = vpop.f32.mrb[0].mxu0
        %v9088 = vadd.f32 0.0, %v9087
        %v9089 = vpop.f32.mrb[0].mxu0
        %9090 = vmatprep.mubr.bf16.mxu0 0
        %9091 = vmatmul.mubr.bf16.gmra.mrb[0].mxu0 %v9008
        %v9092 = vpop.f32.mrb[0].mxu0
        %v9093 = vadd.f32 0.0, %v9092
        %v9094 = vpop.f32.mrb[0].mxu0
        %v9095 = vpop.f32.mrb[0].mxu0
        %v9096 = vadd.f32 0.0, %v9095
        %v9097 = vpop.f32.mrb[0].mxu0
        %9098 = vdwg.mxu0
        %v9107 = vunpack.c.l.b16 %v8942
        %v9108 = vunpack.c.l.b16 %v8943
        %v9109 = vunpack.c.l.b16 %v8944
        %v9110 = vunpack.c.l.b16 %v8945
        %v9111 = vunpack.c.l.b16 %v8946
        %v9112 = vunpack.c.l.b16 %v8947
        %v9113 = vunpack.c.l.b16 %v8948
        %v9114 = vunpack.c.l.b16 %v8949
        %v9115 = vpack.c.b16 %v9108, %v9107
        %v9116 = vpack.c.b16 %v9110, %v9109
        %v9117 = vpack.c.b16 %v9112, %v9111
        %v9118 = vpack.c.b16 %v9114, %v9113
        %v9124 = vsel %vm1302, %v8935, 0
        %v9127 = vsel %vm1302, %v8936, 0
        %v9130 = vsel %vm1302, %v8937, 0
        %v9133 = vsel %vm1302, %v8938, 0
        %v9136 = vsel %vm1302, %v8939, 0
        %v9139 = vsel %vm1302, %v8940, 0
        %v9142 = vsel %vm1302, %v8941, 0
        %9144 = vmatprep.subr.bf16.mxu0 0
        %9145 = vmatpush1.bf16.msra.mxu0 %v9115
        %9146 = vmatprep.subr.bf16.mxu0 0
        %9147 = vmatpush1.bf16.msra.mxu0 %v9116
        %9148 = vmatprep.subr.bf16.mxu0 0
        %9149 = vmatpush1.bf16.msra.mxu0 %v9117
        %9150 = vmatprep.subr.bf16.mxu0 0
        %9151 = vmatpush1.bf16.msra.mxu0 %v9118
        %9152 = vmatprep.subr.bf16.mxu0 0
        %9153 = vmatpush1.bf16.msra.mxu0 0
        %9154 = vmatprep.subr.bf16.mxu0 0
        %9155 = vmatpush1.bf16.msra.mxu0 0
        %9156 = vmatprep.subr.bf16.mxu0 0
        %9157 = vmatpush1.bf16.msra.mxu0 0
        %9158 = vmatprep.subr.bf16.mxu0 0
        %9159 = vmatpush1.bf16.msra.mxu0 0
        %9160 = vmatprep.subr.bf16.mxu0 0
        %9161 = vmatpush1.bf16.msra.mxu0 0
        %9162 = vmatprep.subr.bf16.mxu0 0
        %9163 = vmatpush1.bf16.msra.mxu0 0
        %9164 = vmatprep.subr.bf16.mxu0 0
        %9165 = vmatpush1.bf16.msra.mxu0 0
        %9166 = vmatprep.subr.bf16.mxu0 0
        %9167 = vmatpush1.bf16.msra.mxu0 0
        %9168 = vmatprep.subr.bf16.mxu0 0
        %9169 = vmatpush1.bf16.msra.mxu0 0
        %9170 = vmatprep.subr.bf16.mxu0 0
        %9171 = vmatpush1.bf16.msra.mxu0 0
        %9172 = vmatprep.subr.bf16.mxu0 0
        %9173 = vmatpush1.bf16.msra.mxu0 0
        %9174 = vmatprep.subr.bf16.mxu0 0
        %9175 = vmatpush1.bf16.msra.mxu0 0
        %9176 = vmatprep.mubr.bf16.mxu0 0
        %9177 = vmatmul.mubr.bf16.gmra.mrb[0].mxu0 %v9124
        %v9178 = vpop.f32.mrb[0].mxu0
        %v9179 = vadd.f32 %v9045, %v9178
        %v9180 = vpop.f32.mrb[0].mxu0
        %v9181 = vpop.f32.mrb[0].mxu0
        %v9182 = vadd.f32 %v9048, %v9181
        %v9183 = vpop.f32.mrb[0].mxu0
        %9184 = vmatprep.mubr.bf16.mxu0 0
        %9185 = vmatmul.mubr.bf16.gmra.mrb[0].mxu0 %v9127
        %v9186 = vpop.f32.mrb[0].mxu0
        %v9187 = vadd.f32 %v9053, %v9186
        %v9188 = vpop.f32.mrb[0].mxu0
        %v9189 = vpop.f32.mrb[0].mxu0
        %v9190 = vadd.f32 %v9056, %v9189
        %v9191 = vpop.f32.mrb[0].mxu0
        %9192 = vmatprep.mubr.bf16.mxu0 0
        %9193 = vmatmul.mubr.bf16.gmra.mrb[0].mxu0 %v9130
        %v9194 = vpop.f32.mrb[0].mxu0
        %v9195 = vadd.f32 %v9061, %v9194
        %v9196 = vpop.f32.mrb[0].mxu0
        %v9197 = vpop.f32.mrb[0].mxu0
        %v9198 = vadd.f32 %v9064, %v9197
        %v9199 = vpop.f32.mrb[0].mxu0
        %9200 = vmatprep.mubr.bf16.mxu0 0
        %9201 = vmatmul.mubr.bf16.gmra.mrb[0].mxu0 %v9133
        %v9202 = vpop.f32.mrb[0].mxu0
        %v9203 = vadd.f32 %v9069, %v9202
        %v9204 = vpop.f32.mrb[0].mxu0
        %v9205 = vpop.f32.mrb[0].mxu0
        %v9206 = vadd.f32 %v9072, %v9205
        %v9207 = vpop.f32.mrb[0].mxu0
        %9208 = vmatprep.mubr.bf16.mxu0 0
        %9209 = vmatmul.mubr.bf16.gmra.mrb[0].mxu0 %v9136
        %v9210 = vpop.f32.mrb[0].mxu0
        %v9211 = vadd.f32 %v9077, %v9210
        %v9212 = vpop.f32.mrb[0].mxu0
        %v9213 = vpop.f32.mrb[0].mxu0
        %v9214 = vadd.f32 %v9080, %v9213
        %v9215 = vpop.f32.mrb[0].mxu0
        %9216 = vmatprep.mubr.bf16.mxu0 0
        %9217 = vmatmul.mubr.bf16.gmra.mrb[0].mxu0 %v9139
        %v9218 = vpop.f32.mrb[0].mxu0
        %v9219 = vadd.f32 %v9085, %v9218
        %v9220 = vpop.f32.mrb[0].mxu0
        %v9221 = vpop.f32.mrb[0].mxu0
        %v9222 = vadd.f32 %v9088, %v9221
        %v9223 = vpop.f32.mrb[0].mxu0
        %9224 = vmatprep.mubr.bf16.mxu0 0
        %9225 = vmatmul.mubr.bf16.gmra.mrb[0].mxu0 %v9142
        %v9226 = vpop.f32.mrb[0].mxu0
        %v9227 = vadd.f32 %v9093, %v9226
        %v9228 = vpop.f32.mrb[0].mxu0
        %v9229 = vpop.f32.mrb[0].mxu0
        %v9230 = vadd.f32 %v9096, %v9229
        %v9231 = vpop.f32.mrb[0].mxu0
        %9232 = vdwg.mxu0
        %v9233 = vld [vmem:[%s21] sm:$0x1]
        %v9235 = vlaneseq
        %v9236 = vshrl.u32 %v9235, 7
        %v9237 = vsub.s32 0, %v9236
        %v9238 = vrot.slane %v9233, %v9237
        %v9240 = vadd.f32 %v9179, %v9238
        %v9241 = vadd.f32 %v9182, %v9238
        %v9242 = vadd.f32 %v9187, %v9238
        %v9243 = vadd.f32 %v9190, %v9238
        %v9244 = vadd.f32 %v9195, %v9238
        %v9245 = vadd.f32 %v9198, %v9238
        %v9246 = vadd.f32 %v9203, %v9238
        %v9247 = vadd.f32 %v9206, %v9238
        %v9248 = vadd.f32 %v9211, %v9238
        %v9249 = vadd.f32 %v9214, %v9238
        %v9250 = vadd.f32 %v9219, %v9238
        %v9251 = vadd.f32 %v9222, %v9238
        %v9252 = vadd.f32 %v9227, %v9238
        %v9253 = vadd.f32 %v9230, %v9238
        %v9254 = vsel %vm3230, %v9240, -1e+15
        %v9255 = vsel %vm3231, %v9241, -1e+15
        %v9256 = vsel %vm3232, %v9242, -1e+15
        %v9257 = vsel %vm3233, %v9243, -1e+15
        %v9258 = vsel %vm3234, %v9244, -1e+15
        %v9259 = vsel %vm3235, %v9245, -1e+15
        %v9260 = vsel %vm3236, %v9246, -1e+15
        %v9261 = vsel %vm3237, %v9247, -1e+15
        %v9262 = vsel %vm3238, %v9248, -1e+15
        %v9263 = vsel %vm3239, %v9249, -1e+15
        %v9264 = vsel %vm3240, %v9250, -1e+15
        %v9265 = vsel %vm3241, %v9251, -1e+15
        %v9266 = vsel %vm3242, %v9252, -1e+15
        %v9267 = vsel %vm3243, %v9253, -1e+15
        %v9268 = vsel %vm3244, %v9240, -1e+15
        %v9269 = vsel %vm3245, %v9241, -1e+15
        %v9270 = vsel %vm3246, %v9242, -1e+15
        %v9271 = vsel %vm3247, %v9243, -1e+15
        %v9272 = vsel %vm3248, %v9244, -1e+15
        %v9273 = vsel %vm3249, %v9245, -1e+15
        %v9274 = vsel %vm3250, %v9246, -1e+15
        %v9275 = vsel %vm3251, %v9247, -1e+15
        %v9276 = vsel %vm3252, %v9248, -1e+15
        %v9277 = vsel %vm3253, %v9249, -1e+15
        %v9278 = vsel %vm3254, %v9250, -1e+15
        %v9279 = vsel %vm3255, %v9251, -1e+15
        %v9280 = vsel %vm3256, %v9252, -1e+15
        %v9281 = vsel %vm3257, %v9253, -1e+15
        %v9282 = vsel %vm3258, %v9240, -1e+15
        %v9283 = vsel %vm3259, %v9241, -1e+15
        %v9284 = vsel %vm3260, %v9242, -1e+15
        %v9285 = vsel %vm3261, %v9243, -1e+15
        %v9286 = vsel %vm3262, %v9244, -1e+15
        %v9287 = vsel %vm3263, %v9245, -1e+15
        %v9288 = vsel %vm3264, %v9246, -1e+15
        %v9289 = vsel %vm3265, %v9247, -1e+15
        %v9290 = vsel %vm3266, %v9248, -1e+15
        %v9291 = vsel %vm3267, %v9249, -1e+15
        %v9292 = vsel %vm3268, %v9250, -1e+15
        %v9293 = vsel %vm3269, %v9251, -1e+15
        %v9294 = vsel %vm3270, %v9252, -1e+15
        %v9295 = vsel %vm3271, %v9253, -1e+15
        %v9296 = vsel %vm3272, %v9240, -1e+15
        %v9297 = vsel %vm3273, %v9241, -1e+15
        %v9298 = vsel %vm3274, %v9242, -1e+15
        %v9299 = vsel %vm3275, %v9243, -1e+15
        %v9300 = vsel %vm3276, %v9244, -1e+15
        %v9301 = vsel %vm3277, %v9245, -1e+15
        %v9302 = vsel %vm3278, %v9246, -1e+15
        %v9303 = vsel %vm3279, %v9247, -1e+15
        %v9304 = vsel %vm3280, %v9248, -1e+15
        %v9305 = vsel %vm3281, %v9249, -1e+15
        %v9306 = vsel %vm3282, %v9250, -1e+15
        %v9307 = vsel %vm3283, %v9251, -1e+15
        %v9308 = vsel %vm3284, %v9252, -1e+15
        %v9309 = vsel %vm3285, %v9253, -1e+15
        %v9310 = vsel %vm3286, %v9240, -1e+15
        %v9311 = vsel %vm3287, %v9241, -1e+15
        %v9312 = vsel %vm3288, %v9242, -1e+15
        %v9313 = vsel %vm3289, %v9243, -1e+15
        %v9314 = vsel %vm3290, %v9244, -1e+15
        %v9315 = vsel %vm3291, %v9245, -1e+15
        %v9316 = vsel %vm3292, %v9246, -1e+15
        %v9317 = vsel %vm3293, %v9247, -1e+15
        %v9318 = vsel %vm3294, %v9248, -1e+15
        %v9319 = vsel %vm3295, %v9249, -1e+15
        %v9320 = vsel %vm3296, %v9250, -1e+15
        %v9321 = vsel %vm3297, %v9251, -1e+15
        %v9322 = vsel %vm3298, %v9252, -1e+15
        %v9323 = vsel %vm3299, %v9253, -1e+15
        %v9324 = vsel %vm3300, %v9240, -1e+15
        %v9325 = vsel %vm3301, %v9241, -1e+15
        %v9326 = vsel %vm3302, %v9242, -1e+15
        %v9327 = vsel %vm3303, %v9243, -1e+15
        %v9328 = vsel %vm3304, %v9244, -1e+15
        %v9329 = vsel %vm3305, %v9245, -1e+15
        %v9330 = vsel %vm3306, %v9246, -1e+15
        %v9331 = vsel %vm3307, %v9247, -1e+15
        %v9332 = vsel %vm3308, %v9248, -1e+15
        %v9333 = vsel %vm3309, %v9249, -1e+15
        %v9334 = vsel %vm3310, %v9250, -1e+15
        %v9335 = vsel %vm3311, %v9251, -1e+15
        %v9336 = vsel %vm3312, %v9252, -1e+15
        %v9337 = vsel %vm3313, %v9253, -1e+15
        %v9338 = vsel %vm3314, %v9240, -1e+15
        %v9339 = vsel %vm3315, %v9241, -1e+15
        %v9340 = vsel %vm3316, %v9242, -1e+15
        %v9341 = vsel %vm3317, %v9243, -1e+15
        %v9342 = vsel %vm3318, %v9244, -1e+15
        %v9343 = vsel %vm3319, %v9245, -1e+15
        %v9344 = vsel %vm3320, %v9246, -1e+15
        %v9345 = vsel %vm3321, %v9247, -1e+15
        %v9346 = vsel %vm3322, %v9248, -1e+15
        %v9347 = vsel %vm3323, %v9249, -1e+15
        %v9348 = vsel %vm3324, %v9250, -1e+15
        %v9349 = vsel %vm3325, %v9251, -1e+15
        %v9350 = vsel %vm3326, %v9252, -1e+15
        %v9351 = vsel %vm3327, %v9253, -1e+15
        %v9352 = vsel %vm3328, %v9240, -1e+15
        %v9353 = vsel %vm3329, %v9241, -1e+15
        %v9354 = vsel %vm3330, %v9242, -1e+15
        %v9355 = vsel %vm3331, %v9243, -1e+15
        %v9356 = vsel %vm3332, %v9244, -1e+15
        %v9357 = vsel %vm3333, %v9245, -1e+15
        %v9358 = vsel %vm3334, %v9246, -1e+15
        %v9359 = vsel %vm3335, %v9247, -1e+15
        %v9360 = vsel %vm3336, %v9248, -1e+15
        %v9361 = vsel %vm3337, %v9249, -1e+15
        %v9362 = vsel %vm3338, %v9250, -1e+15
        %v9363 = vsel %vm3339, %v9251, -1e+15
        %v9364 = vsel %vm3340, %v9252, -1e+15
        %v9365 = vsel %vm3341, %v9253, -1e+15
        %v9366 = vsel %vm3342, %v9240, -1e+15
        %v9367 = vsel %vm3343, %v9241, -1e+15
        %v9368 = vsel %vm3344, %v9242, -1e+15
        %v9369 = vsel %vm3345, %v9243, -1e+15
        %v9370 = vsel %vm3346, %v9244, -1e+15
        %v9371 = vsel %vm3347, %v9245, -1e+15
        %v9372 = vsel %vm3348, %v9246, -1e+15
        %v9373 = vsel %vm3349, %v9247, -1e+15
        %v9374 = vsel %vm3350, %v9248, -1e+15
        %v9375 = vsel %vm3351, %v9249, -1e+15
        %v9376 = vsel %vm3352, %v9250, -1e+15
        %v9377 = vsel %vm3353, %v9251, -1e+15
        %v9378 = vsel %vm3354, %v9252, -1e+15
        %v9379 = vsel %vm3355, %v9253, -1e+15
        %v9380 = vsel %vm3356, %v9240, -1e+15
        %v9381 = vsel %vm3357, %v9241, -1e+15
        %v9382 = vsel %vm3358, %v9242, -1e+15
        %v9383 = vsel %vm3359, %v9243, -1e+15
        %v9384 = vsel %vm3360, %v9244, -1e+15
        %v9385 = vsel %vm3361, %v9245, -1e+15
        %v9386 = vsel %vm3362, %v9246, -1e+15
        %v9387 = vsel %vm3363, %v9247, -1e+15
        %v9388 = vsel %vm3364, %v9248, -1e+15
        %v9389 = vsel %vm3365, %v9249, -1e+15
        %v9390 = vsel %vm3366, %v9250, -1e+15
        %v9391 = vsel %vm3367, %v9251, -1e+15
        %v9392 = vsel %vm3368, %v9252, -1e+15
        %v9393 = vsel %vm3369, %v9253, -1e+15
        %v9394 = vsel %vm3370, %v9240, -1e+15
        %v9395 = vsel %vm3371, %v9241, -1e+15
        %v9396 = vsel %vm3372, %v9242, -1e+15
        %v9397 = vsel %vm3373, %v9243, -1e+15
        %v9398 = vsel %vm3374, %v9244, -1e+15
        %v9399 = vsel %vm3375, %v9245, -1e+15
        %v9400 = vsel %vm3376, %v9246, -1e+15
        %v9401 = vsel %vm3377, %v9247, -1e+15
        %v9402 = vsel %vm3378, %v9248, -1e+15
        %v9403 = vsel %vm3379, %v9249, -1e+15
        %v9404 = vsel %vm3380, %v9250, -1e+15
        %v9405 = vsel %vm3381, %v9251, -1e+15
        %v9406 = vsel %vm3382, %v9252, -1e+15
        %v9407 = vsel %vm3383, %v9253, -1e+15
        %v9408 = vsel %vm3384, %v9240, -1e+15
        %v9409 = vsel %vm3385, %v9241, -1e+15
        %v9410 = vsel %vm3386, %v9242, -1e+15
        %v9411 = vsel %vm3387, %v9243, -1e+15
        %v9412 = vsel %vm3388, %v9244, -1e+15
        %v9413 = vsel %vm3389, %v9245, -1e+15
        %v9414 = vsel %vm3390, %v9246, -1e+15
        %v9415 = vsel %vm3391, %v9247, -1e+15
        %v9416 = vsel %vm3392, %v9248, -1e+15
        %v9417 = vsel %vm3393, %v9249, -1e+15
        %v9418 = vsel %vm3394, %v9250, -1e+15
        %v9419 = vsel %vm3395, %v9251, -1e+15
        %v9420 = vsel %vm3396, %v9252, -1e+15
        %v9421 = vsel %vm3397, %v9253, -1e+15
        %v9422 = vsel %vm3398, %v9240, -1e+15
        %v9423 = vsel %vm3399, %v9241, -1e+15
        %v9424 = vsel %vm3400, %v9242, -1e+15
        %v9425 = vsel %vm3401, %v9243, -1e+15
        %v9426 = vsel %vm3402, %v9244, -1e+15
        %v9427 = vsel %vm3403, %v9245, -1e+15
        %v9428 = vsel %vm3404, %v9246, -1e+15
        %v9429 = vsel %vm3405, %v9247, -1e+15
        %v9430 = vsel %vm3406, %v9248, -1e+15
        %v9431 = vsel %vm3407, %v9249, -1e+15
        %v9432 = vsel %vm3408, %v9250, -1e+15
        %v9433 = vsel %vm3409, %v9251, -1e+15
        %v9434 = vsel %vm3410, %v9252, -1e+15
        %v9435 = vsel %vm3411, %v9253, -1e+15
        %v9436 = vsel %vm3412, %v9240, -1e+15
        %v9437 = vsel %vm3413, %v9241, -1e+15
        %v9438 = vsel %vm3414, %v9242, -1e+15
        %v9439 = vsel %vm3415, %v9243, -1e+15
        %v9440 = vsel %vm3416, %v9244, -1e+15
        %v9441 = vsel %vm3417, %v9245, -1e+15
        %v9442 = vsel %vm3418, %v9246, -1e+15
        %v9443 = vsel %vm3419, %v9247, -1e+15
        %v9444 = vsel %vm3420, %v9248, -1e+15
        %v9445 = vsel %vm3421, %v9249, -1e+15
        %v9446 = vsel %vm3422, %v9250, -1e+15
        %v9447 = vsel %vm3423, %v9251, -1e+15
        %v9448 = vsel %vm3424, %v9252, -1e+15
        %v9449 = vsel %vm3425, %v9253, -1e+15
        %v9450 = vsel %vm3426, %v9240, -1e+15
        %v9451 = vsel %vm3427, %v9241, -1e+15
        %v9452 = vsel %vm3428, %v9242, -1e+15
        %v9453 = vsel %vm3429, %v9243, -1e+15
        %v9454 = vsel %vm3430, %v9244, -1e+15
        %v9455 = vsel %vm3431, %v9245, -1e+15
        %v9456 = vsel %vm3432, %v9246, -1e+15
        %v9457 = vsel %vm3433, %v9247, -1e+15
        %v9458 = vsel %vm3434, %v9248, -1e+15
        %v9459 = vsel %vm3435, %v9249, -1e+15
        %v9460 = vsel %vm3436, %v9250, -1e+15
        %v9461 = vsel %vm3437, %v9251, -1e+15
        %v9462 = vsel %vm3438, %v9252, -1e+15
        %v9463 = vsel %vm3439, %v9253, -1e+15
        %v9464 = vsel %vm3440, %v9240, -1e+15
        %v9465 = vsel %vm3441, %v9241, -1e+15
        %v9466 = vsel %vm3442, %v9242, -1e+15
        %v9467 = vsel %vm3443, %v9243, -1e+15
        %v9468 = vsel %vm3444, %v9244, -1e+15
        %v9469 = vsel %vm3445, %v9245, -1e+15
        %v9470 = vsel %vm3446, %v9246, -1e+15
        %v9471 = vsel %vm3447, %v9247, -1e+15
        %v9472 = vsel %vm3448, %v9248, -1e+15
        %v9473 = vsel %vm3449, %v9249, -1e+15
        %v9474 = vsel %vm3450, %v9250, -1e+15
        %v9475 = vsel %vm3451, %v9251, -1e+15
        %v9476 = vsel %vm3452, %v9252, -1e+15
        %v9477 = vsel %vm3453, %v9253, -1e+15
        %v9478 = vsel %vm1302, %v9254, -inf
        %v9479 = vsel %vm1302, %v9255, -inf
        %v9480 = vmax.f32 %v9478, %v9479
        %v9481 = vsel %vm1302, %v9256, -inf
        %v9482 = vmax.f32 %v9480, %v9481
        %v9483 = vsel %vm1302, %v9257, -inf
        %v9484 = vmax.f32 %v9482, %v9483
        %v9485 = vsel %vm1302, %v9258, -inf
        %v9486 = vmax.f32 %v9484, %v9485
        %v9487 = vsel %vm1302, %v9259, -inf
        %v9488 = vmax.f32 %v9486, %v9487
        %v9489 = vsel %vm1302, %v9260, -inf
        %v9490 = vmax.f32 %v9488, %v9489
        %v9491 = vsel %vm1302, %v9261, -inf
        %v9492 = vmax.f32 %v9490, %v9491
        %v9493 = vsel %vm1302, %v9262, -inf
        %v9494 = vmax.f32 %v9492, %v9493
        %v9495 = vsel %vm1302, %v9263, -inf
        %v9496 = vmax.f32 %v9494, %v9495
        %v9497 = vsel %vm1302, %v9264, -inf
        %v9498 = vmax.f32 %v9496, %v9497
        %v9499 = vsel %vm1302, %v9265, -inf
        %v9500 = vmax.f32 %v9498, %v9499
        %v9501 = vsel %vm1302, %v9266, -inf
        %v9502 = vmax.f32 %v9500, %v9501
        %v9503 = vsel %vm1302, %v9267, -inf
        %v9504 = vmax.f32 %v9502, %v9503
        %v9505 = vrot.slane %v9504, 4
        %v9506 = vmax.f32 %v9504, %v9505
        %v9507 = vrot.slane %v9506, 2
        %v9508 = vmax.f32 %v9506, %v9507
        %v9509 = vrot.slane %v9508, 1
        %v9510 = vmax.f32 %v9508, %v9509
        %v9511 = vsel %vm1302, %v9268, -inf
        %v9512 = vsel %vm1302, %v9269, -inf
        %v9513 = vmax.f32 %v9511, %v9512
        %v9514 = vsel %vm1302, %v9270, -inf
        %v9515 = vmax.f32 %v9513, %v9514
        %v9516 = vsel %vm1302, %v9271, -inf
        %v9517 = vmax.f32 %v9515, %v9516
        %v9518 = vsel %vm1302, %v9272, -inf
        %v9519 = vmax.f32 %v9517, %v9518
        %v9520 = vsel %vm1302, %v9273, -inf
        %v9521 = vmax.f32 %v9519, %v9520
        %v9522 = vsel %vm1302, %v9274, -inf
        %v9523 = vmax.f32 %v9521, %v9522
        %v9524 = vsel %vm1302, %v9275, -inf
        %v9525 = vmax.f32 %v9523, %v9524
        %v9526 = vsel %vm1302, %v9276, -inf
        %v9527 = vmax.f32 %v9525, %v9526
        %v9528 = vsel %vm1302, %v9277, -inf
        %v9529 = vmax.f32 %v9527, %v9528
        %v9530 = vsel %vm1302, %v9278, -inf
        %v9531 = vmax.f32 %v9529, %v9530
        %v9532 = vsel %vm1302, %v9279, -inf
        %v9533 = vmax.f32 %v9531, %v9532
        %v9534 = vsel %vm1302, %v9280, -inf
        %v9535 = vmax.f32 %v9533, %v9534
        %v9536 = vsel %vm1302, %v9281, -inf
        %v9537 = vmax.f32 %v9535, %v9536
        %v9538 = vrot.slane %v9537, 4
        %v9539 = vmax.f32 %v9537, %v9538
        %v9540 = vrot.slane %v9539, 2
        %v9541 = vmax.f32 %v9539, %v9540
        %v9542 = vrot.slane %v9541, 1
        %v9543 = vmax.f32 %v9541, %v9542
        %v9544 = vsel %vm1302, %v9282, -inf
        %v9545 = vsel %vm1302, %v9283, -inf
        %v9546 = vmax.f32 %v9544, %v9545
        %v9547 = vsel %vm1302, %v9284, -inf
        %v9548 = vmax.f32 %v9546, %v9547
        %v9549 = vsel %vm1302, %v9285, -inf
        %v9550 = vmax.f32 %v9548, %v9549
        %v9551 = vsel %vm1302, %v9286, -inf
        %v9552 = vmax.f32 %v9550, %v9551
        %v9553 = vsel %vm1302, %v9287, -inf
        %v9554 = vmax.f32 %v9552, %v9553
        %v9555 = vsel %vm1302, %v9288, -inf
        %v9556 = vmax.f32 %v9554, %v9555
        %v9557 = vsel %vm1302, %v9289, -inf
        %v9558 = vmax.f32 %v9556, %v9557
        %v9559 = vsel %vm1302, %v9290, -inf
        %v9560 = vmax.f32 %v9558, %v9559
        %v9561 = vsel %vm1302, %v9291, -inf
        %v9562 = vmax.f32 %v9560, %v9561
        %v9563 = vsel %vm1302, %v9292, -inf
        %v9564 = vmax.f32 %v9562, %v9563
        %v9565 = vsel %vm1302, %v9293, -inf
        %v9566 = vmax.f32 %v9564, %v9565
        %v9567 = vsel %vm1302, %v9294, -inf
        %v9568 = vmax.f32 %v9566, %v9567
        %v9569 = vsel %vm1302, %v9295, -inf
        %v9570 = vmax.f32 %v9568, %v9569
        %v9571 = vrot.slane %v9570, 4
        %v9572 = vmax.f32 %v9570, %v9571
        %v9573 = vrot.slane %v9572, 2
        %v9574 = vmax.f32 %v9572, %v9573
        %v9575 = vrot.slane %v9574, 1
        %v9576 = vmax.f32 %v9574, %v9575
        %v9577 = vsel %vm1302, %v9296, -inf
        %v9578 = vsel %vm1302, %v9297, -inf
        %v9579 = vmax.f32 %v9577, %v9578
        %v9580 = vsel %vm1302, %v9298, -inf
        %v9581 = vmax.f32 %v9579, %v9580
        %v9582 = vsel %vm1302, %v9299, -inf
        %v9583 = vmax.f32 %v9581, %v9582
        %v9584 = vsel %vm1302, %v9300, -inf
        %v9585 = vmax.f32 %v9583, %v9584
        %v9586 = vsel %vm1302, %v9301, -inf
        %v9587 = vmax.f32 %v9585, %v9586
        %v9588 = vsel %vm1302, %v9302, -inf
        %v9589 = vmax.f32 %v9587, %v9588
        %v9590 = vsel %vm1302, %v9303, -inf
        %v9591 = vmax.f32 %v9589, %v9590
        %v9592 = vsel %vm1302, %v9304, -inf
        %v9593 = vmax.f32 %v9591, %v9592
        %v9594 = vsel %vm1302, %v9305, -inf
        %v9595 = vmax.f32 %v9593, %v9594
        %v9596 = vsel %vm1302, %v9306, -inf
        %v9597 = vmax.f32 %v9595, %v9596
        %v9598 = vsel %vm1302, %v9307, -inf
        %v9599 = vmax.f32 %v9597, %v9598
        %v9600 = vsel %vm1302, %v9308, -inf
        %v9601 = vmax.f32 %v9599, %v9600
        %v9602 = vsel %vm1302, %v9309, -inf
        %v9603 = vmax.f32 %v9601, %v9602
        %v9604 = vrot.slane %v9603, 4
        %v9605 = vmax.f32 %v9603, %v9604
        %v9606 = vrot.slane %v9605, 2
        %v9607 = vmax.f32 %v9605, %v9606
        %v9608 = vrot.slane %v9607, 1
        %v9609 = vmax.f32 %v9607, %v9608
        %v9610 = vsel %vm1302, %v9310, -inf
        %v9611 = vsel %vm1302, %v9311, -inf
        %v9612 = vmax.f32 %v9610, %v9611
        %v9613 = vsel %vm1302, %v9312, -inf
        %v9614 = vmax.f32 %v9612, %v9613
        %v9615 = vsel %vm1302, %v9313, -inf
        %v9616 = vmax.f32 %v9614, %v9615
        %v9617 = vsel %vm1302, %v9314, -inf
        %v9618 = vmax.f32 %v9616, %v9617
        %v9619 = vsel %vm1302, %v9315, -inf
        %v9620 = vmax.f32 %v9618, %v9619
        %v9621 = vsel %vm1302, %v9316, -inf
        %v9622 = vmax.f32 %v9620, %v9621
        %v9623 = vsel %vm1302, %v9317, -inf
        %v9624 = vmax.f32 %v9622, %v9623
        %v9625 = vsel %vm1302, %v9318, -inf
        %v9626 = vmax.f32 %v9624, %v9625
        %v9627 = vsel %vm1302, %v9319, -inf
        %v9628 = vmax.f32 %v9626, %v9627
        %v9629 = vsel %vm1302, %v9320, -inf
        %v9630 = vmax.f32 %v9628, %v9629
        %v9631 = vsel %vm1302, %v9321, -inf
        %v9632 = vmax.f32 %v9630, %v9631
        %v9633 = vsel %vm1302, %v9322, -inf
        %v9634 = vmax.f32 %v9632, %v9633
        %v9635 = vsel %vm1302, %v9323, -inf
        %v9636 = vmax.f32 %v9634, %v9635
        %v9637 = vrot.slane %v9636, 4
        %v9638 = vmax.f32 %v9636, %v9637
        %v9639 = vrot.slane %v9638, 2
        %v9640 = vmax.f32 %v9638, %v9639
        %v9641 = vrot.slane %v9640, 1
        %v9642 = vmax.f32 %v9640, %v9641
        %v9643 = vsel %vm1302, %v9324, -inf
        %v9644 = vsel %vm1302, %v9325, -inf
        %v9645 = vmax.f32 %v9643, %v9644
        %v9646 = vsel %vm1302, %v9326, -inf
        %v9647 = vmax.f32 %v9645, %v9646
        %v9648 = vsel %vm1302, %v9327, -inf
        %v9649 = vmax.f32 %v9647, %v9648
        %v9650 = vsel %vm1302, %v9328, -inf
        %v9651 = vmax.f32 %v9649, %v9650
        %v9652 = vsel %vm1302, %v9329, -inf
        %v9653 = vmax.f32 %v9651, %v9652
        %v9654 = vsel %vm1302, %v9330, -inf
        %v9655 = vmax.f32 %v9653, %v9654
        %v9656 = vsel %vm1302, %v9331, -inf
        %v9657 = vmax.f32 %v9655, %v9656
        %v9658 = vsel %vm1302, %v9332, -inf
        %v9659 = vmax.f32 %v9657, %v9658
        %v9660 = vsel %vm1302, %v9333, -inf
        %v9661 = vmax.f32 %v9659, %v9660
        %v9662 = vsel %vm1302, %v9334, -inf
        %v9663 = vmax.f32 %v9661, %v9662
        %v9664 = vsel %vm1302, %v9335, -inf
        %v9665 = vmax.f32 %v9663, %v9664
        %v9666 = vsel %vm1302, %v9336, -inf
        %v9667 = vmax.f32 %v9665, %v9666
        %v9668 = vsel %vm1302, %v9337, -inf
        %v9669 = vmax.f32 %v9667, %v9668
        %v9670 = vrot.slane %v9669, 4
        %v9671 = vmax.f32 %v9669, %v9670
        %v9672 = vrot.slane %v9671, 2
        %v9673 = vmax.f32 %v9671, %v9672
        %v9674 = vrot.slane %v9673, 1
        %v9675 = vmax.f32 %v9673, %v9674
        %v9676 = vsel %vm1302, %v9338, -inf
        %v9677 = vsel %vm1302, %v9339, -inf
        %v9678 = vmax.f32 %v9676, %v9677
        %v9679 = vsel %vm1302, %v9340, -inf
        %v9680 = vmax.f32 %v9678, %v9679
        %v9681 = vsel %vm1302, %v9341, -inf
        %v9682 = vmax.f32 %v9680, %v9681
        %v9683 = vsel %vm1302, %v9342, -inf
        %v9684 = vmax.f32 %v9682, %v9683
        %v9685 = vsel %vm1302, %v9343, -inf
        %v9686 = vmax.f32 %v9684, %v9685
        %v9687 = vsel %vm1302, %v9344, -inf
        %v9688 = vmax.f32 %v9686, %v9687
        %v9689 = vsel %vm1302, %v9345, -inf
        %v9690 = vmax.f32 %v9688, %v9689
        %v9691 = vsel %vm1302, %v9346, -inf
        %v9692 = vmax.f32 %v9690, %v9691
        %v9693 = vsel %vm1302, %v9347, -inf
        %v9694 = vmax.f32 %v9692, %v9693
        %v9695 = vsel %vm1302, %v9348, -inf
        %v9696 = vmax.f32 %v9694, %v9695
        %v9697 = vsel %vm1302, %v9349, -inf
        %v9698 = vmax.f32 %v9696, %v9697
        %v9699 = vsel %vm1302, %v9350, -inf
        %v9700 = vmax.f32 %v9698, %v9699
        %v9701 = vsel %vm1302, %v9351, -inf
        %v9702 = vmax.f32 %v9700, %v9701
        %v9703 = vrot.slane %v9702, 4
        %v9704 = vmax.f32 %v9702, %v9703
        %v9705 = vrot.slane %v9704, 2
        %v9706 = vmax.f32 %v9704, %v9705
        %v9707 = vrot.slane %v9706, 1
        %v9708 = vmax.f32 %v9706, %v9707
        %v9709 = vsel %vm1302, %v9352, -inf
        %v9710 = vsel %vm1302, %v9353, -inf
        %v9711 = vmax.f32 %v9709, %v9710
        %v9712 = vsel %vm1302, %v9354, -inf
        %v9713 = vmax.f32 %v9711, %v9712
        %v9714 = vsel %vm1302, %v9355, -inf
        %v9715 = vmax.f32 %v9713, %v9714
        %v9716 = vsel %vm1302, %v9356, -inf
        %v9717 = vmax.f32 %v9715, %v9716
        %v9718 = vsel %vm1302, %v9357, -inf
        %v9719 = vmax.f32 %v9717, %v9718
        %v9720 = vsel %vm1302, %v9358, -inf
        %v9721 = vmax.f32 %v9719, %v9720
        %v9722 = vsel %vm1302, %v9359, -inf
        %v9723 = vmax.f32 %v9721, %v9722
        %v9724 = vsel %vm1302, %v9360, -inf
        %v9725 = vmax.f32 %v9723, %v9724
        %v9726 = vsel %vm1302, %v9361, -inf
        %v9727 = vmax.f32 %v9725, %v9726
        %v9728 = vsel %vm1302, %v9362, -inf
        %v9729 = vmax.f32 %v9727, %v9728
        %v9730 = vsel %vm1302, %v9363, -inf
        %v9731 = vmax.f32 %v9729, %v9730
        %v9732 = vsel %vm1302, %v9364, -inf
        %v9733 = vmax.f32 %v9731, %v9732
        %v9734 = vsel %vm1302, %v9365, -inf
        %v9735 = vmax.f32 %v9733, %v9734
        %v9736 = vrot.slane %v9735, 4
        %v9737 = vmax.f32 %v9735, %v9736
        %v9738 = vrot.slane %v9737, 2
        %v9739 = vmax.f32 %v9737, %v9738
        %v9740 = vrot.slane %v9739, 1
        %v9741 = vmax.f32 %v9739, %v9740
        %v9742 = vsel %vm1302, %v9366, -inf
        %v9743 = vsel %vm1302, %v9367, -inf
        %v9744 = vmax.f32 %v9742, %v9743
        %v9745 = vsel %vm1302, %v9368, -inf
        %v9746 = vmax.f32 %v9744, %v9745
        %v9747 = vsel %vm1302, %v9369, -inf
        %v9748 = vmax.f32 %v9746, %v9747
        %v9749 = vsel %vm1302, %v9370, -inf
        %v9750 = vmax.f32 %v9748, %v9749
        %v9751 = vsel %vm1302, %v9371, -inf
        %v9752 = vmax.f32 %v9750, %v9751
        %v9753 = vsel %vm1302, %v9372, -inf
        %v9754 = vmax.f32 %v9752, %v9753
        %v9755 = vsel %vm1302, %v9373, -inf
        %v9756 = vmax.f32 %v9754, %v9755
        %v9757 = vsel %vm1302, %v9374, -inf
        %v9758 = vmax.f32 %v9756, %v9757
        %v9759 = vsel %vm1302, %v9375, -inf
        %v9760 = vmax.f32 %v9758, %v9759
        %v9761 = vsel %vm1302, %v9376, -inf
        %v9762 = vmax.f32 %v9760, %v9761
        %v9763 = vsel %vm1302, %v9377, -inf
        %v9764 = vmax.f32 %v9762, %v9763
        %v9765 = vsel %vm1302, %v9378, -inf
        %v9766 = vmax.f32 %v9764, %v9765
        %v9767 = vsel %vm1302, %v9379, -inf
        %v9768 = vmax.f32 %v9766, %v9767
        %v9769 = vrot.slane %v9768, 4
        %v9770 = vmax.f32 %v9768, %v9769
        %v9771 = vrot.slane %v9770, 2
        %v9772 = vmax.f32 %v9770, %v9771
        %v9773 = vrot.slane %v9772, 1
        %v9774 = vmax.f32 %v9772, %v9773
        %v9775 = vsel %vm1302, %v9380, -inf
        %v9776 = vsel %vm1302, %v9381, -inf
        %v9777 = vmax.f32 %v9775, %v9776
        %v9778 = vsel %vm1302, %v9382, -inf
        %v9779 = vmax.f32 %v9777, %v9778
        %v9780 = vsel %vm1302, %v9383, -inf
        %v9781 = vmax.f32 %v9779, %v9780
        %v9782 = vsel %vm1302, %v9384, -inf
        %v9783 = vmax.f32 %v9781, %v9782
        %v9784 = vsel %vm1302, %v9385, -inf
        %v9785 = vmax.f32 %v9783, %v9784
        %v9786 = vsel %vm1302, %v9386, -inf
        %v9787 = vmax.f32 %v9785, %v9786
        %v9788 = vsel %vm1302, %v9387, -inf
        %v9789 = vmax.f32 %v9787, %v9788
        %v9790 = vsel %vm1302, %v9388, -inf
        %v9791 = vmax.f32 %v9789, %v9790
        %v9792 = vsel %vm1302, %v9389, -inf
        %v9793 = vmax.f32 %v9791, %v9792
        %v9794 = vsel %vm1302, %v9390, -inf
        %v9795 = vmax.f32 %v9793, %v9794
        %v9796 = vsel %vm1302, %v9391, -inf
        %v9797 = vmax.f32 %v9795, %v9796
        %v9798 = vsel %vm1302, %v9392, -inf
        %v9799 = vmax.f32 %v9797, %v9798
        %v9800 = vsel %vm1302, %v9393, -inf
        %v9801 = vmax.f32 %v9799, %v9800
        %v9802 = vrot.slane %v9801, 4
        %v9803 = vmax.f32 %v9801, %v9802
        %v9804 = vrot.slane %v9803, 2
        %v9805 = vmax.f32 %v9803, %v9804
        %v9806 = vrot.slane %v9805, 1
        %v9807 = vmax.f32 %v9805, %v9806
        %v9808 = vsel %vm1302, %v9394, -inf
        %v9809 = vsel %vm1302, %v9395, -inf
        %v9810 = vmax.f32 %v9808, %v9809
        %v9811 = vsel %vm1302, %v9396, -inf
        %v9812 = vmax.f32 %v9810, %v9811
        %v9813 = vsel %vm1302, %v9397, -inf
        %v9814 = vmax.f32 %v9812, %v9813
        %v9815 = vsel %vm1302, %v9398, -inf
        %v9816 = vmax.f32 %v9814, %v9815
        %v9817 = vsel %vm1302, %v9399, -inf
        %v9818 = vmax.f32 %v9816, %v9817
        %v9819 = vsel %vm1302, %v9400, -inf
        %v9820 = vmax.f32 %v9818, %v9819
        %v9821 = vsel %vm1302, %v9401, -inf
        %v9822 = vmax.f32 %v9820, %v9821
        %v9823 = vsel %vm1302, %v9402, -inf
        %v9824 = vmax.f32 %v9822, %v9823
        %v9825 = vsel %vm1302, %v9403, -inf
        %v9826 = vmax.f32 %v9824, %v9825
        %v9827 = vsel %vm1302, %v9404, -inf
        %v9828 = vmax.f32 %v9826, %v9827
        %v9829 = vsel %vm1302, %v9405, -inf
        %v9830 = vmax.f32 %v9828, %v9829
        %v9831 = vsel %vm1302, %v9406, -inf
        %v9832 = vmax.f32 %v9830, %v9831
        %v9833 = vsel %vm1302, %v9407, -inf
        %v9834 = vmax.f32 %v9832, %v9833
        %v9835 = vrot.slane %v9834, 4
        %v9836 = vmax.f32 %v9834, %v9835
        %v9837 = vrot.slane %v9836, 2
        %v9838 = vmax.f32 %v9836, %v9837
        %v9839 = vrot.slane %v9838, 1
        %v9840 = vmax.f32 %v9838, %v9839
        %v9841 = vsel %vm1302, %v9408, -inf
        %v9842 = vsel %vm1302, %v9409, -inf
        %v9843 = vmax.f32 %v9841, %v9842
        %v9844 = vsel %vm1302, %v9410, -inf
        %v9845 = vmax.f32 %v9843, %v9844
        %v9846 = vsel %vm1302, %v9411, -inf
        %v9847 = vmax.f32 %v9845, %v9846
        %v9848 = vsel %vm1302, %v9412, -inf
        %v9849 = vmax.f32 %v9847, %v9848
        %v9850 = vsel %vm1302, %v9413, -inf
        %v9851 = vmax.f32 %v9849, %v9850
        %v9852 = vsel %vm1302, %v9414, -inf
        %v9853 = vmax.f32 %v9851, %v9852
        %v9854 = vsel %vm1302, %v9415, -inf
        %v9855 = vmax.f32 %v9853, %v9854
        %v9856 = vsel %vm1302, %v9416, -inf
        %v9857 = vmax.f32 %v9855, %v9856
        %v9858 = vsel %vm1302, %v9417, -inf
        %v9859 = vmax.f32 %v9857, %v9858
        %v9860 = vsel %vm1302, %v9418, -inf
        %v9861 = vmax.f32 %v9859, %v9860
        %v9862 = vsel %vm1302, %v9419, -inf
        %v9863 = vmax.f32 %v9861, %v9862
        %v9864 = vsel %vm1302, %v9420, -inf
        %v9865 = vmax.f32 %v9863, %v9864
        %v9866 = vsel %vm1302, %v9421, -inf
        %v9867 = vmax.f32 %v9865, %v9866
        %v9868 = vrot.slane %v9867, 4
        %v9869 = vmax.f32 %v9867, %v9868
        %v9870 = vrot.slane %v9869, 2
        %v9871 = vmax.f32 %v9869, %v9870
        %v9872 = vrot.slane %v9871, 1
        %v9873 = vmax.f32 %v9871, %v9872
        %v9874 = vsel %vm1302, %v9422, -inf
        %v9875 = vsel %vm1302, %v9423, -inf
        %v9876 = vmax.f32 %v9874, %v9875
        %v9877 = vsel %vm1302, %v9424, -inf
        %v9878 = vmax.f32 %v9876, %v9877
        %v9879 = vsel %vm1302, %v9425, -inf
        %v9880 = vmax.f32 %v9878, %v9879
        %v9881 = vsel %vm1302, %v9426, -inf
        %v9882 = vmax.f32 %v9880, %v9881
        %v9883 = vsel %vm1302, %v9427, -inf
        %v9884 = vmax.f32 %v9882, %v9883
        %v9885 = vsel %vm1302, %v9428, -inf
        %v9886 = vmax.f32 %v9884, %v9885
        %v9887 = vsel %vm1302, %v9429, -inf
        %v9888 = vmax.f32 %v9886, %v9887
        %v9889 = vsel %vm1302, %v9430, -inf
        %v9890 = vmax.f32 %v9888, %v9889
        %v9891 = vsel %vm1302, %v9431, -inf
        %v9892 = vmax.f32 %v9890, %v9891
        %v9893 = vsel %vm1302, %v9432, -inf
        %v9894 = vmax.f32 %v9892, %v9893
        %v9895 = vsel %vm1302, %v9433, -inf
        %v9896 = vmax.f32 %v9894, %v9895
        %v9897 = vsel %vm1302, %v9434, -inf
        %v9898 = vmax.f32 %v9896, %v9897
        %v9899 = vsel %vm1302, %v9435, -inf
        %v9900 = vmax.f32 %v9898, %v9899
        %v9901 = vrot.slane %v9900, 4
        %v9902 = vmax.f32 %v9900, %v9901
        %v9903 = vrot.slane %v9902, 2
        %v9904 = vmax.f32 %v9902, %v9903
        %v9905 = vrot.slane %v9904, 1
        %v9906 = vmax.f32 %v9904, %v9905
        %v9907 = vsel %vm1302, %v9436, -inf
        %v9908 = vsel %vm1302, %v9437, -inf
        %v9909 = vmax.f32 %v9907, %v9908
        %v9910 = vsel %vm1302, %v9438, -inf
        %v9911 = vmax.f32 %v9909, %v9910
        %v9912 = vsel %vm1302, %v9439, -inf
        %v9913 = vmax.f32 %v9911, %v9912
        %v9914 = vsel %vm1302, %v9440, -inf
        %v9915 = vmax.f32 %v9913, %v9914
        %v9916 = vsel %vm1302, %v9441, -inf
        %v9917 = vmax.f32 %v9915, %v9916
        %v9918 = vsel %vm1302, %v9442, -inf
        %v9919 = vmax.f32 %v9917, %v9918
        %v9920 = vsel %vm1302, %v9443, -inf
        %v9921 = vmax.f32 %v9919, %v9920
        %v9922 = vsel %vm1302, %v9444, -inf
        %v9923 = vmax.f32 %v9921, %v9922
        %v9924 = vsel %vm1302, %v9445, -inf
        %v9925 = vmax.f32 %v9923, %v9924
        %v9926 = vsel %vm1302, %v9446, -inf
        %v9927 = vmax.f32 %v9925, %v9926
        %v9928 = vsel %vm1302, %v9447, -inf
        %v9929 = vmax.f32 %v9927, %v9928
        %v9930 = vsel %vm1302, %v9448, -inf
        %v9931 = vmax.f32 %v9929, %v9930
        %v9932 = vsel %vm1302, %v9449, -inf
        %v9933 = vmax.f32 %v9931, %v9932
        %v9934 = vrot.slane %v9933, 4
        %v9935 = vmax.f32 %v9933, %v9934
        %v9936 = vrot.slane %v9935, 2
        %v9937 = vmax.f32 %v9935, %v9936
        %v9938 = vrot.slane %v9937, 1
        %v9939 = vmax.f32 %v9937, %v9938
        %v9940 = vsel %vm1302, %v9450, -inf
        %v9941 = vsel %vm1302, %v9451, -inf
        %v9942 = vmax.f32 %v9940, %v9941
        %v9943 = vsel %vm1302, %v9452, -inf
        %v9944 = vmax.f32 %v9942, %v9943
        %v9945 = vsel %vm1302, %v9453, -inf
        %v9946 = vmax.f32 %v9944, %v9945
        %v9947 = vsel %vm1302, %v9454, -inf
        %v9948 = vmax.f32 %v9946, %v9947
        %v9949 = vsel %vm1302, %v9455, -inf
        %v9950 = vmax.f32 %v9948, %v9949
        %v9951 = vsel %vm1302, %v9456, -inf
        %v9952 = vmax.f32 %v9950, %v9951
        %v9953 = vsel %vm1302, %v9457, -inf
        %v9954 = vmax.f32 %v9952, %v9953
        %v9955 = vsel %vm1302, %v9458, -inf
        %v9956 = vmax.f32 %v9954, %v9955
        %v9957 = vsel %vm1302, %v9459, -inf
        %v9958 = vmax.f32 %v9956, %v9957
        %v9959 = vsel %vm1302, %v9460, -inf
        %v9960 = vmax.f32 %v9958, %v9959
        %v9961 = vsel %vm1302, %v9461, -inf
        %v9962 = vmax.f32 %v9960, %v9961
        %v9963 = vsel %vm1302, %v9462, -inf
        %v9964 = vmax.f32 %v9962, %v9963
        %v9965 = vsel %vm1302, %v9463, -inf
        %v9966 = vmax.f32 %v9964, %v9965
        %v9967 = vrot.slane %v9966, 4
        %v9968 = vmax.f32 %v9966, %v9967
        %v9969 = vrot.slane %v9968, 2
        %v9970 = vmax.f32 %v9968, %v9969
        %v9971 = vrot.slane %v9970, 1
        %v9972 = vmax.f32 %v9970, %v9971
        %v9973 = vsel %vm1302, %v9464, -inf
        %v9974 = vsel %vm1302, %v9465, -inf
        %v9975 = vmax.f32 %v9973, %v9974
        %v9976 = vsel %vm1302, %v9466, -inf
        %v9977 = vmax.f32 %v9975, %v9976
        %v9978 = vsel %vm1302, %v9467, -inf
        %v9979 = vmax.f32 %v9977, %v9978
        %v9980 = vsel %vm1302, %v9468, -inf
        %v9981 = vmax.f32 %v9979, %v9980
        %v9982 = vsel %vm1302, %v9469, -inf
        %v9983 = vmax.f32 %v9981, %v9982
        %v9984 = vsel %vm1302, %v9470, -inf
        %v9985 = vmax.f32 %v9983, %v9984
        %v9986 = vsel %vm1302, %v9471, -inf
        %v9987 = vmax.f32 %v9985, %v9986
        %v9988 = vsel %vm1302, %v9472, -inf
        %v9989 = vmax.f32 %v9987, %v9988
        %v9990 = vsel %vm1302, %v9473, -inf
        %v9991 = vmax.f32 %v9989, %v9990
        %v9992 = vsel %vm1302, %v9474, -inf
        %v9993 = vmax.f32 %v9991, %v9992
        %v9994 = vsel %vm1302, %v9475, -inf
        %v9995 = vmax.f32 %v9993, %v9994
        %v9996 = vsel %vm1302, %v9476, -inf
        %v9997 = vmax.f32 %v9995, %v9996
        %v9998 = vsel %vm1302, %v9477, -inf
        %v9999 = vmax.f32 %v9997, %v9998
        %v10000 = vrot.slane %v9999, 4
        %v10001 = vmax.f32 %v9999, %v10000
        %v10002 = vrot.slane %v10001, 2
        %v10003 = vmax.f32 %v10001, %v10002
        %v10004 = vrot.slane %v10003, 1
        %v10005 = vmax.f32 %v10003, %v10004
        %v10006 = vmul.f32 %v9510, %v9510
        %v10007 = vmul.f32 %v9543, %v9543
        %v10008 = vmul.f32 %v9576, %v9576
        %v10009 = vmul.f32 %v9609, %v9609
        %v10010 = vmul.f32 %v9642, %v9642
        %v10011 = vmul.f32 %v9675, %v9675
        %v10012 = vmul.f32 %v9708, %v9708
        %v10013 = vmul.f32 %v9741, %v9741
        %v10014 = vmul.f32 %v9774, %v9774
        %v10015 = vmul.f32 %v9807, %v9807
        %v10016 = vmul.f32 %v9840, %v9840
        %v10017 = vmul.f32 %v9873, %v9873
        %v10018 = vmul.f32 %v9906, %v9906
        %v10019 = vmul.f32 %v9939, %v9939
        %v10020 = vmul.f32 %v9972, %v9972
        %v10021 = vmul.f32 %v10005, %v10005
        %v10038 = vsel %vm4289, %v10007, %v10006
        %v10039 = vsel %vm4291, %v10008, %v10038
        %v10040 = vsel %vm4293, %v10009, %v10039
        %v10041 = vsel %vm4295, %v10010, %v10040
        %v10042 = vsel %vm4297, %v10011, %v10041
        %v10043 = vsel %vm4299, %v10012, %v10042
        %v10044 = vsel %vm4301, %v10013, %v10043
        %v10045 = vsel %vm4289, %v10015, %v10014
        %v10046 = vsel %vm4291, %v10016, %v10045
        %v10047 = vsel %vm4293, %v10017, %v10046
        %v10048 = vsel %vm4295, %v10018, %v10047
        %v10049 = vsel %vm4297, %v10019, %v10048
        %v10050 = vsel %vm4299, %v10020, %v10049
        %v10051 = vsel %vm4301, %v10021, %v10050
        %v10054 = vsel %vm1302, %v10044, 0.0
        %10055 = vadd.xlane.f32.xlu0 %v10054
        %v10056 = vpop.xlane.xlu0 %10055
        %v10057 = vsel %vm1302, %v10051, 0.0
        %10058 = vadd.xlane.f32.xlu0 %v10057
        %v10059 = vpop.xlane.xlu0 %10058
        %v10060 = vrsqrt.pop %v10056
        %v10061 = vmul.f32 %v10056, %v10060
        %vm10062 = vcmp.eq.f32.partialorder %v10056, inf
        %v10063 = vsel %vm10062, %v10056, %v10061
        %vm10064 = vcmp.eq.f32.partialorder %v10056, 0.0
        %v10065 = vand.u32 %v10056, 2147483648
        %v10066 = vsel %vm10064, %v10065, %v10063
        %v10067 = vrsqrt.pop %v10059
        %v10068 = vmul.f32 %v10059, %v10067
        %vm10069 = vcmp.eq.f32.partialorder %v10059, inf
        %v10070 = vsel %vm10069, %v10059, %v10068
        %vm10071 = vcmp.eq.f32.partialorder %v10059, 0.0
        %v10072 = vand.u32 %v10059, 2147483648
        %v10073 = vsel %vm10071, %v10072, %v10070
        %v10074 = vmax.f32 %v10066, 1e-12
        %v10075 = vmax.f32 %v10073, 1e-12
        %v10078 = vrot.slane %v10074, 1
        %v10079 = vrot.slane %v10074, 2
        %v10080 = vrot.slane %v10074, 3
        %v10081 = vrot.slane %v10074, 4
        %v10082 = vrot.slane %v10074, 5
        %v10083 = vrot.slane %v10074, 6
        %v10084 = vrot.slane %v10074, 7
        %v10085 = vrot.slane %v10075, 1
        %v10086 = vrot.slane %v10075, 2
        %v10087 = vrot.slane %v10075, 3
        %v10088 = vrot.slane %v10075, 4
        %v10089 = vrot.slane %v10075, 5
        %v10090 = vrot.slane %v10075, 6
        %v10091 = vrot.slane %v10075, 7
        %v10108 = vrcp.pop %v10074
        %v10109 = vmul.f32 %v9510, %v10108
        %v10110 = vrcp.pop %v10078
        %v10111 = vmul.f32 %v9543, %v10110
        %v10112 = vrcp.pop %v10079
        %v10113 = vmul.f32 %v9576, %v10112
        %v10114 = vrcp.pop %v10080
        %v10115 = vmul.f32 %v9609, %v10114
        %v10116 = vrcp.pop %v10081
        %v10117 = vmul.f32 %v9642, %v10116
        %v10118 = vrcp.pop %v10082
        %v10119 = vmul.f32 %v9675, %v10118
        %v10120 = vrcp.pop %v10083
        %v10121 = vmul.f32 %v9708, %v10120
        %v10122 = vrcp.pop %v10084
        %v10123 = vmul.f32 %v9741, %v10122
        %v10124 = vrcp.pop %v10075
        %v10125 = vmul.f32 %v9774, %v10124
        %v10126 = vrcp.pop %v10085
        %v10127 = vmul.f32 %v9807, %v10126
        %v10128 = vrcp.pop %v10086
        %v10129 = vmul.f32 %v9840, %v10128
        %v10130 = vrcp.pop %v10087
        %v10131 = vmul.f32 %v9873, %v10130
        %v10132 = vrcp.pop %v10088
        %v10133 = vmul.f32 %v9906, %v10132
        %v10134 = vrcp.pop %v10089
        %v10135 = vmul.f32 %v9939, %v10134
        %v10136 = vrcp.pop %v10090
        %v10137 = vmul.f32 %v9972, %v10136
        %v10138 = vrcp.pop %v10091
        %v10139 = vmul.f32 %v10005, %v10138
        %v10140 = vpack.c.bf16 %v10109, %v10109
        %v10141 = vpack.c.bf16 %v10111, %v10111
        %v10142 = vpack.c.bf16 %v10113, %v10113
        %v10143 = vpack.c.bf16 %v10115, %v10115
        %v10144 = vpack.c.bf16 %v10117, %v10117
        %v10145 = vpack.c.bf16 %v10119, %v10119
        %v10146 = vpack.c.bf16 %v10121, %v10121
        %v10147 = vpack.c.bf16 %v10123, %v10123
        %v10148 = vpack.c.bf16 %v10125, %v10125
        %v10149 = vpack.c.bf16 %v10127, %v10127
        %v10150 = vpack.c.bf16 %v10129, %v10129
        %v10151 = vpack.c.bf16 %v10131, %v10131
        %v10152 = vpack.c.bf16 %v10133, %v10133
        %v10153 = vpack.c.bf16 %v10135, %v10135
        %v10154 = vpack.c.bf16 %v10137, %v10137
        %v10155 = vpack.c.bf16 %v10139, %v10139
        %v10156 = vld [vmem:[%s22] sm:$0xff]
        %v10157 = vld [vmem:[%s22 + $0x8] sm:$0xff]
        %v10158 = vld [vmem:[%s22 + $0x10] sm:$0xff]
        %v10159 = vld [vmem:[%s22 + $0x18] sm:$0xff]
        %v10160 = vld [vmem:[%s22 + $0x20] sm:$0xff]
        %v10161 = vld [vmem:[%s22 + $0x28] sm:$0xff]
        %v10162 = vld [vmem:[%s22 + $0x30] sm:$0xff]
        %v10163 = vld [vmem:[%s22 + $0x38] sm:$0xff]
        %v10164 = vld [vmem:[%s822] sm:$0xff]
        %v10165 = vld [vmem:[%s822 + $0x8] sm:$0xff]
        %v10166 = vpack.c.bf16 %v10165, %v10164
        %v10167 = vld [vmem:[%s23] sm:$0xff]
        %v10168 = vld [vmem:[%s23 + $0x8] sm:$0xff]
        %v10169 = vld [vmem:[%s23 + $0x10] sm:$0xff]
        %v10170 = vld [vmem:[%s23 + $0x18] sm:$0xff]
        %v10171 = vld [vmem:[%s23 + $0x20] sm:$0xff]
        %v10172 = vld [vmem:[%s23 + $0x28] sm:$0xff]
        %v10173 = vld [vmem:[%s23 + $0x30] sm:$0xff]
        %v10174 = vld [vmem:[%s23 + $0x38] sm:$0xff]
        %v10183 = vunpack.c.l.b16 %v10167
        %v10184 = vunpack.c.h.b16 %v10167
        %v10185 = vunpack.c.l.b16 %v10168
        %v10186 = vunpack.c.h.b16 %v10168
        %v10187 = vunpack.c.l.b16 %v10169
        %v10188 = vunpack.c.h.b16 %v10169
        %v10189 = vunpack.c.l.b16 %v10170
        %v10190 = vunpack.c.h.b16 %v10170
        %v10191 = vunpack.c.l.b16 %v10171
        %v10192 = vunpack.c.h.b16 %v10171
        %v10193 = vunpack.c.l.b16 %v10172
        %v10194 = vunpack.c.h.b16 %v10172
        %v10195 = vunpack.c.l.b16 %v10173
        %v10196 = vunpack.c.h.b16 %v10173
        %v10197 = vunpack.c.l.b16 %v10174
        %v10198 = vunpack.c.h.b16 %v10174
        %v10199 = vpack.c.b16 %v10185, %v10183
        %v10200 = vpack.c.b16 %v10186, %v10184
        %v10201 = vpack.c.b16 %v10189, %v10187
        %v10202 = vpack.c.b16 %v10190, %v10188
        %v10203 = vpack.c.b16 %v10193, %v10191
        %v10204 = vpack.c.b16 %v10194, %v10192
        %v10205 = vpack.c.b16 %v10197, %v10195
        %v10206 = vpack.c.b16 %v10198, %v10196
        %v10216 = vsel %vm1302, %v10166, 0
        %10218 = vmatprep.subr.bf16.mxu0 %v10200
        %10219 = vmatpush1.bf16.msra.mxu0 %v10199
        %10220 = vmatprep.subr.bf16.mxu0 %v10202
        %10221 = vmatpush1.bf16.msra.mxu0 %v10201
        %10222 = vmatprep.subr.bf16.mxu0 %v10204
        %10223 = vmatpush1.bf16.msra.mxu0 %v10203
        %10224 = vmatprep.subr.bf16.mxu0 %v10206
        %10225 = vmatpush1.bf16.msra.mxu0 %v10205
        %10226 = vmatprep.subr.bf16.mxu0 0
        %10227 = vmatpush1.bf16.msra.mxu0 0
        %10228 = vmatprep.subr.bf16.mxu0 0
        %10229 = vmatpush1.bf16.msra.mxu0 0
        %10230 = vmatprep.subr.bf16.mxu0 0
        %10231 = vmatpush1.bf16.msra.mxu0 0
        %10232 = vmatprep.subr.bf16.mxu0 0
        %10233 = vmatpush1.bf16.msra.mxu0 0
        %10234 = vmatprep.subr.bf16.mxu0 0
        %10235 = vmatpush1.bf16.msra.mxu0 0
        %10236 = vmatprep.subr.bf16.mxu0 0
        %10237 = vmatpush1.bf16.msra.mxu0 0
        %10238 = vmatprep.subr.bf16.mxu0 0
        %10239 = vmatpush1.bf16.msra.mxu0 0
        %10240 = vmatprep.subr.bf16.mxu0 0
        %10241 = vmatpush1.bf16.msra.mxu0 0
        %10242 = vmatprep.subr.bf16.mxu0 0
        %10243 = vmatpush1.bf16.msra.mxu0 0
        %10244 = vmatprep.subr.bf16.mxu0 0
        %10245 = vmatpush1.bf16.msra.mxu0 0
        %10246 = vmatprep.subr.bf16.mxu0 0
        %10247 = vmatpush1.bf16.msra.mxu0 0
        %10248 = vmatprep.subr.bf16.mxu0 0
        %10249 = vmatpush1.bf16.msra.mxu0 0
        %10250 = vmatprep.mubr.bf16.mxu0 0
        %10251 = vmatmul.mubr.bf16.gmra.mrb[0].mxu0 %v10216
        %v10252 = vpop.f32.mrb[0].mxu0
        %v10253 = vadd.f32 0.0, %v10252
        %v10254 = vpop.f32.mrb[0].mxu0
        %v10255 = vadd.f32 0.0, %v10254
        %v10256 = vpop.f32.mrb[0].mxu0
        %v10257 = vadd.f32 0.0, %v10256
        %v10258 = vpop.f32.mrb[0].mxu0
        %v10259 = vadd.f32 0.0, %v10258
        %10260 = vdwg.mxu0
        %v10277 = vunpack.c.l.b16 %v10140
        %v10278 = vunpack.c.l.b16 %v10141
        %v10279 = vunpack.c.l.b16 %v10142
        %v10280 = vunpack.c.l.b16 %v10143
        %v10281 = vunpack.c.l.b16 %v10144
        %v10282 = vunpack.c.l.b16 %v10145
        %v10283 = vunpack.c.l.b16 %v10146
        %v10284 = vunpack.c.l.b16 %v10147
        %v10285 = vunpack.c.l.b16 %v10148
        %v10286 = vunpack.c.l.b16 %v10149
        %v10287 = vunpack.c.l.b16 %v10150
        %v10288 = vunpack.c.l.b16 %v10151
        %v10289 = vunpack.c.l.b16 %v10152
        %v10290 = vunpack.c.l.b16 %v10153
        %v10291 = vunpack.c.l.b16 %v10154
        %v10292 = vunpack.c.l.b16 %v10155
        %v10293 = vrot.slane %v10278, 7
        %v10294 = vsel %vm4289, %v10293, %v10277
        %v10295 = vrot.slane %v10279, 6
        %v10296 = vsel %vm4291, %v10295, %v10294
        %v10297 = vrot.slane %v10280, 5
        %v10298 = vsel %vm4293, %v10297, %v10296
        %v10299 = vrot.slane %v10281, 4
        %v10300 = vsel %vm4295, %v10299, %v10298
        %v10301 = vrot.slane %v10282, 3
        %v10302 = vsel %vm4297, %v10301, %v10300
        %v10303 = vrot.slane %v10283, 2
        %v10304 = vsel %vm4299, %v10303, %v10302
        %v10305 = vrot.slane %v10284, 1
        %v10306 = vsel %vm4301, %v10305, %v10304
        %v10307 = vrot.slane %v10286, 7
        %v10308 = vsel %vm4289, %v10307, %v10285
        %v10309 = vrot.slane %v10287, 6
        %v10310 = vsel %vm4291, %v10309, %v10308
        %v10311 = vrot.slane %v10288, 5
        %v10312 = vsel %vm4293, %v10311, %v10310
        %v10313 = vrot.slane %v10289, 4
        %v10314 = vsel %vm4295, %v10313, %v10312
        %v10315 = vrot.slane %v10290, 3
        %v10316 = vsel %vm4297, %v10315, %v10314
        %v10317 = vrot.slane %v10291, 2
        %v10318 = vsel %vm4299, %v10317, %v10316
        %v10319 = vrot.slane %v10292, 1
        %v10320 = vsel %vm4301, %v10319, %v10318
        %v10321 = vpack.c.b16 %v10320, %v10306
        %v10330 = vunpack.c.l.b16 %v10156
        %v10331 = vunpack.c.h.b16 %v10156
        %v10332 = vunpack.c.l.b16 %v10157
        %v10333 = vunpack.c.h.b16 %v10157
        %v10334 = vunpack.c.l.b16 %v10158
        %v10335 = vunpack.c.h.b16 %v10158
        %v10336 = vunpack.c.l.b16 %v10159
        %v10337 = vunpack.c.h.b16 %v10159
        %v10338 = vunpack.c.l.b16 %v10160
        %v10339 = vunpack.c.h.b16 %v10160
        %v10340 = vunpack.c.l.b16 %v10161
        %v10341 = vunpack.c.h.b16 %v10161
        %v10342 = vunpack.c.l.b16 %v10162
        %v10343 = vunpack.c.h.b16 %v10162
        %v10344 = vunpack.c.l.b16 %v10163
        %v10345 = vunpack.c.h.b16 %v10163
        %v10346 = vpack.c.b16 %v10332, %v10330
        %v10347 = vpack.c.b16 %v10333, %v10331
        %v10348 = vpack.c.b16 %v10336, %v10334
        %v10349 = vpack.c.b16 %v10337, %v10335
        %v10350 = vpack.c.b16 %v10340, %v10338
        %v10351 = vpack.c.b16 %v10341, %v10339
        %v10352 = vpack.c.b16 %v10344, %v10342
        %v10353 = vpack.c.b16 %v10345, %v10343
        %v10363 = vsel %vm1302, %v10321, 0
        %10365 = vmatprep.subr.bf16.mxu0 %v10347
        %10366 = vmatpush1.bf16.msra.mxu0 %v10346
        %10367 = vmatprep.subr.bf16.mxu0 %v10349
        %10368 = vmatpush1.bf16.msra.mxu0 %v10348
        %10369 = vmatprep.subr.bf16.mxu0 %v10351
        %10370 = vmatpush1.bf16.msra.mxu0 %v10350
        %10371 = vmatprep.subr.bf16.mxu0 %v10353
        %10372 = vmatpush1.bf16.msra.mxu0 %v10352
        %10373 = vmatprep.subr.bf16.mxu0 0
        %10374 = vmatpush1.bf16.msra.mxu0 0
        %10375 = vmatprep.subr.bf16.mxu0 0
        %10376 = vmatpush1.bf16.msra.mxu0 0
        %10377 = vmatprep.subr.bf16.mxu0 0
        %10378 = vmatpush1.bf16.msra.mxu0 0
        %10379 = vmatprep.subr.bf16.mxu0 0
        %10380 = vmatpush1.bf16.msra.mxu0 0
        %10381 = vmatprep.subr.bf16.mxu0 0
        %10382 = vmatpush1.bf16.msra.mxu0 0
        %10383 = vmatprep.subr.bf16.mxu0 0
        %10384 = vmatpush1.bf16.msra.mxu0 0
        %10385 = vmatprep.subr.bf16.mxu0 0
        %10386 = vmatpush1.bf16.msra.mxu0 0
        %10387 = vmatprep.subr.bf16.mxu0 0
        %10388 = vmatpush1.bf16.msra.mxu0 0
        %10389 = vmatprep.subr.bf16.mxu0 0
        %10390 = vmatpush1.bf16.msra.mxu0 0
        %10391 = vmatprep.subr.bf16.mxu0 0
        %10392 = vmatpush1.bf16.msra.mxu0 0
        %10393 = vmatprep.subr.bf16.mxu0 0
        %10394 = vmatpush1.bf16.msra.mxu0 0
        %10395 = vmatprep.subr.bf16.mxu0 0
        %10396 = vmatpush1.bf16.msra.mxu0 0
        %10397 = vmatprep.mubr.bf16.mxu0 0
        %10398 = vmatmul.mubr.bf16.gmra.mrb[0].mxu0 %v10363
        %v10399 = vpop.f32.mrb[0].mxu0
        %v10400 = vadd.f32 %v10253, %v10399
        %v10401 = vpop.f32.mrb[0].mxu0
        %v10402 = vadd.f32 %v10255, %v10401
        %v10403 = vpop.f32.mrb[0].mxu0
        %v10404 = vadd.f32 %v10257, %v10403
        %v10405 = vpop.f32.mrb[0].mxu0
        %v10406 = vadd.f32 %v10259, %v10405
        %10407 = vdwg.mxu0
        %v10408 = vld [vmem:[%s24] sm:$0x3]
        %v10410 = vlaneseq
        %v10411 = vshrl.u32 %v10410, 7
        %v10412 = vsub.s32 0, %v10411
        %v10413 = vrot.slane %v10408, %v10412
        %v10414 = vlaneseq
        %v10415 = vshrl.u32 %v10414, 7
        %v10416 = vsub.s32 1, %v10415
        %v10417 = vrot.slane %v10408, %v10416
        %v10420 = vadd.f32 %v10400, %v10413
        %v10421 = vadd.f32 %v10402, %v10417
        %v10422 = vadd.f32 %v10404, %v10413
        %v10423 = vadd.f32 %v10406, %v10417
        %v10424 = vpack.c.bf16 %v10422, %v10420
        %v10425 = vld [vmem:[%s5] sm:$0xff]
        %v10426 = vld [vmem:[%s5 + $0x8] sm:$0xff]
        %10428 = vrot.lane.b32.xlu0 %v10424, 64
        %v10429 = vpop.permute.xlu0 %10428
        %v10431 = vsel %vm1302, %v10424, 0
        %v10434 = vsel %vm1302, %v10429, 0
        %10436 = vmatprep.subr.bf16.mxu0 0
        %10437 = vmatpush1.bf16.xpose.msra.mxu0 %v10434
        %10438 = vmatprep.subr.bf16.mxu0 0
        %10439 = vmatpush1.bf16.xpose.msra.mxu0 0
        %10440 = vmatprep.subr.bf16.mxu0 0
        %10441 = vmatpush1.bf16.xpose.msra.mxu0 0
        %10442 = vmatprep.subr.bf16.mxu0 0
        %10443 = vmatpush1.bf16.xpose.msra.mxu0 0
        %10444 = vmatprep.subr.bf16.mxu0 0
        %10445 = vmatpush1.bf16.xpose.msra.mxu0 0
        %10446 = vmatprep.subr.bf16.mxu0 0
        %10447 = vmatpush1.bf16.xpose.msra.mxu0 0
        %10448 = vmatprep.subr.bf16.mxu0 0
        %10449 = vmatpush1.bf16.xpose.msra.mxu0 0
        %10450 = vmatprep.subr.bf16.mxu0 0
        %10451 = vmatpush1.bf16.xpose.msra.mxu0 0
        %10452 = vmatprep.subr.bf16.mxu0 0
        %10453 = vmatpush1.bf16.xpose.msra.mxu0 0
        %10454 = vmatprep.subr.bf16.mxu0 0
        %10455 = vmatpush1.bf16.xpose.msra.mxu0 0
        %10456 = vmatprep.subr.bf16.mxu0 0
        %10457 = vmatpush1.bf16.xpose.msra.mxu0 0
        %10458 = vmatprep.subr.bf16.mxu0 0
        %10459 = vmatpush1.bf16.xpose.msra.mxu0 0
        %10460 = vmatprep.subr.bf16.mxu0 0
        %10461 = vmatpush1.bf16.xpose.msra.mxu0 0
        %10462 = vmatprep.subr.bf16.mxu0 0
        %10463 = vmatpush1.bf16.xpose.msra.mxu0 0
        %10464 = vmatprep.subr.bf16.mxu0 0
        %10465 = vmatpush1.bf16.xpose.msra.mxu0 0
        %10466 = vmatprep.subr.bf16.mxu0 0
        %10467 = vmatpush1.bf16.xpose.msra.mxu0 0
        %10468 = vmatprep.mubr.bf16.mxu0 0
        %10469 = vmatmul.mubr.bf16.gmra.mrb[0].mxu0 %v10431
        %v10470 = vpop.f32.mrb[0].mxu0
        %v10471 = vadd.f32 %v10425, %v10470
        %v10472 = vpop.f32.mrb[0].mxu0
        %v10473 = vpop.f32.mrb[0].mxu0
        %v10474 = vadd.f32 %v10426, %v10473
        %v10475 = vpop.f32.mrb[0].mxu0
        %10476 = vdwg.mxu0
        %v10477 = vsel %vm4312, %v10471, -inf
        %10478 = vmax.xlane.f32.xlu0 %v10477
        %v10479 = vpop.xlane.xlu0 %10478
        %v10480 = vsel %vm4312, %v10474, -inf
        %10481 = vmax.xlane.f32.xlu0 %v10480
        %v10482 = vpop.xlane.xlu0 %10481
        %v10483 = vsub.f32 %v10471, %v10479
        %v10484 = vsub.f32 %v10474, %v10482
        %v10485 = vmul.f32 %v10483, 1.442695
        %v10486 = vpow.pop %v10485
        %v10487 = vmul.f32 %v10484, 1.442695
        %v10488 = vpow.pop %v10487
        %v10489 = vsel %vm4312, %v10486, 0.0
        %10490 = vadd.xlane.f32.xlu0 %v10489
        %v10491 = vpop.xlane.xlu0 %10490
        %v10492 = vsel %vm4312, %v10488, 0.0
        %10493 = vadd.xlane.f32.xlu0 %v10492
        %v10494 = vpop.xlane.xlu0 %10493
        %v10495 = vrcp.pop %v10491
        %v10496 = vmul.f32 %v10486, %v10495
        %v10497 = vrcp.pop %v10494
        %v10498 = vmul.f32 %v10488, %v10497
        %v10499 = vpack.c.bf16 %v10498, %v10496
        %v10500 = vpack.c.bf16 %v10423, %v10421
        %v10502 = vsel %vm4312, %v10499, 0
        %10504 = vmatprep.subr.bf16.mxu0 0
        %10505 = vmatpush1.bf16.msra.mxu0 %v10500
        %10506 = vmatprep.subr.bf16.mxu0 0
        %10507 = vmatpush1.bf16.msra.mxu0 0
        %10508 = vmatprep.subr.bf16.mxu0 0
        %10509 = vmatpush1.bf16.msra.mxu0 0
        %10510 = vmatprep.subr.bf16.mxu0 0
        %10511 = vmatpush1.bf16.msra.mxu0 0
        %10512 = vmatprep.subr.bf16.mxu0 0
        %10513 = vmatpush1.bf16.msra.mxu0 0
        %10514 = vmatprep.subr.bf16.mxu0 0
        %10515 = vmatpush1.bf16.msra.mxu0 0
        %10516 = vmatprep.subr.bf16.mxu0 0
        %10517 = vmatpush1.bf16.msra.mxu0 0
        %10518 = vmatprep.subr.bf16.mxu0 0
        %10519 = vmatpush1.bf16.msra.mxu0 0
        %10520 = vmatprep.subr.bf16.mxu0 0
        %10521 = vmatpush1.bf16.msra.mxu0 0
        %10522 = vmatprep.subr.bf16.mxu0 0
        %10523 = vmatpush1.bf16.msra.mxu0 0
        %10524 = vmatprep.subr.bf16.mxu0 0
        %10525 = vmatpush1.bf16.msra.mxu0 0
        %10526 = vmatprep.subr.bf16.mxu0 0
        %10527 = vmatpush1.bf16.msra.mxu0 0
        %10528 = vmatprep.subr.bf16.mxu0 0
        %10529 = vmatpush1.bf16.msra.mxu0 0
        %10530 = vmatprep.subr.bf16.mxu0 0
        %10531 = vmatpush1.bf16.msra.mxu0 0
        %10532 = vmatprep.subr.bf16.mxu0 0
        %10533 = vmatpush1.bf16.msra.mxu0 0
        %10534 = vmatprep.subr.bf16.mxu0 0
        %10535 = vmatpush1.bf16.msra.mxu0 0
        %10536 = vmatprep.mubr.bf16.mxu0 0
        %10537 = vmatmul.mubr.bf16.gmra.mrb[0].mxu0 %v10502
        %v10538 = vpop.f32.mrb[0].mxu0
        %v10539 = vadd.f32 0.0, %v10538
        %v10540 = vpop.f32.mrb[0].mxu0
        %v10541 = vpop.f32.mrb[0].mxu0
        %v10542 = vadd.f32 0.0, %v10541
        %v10543 = vpop.f32.mrb[0].mxu0
        %10544 = vdwg.mxu0
        %10545 = vst.msk [vmem:[%s802] sm:$0xff] %vm1302, %v10539
        %10546 = vst.msk [vmem:[%s802 + $0x8] sm:$0xff] %vm1302, %v10542
        %s10547 = sand.u32 %s592, 1
        %s10548 = scalar_lea.sflag [#allocation3], %s10547
        %s10549 = sand.u32 %s592, 1
        %s10550 = smul.addr %s10549, 16
        %s10551 = scalar_lea.vmem [#allocation2], %s10550
        // Predicated region
        $region121: #{tpu_custom_call.1} parent=119 // pred_check
          %p10552 = pneg %p602
        $region122: #{tpu_custom_call.1} parent=119 // pred_check_branch
          %10554 = sbr.rel (%p10552) target = $region124
        $region123: #{tpu_custom_call.1} parent=119 // pred_region
          %s10556 = ssub.s32 256, 256
          %10557 = vsyncadd %s10548, %s10556
          %s10558 = smul.addr %s39, 2
          %s10559 = smul.addr %s10558, 128
          %s10560 = scalar_lea.hbm %s25, %s10559
          %s10561 = sshll.u32 %s10551, 4
          %s10562 = int_to_ptr.vmem [resolvable:$true] %s10561
          %10567 = dma.vmem_to_hbm [thread:$0]  %s10562, 256, %s10560, %s10548, 128, 128, 8
        $region124: #{tpu_custom_call.1} parent=119 // pred_fallthru
          _
      $region120: #{tpu_custom_call.1} parent=5 // pred_fallthru
        _
      %p10568 = scmp.le.s32.totalorder 2, %s34
      // Predicated region
      $region125: #{tpu_custom_call.1} parent=5 // pred_check
        %p10569 = pneg %p10568
      $region126: #{tpu_custom_call.1} parent=5 // pred_check_branch
        %10571 = sbr.rel (%p10569) target = $region128
      $region127: #{tpu_custom_call.1} parent=5 // pred_region
        %s10572 = ssub.s32 %s34, 2
        // Predicated region
        $region129: #{tpu_custom_call.1} parent=127 // pred_check
          %p10573 = pneg %p608
        $region130: #{tpu_custom_call.1} parent=127 // pred_check_branch
          %10575 = sbr.rel (%p10573) target = $region132
        $region131: #{tpu_custom_call.1} parent=127 // pred_region
          %s10576 = sand.u32 %s593, 1
          %s10577 = scalar_lea.sflag [#allocation3], %s10576
          %s10578 = sand.u32 %s593, 1
          %s10579 = smul.addr %s10578, 16
          %s10580 = scalar_lea.vmem [#allocation2], %s10579
          %10581 = dma.done %s10577, 256
        $region132: #{tpu_custom_call.1} parent=127 // pred_fallthru
          _
      $region128: #{tpu_custom_call.1} parent=5 // pred_fallthru
        _
    $region6: #{tpu_custom_call.1} parent=1 // loop_footer
      %s38 = sadd.s32 1, %s34
    $region7: #{tpu_custom_call.1} parent=1 // loop_footer_branch
      %33 = sbr.rel target = $region3
    $region8: #{tpu_custom_call.1} parent=1 // loop_exit
      _
    %10582 = vsyncpa [#allocation3], 1
    %s10583 = scalar_lea.sflag [#allocation3], 1
    %10584 = vsyncpa %s10583, 1

</llo_original>
